<compile_context>
chip_gen: v5e
topology: v5e:2x2
jax: 0.10.0
libtpu: 0.0.40
codegen_flags: <defaults>
</compile_context>

<pallas_src>
import numpy as np
import jax
import jax.numpy as jnp
from jax.experimental import pallas as pl
from jax.experimental.pallas import tpu as pltpu


# ----------------------------------------------------------------------------
# Bilinear interpolation matrix, matching torch.nn.functional.interpolate
# (mode='bilinear', align_corners=False).
# ----------------------------------------------------------------------------
def bilinear_matrix(out_size, in_size):
    m = np.zeros((out_size, in_size), np.float32)
    scale = in_size / out_size
    for o in range(out_size):
        src = max((o + 0.5) * scale - 0.5, 0.0)
        i0 = min(int(np.floor(src)), in_size - 1)
        lam = src - i0
        i1 = min(i0 + 1, in_size - 1)
        m[o, i0] += 1.0 - lam
        m[o, i1] += lam
    return m


def _pick_batch_block(n):
    # Fold images into the matmul M-dim to amortise per-grid-step overhead,
    # but keep >= 2 grid steps so both v7x TensorCores get work.
    nb = max(1, n // 2)
    while n % nb:
        nb -= 1
    return nb


# ----------------------------------------------------------------------------
# Fused decoder forward (single pallas_call, grid over batch blocks).
# ----------------------------------------------------------------------------
def decoder_forward(feature_maps_nchw, params, upscale, batch_block=None):
    L = len(feature_maps_nchw)
    # NCHW -> NHWC for the kernel.
    fms = [jnp.transpose(f, (0, 2, 3, 1)).astype(jnp.float32) for f in feature_maps_nchw]
    N = fms[0].shape[0]
    shapes = [tuple(f.shape[1:]) for f in fms]               # (H, W, C) per level
    H0, W0, C0 = shapes[0]
    Hout, Wout = H0 * upscale, W0 * upscale
    n_stage = L - 1
    NB = batch_block if batch_block is not None else _pick_batch_block(N)
    assert N % NB == 0

    # --- lane-dense output packing (last dim multiple of 128 when possible) ---
    if Wout % 128 == 0:
        pack = 1                                              # already lane-dense
    elif 128 % Wout == 0 and Hout % (128 // Wout) == 0:
        pack = 128 // Wout                                    # pack rows into lanes
    else:
        pack = 1                                              # fallback (masked stores)
    out_rows, out_cols = Hout // pack, Wout * pack

    # --- host-side constants (bf16 MXU operands, f32 BN affine) ---------------
    stage_meta, stage_arrays = [], []
    for i in range(L - 1, 0, -1):                             # deepest stage first
        Hl, Wl, Clow = shapes[i - 1]
        Hh, Wh, Chigh = shapes[i]
        Cin, Cout = Clow + Chigh, Clow
        # combined 2x bilinear upsample matrix: B[(y,x),(h,w)] = Uh[y,h]*Uw[x,w]
        B = jnp.asarray(np.kron(bilinear_matrix(Hl, Hh),
                                bilinear_matrix(Wl, Wh))).astype(jnp.bfloat16)
        w, scale, shift = params["convs"][i - 1]              # w: (3,3,Cin,Cout) HWIO
        W9 = w.reshape(9, Cin, Cout).astype(jnp.bfloat16)     # per-tap weights
        stage_arrays.append((B, W9, scale.reshape(1, Cout), shift.reshape(1, Cout)))
        stage_meta.append((Hl, Wl, Clow, Hh, Wh, Chigh, Cin, Cout))

    # final x`upscale` upsample: Uh row-packed, Uw^T placed into `pack` lane blocks
    uh = bilinear_matrix(Hout, H0)                            # (Hout, H0)
    uh2 = jnp.asarray(uh.reshape(out_rows, pack * H0)).astype(jnp.bfloat16)
    uwT = bilinear_matrix(Wout, W0).T                         # (W0, Wout)
    uw_parts = []
    for j in range(pack):
        m = np.zeros((W0, out_cols), np.float32)
        m[:, j * Wout:(j + 1) * Wout] = uwT
        uw_parts.append(jnp.asarray(m).astype(jnp.bfloat16))
    wlog = params["logit_w"].reshape(1, C0)                   # f32, 1x1 conv weight
    blog = params["logit_b"]                                  # (1,), SMEM scalar

    # --- fused kernel ----------------------------------------------------------
    def kernel(*refs):
        fm_refs = refs[:L]
        pos = L
        st_refs = refs[pos:pos + 4 * n_stage]; pos += 4 * n_stage
        uh2_ref = refs[pos]; pos += 1
        uw_refs = refs[pos:pos + pack]; pos += pack
        wl_ref = refs[pos]; pos += 1
        b_ref = refs[pos]; pos += 1
        o_ref = refs[pos]; pos += 1
        pad_refs = refs[pos:]

        HhT, WhT, ChT = shapes[L - 1]
        # deepest (coarsest) feature map, flat spatial-major: (NB, Hh*Wh, Chigh)
        f_high = fm_refs[L - 1][...].reshape(NB, HhT * WhT, ChT)

        for s in range(n_stage):
            Hl, Wl, Clow, Hh, Wh, Chigh, Cin, Cout = stage_meta[s]
            B_ref, W_ref, sc_ref, sh_ref = st_refs[4 * s:4 * s + 4]
            pad = pad_refs[s]
            low = L - 2 - s

            # zero the 1-px 'same'-padding halo (interior fully overwritten below).
            # NOTE: intentionally NOT hoisted under pl.when(program_id==0) — with a
            # 'parallel' grid axis each TensorCore has its own scratch and only one
            # of them runs iteration 0.
            pad[:, 0:1, :, :] = jnp.zeros((NB, 1, Wl + 2, Cin), jnp.bfloat16)
            pad[:, Hl + 1:Hl + 2, :, :] = jnp.zeros((NB, 1, Wl + 2, Cin), jnp.bfloat16)
            pad[:, :, 0:1, :] = jnp.zeros((NB, Hl + 2, 1, Cin), jnp.bfloat16)
            pad[:, :, Wl + 1:Wl + 2, :] = jnp.zeros((NB, Hl + 2, 1, Cin), jnp.bfloat16)

            # channel concat written as two direct halves (no materialised concat):
            #   low channels  <- skip-connection feature map
            #   high channels <- 2x bilinear upsample (one MXU matmul per image)
            pad[:, 1:Hl + 1, 1:Wl + 1, :Clow] = fm_refs[low][...].astype(jnp.bfloat16)
            f_high_b = f_high.astype(jnp.bfloat16)
            for nb in range(NB):
                fup = jnp.dot(B_ref[...], f_high_b[nb],
                              preferred_element_type=jnp.float32)     # (Hl*Wl, Chigh)
                pad[nb, 1:Hl + 1, 1:Wl + 1, Clow:] = (
                    fup.reshape(Hl, Wl, Chigh).astype(jnp.bfloat16))

            # 3x3 'same' conv as 9 accumulating MXU matmuls over shifted windows
            acc = jnp.zeros((NB * Hl * Wl, Cout), jnp.float32)
            for ky in range(3):
                for kx in range(3):
                    win = pad[:, ky:ky + Hl, kx:kx + Wl, :].reshape(NB * Hl * Wl, Cin)
                    acc = acc + jnp.dot(win, W_ref[ky * 3 + kx],
                                        preferred_element_type=jnp.float32)

            # folded BatchNorm (inference) + ReLU, f32
            f_high = jnp.maximum(acc * sc_ref[...] + sh_ref[...], 0.0).reshape(
                NB, Hl * Wl, Cout)

        # epilogue: 1x1 logit conv + bilinear x`upscale` upsample,
        # packed so the final store is lane-dense (out_cols multiple of 128).
        for nb in range(NB):
            x3 = f_high[nb].reshape(H0, W0, C0)
            z = jnp.sum(x3 * wl_ref[...], axis=-1).astype(jnp.bfloat16)   # (H0, W0)
            parts = [jnp.dot(z, uw_refs[j][...], preferred_element_type=jnp.float32)
                     for j in range(pack)]                                 # (H0, out_cols)
            t = parts[0] if pack == 1 else jnp.concatenate(parts, axis=0)  # (pack*H0, out_cols)
            p = jnp.dot(uh2_ref[...], t.astype(jnp.bfloat16),
                        preferred_element_type=jnp.float32)                # (out_rows, out_cols)
            # bias added after upsample is valid: bilinear rows sum to 1.
            o_ref[nb] = p + b_ref[0]

    # --- specs ------------------------------------------------------------------
    def _fm_spec(shape):
        H, W, C = shape
        return pl.BlockSpec((NB, H, W, C), lambda n: (n, 0, 0, 0))

    def _const_spec(arr):
        nd = arr.ndim
        return pl.BlockSpec(arr.shape, lambda n, _nd=nd: (0,) * _nd)

    in_specs = [_fm_spec(s) for s in shapes]
    inputs = list(fms)
    for arrs in stage_arrays:
        for a in arrs:
            in_specs.append(_const_spec(a))
            inputs.append(a)
    for a in (uh2, *uw_parts, wlog):
        in_specs.append(_const_spec(a))
        inputs.append(a)
    in_specs.append(pl.BlockSpec(memory_space=pltpu.MemorySpace.SMEM))
    inputs.append(blog)

    scratch_shapes = [pltpu.VMEM((Hl + 2, Wl + 2, Cin), jnp.bfloat16)
                      for (Hl, Wl, _, _, _, _, Cin, _) in stage_meta]
    # add the batch-block leading dim
    scratch_shapes = [pltpu.VMEM((NB,) + s.shape, jnp.bfloat16) for s in scratch_shapes]

    mask = pl.pallas_call(
        kernel,
        grid=(N // NB,),
        in_specs=in_specs,
        out_specs=pl.BlockSpec((NB, out_rows, out_cols), lambda n: (n, 0, 0)),
        out_shape=jax.ShapeDtypeStruct((N, out_rows, out_cols), jnp.float32),
        scratch_shapes=scratch_shapes,
        compiler_params=pltpu.CompilerParams(
            dimension_semantics=("parallel",),
            vmem_limit_bytes=32 * 1024 * 1024),
    )(*inputs)
    return mask.reshape(N, 1, Hout, Wout)                     # NCHW


# ----------------------------------------------------------------------------
# Deterministic synthetic parameters (BatchNorm in inference mode, folded).
# ----------------------------------------------------------------------------
def init_params(key, encoder_dims):
    # TODO(synk): BatchNorm is implemented in eval/inference mode (running stats
    # folded into a per-channel affine), matching the "inference_" module usage.
    params = {"convs": []}
    eps = 1e-5
    for i in range(1, len(encoder_dims)):
        cin = encoder_dims[i] + encoder_dims[i - 1]
        cout = encoder_dims[i - 1]
        key, k1, k2, k3, k4, k5 = jax.random.split(key, 6)
        w = jax.random.normal(k1, (3, 3, cin, cout), jnp.float32) / np.sqrt(9.0 * cin)
        gamma = 1.0 + 0.1 * jax.random.normal(k2, (cout,), jnp.float32)
        beta = 0.1 * jax.random.normal(k3, (cout,), jnp.float32)
        rmean = 0.1 * jax.random.normal(k4, (cout,), jnp.float32)
        rvar = 0.5 + jax.random.uniform(k5, (cout,), jnp.float32)
        scale = gamma / jnp.sqrt(rvar + eps)
        shift = beta - rmean * scale
        params["convs"].append((w, scale, shift))
    key, k1, k2 = jax.random.split(key, 3)
    params["logit_w"] = 0.1 * jax.random.normal(k1, (encoder_dims[0],), jnp.float32)
    params["logit_b"] = 0.1 * jax.random.normal(k2, (1,), jnp.float32)
    return params


# ----------------------------------------------------------------------------
# Pure-JAX reference (f32, same math, XLA ops) used to sanity-check the kernel.
# ----------------------------------------------------------------------------
def reference_forward(feature_maps_nchw, params, upscale):
    fms = [jnp.transpose(f, (0, 2, 3, 1)).astype(jnp.float32) for f in feature_maps_nchw]
    for i in range(len(fms) - 1, 0, -1):
        f_low, f_high = fms[i - 1], fms[i]
        _, Hl, Wl, _ = f_low.shape
        _, Hh, Wh, _ = f_high.shape
        uh = jnp.asarray(bilinear_matrix(Hl, Hh))
        uw = jnp.asarray(bilinear_matrix(Wl, Wh))
        fup = jnp.einsum("Oh,nhwc->nOwc", uh, f_high)
        fup = jnp.einsum("Pw,nOwc->nOPc", uw, fup)
        f = jnp.concatenate([f_low, fup], axis=-1)
        w, scale, shift = params["convs"][i - 1]
        y = jax.lax.conv_general_dilated(
            f, w, window_strides=(1, 1), padding=((1, 1), (1, 1)),
            dimension_numbers=("NHWC", "HWIO", "NHWC"))
        fms[i - 1] = jnp.maximum(y * scale + shift, 0.0)
    x = fms[0]
    z = jnp.einsum("nhwc,c->nhw", x, params["logit_w"]) + params["logit_b"][0]
    _, H, W = z.shape
    uh = jnp.asarray(bilinear_matrix(H * upscale, H))
    uw = jnp.asarray(bilinear_matrix(W * upscale, W))
    mask = jnp.einsum("Oh,nhw->nOw", uh, z)
    mask = jnp.einsum("Pw,nOw->nOP", uw, mask)
    return mask[:, None, :, :]


if __name__ == "__main__":
    encoder_dims = [8, 16, 32]   # like Decoder(encoder_dims=[8,16,32], upscale=4)
    upscale = 4
    N, S = 2, 16

    key = jax.random.PRNGKey(0)
    key, *fkeys = jax.random.split(key, len(encoder_dims) + 1)
    feature_maps = [
        jax.random.normal(fkeys[l],
                          (N, encoder_dims[l], S // (2 ** l), S // (2 ** l)),
                          jnp.float32)
        for l in range(len(encoder_dims))
    ]
    params = init_params(jax.random.PRNGKey(42), encoder_dims)

    out = decoder_forward(feature_maps, params, upscale)
    out = jax.block_until_ready(out)

    ref = jax.block_until_ready(reference_forward(feature_maps, params, upscale))
    assert out.shape == (N, 1, S * upscale, S * upscale), out.shape
    err = float(jnp.max(jnp.abs(out - ref)))
    assert err < 5e-2, f"max abs diff too large: {err}"

    print("KERNEL_OK")
</pallas_src>

<mosaic_0001>
module attributes {stable_mosaic.version = 11 : i64} {
  func.func @kernel(%arg0: i32, %arg1: memref<1x16x16x8xf32, #tpu.memory_space<vmem>>, %arg2: memref<1x8x8x16xf32, #tpu.memory_space<vmem>>, %arg3: memref<1x4x4x32xf32, #tpu.memory_space<vmem>>, %arg4: memref<64x16xbf16, #tpu.memory_space<vmem>>, %arg5: memref<9x48x16xbf16, #tpu.memory_space<vmem>>, %arg6: memref<1x16xf32, #tpu.memory_space<vmem>>, %arg7: memref<1x16xf32, #tpu.memory_space<vmem>>, %arg8: memref<256x64xbf16, #tpu.memory_space<vmem>>, %arg9: memref<9x24x8xbf16, #tpu.memory_space<vmem>>, %arg10: memref<1x8xf32, #tpu.memory_space<vmem>>, %arg11: memref<1x8xf32, #tpu.memory_space<vmem>>, %arg12: memref<32x32xbf16, #tpu.memory_space<vmem>>, %arg13: memref<16x128xbf16, #tpu.memory_space<vmem>>, %arg14: memref<16x128xbf16, #tpu.memory_space<vmem>>, %arg15: memref<1x8xf32, #tpu.memory_space<vmem>>, %arg16: memref<1xf32, #tpu.memory_space<smem>>, %arg17: memref<1x32x128xf32, #tpu.memory_space<vmem>>, %arg18: memref<1x10x10x48xbf16, #tpu.memory_space<vmem>>, %arg19: memref<1x18x18x24xbf16, #tpu.memory_space<vmem>>) attributes {dimension_semantics = [#tpu.dimension_semantics<parallel>], iteration_bounds = array<i64: 2>, scalar_prefetch = 0 : i64, scratch_operands = 2 : i64, tpu.core_type = #tpu.core_type<tc>, window_params = [{transform_indices = @transform_0, window_bounds = array<i64: 1, 16, 16, 8>}, {transform_indices = @transform_1, window_bounds = array<i64: 1, 8, 8, 16>}, {transform_indices = @transform_2, window_bounds = array<i64: 1, 4, 4, 32>}, {pipeline_mode = #tpu.pipeline_mode<synchronous>, transform_indices = @transform_3, window_bounds = array<i64: 64, 16>}, {pipeline_mode = #tpu.pipeline_mode<synchronous>, transform_indices = @transform_4, window_bounds = array<i64: 9, 48, 16>}, {pipeline_mode = #tpu.pipeline_mode<synchronous>, transform_indices = @transform_5, window_bounds = array<i64: 1, 16>}, {pipeline_mode = #tpu.pipeline_mode<synchronous>, transform_indices = @transform_6, window_bounds = array<i64: 1, 16>}, {pipeline_mode = #tpu.pipeline_mode<synchronous>, transform_indices = @transform_7, window_bounds = array<i64: 256, 64>}, {pipeline_mode = #tpu.pipeline_mode<synchronous>, transform_indices = @transform_8, window_bounds = array<i64: 9, 24, 8>}, {pipeline_mode = #tpu.pipeline_mode<synchronous>, transform_indices = @transform_9, window_bounds = array<i64: 1, 8>}, {pipeline_mode = #tpu.pipeline_mode<synchronous>, transform_indices = @transform_10, window_bounds = array<i64: 1, 8>}, {pipeline_mode = #tpu.pipeline_mode<synchronous>, transform_indices = @transform_11, window_bounds = array<i64: 32, 32>}, {pipeline_mode = #tpu.pipeline_mode<synchronous>, transform_indices = @transform_12, window_bounds = array<i64: 16, 128>}, {pipeline_mode = #tpu.pipeline_mode<synchronous>, transform_indices = @transform_13, window_bounds = array<i64: 16, 128>}, {pipeline_mode = #tpu.pipeline_mode<synchronous>, transform_indices = @transform_14, window_bounds = array<i64: 1, 8>}, {transform_indices = @transform_15, window_bounds = array<i64: 1>}, {transform_indices = @transform_16, window_bounds = array<i64: 1, 32, 128>}]} {
    %c0 = arith.constant 0 : index
    %c0_0 = arith.constant 0 : index
    %c0_1 = arith.constant 0 : index
    %c0_2 = arith.constant 0 : index
    %0 = vector.load %arg3[%c0, %c0_0, %c0_1, %c0_2] : memref<1x4x4x32xf32, #tpu.memory_space<vmem>>, vector<1x4x4x32xf32>
    %1 = vector.shape_cast %0 : vector<1x4x4x32xf32> to vector<1x16x32xf32>
    %cst = arith.constant 0.000000e+00 : bf16
    %2 = vector.broadcast %cst : bf16 to vector<1x1x10x48xbf16>
    %c0_3 = arith.constant 0 : index
    %c0_4 = arith.constant 0 : index
    %c0_5 = arith.constant 0 : index
    %c0_6 = arith.constant 0 : index
    %3 = vector.load %arg18[%c0_3, %c0_4, %c0_5, %c0_6] : memref<1x10x10x48xbf16, #tpu.memory_space<vmem>>, vector<1x1x10x48xbf16>
    tpu.vector_store %arg18[%c0_3, %c0_4, %c0_5, %c0_6], %2 {strides = array<i32>} : memref<1x10x10x48xbf16, #tpu.memory_space<vmem>>, vector<1x1x10x48xbf16>,
    %cst_7 = arith.constant 0.000000e+00 : bf16
    %4 = vector.broadcast %cst_7 : bf16 to vector<1x1x10x48xbf16>
    %c0_8 = arith.constant 0 : index
    %c9 = arith.constant 9 : index
    %c0_9 = arith.constant 0 : index
    %c0_10 = arith.constant 0 : index
    %5 = vector.load %arg18[%c0_8, %c9, %c0_9, %c0_10] : memref<1x10x10x48xbf16, #tpu.memory_space<vmem>>, vector<1x1x10x48xbf16>
    tpu.vector_store %arg18[%c0_8, %c9, %c0_9, %c0_10], %4 {strides = array<i32>} : memref<1x10x10x48xbf16, #tpu.memory_space<vmem>>, vector<1x1x10x48xbf16>,
    %cst_11 = arith.constant 0.000000e+00 : bf16
    %6 = vector.broadcast %cst_11 : bf16 to vector<1x10x1x48xbf16>
    %c0_12 = arith.constant 0 : index
    %c0_13 = arith.constant 0 : index
    %c0_14 = arith.constant 0 : index
    %c0_15 = arith.constant 0 : index
    %7 = vector.load %arg18[%c0_12, %c0_13, %c0_14, %c0_15] : memref<1x10x10x48xbf16, #tpu.memory_space<vmem>>, vector<1x10x1x48xbf16>
    tpu.vector_store %arg18[%c0_12, %c0_13, %c0_14, %c0_15], %6 {strides = array<i32>} : memref<1x10x10x48xbf16, #tpu.memory_space<vmem>>, vector<1x10x1x48xbf16>,
    %cst_16 = arith.constant 0.000000e+00 : bf16
    %8 = vector.broadcast %cst_16 : bf16 to vector<1x10x1x48xbf16>
    %c0_17 = arith.constant 0 : index
    %c0_18 = arith.constant 0 : index
    %c9_19 = arith.constant 9 : index
    %c0_20 = arith.constant 0 : index
    %9 = vector.load %arg18[%c0_17, %c0_18, %c9_19, %c0_20] : memref<1x10x10x48xbf16, #tpu.memory_space<vmem>>, vector<1x10x1x48xbf16>
    tpu.vector_store %arg18[%c0_17, %c0_18, %c9_19, %c0_20], %8 {strides = array<i32>} : memref<1x10x10x48xbf16, #tpu.memory_space<vmem>>, vector<1x10x1x48xbf16>,
    %c0_21 = arith.constant 0 : index
    %c0_22 = arith.constant 0 : index
    %c0_23 = arith.constant 0 : index
    %c0_24 = arith.constant 0 : index
    %10 = vector.load %arg2[%c0_21, %c0_22, %c0_23, %c0_24] : memref<1x8x8x16xf32, #tpu.memory_space<vmem>>, vector<1x8x8x16xf32>
    %11 = arith.truncf %10 : vector<1x8x8x16xf32> to vector<1x8x8x16xbf16>
    %c0_25 = arith.constant 0 : index
    %c1 = arith.constant 1 : index
    %c1_26 = arith.constant 1 : index
    %c0_27 = arith.constant 0 : index
    %12 = vector.load %arg18[%c0_25, %c1, %c1_26, %c0_27] : memref<1x10x10x48xbf16, #tpu.memory_space<vmem>>, vector<1x8x8x16xbf16>
    tpu.vector_store %arg18[%c0_25, %c1, %c1_26, %c0_27], %11 {strides = array<i32>} : memref<1x10x10x48xbf16, #tpu.memory_space<vmem>>, vector<1x8x8x16xbf16>,
    %13 = arith.truncf %1 : vector<1x16x32xf32> to vector<1x16x32xbf16>
    %c0_28 = arith.constant 0 : index
    %c0_29 = arith.constant 0 : index
    %14 = vector.load %arg4[%c0_28, %c0_29] : memref<64x16xbf16, #tpu.memory_space<vmem>>, vector<64x16xbf16>
    %15 = vector.shape_cast %13 : vector<1x16x32xbf16> to vector<16x32xbf16>
    %cst_30 = arith.constant dense<0.000000e+00> : vector<64x32xf32>
    %16 = tpu.matmul %14, %15, %cst_30 {dimension_numbers = #tpu.dot_dimension_numbers<[1], [0], [0], [1], [0, 0, 1, 1], [], []>} : vector<64x16xbf16>, vector<16x32xbf16>, vector<64x32xf32> -> vector<64x32xf32>
    %17 = vector.shape_cast %16 : vector<64x32xf32> to vector<8x8x32xf32>
    %18 = arith.truncf %17 : vector<8x8x32xf32> to vector<8x8x32xbf16>
    %c0_31 = arith.constant 0 : index
    %c1_32 = arith.constant 1 : index
    %c1_33 = arith.constant 1 : index
    %c16 = arith.constant 16 : index
    %19 = vector.load %arg18[%c0_31, %c1_32, %c1_33, %c16] : memref<1x10x10x48xbf16, #tpu.memory_space<vmem>>, vector<1x8x8x32xbf16>
    %20 = vector.shape_cast %19 : vector<1x8x8x32xbf16> to vector<8x8x32xbf16>
    %21 = vector.shape_cast %18 : vector<8x8x32xbf16> to vector<1x8x8x32xbf16>
    tpu.vector_store %arg18[%c0_31, %c1_32, %c1_33, %c16], %21 {strides = array<i32>} : memref<1x10x10x48xbf16, #tpu.memory_space<vmem>>, vector<1x8x8x32xbf16>,
    %cst_34 = arith.constant 0.000000e+00 : f32
    %22 = vector.broadcast %cst_34 : f32 to vector<64x16xf32>
    %c0_35 = arith.constant 0 : index
    %c0_36 = arith.constant 0 : index
    %c0_37 = arith.constant 0 : index
    %c0_38 = arith.constant 0 : index
    %23 = vector.load %arg18[%c0_35, %c0_36, %c0_37, %c0_38] : memref<1x10x10x48xbf16, #tpu.memory_space<vmem>>, vector<1x8x8x48xbf16>
    %24 = vector.shape_cast %23 : vector<1x8x8x48xbf16> to vector<64x48xbf16>
    %c0_39 = arith.constant 0 : index
    %c0_40 = arith.constant 0 : index
    %c0_41 = arith.constant 0 : index
    %25 = vector.load %arg5[%c0_39, %c0_40, %c0_41] : memref<9x48x16xbf16, #tpu.memory_space<vmem>>, vector<1x48x16xbf16>
    %26 = vector.shape_cast %25 : vector<1x48x16xbf16> to vector<48x16xbf16>
    %cst_42 = arith.constant dense<0.000000e+00> : vector<64x16xf32>
    %27 = tpu.matmul %24, %26, %cst_42 {dimension_numbers = #tpu.dot_dimension_numbers<[1], [0], [0], [1], [0, 0, 1, 1], [], []>} : vector<64x48xbf16>, vector<48x16xbf16>, vector<64x16xf32> -> vector<64x16xf32>
    %28 = arith.addf %22, %27 : vector<64x16xf32>
    %c0_43 = arith.constant 0 : index
    %c0_44 = arith.constant 0 : index
    %c1_45 = arith.constant 1 : index
    %c0_46 = arith.constant 0 : index
    %29 = vector.load %arg18[%c0_43, %c0_44, %c1_45, %c0_46] : memref<1x10x10x48xbf16, #tpu.memory_space<vmem>>, vector<1x8x8x48xbf16>
    %30 = vector.shape_cast %29 : vector<1x8x8x48xbf16> to vector<64x48xbf16>
    %c1_47 = arith.constant 1 : index
    %c0_48 = arith.constant 0 : index
    %c0_49 = arith.constant 0 : index
    %31 = vector.load %arg5[%c1_47, %c0_48, %c0_49] : memref<9x48x16xbf16, #tpu.memory_space<vmem>>, vector<1x48x16xbf16>
    %32 = vector.shape_cast %31 : vector<1x48x16xbf16> to vector<48x16xbf16>
    %cst_50 = arith.constant dense<0.000000e+00> : vector<64x16xf32>
    %33 = tpu.matmul %30, %32, %cst_50 {dimension_numbers = #tpu.dot_dimension_numbers<[1], [0], [0], [1], [0, 0, 1, 1], [], []>} : vector<64x48xbf16>, vector<48x16xbf16>, vector<64x16xf32> -> vector<64x16xf32>
    %34 = arith.addf %28, %33 : vector<64x16xf32>
    %c0_51 = arith.constant 0 : index
    %c0_52 = arith.constant 0 : index
    %c2 = arith.constant 2 : index
    %c0_53 = arith.constant 0 : index
    %35 = vector.load %arg18[%c0_51, %c0_52, %c2, %c0_53] : memref<1x10x10x48xbf16, #tpu.memory_space<vmem>>, vector<1x8x8x48xbf16>
    %36 = vector.shape_cast %35 : vector<1x8x8x48xbf16> to vector<64x48xbf16>
    %c2_54 = arith.constant 2 : index
    %c0_55 = arith.constant 0 : index
    %c0_56 = arith.constant 0 : index
    %37 = vector.load %arg5[%c2_54, %c0_55, %c0_56] : memref<9x48x16xbf16, #tpu.memory_space<vmem>>, vector<1x48x16xbf16>
    %38 = vector.shape_cast %37 : vector<1x48x16xbf16> to vector<48x16xbf16>
    %cst_57 = arith.constant dense<0.000000e+00> : vector<64x16xf32>
    %39 = tpu.matmul %36, %38, %cst_57 {dimension_numbers = #tpu.dot_dimension_numbers<[1], [0], [0], [1], [0, 0, 1, 1], [], []>} : vector<64x48xbf16>, vector<48x16xbf16>, vector<64x16xf32> -> vector<64x16xf32>
    %40 = arith.addf %34, %39 : vector<64x16xf32>
    %c0_58 = arith.constant 0 : index
    %c1_59 = arith.constant 1 : index
    %c0_60 = arith.constant 0 : index
    %c0_61 = arith.constant 0 : index
    %41 = vector.load %arg18[%c0_58, %c1_59, %c0_60, %c0_61] : memref<1x10x10x48xbf16, #tpu.memory_space<vmem>>, vector<1x8x8x48xbf16>
    %42 = vector.shape_cast %41 : vector<1x8x8x48xbf16> to vector<64x48xbf16>
    %c3 = arith.constant 3 : index
    %c0_62 = arith.constant 0 : index
    %c0_63 = arith.constant 0 : index
    %43 = vector.load %arg5[%c3, %c0_62, %c0_63] : memref<9x48x16xbf16, #tpu.memory_space<vmem>>, vector<1x48x16xbf16>
    %44 = vector.shape_cast %43 : vector<1x48x16xbf16> to vector<48x16xbf16>
    %cst_64 = arith.constant dense<0.000000e+00> : vector<64x16xf32>
    %45 = tpu.matmul %42, %44, %cst_64 {dimension_numbers = #tpu.dot_dimension_numbers<[1], [0], [0], [1], [0, 0, 1, 1], [], []>} : vector<64x48xbf16>, vector<48x16xbf16>, vector<64x16xf32> -> vector<64x16xf32>
    %46 = arith.addf %40, %45 : vector<64x16xf32>
    %c0_65 = arith.constant 0 : index
    %c1_66 = arith.constant 1 : index
    %c1_67 = arith.constant 1 : index
    %c0_68 = arith.constant 0 : index
    %47 = vector.load %arg18[%c0_65, %c1_66, %c1_67, %c0_68] : memref<1x10x10x48xbf16, #tpu.memory_space<vmem>>, vector<1x8x8x48xbf16>
    %48 = vector.shape_cast %47 : vector<1x8x8x48xbf16> to vector<64x48xbf16>
    %c4 = arith.constant 4 : index
    %c0_69 = arith.constant 0 : index
    %c0_70 = arith.constant 0 : index
    %49 = vector.load %arg5[%c4, %c0_69, %c0_70] : memref<9x48x16xbf16, #tpu.memory_space<vmem>>, vector<1x48x16xbf16>
    %50 = vector.shape_cast %49 : vector<1x48x16xbf16> to vector<48x16xbf16>
    %cst_71 = arith.constant dense<0.000000e+00> : vector<64x16xf32>
    %51 = tpu.matmul %48, %50, %cst_71 {dimension_numbers = #tpu.dot_dimension_numbers<[1], [0], [0], [1], [0, 0, 1, 1], [], []>} : vector<64x48xbf16>, vector<48x16xbf16>, vector<64x16xf32> -> vector<64x16xf32>
    %52 = arith.addf %46, %51 : vector<64x16xf32>
    %c0_72 = arith.constant 0 : index
    %c1_73 = arith.constant 1 : index
    %c2_74 = arith.constant 2 : index
    %c0_75 = arith.constant 0 : index
    %53 = vector.load %arg18[%c0_72, %c1_73, %c2_74, %c0_75] : memref<1x10x10x48xbf16, #tpu.memory_space<vmem>>, vector<1x8x8x48xbf16>
    %54 = vector.shape_cast %53 : vector<1x8x8x48xbf16> to vector<64x48xbf16>
    %c5 = arith.constant 5 : index
    %c0_76 = arith.constant 0 : index
    %c0_77 = arith.constant 0 : index
    %55 = vector.load %arg5[%c5, %c0_76, %c0_77] : memref<9x48x16xbf16, #tpu.memory_space<vmem>>, vector<1x48x16xbf16>
    %56 = vector.shape_cast %55 : vector<1x48x16xbf16> to vector<48x16xbf16>
    %cst_78 = arith.constant dense<0.000000e+00> : vector<64x16xf32>
    %57 = tpu.matmul %54, %56, %cst_78 {dimension_numbers = #tpu.dot_dimension_numbers<[1], [0], [0], [1], [0, 0, 1, 1], [], []>} : vector<64x48xbf16>, vector<48x16xbf16>, vector<64x16xf32> -> vector<64x16xf32>
    %58 = arith.addf %52, %57 : vector<64x16xf32>
    %c0_79 = arith.constant 0 : index
    %c2_80 = arith.constant 2 : index
    %c0_81 = arith.constant 0 : index
    %c0_82 = arith.constant 0 : index
    %59 = vector.load %arg18[%c0_79, %c2_80, %c0_81, %c0_82] : memref<1x10x10x48xbf16, #tpu.memory_space<vmem>>, vector<1x8x8x48xbf16>
    %60 = vector.shape_cast %59 : vector<1x8x8x48xbf16> to vector<64x48xbf16>
    %c6 = arith.constant 6 : index
    %c0_83 = arith.constant 0 : index
    %c0_84 = arith.constant 0 : index
    %61 = vector.load %arg5[%c6, %c0_83, %c0_84] : memref<9x48x16xbf16, #tpu.memory_space<vmem>>, vector<1x48x16xbf16>
    %62 = vector.shape_cast %61 : vector<1x48x16xbf16> to vector<48x16xbf16>
    %cst_85 = arith.constant dense<0.000000e+00> : vector<64x16xf32>
    %63 = tpu.matmul %60, %62, %cst_85 {dimension_numbers = #tpu.dot_dimension_numbers<[1], [0], [0], [1], [0, 0, 1, 1], [], []>} : vector<64x48xbf16>, vector<48x16xbf16>, vector<64x16xf32> -> vector<64x16xf32>
    %64 = arith.addf %58, %63 : vector<64x16xf32>
    %c0_86 = arith.constant 0 : index
    %c2_87 = arith.constant 2 : index
    %c1_88 = arith.constant 1 : index
    %c0_89 = arith.constant 0 : index
    %65 = vector.load %arg18[%c0_86, %c2_87, %c1_88, %c0_89] : memref<1x10x10x48xbf16, #tpu.memory_space<vmem>>, vector<1x8x8x48xbf16>
    %66 = vector.shape_cast %65 : vector<1x8x8x48xbf16> to vector<64x48xbf16>
    %c7 = arith.constant 7 : index
    %c0_90 = arith.constant 0 : index
    %c0_91 = arith.constant 0 : index
    %67 = vector.load %arg5[%c7, %c0_90, %c0_91] : memref<9x48x16xbf16, #tpu.memory_space<vmem>>, vector<1x48x16xbf16>
    %68 = vector.shape_cast %67 : vector<1x48x16xbf16> to vector<48x16xbf16>
    %cst_92 = arith.constant dense<0.000000e+00> : vector<64x16xf32>
    %69 = tpu.matmul %66, %68, %cst_92 {dimension_numbers = #tpu.dot_dimension_numbers<[1], [0], [0], [1], [0, 0, 1, 1], [], []>} : vector<64x48xbf16>, vector<48x16xbf16>, vector<64x16xf32> -> vector<64x16xf32>
    %70 = arith.addf %64, %69 : vector<64x16xf32>
    %c0_93 = arith.constant 0 : index
    %c2_94 = arith.constant 2 : index
    %c2_95 = arith.constant 2 : index
    %c0_96 = arith.constant 0 : index
    %71 = vector.load %arg18[%c0_93, %c2_94, %c2_95, %c0_96] : memref<1x10x10x48xbf16, #tpu.memory_space<vmem>>, vector<1x8x8x48xbf16>
    %72 = vector.shape_cast %71 : vector<1x8x8x48xbf16> to vector<64x48xbf16>
    %c8 = arith.constant 8 : index
    %c0_97 = arith.constant 0 : index
    %c0_98 = arith.constant 0 : index
    %73 = vector.load %arg5[%c8, %c0_97, %c0_98] : memref<9x48x16xbf16, #tpu.memory_space<vmem>>, vector<1x48x16xbf16>
    %74 = vector.shape_cast %73 : vector<1x48x16xbf16> to vector<48x16xbf16>
    %cst_99 = arith.constant dense<0.000000e+00> : vector<64x16xf32>
    %75 = tpu.matmul %72, %74, %cst_99 {dimension_numbers = #tpu.dot_dimension_numbers<[1], [0], [0], [1], [0, 0, 1, 1], [], []>} : vector<64x48xbf16>, vector<48x16xbf16>, vector<64x16xf32> -> vector<64x16xf32>
    %76 = arith.addf %70, %75 : vector<64x16xf32>
    %c0_100 = arith.constant 0 : index
    %c0_101 = arith.constant 0 : index
    %77 = vector.load %arg6[%c0_100, %c0_101] : memref<1x16xf32, #tpu.memory_space<vmem>>, vector<1x16xf32>
    %78 = vector.broadcast %77 : vector<1x16xf32> to vector<64x16xf32>
    %79 = arith.mulf %76, %78 : vector<64x16xf32>
    %c0_102 = arith.constant 0 : index
    %c0_103 = arith.constant 0 : index
    %80 = vector.load %arg7[%c0_102, %c0_103] : memref<1x16xf32, #tpu.memory_space<vmem>>, vector<1x16xf32>
    %81 = vector.broadcast %80 : vector<1x16xf32> to vector<64x16xf32>
    %82 = arith.addf %79, %81 : vector<64x16xf32>
    %cst_104 = arith.constant 0.000000e+00 : f32
    %83 = vector.broadcast %cst_104 : f32 to vector<64x16xf32>
    %84 = arith.maximumf %82, %83 : vector<64x16xf32>
    %85 = vector.shape_cast %84 : vector<64x16xf32> to vector<1x64x16xf32>
    %cst_105 = arith.constant 0.000000e+00 : bf16
    %86 = vector.broadcast %cst_105 : bf16 to vector<1x1x18x24xbf16>
    %c0_106 = arith.constant 0 : index
    %c0_107 = arith.constant 0 : index
    %c0_108 = arith.constant 0 : index
    %c0_109 = arith.constant 0 : index
    %87 = vector.load %arg19[%c0_106, %c0_107, %c0_108, %c0_109] : memref<1x18x18x24xbf16, #tpu.memory_space<vmem>>, vector<1x1x18x24xbf16>
    tpu.vector_store %arg19[%c0_106, %c0_107, %c0_108, %c0_109], %86 {strides = array<i32>} : memref<1x18x18x24xbf16, #tpu.memory_space<vmem>>, vector<1x1x18x24xbf16>,
    %cst_110 = arith.constant 0.000000e+00 : bf16
    %88 = vector.broadcast %cst_110 : bf16 to vector<1x1x18x24xbf16>
    %c0_111 = arith.constant 0 : index
    %c17 = arith.constant 17 : index
    %c0_112 = arith.constant 0 : index
    %c0_113 = arith.constant 0 : index
    %89 = vector.load %arg19[%c0_111, %c17, %c0_112, %c0_113] : memref<1x18x18x24xbf16, #tpu.memory_space<vmem>>, vector<1x1x18x24xbf16>
    tpu.vector_store %arg19[%c0_111, %c17, %c0_112, %c0_113], %88 {strides = array<i32>} : memref<1x18x18x24xbf16, #tpu.memory_space<vmem>>, vector<1x1x18x24xbf16>,
    %cst_114 = arith.constant 0.000000e+00 : bf16
    %90 = vector.broadcast %cst_114 : bf16 to vector<1x18x1x24xbf16>
    %c0_115 = arith.constant 0 : index
    %c0_116 = arith.constant 0 : index
    %c0_117 = arith.constant 0 : index
    %c0_118 = arith.constant 0 : index
    %91 = vector.load %arg19[%c0_115, %c0_116, %c0_117, %c0_118] : memref<1x18x18x24xbf16, #tpu.memory_space<vmem>>, vector<1x18x1x24xbf16>
    tpu.vector_store %arg19[%c0_115, %c0_116, %c0_117, %c0_118], %90 {strides = array<i32>} : memref<1x18x18x24xbf16, #tpu.memory_space<vmem>>, vector<1x18x1x24xbf16>,
    %cst_119 = arith.constant 0.000000e+00 : bf16
    %92 = vector.broadcast %cst_119 : bf16 to vector<1x18x1x24xbf16>
    %c0_120 = arith.constant 0 : index
    %c0_121 = arith.constant 0 : index
    %c17_122 = arith.constant 17 : index
    %c0_123 = arith.constant 0 : index
    %93 = vector.load %arg19[%c0_120, %c0_121, %c17_122, %c0_123] : memref<1x18x18x24xbf16, #tpu.memory_space<vmem>>, vector<1x18x1x24xbf16>
    tpu.vector_store %arg19[%c0_120, %c0_121, %c17_122, %c0_123], %92 {strides = array<i32>} : memref<1x18x18x24xbf16, #tpu.memory_space<vmem>>, vector<1x18x1x24xbf16>,
    %c0_124 = arith.constant 0 : index
    %c0_125 = arith.constant 0 : index
    %c0_126 = arith.constant 0 : index
    %c0_127 = arith.constant 0 : index
    %94 = vector.load %arg1[%c0_124, %c0_125, %c0_126, %c0_127] : memref<1x16x16x8xf32, #tpu.memory_space<vmem>>, vector<1x16x16x8xf32>
    %95 = arith.truncf %94 : vector<1x16x16x8xf32> to vector<1x16x16x8xbf16>
    %c0_128 = arith.constant 0 : index
    %c1_129 = arith.constant 1 : index
    %c1_130 = arith.constant 1 : index
    %c0_131 = arith.constant 0 : index
    %96 = vector.load %arg19[%c0_128, %c1_129, %c1_130, %c0_131] : memref<1x18x18x24xbf16, #tpu.memory_space<vmem>>, vector<1x16x16x8xbf16>
    tpu.vector_store %arg19[%c0_128, %c1_129, %c1_130, %c0_131], %95 {strides = array<i32>} : memref<1x18x18x24xbf16, #tpu.memory_space<vmem>>, vector<1x16x16x8xbf16>,
    %97 = arith.truncf %85 : vector<1x64x16xf32> to vector<1x64x16xbf16>
    %c0_132 = arith.constant 0 : index
    %c0_133 = arith.constant 0 : index
    %98 = vector.load %arg8[%c0_132, %c0_133] : memref<256x64xbf16, #tpu.memory_space<vmem>>, vector<256x64xbf16>
    %99 = vector.shape_cast %97 : vector<1x64x16xbf16> to vector<64x16xbf16>
    %cst_134 = arith.constant dense<0.000000e+00> : vector<256x16xf32>
    %100 = tpu.matmul %98, %99, %cst_134 {dimension_numbers = #tpu.dot_dimension_numbers<[1], [0], [0], [1], [0, 0, 1, 1], [], []>} : vector<256x64xbf16>, vector<64x16xbf16>, vector<256x16xf32> -> vector<256x16xf32>
    %101 = vector.shape_cast %100 : vector<256x16xf32> to vector<16x16x16xf32>
    %102 = arith.truncf %101 : vector<16x16x16xf32> to vector<16x16x16xbf16>
    %c0_135 = arith.constant 0 : index
    %c1_136 = arith.constant 1 : index
    %c1_137 = arith.constant 1 : index
    %c8_138 = arith.constant 8 : index
    %103 = vector.load %arg19[%c0_135, %c1_136, %c1_137, %c8_138] : memref<1x18x18x24xbf16, #tpu.memory_space<vmem>>, vector<1x16x16x16xbf16>
    %104 = vector.shape_cast %103 : vector<1x16x16x16xbf16> to vector<16x16x16xbf16>
    %105 = vector.shape_cast %102 : vector<16x16x16xbf16> to vector<1x16x16x16xbf16>
    tpu.vector_store %arg19[%c0_135, %c1_136, %c1_137, %c8_138], %105 {strides = array<i32>} : memref<1x18x18x24xbf16, #tpu.memory_space<vmem>>, vector<1x16x16x16xbf16>,
    %cst_139 = arith.constant 0.000000e+00 : f32
    %106 = vector.broadcast %cst_139 : f32 to vector<256x8xf32>
    %c0_140 = arith.constant 0 : index
    %c0_141 = arith.constant 0 : index
    %c0_142 = arith.constant 0 : index
    %c0_143 = arith.constant 0 : index
    %107 = vector.load %arg19[%c0_140, %c0_141, %c0_142, %c0_143] : memref<1x18x18x24xbf16, #tpu.memory_space<vmem>>, vector<1x16x16x24xbf16>
    %108 = vector.shape_cast %107 : vector<1x16x16x24xbf16> to vector<256x24xbf16>
    %c0_144 = arith.constant 0 : index
    %c0_145 = arith.constant 0 : index
    %c0_146 = arith.constant 0 : index
    %109 = vector.load %arg9[%c0_144, %c0_145, %c0_146] : memref<9x24x8xbf16, #tpu.memory_space<vmem>>, vector<1x24x8xbf16>
    %110 = vector.shape_cast %109 : vector<1x24x8xbf16> to vector<24x8xbf16>
    %cst_147 = arith.constant dense<0.000000e+00> : vector<256x8xf32>
    %111 = tpu.matmul %108, %110, %cst_147 {dimension_numbers = #tpu.dot_dimension_numbers<[1], [0], [0], [1], [0, 0, 1, 1], [], []>} : vector<256x24xbf16>, vector<24x8xbf16>, vector<256x8xf32> -> vector<256x8xf32>
    %112 = arith.addf %106, %111 : vector<256x8xf32>
    %c0_148 = arith.constant 0 : index
    %c0_149 = arith.constant 0 : index
    %c1_150 = arith.constant 1 : index
    %c0_151 = arith.constant 0 : index
    %113 = vector.load %arg19[%c0_148, %c0_149, %c1_150, %c0_151] : memref<1x18x18x24xbf16, #tpu.memory_space<vmem>>, vector<1x16x16x24xbf16>
    %114 = vector.shape_cast %113 : vector<1x16x16x24xbf16> to vector<256x24xbf16>
    %c1_152 = arith.constant 1 : index
    %c0_153 = arith.constant 0 : index
    %c0_154 = arith.constant 0 : index
    %115 = vector.load %arg9[%c1_152, %c0_153, %c0_154] : memref<9x24x8xbf16, #tpu.memory_space<vmem>>, vector<1x24x8xbf16>
    %116 = vector.shape_cast %115 : vector<1x24x8xbf16> to vector<24x8xbf16>
    %cst_155 = arith.constant dense<0.000000e+00> : vector<256x8xf32>
    %117 = tpu.matmul %114, %116, %cst_155 {dimension_numbers = #tpu.dot_dimension_numbers<[1], [0], [0], [1], [0, 0, 1, 1], [], []>} : vector<256x24xbf16>, vector<24x8xbf16>, vector<256x8xf32> -> vector<256x8xf32>
    %118 = arith.addf %112, %117 : vector<256x8xf32>
    %c0_156 = arith.constant 0 : index
    %c0_157 = arith.constant 0 : index
    %c2_158 = arith.constant 2 : index
    %c0_159 = arith.constant 0 : index
    %119 = vector.load %arg19[%c0_156, %c0_157, %c2_158, %c0_159] : memref<1x18x18x24xbf16, #tpu.memory_space<vmem>>, vector<1x16x16x24xbf16>
    %120 = vector.shape_cast %119 : vector<1x16x16x24xbf16> to vector<256x24xbf16>
    %c2_160 = arith.constant 2 : index
    %c0_161 = arith.constant 0 : index
    %c0_162 = arith.constant 0 : index
    %121 = vector.load %arg9[%c2_160, %c0_161, %c0_162] : memref<9x24x8xbf16, #tpu.memory_space<vmem>>, vector<1x24x8xbf16>
    %122 = vector.shape_cast %121 : vector<1x24x8xbf16> to vector<24x8xbf16>
    %cst_163 = arith.constant dense<0.000000e+00> : vector<256x8xf32>
    %123 = tpu.matmul %120, %122, %cst_163 {dimension_numbers = #tpu.dot_dimension_numbers<[1], [0], [0], [1], [0, 0, 1, 1], [], []>} : vector<256x24xbf16>, vector<24x8xbf16>, vector<256x8xf32> -> vector<256x8xf32>
    %124 = arith.addf %118, %123 : vector<256x8xf32>
    %c0_164 = arith.constant 0 : index
    %c1_165 = arith.constant 1 : index
    %c0_166 = arith.constant 0 : index
    %c0_167 = arith.constant 0 : index
    %125 = vector.load %arg19[%c0_164, %c1_165, %c0_166, %c0_167] : memref<1x18x18x24xbf16, #tpu.memory_space<vmem>>, vector<1x16x16x24xbf16>
    %126 = vector.shape_cast %125 : vector<1x16x16x24xbf16> to vector<256x24xbf16>
    %c3_168 = arith.constant 3 : index
    %c0_169 = arith.constant 0 : index
    %c0_170 = arith.constant 0 : index
    %127 = vector.load %arg9[%c3_168, %c0_169, %c0_170] : memref<9x24x8xbf16, #tpu.memory_space<vmem>>, vector<1x24x8xbf16>
    %128 = vector.shape_cast %127 : vector<1x24x8xbf16> to vector<24x8xbf16>
    %cst_171 = arith.constant dense<0.000000e+00> : vector<256x8xf32>
    %129 = tpu.matmul %126, %128, %cst_171 {dimension_numbers = #tpu.dot_dimension_numbers<[1], [0], [0], [1], [0, 0, 1, 1], [], []>} : vector<256x24xbf16>, vector<24x8xbf16>, vector<256x8xf32> -> vector<256x8xf32>
    %130 = arith.addf %124, %129 : vector<256x8xf32>
    %c0_172 = arith.constant 0 : index
    %c1_173 = arith.constant 1 : index
    %c1_174 = arith.constant 1 : index
    %c0_175 = arith.constant 0 : index
    %131 = vector.load %arg19[%c0_172, %c1_173, %c1_174, %c0_175] : memref<1x18x18x24xbf16, #tpu.memory_space<vmem>>, vector<1x16x16x24xbf16>
    %132 = vector.shape_cast %131 : vector<1x16x16x24xbf16> to vector<256x24xbf16>
    %c4_176 = arith.constant 4 : index
    %c0_177 = arith.constant 0 : index
    %c0_178 = arith.constant 0 : index
    %133 = vector.load %arg9[%c4_176, %c0_177, %c0_178] : memref<9x24x8xbf16, #tpu.memory_space<vmem>>, vector<1x24x8xbf16>
    %134 = vector.shape_cast %133 : vector<1x24x8xbf16> to vector<24x8xbf16>
    %cst_179 = arith.constant dense<0.000000e+00> : vector<256x8xf32>
    %135 = tpu.matmul %132, %134, %cst_179 {dimension_numbers = #tpu.dot_dimension_numbers<[1], [0], [0], [1], [0, 0, 1, 1], [], []>} : vector<256x24xbf16>, vector<24x8xbf16>, vector<256x8xf32> -> vector<256x8xf32>
    %136 = arith.addf %130, %135 : vector<256x8xf32>
    %c0_180 = arith.constant 0 : index
    %c1_181 = arith.constant 1 : index
    %c2_182 = arith.constant 2 : index
    %c0_183 = arith.constant 0 : index
    %137 = vector.load %arg19[%c0_180, %c1_181, %c2_182, %c0_183] : memref<1x18x18x24xbf16, #tpu.memory_space<vmem>>, vector<1x16x16x24xbf16>
    %138 = vector.shape_cast %137 : vector<1x16x16x24xbf16> to vector<256x24xbf16>
    %c5_184 = arith.constant 5 : index
    %c0_185 = arith.constant 0 : index
    %c0_186 = arith.constant 0 : index
    %139 = vector.load %arg9[%c5_184, %c0_185, %c0_186] : memref<9x24x8xbf16, #tpu.memory_space<vmem>>, vector<1x24x8xbf16>
    %140 = vector.shape_cast %139 : vector<1x24x8xbf16> to vector<24x8xbf16>
    %cst_187 = arith.constant dense<0.000000e+00> : vector<256x8xf32>
    %141 = tpu.matmul %138, %140, %cst_187 {dimension_numbers = #tpu.dot_dimension_numbers<[1], [0], [0], [1], [0, 0, 1, 1], [], []>} : vector<256x24xbf16>, vector<24x8xbf16>, vector<256x8xf32> -> vector<256x8xf32>
    %142 = arith.addf %136, %141 : vector<256x8xf32>
    %c0_188 = arith.constant 0 : index
    %c2_189 = arith.constant 2 : index
    %c0_190 = arith.constant 0 : index
    %c0_191 = arith.constant 0 : index
    %143 = vector.load %arg19[%c0_188, %c2_189, %c0_190, %c0_191] : memref<1x18x18x24xbf16, #tpu.memory_space<vmem>>, vector<1x16x16x24xbf16>
    %144 = vector.shape_cast %143 : vector<1x16x16x24xbf16> to vector<256x24xbf16>
    %c6_192 = arith.constant 6 : index
    %c0_193 = arith.constant 0 : index
    %c0_194 = arith.constant 0 : index
    %145 = vector.load %arg9[%c6_192, %c0_193, %c0_194] : memref<9x24x8xbf16, #tpu.memory_space<vmem>>, vector<1x24x8xbf16>
    %146 = vector.shape_cast %145 : vector<1x24x8xbf16> to vector<24x8xbf16>
    %cst_195 = arith.constant dense<0.000000e+00> : vector<256x8xf32>
    %147 = tpu.matmul %144, %146, %cst_195 {dimension_numbers = #tpu.dot_dimension_numbers<[1], [0], [0], [1], [0, 0, 1, 1], [], []>} : vector<256x24xbf16>, vector<24x8xbf16>, vector<256x8xf32> -> vector<256x8xf32>
    %148 = arith.addf %142, %147 : vector<256x8xf32>
    %c0_196 = arith.constant 0 : index
    %c2_197 = arith.constant 2 : index
    %c1_198 = arith.constant 1 : index
    %c0_199 = arith.constant 0 : index
    %149 = vector.load %arg19[%c0_196, %c2_197, %c1_198, %c0_199] : memref<1x18x18x24xbf16, #tpu.memory_space<vmem>>, vector<1x16x16x24xbf16>
    %150 = vector.shape_cast %149 : vector<1x16x16x24xbf16> to vector<256x24xbf16>
    %c7_200 = arith.constant 7 : index
    %c0_201 = arith.constant 0 : index
    %c0_202 = arith.constant 0 : index
    %151 = vector.load %arg9[%c7_200, %c0_201, %c0_202] : memref<9x24x8xbf16, #tpu.memory_space<vmem>>, vector<1x24x8xbf16>
    %152 = vector.shape_cast %151 : vector<1x24x8xbf16> to vector<24x8xbf16>
    %cst_203 = arith.constant dense<0.000000e+00> : vector<256x8xf32>
    %153 = tpu.matmul %150, %152, %cst_203 {dimension_numbers = #tpu.dot_dimension_numbers<[1], [0], [0], [1], [0, 0, 1, 1], [], []>} : vector<256x24xbf16>, vector<24x8xbf16>, vector<256x8xf32> -> vector<256x8xf32>
    %154 = arith.addf %148, %153 : vector<256x8xf32>
    %c0_204 = arith.constant 0 : index
    %c2_205 = arith.constant 2 : index
    %c2_206 = arith.constant 2 : index
    %c0_207 = arith.constant 0 : index
    %155 = vector.load %arg19[%c0_204, %c2_205, %c2_206, %c0_207] : memref<1x18x18x24xbf16, #tpu.memory_space<vmem>>, vector<1x16x16x24xbf16>
    %156 = vector.shape_cast %155 : vector<1x16x16x24xbf16> to vector<256x24xbf16>
    %c8_208 = arith.constant 8 : index
    %c0_209 = arith.constant 0 : index
    %c0_210 = arith.constant 0 : index
    %157 = vector.load %arg9[%c8_208, %c0_209, %c0_210] : memref<9x24x8xbf16, #tpu.memory_space<vmem>>, vector<1x24x8xbf16>
    %158 = vector.shape_cast %157 : vector<1x24x8xbf16> to vector<24x8xbf16>
    %cst_211 = arith.constant dense<0.000000e+00> : vector<256x8xf32>
    %159 = tpu.matmul %156, %158, %cst_211 {dimension_numbers = #tpu.dot_dimension_numbers<[1], [0], [0], [1], [0, 0, 1, 1], [], []>} : vector<256x24xbf16>, vector<24x8xbf16>, vector<256x8xf32> -> vector<256x8xf32>
    %160 = arith.addf %154, %159 : vector<256x8xf32>
    %c0_212 = arith.constant 0 : index
    %c0_213 = arith.constant 0 : index
    %161 = vector.load %arg10[%c0_212, %c0_213] : memref<1x8xf32, #tpu.memory_space<vmem>>, vector<1x8xf32>
    %162 = vector.broadcast %161 : vector<1x8xf32> to vector<256x8xf32>
    %163 = arith.mulf %160, %162 : vector<256x8xf32>
    %c0_214 = arith.constant 0 : index
    %c0_215 = arith.constant 0 : index
    %164 = vector.load %arg11[%c0_214, %c0_215] : memref<1x8xf32, #tpu.memory_space<vmem>>, vector<1x8xf32>
    %165 = vector.broadcast %164 : vector<1x8xf32> to vector<256x8xf32>
    %166 = arith.addf %163, %165 : vector<256x8xf32>
    %cst_216 = arith.constant 0.000000e+00 : f32
    %167 = vector.broadcast %cst_216 : f32 to vector<256x8xf32>
    %168 = arith.maximumf %166, %167 : vector<256x8xf32>
    %169 = vector.shape_cast %168 : vector<256x8xf32> to vector<1x256x8xf32>
    %170 = vector.shape_cast %169 : vector<1x256x8xf32> to vector<256x8xf32>
    %171 = vector.shape_cast %170 : vector<256x8xf32> to vector<16x16x8xf32>
    %c0_217 = arith.constant 0 : index
    %c0_218 = arith.constant 0 : index
    %172 = vector.load %arg15[%c0_217, %c0_218] : memref<1x8xf32, #tpu.memory_space<vmem>>, vector<1x8xf32>
    %173 = vector.shape_cast %172 : vector<1x8xf32> to vector<1x1x8xf32>
    %174 = vector.broadcast %173 : vector<1x1x8xf32> to vector<16x16x8xf32>
    %175 = arith.mulf %171, %174 : vector<16x16x8xf32>
    %cst_219 = arith.constant dense<0.000000e+00> : vector<16x16xf32>
    %176 = vector.multi_reduction <add>, %175, %cst_219 [2] : vector<16x16x8xf32> to vector<16x16xf32>
    %177 = arith.truncf %176 : vector<16x16xf32> to vector<16x16xbf16>
    %c0_220 = arith.constant 0 : index
    %c0_221 = arith.constant 0 : index
    %178 = vector.load %arg13[%c0_220, %c0_221] : memref<16x128xbf16, #tpu.memory_space<vmem>>, vector<16x128xbf16>
    %cst_222 = arith.constant dense<0.000000e+00> : vector<16x128xf32>
    %179 = tpu.matmul %177, %178, %cst_222 {dimension_numbers = #tpu.dot_dimension_numbers<[1], [0], [0], [1], [0, 0, 1, 1], [], []>} : vector<16x16xbf16>, vector<16x128xbf16>, vector<16x128xf32> -> vector<16x128xf32>
    %c0_223 = arith.constant 0 : index
    %c0_224 = arith.constant 0 : index
    %180 = vector.load %arg14[%c0_223, %c0_224] : memref<16x128xbf16, #tpu.memory_space<vmem>>, vector<16x128xbf16>
    %cst_225 = arith.constant dense<0.000000e+00> : vector<16x128xf32>
    %181 = tpu.matmul %177, %180, %cst_225 {dimension_numbers = #tpu.dot_dimension_numbers<[1], [0], [0], [1], [0, 0, 1, 1], [], []>} : vector<16x16xbf16>, vector<16x128xbf16>, vector<16x128xf32> -> vector<16x128xf32>
    %182 = tpu.concatenate %179, %181 in 0 : vector<16x128xf32>, vector<16x128xf32> -> vector<32x128xf32>
    %c0_226 = arith.constant 0 : index
    %c0_227 = arith.constant 0 : index
    %183 = vector.load %arg12[%c0_226, %c0_227] : memref<32x32xbf16, #tpu.memory_space<vmem>>, vector<32x32xbf16>
    %184 = arith.truncf %182 : vector<32x128xf32> to vector<32x128xbf16>
    %cst_228 = arith.constant dense<0.000000e+00> : vector<32x128xf32>
    %185 = tpu.matmul %183, %184, %cst_228 {dimension_numbers = #tpu.dot_dimension_numbers<[1], [0], [0], [1], [0, 0, 1, 1], [], []>} : vector<32x32xbf16>, vector<32x128xbf16>, vector<32x128xf32> -> vector<32x128xf32>
    %c0_229 = arith.constant 0 : index
    %186 = memref.load %arg16[%c0_229] : memref<1xf32, #tpu.memory_space<smem>>
    %187 = vector.broadcast %186 : f32 to vector<32x128xf32>
    %188 = arith.addf %185, %187 : vector<32x128xf32>
    %c0_230 = arith.constant 0 : index
    %c0_231 = arith.constant 0 : index
    %c0_232 = arith.constant 0 : index
    %189 = vector.load %arg17[%c0_230, %c0_231, %c0_232] : memref<1x32x128xf32, #tpu.memory_space<vmem>>, vector<1x32x128xf32>
    %190 = vector.shape_cast %189 : vector<1x32x128xf32> to vector<32x128xf32>
    %191 = vector.shape_cast %188 : vector<32x128xf32> to vector<1x32x128xf32>
    tpu.vector_store %arg17[%c0_230, %c0_231, %c0_232], %191 {strides = array<i32>} : memref<1x32x128xf32, #tpu.memory_space<vmem>>, vector<1x32x128xf32>,
    return
  }
  func.func @transform_0(%arg0: i32) -> (i32, i32, i32, i32) {
    %c0_i32 = arith.constant 0 : i32
    %c0_i32_0 = arith.constant 0 : i32
    %c0_i32_1 = arith.constant 0 : i32
    %c0_i32_2 = arith.constant 0 : i32
    return %arg0, %c0_i32, %c0_i32_0, %c0_i32_1 : i32, i32, i32, i32
  }
  func.func @transform_1(%arg0: i32) -> (i32, i32, i32, i32) {
    %c0_i32 = arith.constant 0 : i32
    %c0_i32_0 = arith.constant 0 : i32
    %c0_i32_1 = arith.constant 0 : i32
    %c0_i32_2 = arith.constant 0 : i32
    return %arg0, %c0_i32, %c0_i32_0, %c0_i32_1 : i32, i32, i32, i32
  }
  func.func @transform_2(%arg0: i32) -> (i32, i32, i32, i32) {
    %c0_i32 = arith.constant 0 : i32
    %c0_i32_0 = arith.constant 0 : i32
    %c0_i32_1 = arith.constant 0 : i32
    %c0_i32_2 = arith.constant 0 : i32
    return %arg0, %c0_i32, %c0_i32_0, %c0_i32_1 : i32, i32, i32, i32
  }
  func.func @transform_3(%arg0: i32) -> (i32, i32) {
    %c0_i32 = arith.constant 0 : i32
    %c0_i32_0 = arith.constant 0 : i32
    %c0_i32_1 = arith.constant 0 : i32
    return %c0_i32, %c0_i32_0 : i32, i32
  }
  func.func @transform_4(%arg0: i32) -> (i32, i32, i32) {
    %c0_i32 = arith.constant 0 : i32
    %c0_i32_0 = arith.constant 0 : i32
    %c0_i32_1 = arith.constant 0 : i32
    %c0_i32_2 = arith.constant 0 : i32
    return %c0_i32, %c0_i32_0, %c0_i32_1 : i32, i32, i32
  }
  func.func @transform_5(%arg0: i32) -> (i32, i32) {
    %c0_i32 = arith.constant 0 : i32
    %c0_i32_0 = arith.constant 0 : i32
    %c0_i32_1 = arith.constant 0 : i32
    return %c0_i32, %c0_i32_0 : i32, i32
  }
  func.func @transform_6(%arg0: i32) -> (i32, i32) {
    %c0_i32 = arith.constant 0 : i32
    %c0_i32_0 = arith.constant 0 : i32
    %c0_i32_1 = arith.constant 0 : i32
    return %c0_i32, %c0_i32_0 : i32, i32
  }
  func.func @transform_7(%arg0: i32) -> (i32, i32) {
    %c0_i32 = arith.constant 0 : i32
    %c0_i32_0 = arith.constant 0 : i32
    %c0_i32_1 = arith.constant 0 : i32
    return %c0_i32, %c0_i32_0 : i32, i32
  }
  func.func @transform_8(%arg0: i32) -> (i32, i32, i32) {
    %c0_i32 = arith.constant 0 : i32
    %c0_i32_0 = arith.constant 0 : i32
    %c0_i32_1 = arith.constant 0 : i32
    %c0_i32_2 = arith.constant 0 : i32
    return %c0_i32, %c0_i32_0, %c0_i32_1 : i32, i32, i32
  }
  func.func @transform_9(%arg0: i32) -> (i32, i32) {
    %c0_i32 = arith.constant 0 : i32
    %c0_i32_0 = arith.constant 0 : i32
    %c0_i32_1 = arith.constant 0 : i32
    return %c0_i32, %c0_i32_0 : i32, i32
  }
  func.func @transform_10(%arg0: i32) -> (i32, i32) {
    %c0_i32 = arith.constant 0 : i32
    %c0_i32_0 = arith.constant 0 : i32
    %c0_i32_1 = arith.constant 0 : i32
    return %c0_i32, %c0_i32_0 : i32, i32
  }
  func.func @transform_11(%arg0: i32) -> (i32, i32) {
    %c0_i32 = arith.constant 0 : i32
    %c0_i32_0 = arith.constant 0 : i32
    %c0_i32_1 = arith.constant 0 : i32
    return %c0_i32, %c0_i32_0 : i32, i32
  }
  func.func @transform_12(%arg0: i32) -> (i32, i32) {
    %c0_i32 = arith.constant 0 : i32
    %c0_i32_0 = arith.constant 0 : i32
    %c0_i32_1 = arith.constant 0 : i32
    return %c0_i32, %c0_i32_0 : i32, i32
  }
  func.func @transform_13(%arg0: i32) -> (i32, i32) {
    %c0_i32 = arith.constant 0 : i32
    %c0_i32_0 = arith.constant 0 : i32
    %c0_i32_1 = arith.constant 0 : i32
    return %c0_i32, %c0_i32_0 : i32, i32
  }
  func.func @transform_14(%arg0: i32) -> (i32, i32) {
    %c0_i32 = arith.constant 0 : i32
    %c0_i32_0 = arith.constant 0 : i32
    %c0_i32_1 = arith.constant 0 : i32
    return %c0_i32, %c0_i32_0 : i32, i32
  }
  func.func @transform_15(%arg0: i32) -> i32 {
    %c0_i32 = arith.constant 0 : i32
    %c0_i32_0 = arith.constant 0 : i32
    return %c0_i32 : i32
  }
  func.func @transform_16(%arg0: i32) -> (i32, i32, i32) {
    %c0_i32 = arith.constant 0 : i32
    %c0_i32_0 = arith.constant 0 : i32
    %c0_i32_1 = arith.constant 0 : i32
    return %arg0, %c0_i32, %c0_i32_0 : i32, i32, i32
  }
}

</mosaic_0001>

<llo_original>
// kernel: tpu_custom_call.1
$region0: #{tpu_custom_call.1}
  #allocation0 [shape = 'u32[]', space=smem, size = 0x4, offset = 0x4, fixed_abs, tag = 'smem constant byte address 0x4 - core index']
  #allocation1 [shape = 'u32[72,128]{1,0:T(1,128)}', space=vmem, size = 0x9000, scoped, tag = 'internal scratch']
  #allocation2 [shape = 'bf16[1,10,10,48]{3,2,1,0:T(8,128)(2,1)}', space=vmem, size = 0xa000, scoped, tag = 'scratch operand']
  #allocation3 [shape = 'bf16[1,18,18,24]{3,2,1,0:T(8,128)(2,1)}', space=vmem, size = 0x1b000, scoped, tag = 'scratch operand']
  #allocation4 [shape = 'f32[1]{0:T(128)S(6)}', space=smem, size = 0x200, scoped, tag = 'scoped memory for tpu_custom_call.1']
  %s0 = inlined_call_operand.vmem [shape: f32[2,16,16,8], index: 0, kind: input, shape index: {}]
  %s1 = inlined_call_operand.vmem [shape: f32[2,8,8,16], index: 1, kind: input, shape index: {}]
  %s2 = inlined_call_operand.vmem [shape: f32[2,4,4,32], index: 2, kind: input, shape index: {}]
  %s3 = inlined_call_operand.vmem [shape: bf16[64,16], index: 3, kind: input, shape index: {}]
  %s4 = inlined_call_operand.vmem [shape: bf16[9,48,16], index: 4, kind: input, shape index: {}]
  %s5 = inlined_call_operand.vmem [shape: f32[1,16], index: 5, kind: input, shape index: {}]
  %s6 = inlined_call_operand.vmem [shape: f32[1,16], index: 6, kind: input, shape index: {}]
  %s7 = inlined_call_operand.vmem [shape: bf16[256,64], index: 7, kind: input, shape index: {}]
  %s8 = inlined_call_operand.vmem [shape: bf16[9,24,8], index: 8, kind: input, shape index: {}]
  %s9 = inlined_call_operand.vmem [shape: f32[1,8], index: 9, kind: input, shape index: {}]
  %s10 = inlined_call_operand.vmem [shape: f32[1,8], index: 10, kind: input, shape index: {}]
  %s11 = inlined_call_operand.vmem [shape: bf16[32,32], index: 11, kind: input, shape index: {}]
  %s12 = inlined_call_operand.vmem [shape: bf16[16,128], index: 12, kind: input, shape index: {}]
  %s13 = inlined_call_operand.vmem [shape: bf16[16,128], index: 13, kind: input, shape index: {}]
  %s14 = inlined_call_operand.vmem [shape: f32[1,8], index: 14, kind: input, shape index: {}]
  %s15 = inlined_call_operand.<no memory space> [shape: f32[1], index: 15, kind: input, shape index: {}]
  %s16 = inlined_call_operand.hbm [shape: f32[2,32,128], index: 16, kind: output, shape index: {}]
  %s17 = sld [smem:[#allocation0]]
  $region97: #{tpu_custom_call.1} parent=0
    _
  %s19 = ssub.s32 1, %s17
  %s20 = scalar_select 0, %s19, %s17
  %21 = sst [smem:[#allocation4]] %s15
  $region1: #{tpu_custom_call.1} parent=0
    #allocation5 [shape = 'u8[32768]{0}', space=vmem, size = 0x8000, scoped, tag = 'output window, operand 0']
    #allocation6 [shape = 's32[2]{0}', space=sflag, size = 0x8, scoped, tag = 'scoped memory for tpu_custom_call.1']
    %22 = vsyncpa [#allocation6], 0
    %s23 = scalar_lea.sflag [#allocation6], 1
    %24 = vsyncpa %s23, 0
    loop: start=0, step=1, limit=4
    $region2: #{tpu_custom_call.1} parent=1 // loop_pre_header
      _
    $region3: #{tpu_custom_call.1} parent=1 // loop_header
      %s26 = sphi 0, %s30
      %p27 = scmp.ge.s32.totalorder %s26, 4
      %s36 = sphi 0, %s38
      %s39 = sphi 0, %s36
      %s40 = sphi 0, %s39
      %s56 = sphi 0, %s40
      %s62 = sphi 0, %s64
      %s65 = sphi 0, %s62
      %s66 = sphi 0, %s65
      %s82 = sphi 0, %s66
      %s88 = sphi 0, %s90
      %s91 = sphi 0, %s88
      %s92 = sphi 0, %s91
      %s108 = sphi 0, %s92
      %s112 = sphi 0, %s112
      %s114 = sphi 0, %s112
      %s115 = sphi 0, %s114
      %s129 = sphi 0, %s115
      %s133 = sphi 0, %s133
      %s135 = sphi 0, %s133
      %s136 = sphi 0, %s135
      %s150 = sphi 0, %s136
      %s154 = sphi 0, %s154
      %s156 = sphi 0, %s154
      %s157 = sphi 0, %s156
      %s171 = sphi 0, %s157
      %s175 = sphi 0, %s175
      %s177 = sphi 0, %s175
      %s178 = sphi 0, %s177
      %s192 = sphi 0, %s178
      %s196 = sphi 0, %s196
      %s198 = sphi 0, %s196
      %s199 = sphi 0, %s198
      %s213 = sphi 0, %s199
      %s217 = sphi 0, %s217
      %s219 = sphi 0, %s217
      %s220 = sphi 0, %s219
      %s234 = sphi 0, %s220
      %s238 = sphi 0, %s238
      %s240 = sphi 0, %s238
      %s241 = sphi 0, %s240
      %s255 = sphi 0, %s241
      %s259 = sphi 0, %s259
      %s261 = sphi 0, %s259
      %s262 = sphi 0, %s261
      %s276 = sphi 0, %s262
      %s280 = sphi 0, %s280
      %s282 = sphi 0, %s280
      %s283 = sphi 0, %s282
      %s297 = sphi 0, %s283
      %s301 = sphi 0, %s301
      %s303 = sphi 0, %s301
      %s304 = sphi 0, %s303
      %s318 = sphi 0, %s304
      %s322 = sphi 0, %s322
      %s324 = sphi 0, %s322
      %s325 = sphi 0, %s324
      %s339 = sphi 0, %s325
      %s343 = sphi 0, %s343
      %s345 = sphi 0, %s343
      %s346 = sphi 0, %s345
      %s360 = sphi 0, %s346
      %s364 = sphi 0, %s364
      %s366 = sphi 0, %s364
      %s367 = sphi 0, %s366
      %s381 = sphi 0, %s367
      %s387 = sphi 0, %s389
      %s390 = sphi 0, %s387
      %s391 = sphi 0, %s390
      %s407 = sphi 0, %s391
    $region4: #{tpu_custom_call.1} parent=1 // loop_header_branch
      %29 = sbr.rel (%p27) target = $region8
    $region5: #{tpu_custom_call.1} parent=1 // loop_body
      %s31 = ssub.s32 %s26, 1
      %s32 = ssub.s32 %s26, 2
      %s33 = sadd.s32 %s26, 1
      %s34 = ssub.s32 %s26, %s33
      %p35 = scmp.eq.s32.totalorder %s34, 0
      %s37 = sadd.s32 %s36, 1
      %s38 = scalar_select %p35, %s36, %s37
      %p41 = pneg %p35
      %p42 = scmp.eq.s32.totalorder %s26, 1
      %p43 = por %p41, %p42
      %p44 = scmp.ne.s32.totalorder %s36, %s39
      %p45 = scmp.eq.s32.totalorder %s26, 0
      %p46 = por %p44, %p45
      %p47 = scmp.ne.s32.totalorder %s36, %s39
      %p48 = scmp.eq.s32.totalorder %s31, 1
      %p49 = por %p47, %p48
      %p50 = scmp.ne.s32.totalorder %s39, %s40
      %p51 = scmp.eq.s32.totalorder %s31, 0
      %p52 = por %p50, %p51
      %p53 = scmp.ne.s32.totalorder %s39, %s40
      %p54 = scmp.eq.s32.totalorder %s32, 1
      %p55 = por %p53, %p54
      %p57 = scmp.ne.s32.totalorder %s40, %s56
      %p58 = scmp.eq.s32.totalorder %s32, 0
      %p59 = por %p57, %p58
      %s60 = ssub.s32 %s26, %s33
      %p61 = scmp.eq.s32.totalorder %s60, 0
      %s63 = sadd.s32 %s62, 1
      %s64 = scalar_select %p61, %s62, %s63
      %p67 = pneg %p61
      %p68 = scmp.eq.s32.totalorder %s26, 1
      %p69 = por %p67, %p68
      %p70 = scmp.ne.s32.totalorder %s62, %s65
      %p71 = scmp.eq.s32.totalorder %s26, 0
      %p72 = por %p70, %p71
      %p73 = scmp.ne.s32.totalorder %s62, %s65
      %p74 = scmp.eq.s32.totalorder %s31, 1
      %p75 = por %p73, %p74
      %p76 = scmp.ne.s32.totalorder %s65, %s66
      %p77 = scmp.eq.s32.totalorder %s31, 0
      %p78 = por %p76, %p77
      %p79 = scmp.ne.s32.totalorder %s65, %s66
      %p80 = scmp.eq.s32.totalorder %s32, 1
      %p81 = por %p79, %p80
      %p83 = scmp.ne.s32.totalorder %s66, %s82
      %p84 = scmp.eq.s32.totalorder %s32, 0
      %p85 = por %p83, %p84
      %s86 = ssub.s32 %s26, %s33
      %p87 = scmp.eq.s32.totalorder %s86, 0
      %s89 = sadd.s32 %s88, 1
      %s90 = scalar_select %p87, %s88, %s89
      %p93 = pneg %p87
      %p94 = scmp.eq.s32.totalorder %s26, 1
      %p95 = por %p93, %p94
      %p96 = scmp.ne.s32.totalorder %s88, %s91
      %p97 = scmp.eq.s32.totalorder %s26, 0
      %p98 = por %p96, %p97
      %p99 = scmp.ne.s32.totalorder %s88, %s91
      %p100 = scmp.eq.s32.totalorder %s31, 1
      %p101 = por %p99, %p100
      %p102 = scmp.ne.s32.totalorder %s91, %s92
      %p103 = scmp.eq.s32.totalorder %s31, 0
      %p104 = por %p102, %p103
      %p105 = scmp.ne.s32.totalorder %s91, %s92
      %p106 = scmp.eq.s32.totalorder %s32, 1
      %p107 = por %p105, %p106
      %p109 = scmp.ne.s32.totalorder %s92, %s108
      %p110 = scmp.eq.s32.totalorder %s32, 0
      %p111 = por %p109, %p110
      %s113 = sadd.s32 %s112, 1
      %p116 = scmp.eq.s32.totalorder %s26, 1
      %p117 = scmp.ne.s32.totalorder %s112, %s114
      %p118 = scmp.eq.s32.totalorder %s26, 0
      %p119 = por %p117, %p118
      %p120 = scmp.ne.s32.totalorder %s112, %s114
      %p121 = scmp.eq.s32.totalorder %s31, 1
      %p122 = por %p120, %p121
      %p123 = scmp.ne.s32.totalorder %s114, %s115
      %p124 = scmp.eq.s32.totalorder %s31, 0
      %p125 = por %p123, %p124
      %p126 = scmp.ne.s32.totalorder %s114, %s115
      %p127 = scmp.eq.s32.totalorder %s32, 1
      %p128 = por %p126, %p127
      %p130 = scmp.ne.s32.totalorder %s115, %s129
      %p131 = scmp.eq.s32.totalorder %s32, 0
      %p132 = por %p130, %p131
      %s134 = sadd.s32 %s133, 1
      %p137 = scmp.eq.s32.totalorder %s26, 1
      %p138 = scmp.ne.s32.totalorder %s133, %s135
      %p139 = scmp.eq.s32.totalorder %s26, 0
      %p140 = por %p138, %p139
      %p141 = scmp.ne.s32.totalorder %s133, %s135
      %p142 = scmp.eq.s32.totalorder %s31, 1
      %p143 = por %p141, %p142
      %p144 = scmp.ne.s32.totalorder %s135, %s136
      %p145 = scmp.eq.s32.totalorder %s31, 0
      %p146 = por %p144, %p145
      %p147 = scmp.ne.s32.totalorder %s135, %s136
      %p148 = scmp.eq.s32.totalorder %s32, 1
      %p149 = por %p147, %p148
      %p151 = scmp.ne.s32.totalorder %s136, %s150
      %p152 = scmp.eq.s32.totalorder %s32, 0
      %p153 = por %p151, %p152
      %s155 = sadd.s32 %s154, 1
      %p158 = scmp.eq.s32.totalorder %s26, 1
      %p159 = scmp.ne.s32.totalorder %s154, %s156
      %p160 = scmp.eq.s32.totalorder %s26, 0
      %p161 = por %p159, %p160
      %p162 = scmp.ne.s32.totalorder %s154, %s156
      %p163 = scmp.eq.s32.totalorder %s31, 1
      %p164 = por %p162, %p163
      %p165 = scmp.ne.s32.totalorder %s156, %s157
      %p166 = scmp.eq.s32.totalorder %s31, 0
      %p167 = por %p165, %p166
      %p168 = scmp.ne.s32.totalorder %s156, %s157
      %p169 = scmp.eq.s32.totalorder %s32, 1
      %p170 = por %p168, %p169
      %p172 = scmp.ne.s32.totalorder %s157, %s171
      %p173 = scmp.eq.s32.totalorder %s32, 0
      %p174 = por %p172, %p173
      %s176 = sadd.s32 %s175, 1
      %p179 = scmp.eq.s32.totalorder %s26, 1
      %p180 = scmp.ne.s32.totalorder %s175, %s177
      %p181 = scmp.eq.s32.totalorder %s26, 0
      %p182 = por %p180, %p181
      %p183 = scmp.ne.s32.totalorder %s175, %s177
      %p184 = scmp.eq.s32.totalorder %s31, 1
      %p185 = por %p183, %p184
      %p186 = scmp.ne.s32.totalorder %s177, %s178
      %p187 = scmp.eq.s32.totalorder %s31, 0
      %p188 = por %p186, %p187
      %p189 = scmp.ne.s32.totalorder %s177, %s178
      %p190 = scmp.eq.s32.totalorder %s32, 1
      %p191 = por %p189, %p190
      %p193 = scmp.ne.s32.totalorder %s178, %s192
      %p194 = scmp.eq.s32.totalorder %s32, 0
      %p195 = por %p193, %p194
      %s197 = sadd.s32 %s196, 1
      %p200 = scmp.eq.s32.totalorder %s26, 1
      %p201 = scmp.ne.s32.totalorder %s196, %s198
      %p202 = scmp.eq.s32.totalorder %s26, 0
      %p203 = por %p201, %p202
      %p204 = scmp.ne.s32.totalorder %s196, %s198
      %p205 = scmp.eq.s32.totalorder %s31, 1
      %p206 = por %p204, %p205
      %p207 = scmp.ne.s32.totalorder %s198, %s199
      %p208 = scmp.eq.s32.totalorder %s31, 0
      %p209 = por %p207, %p208
      %p210 = scmp.ne.s32.totalorder %s198, %s199
      %p211 = scmp.eq.s32.totalorder %s32, 1
      %p212 = por %p210, %p211
      %p214 = scmp.ne.s32.totalorder %s199, %s213
      %p215 = scmp.eq.s32.totalorder %s32, 0
      %p216 = por %p214, %p215
      %s218 = sadd.s32 %s217, 1
      %p221 = scmp.eq.s32.totalorder %s26, 1
      %p222 = scmp.ne.s32.totalorder %s217, %s219
      %p223 = scmp.eq.s32.totalorder %s26, 0
      %p224 = por %p222, %p223
      %p225 = scmp.ne.s32.totalorder %s217, %s219
      %p226 = scmp.eq.s32.totalorder %s31, 1
      %p227 = por %p225, %p226
      %p228 = scmp.ne.s32.totalorder %s219, %s220
      %p229 = scmp.eq.s32.totalorder %s31, 0
      %p230 = por %p228, %p229
      %p231 = scmp.ne.s32.totalorder %s219, %s220
      %p232 = scmp.eq.s32.totalorder %s32, 1
      %p233 = por %p231, %p232
      %p235 = scmp.ne.s32.totalorder %s220, %s234
      %p236 = scmp.eq.s32.totalorder %s32, 0
      %p237 = por %p235, %p236
      %s239 = sadd.s32 %s238, 1
      %p242 = scmp.eq.s32.totalorder %s26, 1
      %p243 = scmp.ne.s32.totalorder %s238, %s240
      %p244 = scmp.eq.s32.totalorder %s26, 0
      %p245 = por %p243, %p244
      %p246 = scmp.ne.s32.totalorder %s238, %s240
      %p247 = scmp.eq.s32.totalorder %s31, 1
      %p248 = por %p246, %p247
      %p249 = scmp.ne.s32.totalorder %s240, %s241
      %p250 = scmp.eq.s32.totalorder %s31, 0
      %p251 = por %p249, %p250
      %p252 = scmp.ne.s32.totalorder %s240, %s241
      %p253 = scmp.eq.s32.totalorder %s32, 1
      %p254 = por %p252, %p253
      %p256 = scmp.ne.s32.totalorder %s241, %s255
      %p257 = scmp.eq.s32.totalorder %s32, 0
      %p258 = por %p256, %p257
      %s260 = sadd.s32 %s259, 1
      %p263 = scmp.eq.s32.totalorder %s26, 1
      %p264 = scmp.ne.s32.totalorder %s259, %s261
      %p265 = scmp.eq.s32.totalorder %s26, 0
      %p266 = por %p264, %p265
      %p267 = scmp.ne.s32.totalorder %s259, %s261
      %p268 = scmp.eq.s32.totalorder %s31, 1
      %p269 = por %p267, %p268
      %p270 = scmp.ne.s32.totalorder %s261, %s262
      %p271 = scmp.eq.s32.totalorder %s31, 0
      %p272 = por %p270, %p271
      %p273 = scmp.ne.s32.totalorder %s261, %s262
      %p274 = scmp.eq.s32.totalorder %s32, 1
      %p275 = por %p273, %p274
      %p277 = scmp.ne.s32.totalorder %s262, %s276
      %p278 = scmp.eq.s32.totalorder %s32, 0
      %p279 = por %p277, %p278
      %s281 = sadd.s32 %s280, 1
      %p284 = scmp.eq.s32.totalorder %s26, 1
      %p285 = scmp.ne.s32.totalorder %s280, %s282
      %p286 = scmp.eq.s32.totalorder %s26, 0
      %p287 = por %p285, %p286
      %p288 = scmp.ne.s32.totalorder %s280, %s282
      %p289 = scmp.eq.s32.totalorder %s31, 1
      %p290 = por %p288, %p289
      %p291 = scmp.ne.s32.totalorder %s282, %s283
      %p292 = scmp.eq.s32.totalorder %s31, 0
      %p293 = por %p291, %p292
      %p294 = scmp.ne.s32.totalorder %s282, %s283
      %p295 = scmp.eq.s32.totalorder %s32, 1
      %p296 = por %p294, %p295
      %p298 = scmp.ne.s32.totalorder %s283, %s297
      %p299 = scmp.eq.s32.totalorder %s32, 0
      %p300 = por %p298, %p299
      %s302 = sadd.s32 %s301, 1
      %p305 = scmp.eq.s32.totalorder %s26, 1
      %p306 = scmp.ne.s32.totalorder %s301, %s303
      %p307 = scmp.eq.s32.totalorder %s26, 0
      %p308 = por %p306, %p307
      %p309 = scmp.ne.s32.totalorder %s301, %s303
      %p310 = scmp.eq.s32.totalorder %s31, 1
      %p311 = por %p309, %p310
      %p312 = scmp.ne.s32.totalorder %s303, %s304
      %p313 = scmp.eq.s32.totalorder %s31, 0
      %p314 = por %p312, %p313
      %p315 = scmp.ne.s32.totalorder %s303, %s304
      %p316 = scmp.eq.s32.totalorder %s32, 1
      %p317 = por %p315, %p316
      %p319 = scmp.ne.s32.totalorder %s304, %s318
      %p320 = scmp.eq.s32.totalorder %s32, 0
      %p321 = por %p319, %p320
      %s323 = sadd.s32 %s322, 1
      %p326 = scmp.eq.s32.totalorder %s26, 1
      %p327 = scmp.ne.s32.totalorder %s322, %s324
      %p328 = scmp.eq.s32.totalorder %s26, 0
      %p329 = por %p327, %p328
      %p330 = scmp.ne.s32.totalorder %s322, %s324
      %p331 = scmp.eq.s32.totalorder %s31, 1
      %p332 = por %p330, %p331
      %p333 = scmp.ne.s32.totalorder %s324, %s325
      %p334 = scmp.eq.s32.totalorder %s31, 0
      %p335 = por %p333, %p334
      %p336 = scmp.ne.s32.totalorder %s324, %s325
      %p337 = scmp.eq.s32.totalorder %s32, 1
      %p338 = por %p336, %p337
      %p340 = scmp.ne.s32.totalorder %s325, %s339
      %p341 = scmp.eq.s32.totalorder %s32, 0
      %p342 = por %p340, %p341
      %s344 = sadd.s32 %s343, 1
      %p347 = scmp.eq.s32.totalorder %s26, 1
      %p348 = scmp.ne.s32.totalorder %s343, %s345
      %p349 = scmp.eq.s32.totalorder %s26, 0
      %p350 = por %p348, %p349
      %p351 = scmp.ne.s32.totalorder %s343, %s345
      %p352 = scmp.eq.s32.totalorder %s31, 1
      %p353 = por %p351, %p352
      %p354 = scmp.ne.s32.totalorder %s345, %s346
      %p355 = scmp.eq.s32.totalorder %s31, 0
      %p356 = por %p354, %p355
      %p357 = scmp.ne.s32.totalorder %s345, %s346
      %p358 = scmp.eq.s32.totalorder %s32, 1
      %p359 = por %p357, %p358
      %p361 = scmp.ne.s32.totalorder %s346, %s360
      %p362 = scmp.eq.s32.totalorder %s32, 0
      %p363 = por %p361, %p362
      %s365 = sadd.s32 %s364, 1
      %p368 = scmp.eq.s32.totalorder %s26, 1
      %p369 = scmp.ne.s32.totalorder %s364, %s366
      %p370 = scmp.eq.s32.totalorder %s26, 0
      %p371 = por %p369, %p370
      %p372 = scmp.ne.s32.totalorder %s364, %s366
      %p373 = scmp.eq.s32.totalorder %s31, 1
      %p374 = por %p372, %p373
      %p375 = scmp.ne.s32.totalorder %s366, %s367
      %p376 = scmp.eq.s32.totalorder %s31, 0
      %p377 = por %p375, %p376
      %p378 = scmp.ne.s32.totalorder %s366, %s367
      %p379 = scmp.eq.s32.totalorder %s32, 1
      %p380 = por %p378, %p379
      %p382 = scmp.ne.s32.totalorder %s367, %s381
      %p383 = scmp.eq.s32.totalorder %s32, 0
      %p384 = por %p382, %p383
      %s385 = ssub.s32 %s26, %s33
      %p386 = scmp.eq.s32.totalorder %s385, 0
      %s388 = sadd.s32 %s387, 1
      %s389 = scalar_select %p386, %s387, %s388
      %p392 = pneg %p386
      %p393 = scmp.eq.s32.totalorder %s26, 1
      %p394 = por %p392, %p393
      %p395 = scmp.ne.s32.totalorder %s387, %s390
      %p396 = scmp.eq.s32.totalorder %s26, 0
      %p397 = por %p395, %p396
      %p398 = scmp.ne.s32.totalorder %s387, %s390
      %p399 = scmp.eq.s32.totalorder %s31, 1
      %p400 = por %p398, %p399
      %p401 = scmp.ne.s32.totalorder %s390, %s391
      %p402 = scmp.eq.s32.totalorder %s31, 0
      %p403 = por %p401, %p402
      %p404 = scmp.ne.s32.totalorder %s390, %s391
      %p405 = scmp.eq.s32.totalorder %s32, 1
      %p406 = por %p404, %p405
      %p408 = scmp.ne.s32.totalorder %s391, %s407
      %p409 = scmp.eq.s32.totalorder %s32, 0
      %p410 = por %p408, %p409
      %p411 = scmp.le.s32.totalorder 1, %s26
      %p412 = scmp.lt.s32.totalorder %s26, 3
      %p413 = pnand %p411, %p412
      %p414 = pneg %p413
      // Predicated region
      $region9: #{tpu_custom_call.1} parent=5 // pred_check
        _
      $region10: #{tpu_custom_call.1} parent=5 // pred_check_branch
        %416 = sbr.rel (%p413) target = $region12
      $region11: #{tpu_custom_call.1} parent=5 // pred_region
        %s417 = ssub.s32 %s26, 1
        // Predicated region
        $region13: #{tpu_custom_call.1} parent=11 // pred_check
          %p418 = pneg %p125
        $region14: #{tpu_custom_call.1} parent=11 // pred_check_branch
          %420 = sbr.rel (%p418) target = $region16
        $region15: #{tpu_custom_call.1} parent=11 // pred_region
          _
        $region16: #{tpu_custom_call.1} parent=11 // pred_fallthru
          _
        // Predicated region
        $region17: #{tpu_custom_call.1} parent=11 // pred_check
          %p421 = pneg %p146
        $region18: #{tpu_custom_call.1} parent=11 // pred_check_branch
          %423 = sbr.rel (%p421) target = $region20
        $region19: #{tpu_custom_call.1} parent=11 // pred_region
          _
        $region20: #{tpu_custom_call.1} parent=11 // pred_fallthru
          _
        // Predicated region
        $region21: #{tpu_custom_call.1} parent=11 // pred_check
          %p424 = pneg %p167
        $region22: #{tpu_custom_call.1} parent=11 // pred_check_branch
          %426 = sbr.rel (%p424) target = $region24
        $region23: #{tpu_custom_call.1} parent=11 // pred_region
          _
        $region24: #{tpu_custom_call.1} parent=11 // pred_fallthru
          _
        // Predicated region
        $region25: #{tpu_custom_call.1} parent=11 // pred_check
          %p427 = pneg %p188
        $region26: #{tpu_custom_call.1} parent=11 // pred_check_branch
          %429 = sbr.rel (%p427) target = $region28
        $region27: #{tpu_custom_call.1} parent=11 // pred_region
          _
        $region28: #{tpu_custom_call.1} parent=11 // pred_fallthru
          _
        // Predicated region
        $region29: #{tpu_custom_call.1} parent=11 // pred_check
          %p430 = pneg %p209
        $region30: #{tpu_custom_call.1} parent=11 // pred_check_branch
          %432 = sbr.rel (%p430) target = $region32
        $region31: #{tpu_custom_call.1} parent=11 // pred_region
          _
        $region32: #{tpu_custom_call.1} parent=11 // pred_fallthru
          _
        // Predicated region
        $region33: #{tpu_custom_call.1} parent=11 // pred_check
          %p433 = pneg %p230
        $region34: #{tpu_custom_call.1} parent=11 // pred_check_branch
          %435 = sbr.rel (%p433) target = $region36
        $region35: #{tpu_custom_call.1} parent=11 // pred_region
          _
        $region36: #{tpu_custom_call.1} parent=11 // pred_fallthru
          _
        // Predicated region
        $region37: #{tpu_custom_call.1} parent=11 // pred_check
          %p436 = pneg %p251
        $region38: #{tpu_custom_call.1} parent=11 // pred_check_branch
          %438 = sbr.rel (%p436) target = $region40
        $region39: #{tpu_custom_call.1} parent=11 // pred_region
          _
        $region40: #{tpu_custom_call.1} parent=11 // pred_fallthru
          _
        // Predicated region
        $region41: #{tpu_custom_call.1} parent=11 // pred_check
          %p439 = pneg %p272
        $region42: #{tpu_custom_call.1} parent=11 // pred_check_branch
          %441 = sbr.rel (%p439) target = $region44
        $region43: #{tpu_custom_call.1} parent=11 // pred_region
          _
        $region44: #{tpu_custom_call.1} parent=11 // pred_fallthru
          _
        // Predicated region
        $region45: #{tpu_custom_call.1} parent=11 // pred_check
          %p442 = pneg %p293
        $region46: #{tpu_custom_call.1} parent=11 // pred_check_branch
          %444 = sbr.rel (%p442) target = $region48
        $region47: #{tpu_custom_call.1} parent=11 // pred_region
          _
        $region48: #{tpu_custom_call.1} parent=11 // pred_fallthru
          _
        // Predicated region
        $region49: #{tpu_custom_call.1} parent=11 // pred_check
          %p445 = pneg %p314
        $region50: #{tpu_custom_call.1} parent=11 // pred_check_branch
          %447 = sbr.rel (%p445) target = $region52
        $region51: #{tpu_custom_call.1} parent=11 // pred_region
          _
        $region52: #{tpu_custom_call.1} parent=11 // pred_fallthru
          _
        // Predicated region
        $region53: #{tpu_custom_call.1} parent=11 // pred_check
          %p448 = pneg %p335
        $region54: #{tpu_custom_call.1} parent=11 // pred_check_branch
          %450 = sbr.rel (%p448) target = $region56
        $region55: #{tpu_custom_call.1} parent=11 // pred_region
          _
        $region56: #{tpu_custom_call.1} parent=11 // pred_fallthru
          _
        // Predicated region
        $region57: #{tpu_custom_call.1} parent=11 // pred_check
          %p451 = pneg %p356
        $region58: #{tpu_custom_call.1} parent=11 // pred_check_branch
          %453 = sbr.rel (%p451) target = $region60
        $region59: #{tpu_custom_call.1} parent=11 // pred_region
          _
        $region60: #{tpu_custom_call.1} parent=11 // pred_fallthru
          _
        // Predicated region
        $region61: #{tpu_custom_call.1} parent=11 // pred_check
          %p454 = pneg %p377
        $region62: #{tpu_custom_call.1} parent=11 // pred_check_branch
          %456 = sbr.rel (%p454) target = $region64
        $region63: #{tpu_custom_call.1} parent=11 // pred_region
          _
        $region64: #{tpu_custom_call.1} parent=11 // pred_fallthru
          _
      $region12: #{tpu_custom_call.1} parent=5 // pred_fallthru
        _
      %p457 = scmp.lt.s32.totalorder %s26, 2
      // Predicated region
      $region65: #{tpu_custom_call.1} parent=5 // pred_check
        %p458 = pneg %p457
      $region66: #{tpu_custom_call.1} parent=5 // pred_check_branch
        %460 = sbr.rel (%p458) target = $region68
      $region67: #{tpu_custom_call.1} parent=5 // pred_region
        // Predicated region
        $region69: #{tpu_custom_call.1} parent=67 // pred_check
          %p461 = pneg %p46
        $region70: #{tpu_custom_call.1} parent=67 // pred_check_branch
          %463 = sbr.rel (%p461) target = $region72
        $region71: #{tpu_custom_call.1} parent=67 // pred_region
          %p464 = scmp.lt.s32.totalorder %s26, 1
          %s465 = scalar_select %p464, %s26, 1
          %s466 = smul.addr %s465, 32
          %s467 = smul.addr %s466, 8
          %s468 = scalar_lea.vmem %s0, %s467
        $region72: #{tpu_custom_call.1} parent=67 // pred_fallthru
          _
        // Predicated region
        $region73: #{tpu_custom_call.1} parent=67 // pred_check
          %p469 = pneg %p72
        $region74: #{tpu_custom_call.1} parent=67 // pred_check_branch
          %471 = sbr.rel (%p469) target = $region76
        $region75: #{tpu_custom_call.1} parent=67 // pred_region
          %p472 = scmp.lt.s32.totalorder %s26, 1
          %s473 = scalar_select %p472, %s26, 1
          %s474 = smul.addr %s473, 8
          %s475 = smul.addr %s474, 8
          %s476 = scalar_lea.vmem %s1, %s475
        $region76: #{tpu_custom_call.1} parent=67 // pred_fallthru
          _
        // Predicated region
        $region77: #{tpu_custom_call.1} parent=67 // pred_check
          %p477 = pneg %p98
        $region78: #{tpu_custom_call.1} parent=67 // pred_check_branch
          %479 = sbr.rel (%p477) target = $region80
        $region79: #{tpu_custom_call.1} parent=67 // pred_region
          %p480 = scmp.lt.s32.totalorder %s26, 1
          %s481 = scalar_select %p480, %s26, 1
          %s482 = smul.addr %s481, 4
          %s483 = smul.addr %s482, 4
          %s484 = scalar_lea.vmem %s2, %s483
        $region80: #{tpu_custom_call.1} parent=67 // pred_fallthru
          _
      $region68: #{tpu_custom_call.1} parent=5 // pred_fallthru
        _
      %p485 = scmp.le.s32.totalorder 1, %s26
      %p486 = scmp.lt.s32.totalorder %s26, 3
      %p487 = pnand %p485, %p486
      %p488 = pneg %p487
      // Predicated region
      $region81: #{tpu_custom_call.1} parent=5 // pred_check
        _
      $region82: #{tpu_custom_call.1} parent=5 // pred_check_branch
        %490 = sbr.rel (%p487) target = $region84
      $region83: #{tpu_custom_call.1} parent=5 // pred_region
        %s491 = ssub.s32 %s26, 1
        %p492 = scmp.lt.s32.totalorder %s31, 1
        %s493 = scalar_select %p492, %s31, 1
        %s494 = smul.addr %s493, 32
        %s495 = smul.addr %s494, 8
        %s496 = scalar_lea.vmem %s0, %s495
        %p497 = pneg %p52
        %p498 = pneg %p49
        %p499 = scmp.lt.s32.totalorder %s31, 1
        %s500 = scalar_select %p499, %s31, 1
        %s501 = smul.addr %s500, 8
        %s502 = smul.addr %s501, 8
        %s503 = scalar_lea.vmem %s1, %s502
        %p504 = pneg %p78
        %p505 = pneg %p75
        %p506 = scmp.lt.s32.totalorder %s31, 1
        %s507 = scalar_select %p506, %s31, 1
        %s508 = smul.addr %s507, 4
        %s509 = smul.addr %s508, 4
        %s510 = scalar_lea.vmem %s2, %s509
        %p511 = pneg %p104
        %p512 = pneg %p101
        %p513 = pneg %p125
        %p514 = pneg %p122
        %p515 = pneg %p146
        %p516 = pneg %p143
        %p517 = pneg %p167
        %p518 = pneg %p164
        %p519 = pneg %p188
        %p520 = pneg %p185
        %p521 = pneg %p209
        %p522 = pneg %p206
        %p523 = pneg %p230
        %p524 = pneg %p227
        %p525 = pneg %p251
        %p526 = pneg %p248
        %p527 = pneg %p272
        %p528 = pneg %p269
        %p529 = pneg %p293
        %p530 = pneg %p290
        %p531 = pneg %p314
        %p532 = pneg %p311
        %p533 = pneg %p335
        %p534 = pneg %p332
        %p535 = pneg %p356
        %p536 = pneg %p353
        %p537 = pneg %p377
        %p538 = pneg %p374
        %p539 = pneg %p403
        %p540 = pneg %p400
        %s541 = sand.u32 %s390, 1
        %s542 = scalar_lea.sflag [#allocation6], %s541
        %s543 = sand.u32 %s390, 1
        %s544 = smul.addr %s543, 32
        %s545 = scalar_lea.vmem [#allocation5], %s544
        %p546 = scmp.lt.s32.totalorder %s31, 1
        %s547 = scalar_select %p546, %s31, 1
        %s548 = smul.addr %s547, 32
        %s549 = smul.addr %s548, 8
        %s550 = scalar_lea.vmem %s0, %s549
        %p551 = scmp.lt.s32.totalorder %s31, 1
        %s552 = scalar_select %p551, %s31, 1
        %s553 = smul.addr %s552, 8
        %s554 = smul.addr %s553, 8
        %s555 = scalar_lea.vmem %s1, %s554
        %p556 = scmp.lt.s32.totalorder %s31, 1
        %s557 = scalar_select %p556, %s31, 1
        %s558 = smul.addr %s557, 4
        %s559 = smul.addr %s558, 4
        %s560 = scalar_lea.vmem %s2, %s559
        %v562 = vld [vmem:[%s560] sm:$0xf]
        %v563 = vld [vmem:[%s560 + $0x4] sm:$0xf]
        %v564 = vld [vmem:[%s560 + $0x8] sm:$0xf]
        %v565 = vld [vmem:[%s560 + $0xc] sm:$0xf]
        %vm566 = vcmask 388096
        %567 = vst.msk [vmem:[#allocation2] sm:$0xf] %vm566, 0
        %vm568 = vcmask 385024
        %569 = vst.msk [vmem:[#allocation2 + $0x4] sm:$0x1] %vm568, 0
        %s570 = scalar_lea.vmem [#allocation2], 72
        %571 = vst.msk [vmem:[%s570] sm:$0xf] %vm566, 0
        %572 = vst.msk [vmem:[%s570 + $0x4] sm:$0x1] %vm568, 0
        %vm573 = vcmask 385024
        %vm574 = vsmask.f32 256
        %vm575 = vmand %vm573, %vm574
        %v576 = vld [vmem:[#allocation2] sm:$0x1]
        %v577 = vsel %vm575, 0, %v576
        %578 = vst [vmem:[#allocation2] sm:$0x1] %v577
        %v579 = vld [vmem:[#allocation2 + $0x8] sm:$0x1]
        %v580 = vsel %vm575, 0, %v579
        %581 = vst [vmem:[#allocation2 + $0x8] sm:$0x1] %v580
        %v582 = vld [vmem:[#allocation2 + $0x10] sm:$0x1]
        %v583 = vsel %vm575, 0, %v582
        %584 = vst [vmem:[#allocation2 + $0x10] sm:$0x1] %v583
        %v585 = vld [vmem:[#allocation2 + $0x18] sm:$0x1]
        %v586 = vsel %vm575, 0, %v585
        %587 = vst [vmem:[#allocation2 + $0x18] sm:$0x1] %v586
        %v588 = vld [vmem:[#allocation2 + $0x20] sm:$0x1]
        %v589 = vsel %vm575, 0, %v588
        %590 = vst [vmem:[#allocation2 + $0x20] sm:$0x1] %v589
        %v591 = vld [vmem:[#allocation2 + $0x28] sm:$0x1]
        %v592 = vsel %vm575, 0, %v591
        %593 = vst [vmem:[#allocation2 + $0x28] sm:$0x1] %v592
        %v594 = vld [vmem:[#allocation2 + $0x30] sm:$0x1]
        %v595 = vsel %vm575, 0, %v594
        %596 = vst [vmem:[#allocation2 + $0x30] sm:$0x1] %v595
        %v597 = vld [vmem:[#allocation2 + $0x38] sm:$0x1]
        %v598 = vsel %vm575, 0, %v597
        %599 = vst [vmem:[#allocation2 + $0x38] sm:$0x1] %v598
        %v600 = vld [vmem:[#allocation2 + $0x40] sm:$0x1]
        %v601 = vsel %vm575, 0, %v600
        %602 = vst [vmem:[#allocation2 + $0x40] sm:$0x1] %v601
        %v603 = vld [vmem:[#allocation2 + $0x48] sm:$0x1]
        %v604 = vsel %vm575, 0, %v603
        %605 = vst [vmem:[#allocation2 + $0x48] sm:$0x1] %v604
        %vm606 = vsmask.f32 7938
        %vm607 = vmand %vm573, %vm606
        %v608 = vld [vmem:[#allocation2 + $0x4] sm:$0x1]
        %v609 = vsel %vm607, 0, %v608
        %610 = vst [vmem:[#allocation2 + $0x4] sm:$0x1] %v609
        %v611 = vld [vmem:[#allocation2 + $0xc] sm:$0x1]
        %v612 = vsel %vm607, 0, %v611
        %613 = vst [vmem:[#allocation2 + $0xc] sm:$0x1] %v612
        %v614 = vld [vmem:[#allocation2 + $0x14] sm:$0x1]
        %v615 = vsel %vm607, 0, %v614
        %616 = vst [vmem:[#allocation2 + $0x14] sm:$0x1] %v615
        %v617 = vld [vmem:[#allocation2 + $0x1c] sm:$0x1]
        %v618 = vsel %vm607, 0, %v617
        %619 = vst [vmem:[#allocation2 + $0x1c] sm:$0x1] %v618
        %v620 = vld [vmem:[#allocation2 + $0x24] sm:$0x1]
        %v621 = vsel %vm607, 0, %v620
        %622 = vst [vmem:[#allocation2 + $0x24] sm:$0x1] %v621
        %v623 = vld [vmem:[#allocation2 + $0x2c] sm:$0x1]
        %v624 = vsel %vm607, 0, %v623
        %625 = vst [vmem:[#allocation2 + $0x2c] sm:$0x1] %v624
        %v626 = vld [vmem:[#allocation2 + $0x34] sm:$0x1]
        %v627 = vsel %vm607, 0, %v626
        %628 = vst [vmem:[#allocation2 + $0x34] sm:$0x1] %v627
        %v629 = vld [vmem:[#allocation2 + $0x3c] sm:$0x1]
        %v630 = vsel %vm607, 0, %v629
        %631 = vst [vmem:[#allocation2 + $0x3c] sm:$0x1] %v630
        %v632 = vld [vmem:[#allocation2 + $0x44] sm:$0x1]
        %v633 = vsel %vm607, 0, %v632
        %634 = vst [vmem:[#allocation2 + $0x44] sm:$0x1] %v633
        %v635 = vld [vmem:[#allocation2 + $0x4c] sm:$0x1]
        %v636 = vsel %vm607, 0, %v635
        %637 = vst [vmem:[#allocation2 + $0x4c] sm:$0x1] %v636
        %v638 = vld [vmem:[%s555] sm:$0xff]
        %v639 = vld [vmem:[%s555 + $0x8] sm:$0xff]
        %v640 = vld [vmem:[%s555 + $0x10] sm:$0xff]
        %v641 = vld [vmem:[%s555 + $0x18] sm:$0xff]
        %v642 = vld [vmem:[%s555 + $0x20] sm:$0xff]
        %v643 = vld [vmem:[%s555 + $0x28] sm:$0xff]
        %v644 = vld [vmem:[%s555 + $0x30] sm:$0xff]
        %v645 = vld [vmem:[%s555 + $0x38] sm:$0xff]
        %v646 = vpack.c.bf16 %v638, %v638
        %v647 = vpack.c.bf16 %v639, %v639
        %v648 = vpack.c.bf16 %v640, %v640
        %v649 = vpack.c.bf16 %v641, %v641
        %v650 = vpack.c.bf16 %v642, %v642
        %v651 = vpack.c.bf16 %v643, %v643
        %v652 = vpack.c.bf16 %v644, %v644
        %v653 = vpack.c.bf16 %v645, %v645
        %v655 = vshrl.u32 %v646, 16
        %v657 = vrot.slane %v655, 7
        %v658 = vshll.u32 %v646, 16
        %v660 = vor.u32 %v657, %v658
        %v661 = vrot.slane %v657, 4
        %v663 = vshrl.u32 %v647, 16
        %v665 = vrot.slane %v663, 7
        %v666 = vshll.u32 %v647, 16
        %v668 = vor.u32 %v665, %v666
        %v669 = vrot.slane %v665, 4
        %v671 = vshrl.u32 %v648, 16
        %v673 = vrot.slane %v671, 7
        %v674 = vshll.u32 %v648, 16
        %v676 = vor.u32 %v673, %v674
        %v677 = vrot.slane %v673, 4
        %v679 = vshrl.u32 %v649, 16
        %v681 = vrot.slane %v679, 7
        %v682 = vshll.u32 %v649, 16
        %v684 = vor.u32 %v681, %v682
        %v685 = vrot.slane %v681, 4
        %v687 = vshrl.u32 %v650, 16
        %v689 = vrot.slane %v687, 7
        %v690 = vshll.u32 %v650, 16
        %v692 = vor.u32 %v689, %v690
        %v693 = vrot.slane %v689, 4
        %v695 = vshrl.u32 %v651, 16
        %v697 = vrot.slane %v695, 7
        %v698 = vshll.u32 %v651, 16
        %v700 = vor.u32 %v697, %v698
        %v701 = vrot.slane %v697, 4
        %v703 = vshrl.u32 %v652, 16
        %v705 = vrot.slane %v703, 7
        %v706 = vshll.u32 %v652, 16
        %v708 = vor.u32 %v705, %v706
        %v709 = vrot.slane %v705, 4
        %v711 = vshrl.u32 %v653, 16
        %v713 = vrot.slane %v711, 7
        %v714 = vshll.u32 %v653, 16
        %v716 = vor.u32 %v713, %v714
        %v717 = vrot.slane %v713, 4
        %s734 = scalar_lea.vmem [#allocation2], 8
        %vm735 = vcmask 125952
        %vm736 = vmand %vm735, %vm606
        %v737 = vld [vmem:[%s734] sm:$0xf]
        %v738 = vsel %vm736, %v660, %v737
        %739 = vst [vmem:[%s734] sm:$0xf] %v738
        %vm740 = vcmask 122880
        %vm741 = vmand %vm740, %vm574
        %v742 = vld [vmem:[%s734 + $0x4] sm:$0x1]
        %v743 = vsel %vm741, %v661, %v742
        %744 = vst [vmem:[%s734 + $0x4] sm:$0x1] %v743
        %v745 = vld [vmem:[%s734 + $0x8] sm:$0xf]
        %v746 = vsel %vm736, %v668, %v745
        %747 = vst [vmem:[%s734 + $0x8] sm:$0xf] %v746
        %v748 = vld [vmem:[%s734 + $0xc] sm:$0x1]
        %v749 = vsel %vm741, %v669, %v748
        %750 = vst [vmem:[%s734 + $0xc] sm:$0x1] %v749
        %v751 = vld [vmem:[%s734 + $0x10] sm:$0xf]
        %v752 = vsel %vm736, %v676, %v751
        %753 = vst [vmem:[%s734 + $0x10] sm:$0xf] %v752
        %v754 = vld [vmem:[%s734 + $0x14] sm:$0x1]
        %v755 = vsel %vm741, %v677, %v754
        %756 = vst [vmem:[%s734 + $0x14] sm:$0x1] %v755
        %v757 = vld [vmem:[%s734 + $0x18] sm:$0xf]
        %v758 = vsel %vm736, %v684, %v757
        %759 = vst [vmem:[%s734 + $0x18] sm:$0xf] %v758
        %v760 = vld [vmem:[%s734 + $0x1c] sm:$0x1]
        %v761 = vsel %vm741, %v685, %v760
        %762 = vst [vmem:[%s734 + $0x1c] sm:$0x1] %v761
        %v763 = vld [vmem:[%s734 + $0x20] sm:$0xf]
        %v764 = vsel %vm736, %v692, %v763
        %765 = vst [vmem:[%s734 + $0x20] sm:$0xf] %v764
        %v766 = vld [vmem:[%s734 + $0x24] sm:$0x1]
        %v767 = vsel %vm741, %v693, %v766
        %768 = vst [vmem:[%s734 + $0x24] sm:$0x1] %v767
        %v769 = vld [vmem:[%s734 + $0x28] sm:$0xf]
        %v770 = vsel %vm736, %v700, %v769
        %771 = vst [vmem:[%s734 + $0x28] sm:$0xf] %v770
        %v772 = vld [vmem:[%s734 + $0x2c] sm:$0x1]
        %v773 = vsel %vm741, %v701, %v772
        %774 = vst [vmem:[%s734 + $0x2c] sm:$0x1] %v773
        %v775 = vld [vmem:[%s734 + $0x30] sm:$0xf]
        %v776 = vsel %vm736, %v708, %v775
        %777 = vst [vmem:[%s734 + $0x30] sm:$0xf] %v776
        %v778 = vld [vmem:[%s734 + $0x34] sm:$0x1]
        %v779 = vsel %vm741, %v709, %v778
        %780 = vst [vmem:[%s734 + $0x34] sm:$0x1] %v779
        %v781 = vld [vmem:[%s734 + $0x38] sm:$0xf]
        %v782 = vsel %vm736, %v716, %v781
        %783 = vst [vmem:[%s734 + $0x38] sm:$0xf] %v782
        %v784 = vld [vmem:[%s734 + $0x3c] sm:$0x1]
        %v785 = vsel %vm741, %v717, %v784
        %786 = vst [vmem:[%s734 + $0x3c] sm:$0x1] %v785
        %791 = vst [vmem:[#allocation1] ss:$2 sm:$0xff] %v562
        %s792 = scalar_lea.vmem [#allocation1], 1
        %793 = vst [vmem:[%s792] ss:$2 sm:$0xff] %v563
        %s794 = scalar_lea.vmem [#allocation1], 16
        %795 = vst [vmem:[%s794] ss:$2 sm:$0xff] %v564
        %s796 = scalar_lea.vmem [#allocation1], 17
        %797 = vst [vmem:[%s796] ss:$2 sm:$0xff] %v565
        %v798 = vld.sshfl [vmem:[#allocation1] sm:$0xff pattern:$0x75316420]
        %v799 = vld.sshfl [vmem:[#allocation1 + $0x10] sm:$0xff pattern:$0x75316420]
        %v802 = vpack.c.bf16 %v798, %v798
        %v803 = vpack.c.bf16 %v799, %v799
        %v804 = vld [vmem:[%s3] sm:$0xf]
        %v805 = vld [vmem:[%s3 + $0x4] sm:$0xf]
        %v806 = vld [vmem:[%s3 + $0x8] sm:$0xf]
        %v807 = vld [vmem:[%s3 + $0xc] sm:$0xf]
        %v808 = vld [vmem:[%s3 + $0x10] sm:$0xf]
        %v809 = vld [vmem:[%s3 + $0x14] sm:$0xf]
        %v810 = vld [vmem:[%s3 + $0x18] sm:$0xf]
        %v811 = vld [vmem:[%s3 + $0x1c] sm:$0xf]
        %v820 = vunpack.c.l.b16 %v804
        %v821 = vunpack.c.l.b16 %v805
        %v822 = vunpack.c.l.b16 %v806
        %v823 = vunpack.c.l.b16 %v807
        %v824 = vunpack.c.l.b16 %v808
        %v825 = vunpack.c.l.b16 %v809
        %v826 = vunpack.c.l.b16 %v810
        %v827 = vunpack.c.l.b16 %v811
        %v828 = vpack.c.b16 %v821, %v820
        %v829 = vpack.c.b16 %v823, %v822
        %v830 = vpack.c.b16 %v825, %v824
        %v831 = vpack.c.b16 %v827, %v826
        %v834 = vunpack.c.l.b16 %v802
        %v835 = vunpack.c.l.b16 %v803
        %v836 = vpack.c.b16 %v835, %v834
        %vm838 = vcmask 130048
        %v840 = vsel %vm838, %v828, 0
        %v843 = vsel %vm838, %v829, 0
        %v846 = vsel %vm838, %v830, 0
        %v849 = vsel %vm838, %v831, 0
        %851 = vmatpush.bf16.msra.mxu0 0
        %852 = vmatpush.bf16.msra.mxu0 0
        %853 = vmatpush.bf16.msra.mxu0 0
        %854 = vmatpush.bf16.msra.mxu0 0
        %855 = vmatpush.bf16.msra.mxu0 0
        %856 = vmatpush.bf16.msra.mxu0 0
        %857 = vmatpush.bf16.msra.mxu0 0
        %858 = vmatpush.bf16.msra.mxu0 %v836
        %859 = vmatmul.bf16.gmra.mxu0 %v840
        %v860 = vpop.f32.mrf.mxu0
        %v861 = vadd.f32 0.0, %v860
        %v862 = vpop.f32.mrf.mxu0
        %v863 = vadd.f32 0.0, %v862
        %864 = vmatmul.bf16.gmra.mxu0 %v843
        %v865 = vpop.f32.mrf.mxu0
        %v866 = vadd.f32 0.0, %v865
        %v867 = vpop.f32.mrf.mxu0
        %v868 = vadd.f32 0.0, %v867
        %869 = vmatmul.bf16.gmra.mxu0 %v846
        %v870 = vpop.f32.mrf.mxu0
        %v871 = vadd.f32 0.0, %v870
        %v872 = vpop.f32.mrf.mxu0
        %v873 = vadd.f32 0.0, %v872
        %874 = vmatmul.bf16.gmra.mxu0 %v849
        %v875 = vpop.f32.mrf.mxu0
        %v876 = vadd.f32 0.0, %v875
        %v877 = vpop.f32.mrf.mxu0
        %v878 = vadd.f32 0.0, %v877
        %879 = vdwg.mxu0
        %v880 = vpack.c.bf16 %v861, %v861
        %v881 = vpack.c.bf16 %v863, %v863
        %v882 = vpack.c.bf16 %v866, %v866
        %v883 = vpack.c.bf16 %v868, %v868
        %v884 = vpack.c.bf16 %v871, %v871
        %v885 = vpack.c.bf16 %v873, %v873
        %v886 = vpack.c.bf16 %v876, %v876
        %v887 = vpack.c.bf16 %v878, %v878
        %v889 = vshrl.u32 %v880, 16
        %v891 = vrot.slane %v889, 7
        %v892 = vshll.u32 %v880, 16
        %v894 = vor.u32 %v891, %v892
        %v895 = vrot.slane %v891, 4
        %v897 = vshrl.u32 %v881, 16
        %v899 = vrot.slane %v897, 7
        %v900 = vshll.u32 %v881, 16
        %v902 = vor.u32 %v899, %v900
        %v903 = vrot.slane %v899, 4
        %v905 = vshrl.u32 %v882, 16
        %v907 = vrot.slane %v905, 7
        %v908 = vshll.u32 %v882, 16
        %v910 = vor.u32 %v907, %v908
        %v911 = vrot.slane %v907, 4
        %v913 = vshrl.u32 %v883, 16
        %v915 = vrot.slane %v913, 7
        %v916 = vshll.u32 %v883, 16
        %v918 = vor.u32 %v915, %v916
        %v919 = vrot.slane %v915, 4
        %v921 = vshrl.u32 %v884, 16
        %v923 = vrot.slane %v921, 7
        %v924 = vshll.u32 %v884, 16
        %v926 = vor.u32 %v923, %v924
        %v927 = vrot.slane %v923, 4
        %v929 = vshrl.u32 %v885, 16
        %v931 = vrot.slane %v929, 7
        %v932 = vshll.u32 %v885, 16
        %v934 = vor.u32 %v931, %v932
        %v935 = vrot.slane %v931, 4
        %v937 = vshrl.u32 %v886, 16
        %v939 = vrot.slane %v937, 7
        %v940 = vshll.u32 %v886, 16
        %v942 = vor.u32 %v939, %v940
        %v943 = vrot.slane %v939, 4
        %v945 = vshrl.u32 %v887, 16
        %v947 = vrot.slane %v945, 7
        %v948 = vshll.u32 %v887, 16
        %v950 = vor.u32 %v947, %v948
        %v951 = vrot.slane %v947, 4
        %952 = vrot.lane.b32.xlu0 %v894, 16
        %v953 = vpop.permute.xlu0 %952
        %954 = vrot.lane.b32.xlu0 %v895, 16
        %v955 = vpop.permute.xlu0 %954
        %956 = vrot.lane.b32.xlu0 %v902, 16
        %v957 = vpop.permute.xlu0 %956
        %958 = vrot.lane.b32.xlu0 %v903, 16
        %v959 = vpop.permute.xlu0 %958
        %960 = vrot.lane.b32.xlu0 %v910, 16
        %v961 = vpop.permute.xlu0 %960
        %962 = vrot.lane.b32.xlu0 %v911, 16
        %v963 = vpop.permute.xlu0 %962
        %964 = vrot.lane.b32.xlu0 %v918, 16
        %v965 = vpop.permute.xlu0 %964
        %966 = vrot.lane.b32.xlu0 %v919, 16
        %v967 = vpop.permute.xlu0 %966
        %968 = vrot.lane.b32.xlu0 %v926, 16
        %v969 = vpop.permute.xlu0 %968
        %970 = vrot.lane.b32.xlu0 %v927, 16
        %v971 = vpop.permute.xlu0 %970
        %972 = vrot.lane.b32.xlu0 %v934, 16
        %v973 = vpop.permute.xlu0 %972
        %974 = vrot.lane.b32.xlu0 %v935, 16
        %v975 = vpop.permute.xlu0 %974
        %976 = vrot.lane.b32.xlu0 %v942, 16
        %v977 = vpop.permute.xlu0 %976
        %978 = vrot.lane.b32.xlu0 %v943, 16
        %v979 = vpop.permute.xlu0 %978
        %980 = vrot.lane.b32.xlu0 %v950, 16
        %v981 = vpop.permute.xlu0 %980
        %982 = vrot.lane.b32.xlu0 %v951, 16
        %v983 = vpop.permute.xlu0 %982
        %vm1000 = vcmask 388224
        %vm1001 = vmand %vm1000, %vm606
        %v1002 = vld [vmem:[%s734] sm:$0xf]
        %v1003 = vsel %vm1001, %v953, %v1002
        %1004 = vst [vmem:[%s734] sm:$0xf] %v1003
        %vm1005 = vcmask 385152
        %vm1006 = vmand %vm1005, %vm574
        %v1007 = vld [vmem:[%s734 + $0x4] sm:$0x1]
        %v1008 = vsel %vm1006, %v955, %v1007
        %1009 = vst [vmem:[%s734 + $0x4] sm:$0x1] %v1008
        %v1010 = vld [vmem:[%s734 + $0x8] sm:$0xf]
        %v1011 = vsel %vm1001, %v957, %v1010
        %1012 = vst [vmem:[%s734 + $0x8] sm:$0xf] %v1011
        %v1013 = vld [vmem:[%s734 + $0xc] sm:$0x1]
        %v1014 = vsel %vm1006, %v959, %v1013
        %1015 = vst [vmem:[%s734 + $0xc] sm:$0x1] %v1014
        %v1016 = vld [vmem:[%s734 + $0x10] sm:$0xf]
        %v1017 = vsel %vm1001, %v961, %v1016
        %1018 = vst [vmem:[%s734 + $0x10] sm:$0xf] %v1017
        %v1019 = vld [vmem:[%s734 + $0x14] sm:$0x1]
        %v1020 = vsel %vm1006, %v963, %v1019
        %1021 = vst [vmem:[%s734 + $0x14] sm:$0x1] %v1020
        %v1022 = vld [vmem:[%s734 + $0x18] sm:$0xf]
        %v1023 = vsel %vm1001, %v965, %v1022
        %1024 = vst [vmem:[%s734 + $0x18] sm:$0xf] %v1023
        %v1025 = vld [vmem:[%s734 + $0x1c] sm:$0x1]
        %v1026 = vsel %vm1006, %v967, %v1025
        %1027 = vst [vmem:[%s734 + $0x1c] sm:$0x1] %v1026
        %v1028 = vld [vmem:[%s734 + $0x20] sm:$0xf]
        %v1029 = vsel %vm1001, %v969, %v1028
        %1030 = vst [vmem:[%s734 + $0x20] sm:$0xf] %v1029
        %v1031 = vld [vmem:[%s734 + $0x24] sm:$0x1]
        %v1032 = vsel %vm1006, %v971, %v1031
        %1033 = vst [vmem:[%s734 + $0x24] sm:$0x1] %v1032
        %v1034 = vld [vmem:[%s734 + $0x28] sm:$0xf]
        %v1035 = vsel %vm1001, %v973, %v1034
        %1036 = vst [vmem:[%s734 + $0x28] sm:$0xf] %v1035
        %v1037 = vld [vmem:[%s734 + $0x2c] sm:$0x1]
        %v1038 = vsel %vm1006, %v975, %v1037
        %1039 = vst [vmem:[%s734 + $0x2c] sm:$0x1] %v1038
        %v1040 = vld [vmem:[%s734 + $0x30] sm:$0xf]
        %v1041 = vsel %vm1001, %v977, %v1040
        %1042 = vst [vmem:[%s734 + $0x30] sm:$0xf] %v1041
        %v1043 = vld [vmem:[%s734 + $0x34] sm:$0x1]
        %v1044 = vsel %vm1006, %v979, %v1043
        %1045 = vst [vmem:[%s734 + $0x34] sm:$0x1] %v1044
        %v1046 = vld [vmem:[%s734 + $0x38] sm:$0xf]
        %v1047 = vsel %vm1001, %v981, %v1046
        %1048 = vst [vmem:[%s734 + $0x38] sm:$0xf] %v1047
        %v1049 = vld [vmem:[%s734 + $0x3c] sm:$0x1]
        %v1050 = vsel %vm1006, %v983, %v1049
        %1051 = vst [vmem:[%s734 + $0x3c] sm:$0x1] %v1050
        %v1052 = vld [vmem:[#allocation2] sm:$0xf]
        %v1053 = vld [vmem:[#allocation2 + $0x8] sm:$0xf]
        %v1054 = vld [vmem:[#allocation2 + $0x10] sm:$0xf]
        %v1055 = vld [vmem:[#allocation2 + $0x18] sm:$0xf]
        %v1056 = vld [vmem:[#allocation2 + $0x20] sm:$0xf]
        %v1057 = vld [vmem:[#allocation2 + $0x28] sm:$0xf]
        %v1058 = vld [vmem:[#allocation2 + $0x30] sm:$0xf]
        %v1059 = vld [vmem:[#allocation2 + $0x38] sm:$0xf]
        %v1060 = vld [vmem:[%s4] sm:$0xf]
        %v1061 = vld [vmem:[%s4 + $0x4] sm:$0xf]
        %v1062 = vld [vmem:[%s4 + $0x8] sm:$0xf]
        %v1063 = vld [vmem:[%s4 + $0xc] sm:$0xf]
        %v1064 = vld [vmem:[%s4 + $0x10] sm:$0xf]
        %v1065 = vld [vmem:[%s4 + $0x14] sm:$0xf]
        %v1066 = vld [vmem:[#allocation2 + $0x4] sm:$0x1]
        %v1067 = vld [vmem:[#allocation2 + $0xc] sm:$0x1]
        %v1068 = vld [vmem:[#allocation2 + $0x14] sm:$0x1]
        %v1069 = vld [vmem:[#allocation2 + $0x1c] sm:$0x1]
        %v1070 = vld [vmem:[#allocation2 + $0x24] sm:$0x1]
        %v1071 = vld [vmem:[#allocation2 + $0x2c] sm:$0x1]
        %v1072 = vld [vmem:[#allocation2 + $0x34] sm:$0x1]
        %v1073 = vld [vmem:[#allocation2 + $0x3c] sm:$0x1]
        %vm1074 = vsmask.f32 3328
        %vm1075 = vsmask.f32 7440
        %vm1076 = vmor %vm1074, %vm1075
        %v1078 = vshrl.u32 %v1052, 16
        %v1080 = vrot.slane %v1078, 4
        %v1081 = vshll.u32 %v1052, 16
        %v1083 = vrot.slane %v1081, 5
        %v1084 = vor.u32 %v1080, %v1083
        %v1085 = vrot.slane %v1084, 4
        %v1087 = vshll.u32 %v1066, 16
        %v1089 = vrot.slane %v1087, 5
        %v1090 = vsel %vm1076, %v1085, %v1089
        %v1092 = vshrl.u32 %v1053, 16
        %v1094 = vrot.slane %v1092, 4
        %v1095 = vshll.u32 %v1053, 16
        %v1097 = vrot.slane %v1095, 5
        %v1098 = vor.u32 %v1094, %v1097
        %v1099 = vrot.slane %v1098, 4
        %v1101 = vshll.u32 %v1067, 16
        %v1103 = vrot.slane %v1101, 5
        %v1104 = vsel %vm1076, %v1099, %v1103
        %v1106 = vshrl.u32 %v1054, 16
        %v1108 = vrot.slane %v1106, 4
        %v1109 = vshll.u32 %v1054, 16
        %v1111 = vrot.slane %v1109, 5
        %v1112 = vor.u32 %v1108, %v1111
        %v1113 = vrot.slane %v1112, 4
        %v1115 = vshll.u32 %v1068, 16
        %v1117 = vrot.slane %v1115, 5
        %v1118 = vsel %vm1076, %v1113, %v1117
        %v1120 = vshrl.u32 %v1055, 16
        %v1122 = vrot.slane %v1120, 4
        %v1123 = vshll.u32 %v1055, 16
        %v1125 = vrot.slane %v1123, 5
        %v1126 = vor.u32 %v1122, %v1125
        %v1127 = vrot.slane %v1126, 4
        %v1129 = vshll.u32 %v1069, 16
        %v1131 = vrot.slane %v1129, 5
        %v1132 = vsel %vm1076, %v1127, %v1131
        %v1134 = vshrl.u32 %v1056, 16
        %v1136 = vrot.slane %v1134, 4
        %v1137 = vshll.u32 %v1056, 16
        %v1139 = vrot.slane %v1137, 5
        %v1140 = vor.u32 %v1136, %v1139
        %v1141 = vrot.slane %v1140, 4
        %v1143 = vshll.u32 %v1070, 16
        %v1145 = vrot.slane %v1143, 5
        %v1146 = vsel %vm1076, %v1141, %v1145
        %v1148 = vshrl.u32 %v1057, 16
        %v1150 = vrot.slane %v1148, 4
        %v1151 = vshll.u32 %v1057, 16
        %v1153 = vrot.slane %v1151, 5
        %v1154 = vor.u32 %v1150, %v1153
        %v1155 = vrot.slane %v1154, 4
        %v1157 = vshll.u32 %v1071, 16
        %v1159 = vrot.slane %v1157, 5
        %v1160 = vsel %vm1076, %v1155, %v1159
        %v1162 = vshrl.u32 %v1058, 16
        %v1164 = vrot.slane %v1162, 4
        %v1165 = vshll.u32 %v1058, 16
        %v1167 = vrot.slane %v1165, 5
        %v1168 = vor.u32 %v1164, %v1167
        %v1169 = vrot.slane %v1168, 4
        %v1171 = vshll.u32 %v1072, 16
        %v1173 = vrot.slane %v1171, 5
        %v1174 = vsel %vm1076, %v1169, %v1173
        %v1176 = vshrl.u32 %v1059, 16
        %v1178 = vrot.slane %v1176, 4
        %v1179 = vshll.u32 %v1059, 16
        %v1181 = vrot.slane %v1179, 5
        %v1182 = vor.u32 %v1178, %v1181
        %v1183 = vrot.slane %v1182, 4
        %v1185 = vshll.u32 %v1073, 16
        %v1187 = vrot.slane %v1185, 5
        %v1188 = vsel %vm1076, %v1183, %v1187
        %s1189 = scalar_lea.vmem %s4, 24
        %v1190 = vld [vmem:[%s1189] sm:$0xf]
        %v1191 = vld [vmem:[%s1189 + $0x4] sm:$0xf]
        %v1192 = vld [vmem:[%s1189 + $0x8] sm:$0xf]
        %v1193 = vld [vmem:[%s1189 + $0xc] sm:$0xf]
        %v1194 = vld [vmem:[%s1189 + $0x10] sm:$0xf]
        %v1195 = vld [vmem:[%s1189 + $0x14] sm:$0xf]
        %v1196 = vunpack.c.l.b16 %v1090
        %v1197 = vunpack.c.l.b16 %v1104
        %v1198 = vunpack.c.l.b16 %v1118
        %v1199 = vunpack.c.l.b16 %v1132
        %v1200 = vunpack.c.l.b16 %v1146
        %v1201 = vunpack.c.l.b16 %v1160
        %v1202 = vunpack.c.l.b16 %v1174
        %v1203 = vunpack.c.l.b16 %v1188
        %v1204 = vpack.c.b16 %v1197, %v1196
        %v1205 = vpack.c.b16 %v1199, %v1198
        %v1206 = vpack.c.b16 %v1201, %v1200
        %v1207 = vpack.c.b16 %v1203, %v1202
        %v1214 = vunpack.c.l.b16 %v1190
        %v1215 = vunpack.c.l.b16 %v1191
        %v1216 = vunpack.c.l.b16 %v1192
        %v1217 = vunpack.c.l.b16 %v1193
        %v1218 = vunpack.c.l.b16 %v1194
        %v1219 = vunpack.c.l.b16 %v1195
        %v1220 = vpack.c.b16 %v1215, %v1214
        %v1221 = vpack.c.b16 %v1217, %v1216
        %v1222 = vpack.c.b16 %v1219, %v1218
        %vm1226 = vcmask 392192
        %v1228 = vsel %vm1226, %v1204, 0
        %v1231 = vsel %vm1226, %v1205, 0
        %v1234 = vsel %vm1226, %v1206, 0
        %v1237 = vsel %vm1226, %v1207, 0
        %1239 = vmatpush.bf16.msra.mxu0 0
        %1240 = vmatpush.bf16.msra.mxu0 0
        %1241 = vmatpush.bf16.msra.mxu0 0
        %1242 = vmatpush.bf16.msra.mxu0 0
        %1243 = vmatpush.bf16.msra.mxu0 0
        %1244 = vmatpush.bf16.msra.mxu0 %v1222
        %1245 = vmatpush.bf16.msra.mxu0 %v1221
        %1246 = vmatpush.bf16.msra.mxu0 %v1220
        %1247 = vmatmul.bf16.gmra.mxu0 %v1228
        %v1248 = vpop.f32.mrf.mxu0
        %v1249 = vadd.f32 0.0, %v1248
        %v1250 = vpop.f32.mrf.mxu0
        %v1251 = vadd.f32 0.0, %v1250
        %1252 = vmatmul.bf16.gmra.mxu0 %v1231
        %v1253 = vpop.f32.mrf.mxu0
        %v1254 = vadd.f32 0.0, %v1253
        %v1255 = vpop.f32.mrf.mxu0
        %v1256 = vadd.f32 0.0, %v1255
        %1257 = vmatmul.bf16.gmra.mxu0 %v1234
        %v1258 = vpop.f32.mrf.mxu0
        %v1259 = vadd.f32 0.0, %v1258
        %v1260 = vpop.f32.mrf.mxu0
        %v1261 = vadd.f32 0.0, %v1260
        %1262 = vmatmul.bf16.gmra.mxu0 %v1237
        %v1263 = vpop.f32.mrf.mxu0
        %v1264 = vadd.f32 0.0, %v1263
        %v1265 = vpop.f32.mrf.mxu0
        %v1266 = vadd.f32 0.0, %v1265
        %1267 = vdwg.mxu0
        %v1276 = vunpack.c.l.b16 %v1052
        %v1277 = vunpack.c.l.b16 %v1053
        %v1278 = vunpack.c.l.b16 %v1054
        %v1279 = vunpack.c.l.b16 %v1055
        %v1280 = vunpack.c.l.b16 %v1056
        %v1281 = vunpack.c.l.b16 %v1057
        %v1282 = vunpack.c.l.b16 %v1058
        %v1283 = vunpack.c.l.b16 %v1059
        %v1284 = vpack.c.b16 %v1277, %v1276
        %v1285 = vpack.c.b16 %v1279, %v1278
        %v1286 = vpack.c.b16 %v1281, %v1280
        %v1287 = vpack.c.b16 %v1283, %v1282
        %v1294 = vunpack.c.l.b16 %v1060
        %v1295 = vunpack.c.l.b16 %v1061
        %v1296 = vunpack.c.l.b16 %v1062
        %v1297 = vunpack.c.l.b16 %v1063
        %v1298 = vunpack.c.l.b16 %v1064
        %v1299 = vunpack.c.l.b16 %v1065
        %v1300 = vpack.c.b16 %v1295, %v1294
        %v1301 = vpack.c.b16 %v1297, %v1296
        %v1302 = vpack.c.b16 %v1299, %v1298
        %v1307 = vsel %vm1226, %v1284, 0
        %v1310 = vsel %vm1226, %v1285, 0
        %v1313 = vsel %vm1226, %v1286, 0
        %v1316 = vsel %vm1226, %v1287, 0
        %1318 = vmatpush.bf16.msra.mxu0 0
        %1319 = vmatpush.bf16.msra.mxu0 0
        %1320 = vmatpush.bf16.msra.mxu0 0
        %1321 = vmatpush.bf16.msra.mxu0 0
        %1322 = vmatpush.bf16.msra.mxu0 0
        %1323 = vmatpush.bf16.msra.mxu0 %v1302
        %1324 = vmatpush.bf16.msra.mxu0 %v1301
        %1325 = vmatpush.bf16.msra.mxu0 %v1300
        %1326 = vmatmul.bf16.gmra.mxu0 %v1307
        %v1327 = vpop.f32.mrf.mxu0
        %v1328 = vadd.f32 %v1249, %v1327
        %v1329 = vpop.f32.mrf.mxu0
        %v1330 = vadd.f32 %v1251, %v1329
        %1331 = vmatmul.bf16.gmra.mxu0 %v1310
        %v1332 = vpop.f32.mrf.mxu0
        %v1333 = vadd.f32 %v1254, %v1332
        %v1334 = vpop.f32.mrf.mxu0
        %v1335 = vadd.f32 %v1256, %v1334
        %1336 = vmatmul.bf16.gmra.mxu0 %v1313
        %v1337 = vpop.f32.mrf.mxu0
        %v1338 = vadd.f32 %v1259, %v1337
        %v1339 = vpop.f32.mrf.mxu0
        %v1340 = vadd.f32 %v1261, %v1339
        %1341 = vmatmul.bf16.gmra.mxu0 %v1316
        %v1342 = vpop.f32.mrf.mxu0
        %v1343 = vadd.f32 %v1264, %v1342
        %v1344 = vpop.f32.mrf.mxu0
        %v1345 = vadd.f32 %v1266, %v1344
        %1346 = vdwg.mxu0
        %v1347 = vld [vmem:[#allocation2] sm:$0xe]
        %v1348 = vld [vmem:[#allocation2 + $0x8] sm:$0xe]
        %v1349 = vld [vmem:[#allocation2 + $0x10] sm:$0xe]
        %v1350 = vld [vmem:[#allocation2 + $0x18] sm:$0xe]
        %v1351 = vld [vmem:[#allocation2 + $0x20] sm:$0xe]
        %v1352 = vld [vmem:[#allocation2 + $0x28] sm:$0xe]
        %v1353 = vld [vmem:[#allocation2 + $0x30] sm:$0xe]
        %v1354 = vld [vmem:[#allocation2 + $0x38] sm:$0xe]
        %vm1371 = vcmask 1042432
        %vm1372 = vcmask 1046532
        %vm1373 = vmor %vm1371, %vm1372
        %v1374 = vrot.slane %v1347, 5
        %v1375 = vrot.slane %v1374, 4
        %v1376 = vrot.slane %v1066, 5
        %v1377 = vsel %vm1373, %v1375, %v1376
        %v1378 = vrot.slane %v1348, 5
        %v1379 = vrot.slane %v1378, 4
        %v1380 = vrot.slane %v1067, 5
        %v1381 = vsel %vm1373, %v1379, %v1380
        %v1382 = vrot.slane %v1349, 5
        %v1383 = vrot.slane %v1382, 4
        %v1384 = vrot.slane %v1068, 5
        %v1385 = vsel %vm1373, %v1383, %v1384
        %v1386 = vrot.slane %v1350, 5
        %v1387 = vrot.slane %v1386, 4
        %v1388 = vrot.slane %v1069, 5
        %v1389 = vsel %vm1373, %v1387, %v1388
        %v1390 = vrot.slane %v1351, 5
        %v1391 = vrot.slane %v1390, 4
        %v1392 = vrot.slane %v1070, 5
        %v1393 = vsel %vm1373, %v1391, %v1392
        %v1394 = vrot.slane %v1352, 5
        %v1395 = vrot.slane %v1394, 4
        %v1396 = vrot.slane %v1071, 5
        %v1397 = vsel %vm1373, %v1395, %v1396
        %v1398 = vrot.slane %v1353, 5
        %v1399 = vrot.slane %v1398, 4
        %v1400 = vrot.slane %v1072, 5
        %v1401 = vsel %vm1373, %v1399, %v1400
        %v1402 = vrot.slane %v1354, 5
        %v1403 = vrot.slane %v1402, 4
        %v1404 = vrot.slane %v1073, 5
        %v1405 = vsel %vm1373, %v1403, %v1404
        %s1406 = scalar_lea.vmem %s4, 48
        %v1407 = vld [vmem:[%s1406] sm:$0xf]
        %v1408 = vld [vmem:[%s1406 + $0x4] sm:$0xf]
        %v1409 = vld [vmem:[%s1406 + $0x8] sm:$0xf]
        %v1410 = vld [vmem:[%s1406 + $0xc] sm:$0xf]
        %v1411 = vld [vmem:[%s1406 + $0x10] sm:$0xf]
        %v1412 = vld [vmem:[%s1406 + $0x14] sm:$0xf]
        %v1413 = vunpack.c.l.b16 %v1377
        %v1414 = vunpack.c.l.b16 %v1381
        %v1415 = vunpack.c.l.b16 %v1385
        %v1416 = vunpack.c.l.b16 %v1389
        %v1417 = vunpack.c.l.b16 %v1393
        %v1418 = vunpack.c.l.b16 %v1397
        %v1419 = vunpack.c.l.b16 %v1401
        %v1420 = vunpack.c.l.b16 %v1405
        %v1421 = vpack.c.b16 %v1414, %v1413
        %v1422 = vpack.c.b16 %v1416, %v1415
        %v1423 = vpack.c.b16 %v1418, %v1417
        %v1424 = vpack.c.b16 %v1420, %v1419
        %v1431 = vunpack.c.l.b16 %v1407
        %v1432 = vunpack.c.l.b16 %v1408
        %v1433 = vunpack.c.l.b16 %v1409
        %v1434 = vunpack.c.l.b16 %v1410
        %v1435 = vunpack.c.l.b16 %v1411
        %v1436 = vunpack.c.l.b16 %v1412
        %v1437 = vpack.c.b16 %v1432, %v1431
        %v1438 = vpack.c.b16 %v1434, %v1433
        %v1439 = vpack.c.b16 %v1436, %v1435
        %v1444 = vsel %vm1226, %v1421, 0
        %v1447 = vsel %vm1226, %v1422, 0
        %v1450 = vsel %vm1226, %v1423, 0
        %v1453 = vsel %vm1226, %v1424, 0
        %1455 = vmatpush.bf16.msra.mxu0 0
        %1456 = vmatpush.bf16.msra.mxu0 0
        %1457 = vmatpush.bf16.msra.mxu0 0
        %1458 = vmatpush.bf16.msra.mxu0 0
        %1459 = vmatpush.bf16.msra.mxu0 0
        %1460 = vmatpush.bf16.msra.mxu0 %v1439
        %1461 = vmatpush.bf16.msra.mxu0 %v1438
        %1462 = vmatpush.bf16.msra.mxu0 %v1437
        %1463 = vmatmul.bf16.gmra.mxu0 %v1444
        %v1464 = vpop.f32.mrf.mxu0
        %v1465 = vadd.f32 0.0, %v1464
        %v1466 = vpop.f32.mrf.mxu0
        %v1467 = vadd.f32 0.0, %v1466
        %1468 = vmatmul.bf16.gmra.mxu0 %v1447
        %v1469 = vpop.f32.mrf.mxu0
        %v1470 = vadd.f32 0.0, %v1469
        %v1471 = vpop.f32.mrf.mxu0
        %v1472 = vadd.f32 0.0, %v1471
        %1473 = vmatmul.bf16.gmra.mxu0 %v1450
        %v1474 = vpop.f32.mrf.mxu0
        %v1475 = vadd.f32 0.0, %v1474
        %v1476 = vpop.f32.mrf.mxu0
        %v1477 = vadd.f32 0.0, %v1476
        %1478 = vmatmul.bf16.gmra.mxu0 %v1453
        %v1479 = vpop.f32.mrf.mxu0
        %v1480 = vadd.f32 0.0, %v1479
        %v1481 = vpop.f32.mrf.mxu0
        %v1482 = vadd.f32 0.0, %v1481
        %1483 = vdwg.mxu0
        %v1484 = vadd.f32 %v1328, %v1465
        %v1485 = vadd.f32 %v1330, %v1467
        %v1486 = vadd.f32 %v1333, %v1470
        %v1487 = vadd.f32 %v1335, %v1472
        %v1488 = vadd.f32 %v1338, %v1475
        %v1489 = vadd.f32 %v1340, %v1477
        %v1490 = vadd.f32 %v1343, %v1480
        %v1491 = vadd.f32 %v1345, %v1482
        %v1492 = vld [vmem:[%s734] sm:$0xf]
        %v1493 = vld [vmem:[%s734 + $0x8] sm:$0xf]
        %v1494 = vld [vmem:[%s734 + $0x10] sm:$0xf]
        %v1495 = vld [vmem:[%s734 + $0x18] sm:$0xf]
        %v1496 = vld [vmem:[%s734 + $0x20] sm:$0xf]
        %v1497 = vld [vmem:[%s734 + $0x28] sm:$0xf]
        %v1498 = vld [vmem:[%s734 + $0x30] sm:$0xf]
        %v1499 = vld [vmem:[%s734 + $0x38] sm:$0xf]
        %s1500 = scalar_lea.vmem %s4, 72
        %v1501 = vld [vmem:[%s1500] sm:$0xf]
        %v1502 = vld [vmem:[%s1500 + $0x4] sm:$0xf]
        %v1503 = vld [vmem:[%s1500 + $0x8] sm:$0xf]
        %v1504 = vld [vmem:[%s1500 + $0xc] sm:$0xf]
        %v1505 = vld [vmem:[%s1500 + $0x10] sm:$0xf]
        %v1506 = vld [vmem:[%s1500 + $0x14] sm:$0xf]
        %v1515 = vunpack.c.l.b16 %v1492
        %v1516 = vunpack.c.l.b16 %v1493
        %v1517 = vunpack.c.l.b16 %v1494
        %v1518 = vunpack.c.l.b16 %v1495
        %v1519 = vunpack.c.l.b16 %v1496
        %v1520 = vunpack.c.l.b16 %v1497
        %v1521 = vunpack.c.l.b16 %v1498
        %v1522 = vunpack.c.l.b16 %v1499
        %v1523 = vpack.c.b16 %v1516, %v1515
        %v1524 = vpack.c.b16 %v1518, %v1517
        %v1525 = vpack.c.b16 %v1520, %v1519
        %v1526 = vpack.c.b16 %v1522, %v1521
        %v1533 = vunpack.c.l.b16 %v1501
        %v1534 = vunpack.c.l.b16 %v1502
        %v1535 = vunpack.c.l.b16 %v1503
        %v1536 = vunpack.c.l.b16 %v1504
        %v1537 = vunpack.c.l.b16 %v1505
        %v1538 = vunpack.c.l.b16 %v1506
        %v1539 = vpack.c.b16 %v1534, %v1533
        %v1540 = vpack.c.b16 %v1536, %v1535
        %v1541 = vpack.c.b16 %v1538, %v1537
        %v1546 = vsel %vm1226, %v1523, 0
        %v1549 = vsel %vm1226, %v1524, 0
        %v1552 = vsel %vm1226, %v1525, 0
        %v1555 = vsel %vm1226, %v1526, 0
        %1557 = vmatpush.bf16.msra.mxu0 0
        %1558 = vmatpush.bf16.msra.mxu0 0
        %1559 = vmatpush.bf16.msra.mxu0 0
        %1560 = vmatpush.bf16.msra.mxu0 0
        %1561 = vmatpush.bf16.msra.mxu0 0
        %1562 = vmatpush.bf16.msra.mxu0 %v1541
        %1563 = vmatpush.bf16.msra.mxu0 %v1540
        %1564 = vmatpush.bf16.msra.mxu0 %v1539
        %1565 = vmatmul.bf16.gmra.mxu0 %v1546
        %v1566 = vpop.f32.mrf.mxu0
        %v1567 = vadd.f32 0.0, %v1566
        %v1568 = vpop.f32.mrf.mxu0
        %v1569 = vadd.f32 0.0, %v1568
        %1570 = vmatmul.bf16.gmra.mxu0 %v1549
        %v1571 = vpop.f32.mrf.mxu0
        %v1572 = vadd.f32 0.0, %v1571
        %v1573 = vpop.f32.mrf.mxu0
        %v1574 = vadd.f32 0.0, %v1573
        %1575 = vmatmul.bf16.gmra.mxu0 %v1552
        %v1576 = vpop.f32.mrf.mxu0
        %v1577 = vadd.f32 0.0, %v1576
        %v1578 = vpop.f32.mrf.mxu0
        %v1579 = vadd.f32 0.0, %v1578
        %1580 = vmatmul.bf16.gmra.mxu0 %v1555
        %v1581 = vpop.f32.mrf.mxu0
        %v1582 = vadd.f32 0.0, %v1581
        %v1583 = vpop.f32.mrf.mxu0
        %v1584 = vadd.f32 0.0, %v1583
        %1585 = vdwg.mxu0
        %v1586 = vadd.f32 %v1484, %v1567
        %v1587 = vadd.f32 %v1485, %v1569
        %v1588 = vadd.f32 %v1486, %v1572
        %v1589 = vadd.f32 %v1487, %v1574
        %v1590 = vadd.f32 %v1488, %v1577
        %v1591 = vadd.f32 %v1489, %v1579
        %v1592 = vadd.f32 %v1490, %v1582
        %v1593 = vadd.f32 %v1491, %v1584
        %v1594 = vld [vmem:[%s734] sm:$0xf]
        %v1595 = vld [vmem:[%s734 + $0x4] sm:$0x1]
        %v1596 = vld [vmem:[%s734 + $0x8] sm:$0xf]
        %v1597 = vld [vmem:[%s734 + $0xc] sm:$0x1]
        %v1598 = vld [vmem:[%s734 + $0x10] sm:$0xf]
        %v1599 = vld [vmem:[%s734 + $0x14] sm:$0x1]
        %v1600 = vld [vmem:[%s734 + $0x18] sm:$0xf]
        %v1601 = vld [vmem:[%s734 + $0x1c] sm:$0x1]
        %v1602 = vld [vmem:[%s734 + $0x20] sm:$0xf]
        %v1603 = vld [vmem:[%s734 + $0x24] sm:$0x1]
        %v1604 = vld [vmem:[%s734 + $0x28] sm:$0xf]
        %v1605 = vld [vmem:[%s734 + $0x2c] sm:$0x1]
        %v1606 = vld [vmem:[%s734 + $0x30] sm:$0xf]
        %v1607 = vld [vmem:[%s734 + $0x34] sm:$0x1]
        %v1608 = vld [vmem:[%s734 + $0x38] sm:$0xf]
        %v1609 = vld [vmem:[%s734 + $0x3c] sm:$0x1]
        %v1611 = vshrl.u32 %v1594, 16
        %v1613 = vrot.slane %v1611, 4
        %v1614 = vshll.u32 %v1594, 16
        %v1616 = vrot.slane %v1614, 5
        %v1617 = vor.u32 %v1613, %v1616
        %v1618 = vrot.slane %v1617, 4
        %v1620 = vshll.u32 %v1595, 16
        %v1622 = vrot.slane %v1620, 5
        %v1623 = vsel %vm1076, %v1618, %v1622
        %v1625 = vshrl.u32 %v1596, 16
        %v1627 = vrot.slane %v1625, 4
        %v1628 = vshll.u32 %v1596, 16
        %v1630 = vrot.slane %v1628, 5
        %v1631 = vor.u32 %v1627, %v1630
        %v1632 = vrot.slane %v1631, 4
        %v1634 = vshll.u32 %v1597, 16
        %v1636 = vrot.slane %v1634, 5
        %v1637 = vsel %vm1076, %v1632, %v1636
        %v1639 = vshrl.u32 %v1598, 16
        %v1641 = vrot.slane %v1639, 4
        %v1642 = vshll.u32 %v1598, 16
        %v1644 = vrot.slane %v1642, 5
        %v1645 = vor.u32 %v1641, %v1644
        %v1646 = vrot.slane %v1645, 4
        %v1648 = vshll.u32 %v1599, 16
        %v1650 = vrot.slane %v1648, 5
        %v1651 = vsel %vm1076, %v1646, %v1650
        %v1653 = vshrl.u32 %v1600, 16
        %v1655 = vrot.slane %v1653, 4
        %v1656 = vshll.u32 %v1600, 16
        %v1658 = vrot.slane %v1656, 5
        %v1659 = vor.u32 %v1655, %v1658
        %v1660 = vrot.slane %v1659, 4
        %v1662 = vshll.u32 %v1601, 16
        %v1664 = vrot.slane %v1662, 5
        %v1665 = vsel %vm1076, %v1660, %v1664
        %v1667 = vshrl.u32 %v1602, 16
        %v1669 = vrot.slane %v1667, 4
        %v1670 = vshll.u32 %v1602, 16
        %v1672 = vrot.slane %v1670, 5
        %v1673 = vor.u32 %v1669, %v1672
        %v1674 = vrot.slane %v1673, 4
        %v1676 = vshll.u32 %v1603, 16
        %v1678 = vrot.slane %v1676, 5
        %v1679 = vsel %vm1076, %v1674, %v1678
        %v1681 = vshrl.u32 %v1604, 16
        %v1683 = vrot.slane %v1681, 4
        %v1684 = vshll.u32 %v1604, 16
        %v1686 = vrot.slane %v1684, 5
        %v1687 = vor.u32 %v1683, %v1686
        %v1688 = vrot.slane %v1687, 4
        %v1690 = vshll.u32 %v1605, 16
        %v1692 = vrot.slane %v1690, 5
        %v1693 = vsel %vm1076, %v1688, %v1692
        %v1695 = vshrl.u32 %v1606, 16
        %v1697 = vrot.slane %v1695, 4
        %v1698 = vshll.u32 %v1606, 16
        %v1700 = vrot.slane %v1698, 5
        %v1701 = vor.u32 %v1697, %v1700
        %v1702 = vrot.slane %v1701, 4
        %v1704 = vshll.u32 %v1607, 16
        %v1706 = vrot.slane %v1704, 5
        %v1707 = vsel %vm1076, %v1702, %v1706
        %v1709 = vshrl.u32 %v1608, 16
        %v1711 = vrot.slane %v1709, 4
        %v1712 = vshll.u32 %v1608, 16
        %v1714 = vrot.slane %v1712, 5
        %v1715 = vor.u32 %v1711, %v1714
        %v1716 = vrot.slane %v1715, 4
        %v1718 = vshll.u32 %v1609, 16
        %v1720 = vrot.slane %v1718, 5
        %v1721 = vsel %vm1076, %v1716, %v1720
        %s1722 = scalar_lea.vmem %s4, 96
        %v1723 = vld [vmem:[%s1722] sm:$0xf]
        %v1724 = vld [vmem:[%s1722 + $0x4] sm:$0xf]
        %v1725 = vld [vmem:[%s1722 + $0x8] sm:$0xf]
        %v1726 = vld [vmem:[%s1722 + $0xc] sm:$0xf]
        %v1727 = vld [vmem:[%s1722 + $0x10] sm:$0xf]
        %v1728 = vld [vmem:[%s1722 + $0x14] sm:$0xf]
        %v1729 = vunpack.c.l.b16 %v1623
        %v1730 = vunpack.c.l.b16 %v1637
        %v1731 = vunpack.c.l.b16 %v1651
        %v1732 = vunpack.c.l.b16 %v1665
        %v1733 = vunpack.c.l.b16 %v1679
        %v1734 = vunpack.c.l.b16 %v1693
        %v1735 = vunpack.c.l.b16 %v1707
        %v1736 = vunpack.c.l.b16 %v1721
        %v1737 = vpack.c.b16 %v1730, %v1729
        %v1738 = vpack.c.b16 %v1732, %v1731
        %v1739 = vpack.c.b16 %v1734, %v1733
        %v1740 = vpack.c.b16 %v1736, %v1735
        %v1747 = vunpack.c.l.b16 %v1723
        %v1748 = vunpack.c.l.b16 %v1724
        %v1749 = vunpack.c.l.b16 %v1725
        %v1750 = vunpack.c.l.b16 %v1726
        %v1751 = vunpack.c.l.b16 %v1727
        %v1752 = vunpack.c.l.b16 %v1728
        %v1753 = vpack.c.b16 %v1748, %v1747
        %v1754 = vpack.c.b16 %v1750, %v1749
        %v1755 = vpack.c.b16 %v1752, %v1751
        %v1760 = vsel %vm1226, %v1737, 0
        %v1763 = vsel %vm1226, %v1738, 0
        %v1766 = vsel %vm1226, %v1739, 0
        %v1769 = vsel %vm1226, %v1740, 0
        %1771 = vmatpush.bf16.msra.mxu0 0
        %1772 = vmatpush.bf16.msra.mxu0 0
        %1773 = vmatpush.bf16.msra.mxu0 0
        %1774 = vmatpush.bf16.msra.mxu0 0
        %1775 = vmatpush.bf16.msra.mxu0 0
        %1776 = vmatpush.bf16.msra.mxu0 %v1755
        %1777 = vmatpush.bf16.msra.mxu0 %v1754
        %1778 = vmatpush.bf16.msra.mxu0 %v1753
        %1779 = vmatmul.bf16.gmra.mxu0 %v1760
        %v1780 = vpop.f32.mrf.mxu0
        %v1781 = vadd.f32 0.0, %v1780
        %v1782 = vpop.f32.mrf.mxu0
        %v1783 = vadd.f32 0.0, %v1782
        %1784 = vmatmul.bf16.gmra.mxu0 %v1763
        %v1785 = vpop.f32.mrf.mxu0
        %v1786 = vadd.f32 0.0, %v1785
        %v1787 = vpop.f32.mrf.mxu0
        %v1788 = vadd.f32 0.0, %v1787
        %1789 = vmatmul.bf16.gmra.mxu0 %v1766
        %v1790 = vpop.f32.mrf.mxu0
        %v1791 = vadd.f32 0.0, %v1790
        %v1792 = vpop.f32.mrf.mxu0
        %v1793 = vadd.f32 0.0, %v1792
        %1794 = vmatmul.bf16.gmra.mxu0 %v1769
        %v1795 = vpop.f32.mrf.mxu0
        %v1796 = vadd.f32 0.0, %v1795
        %v1797 = vpop.f32.mrf.mxu0
        %v1798 = vadd.f32 0.0, %v1797
        %1799 = vdwg.mxu0
        %v1800 = vadd.f32 %v1586, %v1781
        %v1801 = vadd.f32 %v1587, %v1783
        %v1802 = vadd.f32 %v1588, %v1786
        %v1803 = vadd.f32 %v1589, %v1788
        %v1804 = vadd.f32 %v1590, %v1791
        %v1805 = vadd.f32 %v1591, %v1793
        %v1806 = vadd.f32 %v1592, %v1796
        %v1807 = vadd.f32 %v1593, %v1798
        %v1808 = vld [vmem:[%s734] sm:$0xe]
        %v1809 = vld [vmem:[%s734 + $0x8] sm:$0xe]
        %v1810 = vld [vmem:[%s734 + $0x10] sm:$0xe]
        %v1811 = vld [vmem:[%s734 + $0x18] sm:$0xe]
        %v1812 = vld [vmem:[%s734 + $0x20] sm:$0xe]
        %v1813 = vld [vmem:[%s734 + $0x28] sm:$0xe]
        %v1814 = vld [vmem:[%s734 + $0x30] sm:$0xe]
        %v1815 = vld [vmem:[%s734 + $0x38] sm:$0xe]
        %v1832 = vrot.slane %v1808, 5
        %v1833 = vrot.slane %v1832, 4
        %v1834 = vrot.slane %v1595, 5
        %v1835 = vsel %vm1373, %v1833, %v1834
        %v1836 = vrot.slane %v1809, 5
        %v1837 = vrot.slane %v1836, 4
        %v1838 = vrot.slane %v1597, 5
        %v1839 = vsel %vm1373, %v1837, %v1838
        %v1840 = vrot.slane %v1810, 5
        %v1841 = vrot.slane %v1840, 4
        %v1842 = vrot.slane %v1599, 5
        %v1843 = vsel %vm1373, %v1841, %v1842
        %v1844 = vrot.slane %v1811, 5
        %v1845 = vrot.slane %v1844, 4
        %v1846 = vrot.slane %v1601, 5
        %v1847 = vsel %vm1373, %v1845, %v1846
        %v1848 = vrot.slane %v1812, 5
        %v1849 = vrot.slane %v1848, 4
        %v1850 = vrot.slane %v1603, 5
        %v1851 = vsel %vm1373, %v1849, %v1850
        %v1852 = vrot.slane %v1813, 5
        %v1853 = vrot.slane %v1852, 4
        %v1854 = vrot.slane %v1605, 5
        %v1855 = vsel %vm1373, %v1853, %v1854
        %v1856 = vrot.slane %v1814, 5
        %v1857 = vrot.slane %v1856, 4
        %v1858 = vrot.slane %v1607, 5
        %v1859 = vsel %vm1373, %v1857, %v1858
        %v1860 = vrot.slane %v1815, 5
        %v1861 = vrot.slane %v1860, 4
        %v1862 = vrot.slane %v1609, 5
        %v1863 = vsel %vm1373, %v1861, %v1862
        %s1864 = scalar_lea.vmem %s4, 120
        %v1865 = vld [vmem:[%s1864] sm:$0xf]
        %v1866 = vld [vmem:[%s1864 + $0x4] sm:$0xf]
        %v1867 = vld [vmem:[%s1864 + $0x8] sm:$0xf]
        %v1868 = vld [vmem:[%s1864 + $0xc] sm:$0xf]
        %v1869 = vld [vmem:[%s1864 + $0x10] sm:$0xf]
        %v1870 = vld [vmem:[%s1864 + $0x14] sm:$0xf]
        %v1871 = vunpack.c.l.b16 %v1835
        %v1872 = vunpack.c.l.b16 %v1839
        %v1873 = vunpack.c.l.b16 %v1843
        %v1874 = vunpack.c.l.b16 %v1847
        %v1875 = vunpack.c.l.b16 %v1851
        %v1876 = vunpack.c.l.b16 %v1855
        %v1877 = vunpack.c.l.b16 %v1859
        %v1878 = vunpack.c.l.b16 %v1863
        %v1879 = vpack.c.b16 %v1872, %v1871
        %v1880 = vpack.c.b16 %v1874, %v1873
        %v1881 = vpack.c.b16 %v1876, %v1875
        %v1882 = vpack.c.b16 %v1878, %v1877
        %v1889 = vunpack.c.l.b16 %v1865
        %v1890 = vunpack.c.l.b16 %v1866
        %v1891 = vunpack.c.l.b16 %v1867
        %v1892 = vunpack.c.l.b16 %v1868
        %v1893 = vunpack.c.l.b16 %v1869
        %v1894 = vunpack.c.l.b16 %v1870
        %v1895 = vpack.c.b16 %v1890, %v1889
        %v1896 = vpack.c.b16 %v1892, %v1891
        %v1897 = vpack.c.b16 %v1894, %v1893
        %v1902 = vsel %vm1226, %v1879, 0
        %v1905 = vsel %vm1226, %v1880, 0
        %v1908 = vsel %vm1226, %v1881, 0
        %v1911 = vsel %vm1226, %v1882, 0
        %1913 = vmatpush.bf16.msra.mxu0 0
        %1914 = vmatpush.bf16.msra.mxu0 0
        %1915 = vmatpush.bf16.msra.mxu0 0
        %1916 = vmatpush.bf16.msra.mxu0 0
        %1917 = vmatpush.bf16.msra.mxu0 0
        %1918 = vmatpush.bf16.msra.mxu0 %v1897
        %1919 = vmatpush.bf16.msra.mxu0 %v1896
        %1920 = vmatpush.bf16.msra.mxu0 %v1895
        %1921 = vmatmul.bf16.gmra.mxu0 %v1902
        %v1922 = vpop.f32.mrf.mxu0
        %v1923 = vadd.f32 0.0, %v1922
        %v1924 = vpop.f32.mrf.mxu0
        %v1925 = vadd.f32 0.0, %v1924
        %1926 = vmatmul.bf16.gmra.mxu0 %v1905
        %v1927 = vpop.f32.mrf.mxu0
        %v1928 = vadd.f32 0.0, %v1927
        %v1929 = vpop.f32.mrf.mxu0
        %v1930 = vadd.f32 0.0, %v1929
        %1931 = vmatmul.bf16.gmra.mxu0 %v1908
        %v1932 = vpop.f32.mrf.mxu0
        %v1933 = vadd.f32 0.0, %v1932
        %v1934 = vpop.f32.mrf.mxu0
        %v1935 = vadd.f32 0.0, %v1934
        %1936 = vmatmul.bf16.gmra.mxu0 %v1911
        %v1937 = vpop.f32.mrf.mxu0
        %v1938 = vadd.f32 0.0, %v1937
        %v1939 = vpop.f32.mrf.mxu0
        %v1940 = vadd.f32 0.0, %v1939
        %1941 = vdwg.mxu0
        %v1942 = vadd.f32 %v1800, %v1923
        %v1943 = vadd.f32 %v1801, %v1925
        %v1944 = vadd.f32 %v1802, %v1928
        %v1945 = vadd.f32 %v1803, %v1930
        %v1946 = vadd.f32 %v1804, %v1933
        %v1947 = vadd.f32 %v1805, %v1935
        %v1948 = vadd.f32 %v1806, %v1938
        %v1949 = vadd.f32 %v1807, %v1940
        %s1950 = scalar_lea.vmem [#allocation2], 16
        %v1951 = vld [vmem:[%s1950] sm:$0xf]
        %v1952 = vld [vmem:[%s1950 + $0x8] sm:$0xf]
        %v1953 = vld [vmem:[%s1950 + $0x10] sm:$0xf]
        %v1954 = vld [vmem:[%s1950 + $0x18] sm:$0xf]
        %v1955 = vld [vmem:[%s1950 + $0x20] sm:$0xf]
        %v1956 = vld [vmem:[%s1950 + $0x28] sm:$0xf]
        %v1957 = vld [vmem:[%s1950 + $0x30] sm:$0xf]
        %v1958 = vld [vmem:[%s1950 + $0x38] sm:$0xf]
        %s1959 = scalar_lea.vmem %s4, 144
        %v1960 = vld [vmem:[%s1959] sm:$0xf]
        %v1961 = vld [vmem:[%s1959 + $0x4] sm:$0xf]
        %v1962 = vld [vmem:[%s1959 + $0x8] sm:$0xf]
        %v1963 = vld [vmem:[%s1959 + $0xc] sm:$0xf]
        %v1964 = vld [vmem:[%s1959 + $0x10] sm:$0xf]
        %v1965 = vld [vmem:[%s1959 + $0x14] sm:$0xf]
        %v1974 = vunpack.c.l.b16 %v1951
        %v1975 = vunpack.c.l.b16 %v1952
        %v1976 = vunpack.c.l.b16 %v1953
        %v1977 = vunpack.c.l.b16 %v1954
        %v1978 = vunpack.c.l.b16 %v1955
        %v1979 = vunpack.c.l.b16 %v1956
        %v1980 = vunpack.c.l.b16 %v1957
        %v1981 = vunpack.c.l.b16 %v1958
        %v1982 = vpack.c.b16 %v1975, %v1974
        %v1983 = vpack.c.b16 %v1977, %v1976
        %v1984 = vpack.c.b16 %v1979, %v1978
        %v1985 = vpack.c.b16 %v1981, %v1980
        %v1992 = vunpack.c.l.b16 %v1960
        %v1993 = vunpack.c.l.b16 %v1961
        %v1994 = vunpack.c.l.b16 %v1962
        %v1995 = vunpack.c.l.b16 %v1963
        %v1996 = vunpack.c.l.b16 %v1964
        %v1997 = vunpack.c.l.b16 %v1965
        %v1998 = vpack.c.b16 %v1993, %v1992
        %v1999 = vpack.c.b16 %v1995, %v1994
        %v2000 = vpack.c.b16 %v1997, %v1996
        %v2005 = vsel %vm1226, %v1982, 0
        %v2008 = vsel %vm1226, %v1983, 0
        %v2011 = vsel %vm1226, %v1984, 0
        %v2014 = vsel %vm1226, %v1985, 0
        %2016 = vmatpush.bf16.msra.mxu0 0
        %2017 = vmatpush.bf16.msra.mxu0 0
        %2018 = vmatpush.bf16.msra.mxu0 0
        %2019 = vmatpush.bf16.msra.mxu0 0
        %2020 = vmatpush.bf16.msra.mxu0 0
        %2021 = vmatpush.bf16.msra.mxu0 %v2000
        %2022 = vmatpush.bf16.msra.mxu0 %v1999
        %2023 = vmatpush.bf16.msra.mxu0 %v1998
        %2024 = vmatmul.bf16.gmra.mxu0 %v2005
        %v2025 = vpop.f32.mrf.mxu0
        %v2026 = vadd.f32 0.0, %v2025
        %v2027 = vpop.f32.mrf.mxu0
        %v2028 = vadd.f32 0.0, %v2027
        %2029 = vmatmul.bf16.gmra.mxu0 %v2008
        %v2030 = vpop.f32.mrf.mxu0
        %v2031 = vadd.f32 0.0, %v2030
        %v2032 = vpop.f32.mrf.mxu0
        %v2033 = vadd.f32 0.0, %v2032
        %2034 = vmatmul.bf16.gmra.mxu0 %v2011
        %v2035 = vpop.f32.mrf.mxu0
        %v2036 = vadd.f32 0.0, %v2035
        %v2037 = vpop.f32.mrf.mxu0
        %v2038 = vadd.f32 0.0, %v2037
        %2039 = vmatmul.bf16.gmra.mxu0 %v2014
        %v2040 = vpop.f32.mrf.mxu0
        %v2041 = vadd.f32 0.0, %v2040
        %v2042 = vpop.f32.mrf.mxu0
        %v2043 = vadd.f32 0.0, %v2042
        %2044 = vdwg.mxu0
        %v2045 = vadd.f32 %v1942, %v2026
        %v2046 = vadd.f32 %v1943, %v2028
        %v2047 = vadd.f32 %v1944, %v2031
        %v2048 = vadd.f32 %v1945, %v2033
        %v2049 = vadd.f32 %v1946, %v2036
        %v2050 = vadd.f32 %v1947, %v2038
        %v2051 = vadd.f32 %v1948, %v2041
        %v2052 = vadd.f32 %v1949, %v2043
        %v2053 = vld [vmem:[%s1950] sm:$0xf]
        %v2054 = vld [vmem:[%s1950 + $0x4] sm:$0x1]
        %v2055 = vld [vmem:[%s1950 + $0x8] sm:$0xf]
        %v2056 = vld [vmem:[%s1950 + $0xc] sm:$0x1]
        %v2057 = vld [vmem:[%s1950 + $0x10] sm:$0xf]
        %v2058 = vld [vmem:[%s1950 + $0x14] sm:$0x1]
        %v2059 = vld [vmem:[%s1950 + $0x18] sm:$0xf]
        %v2060 = vld [vmem:[%s1950 + $0x1c] sm:$0x1]
        %v2061 = vld [vmem:[%s1950 + $0x20] sm:$0xf]
        %v2062 = vld [vmem:[%s1950 + $0x24] sm:$0x1]
        %v2063 = vld [vmem:[%s1950 + $0x28] sm:$0xf]
        %v2064 = vld [vmem:[%s1950 + $0x2c] sm:$0x1]
        %v2065 = vld [vmem:[%s1950 + $0x30] sm:$0xf]
        %v2066 = vld [vmem:[%s1950 + $0x34] sm:$0x1]
        %v2067 = vld [vmem:[%s1950 + $0x38] sm:$0xf]
        %v2068 = vld [vmem:[%s1950 + $0x3c] sm:$0x1]
        %v2070 = vshrl.u32 %v2053, 16
        %v2072 = vrot.slane %v2070, 4
        %v2073 = vshll.u32 %v2053, 16
        %v2075 = vrot.slane %v2073, 5
        %v2076 = vor.u32 %v2072, %v2075
        %v2077 = vrot.slane %v2076, 4
        %v2079 = vshll.u32 %v2054, 16
        %v2081 = vrot.slane %v2079, 5
        %v2082 = vsel %vm1076, %v2077, %v2081
        %v2084 = vshrl.u32 %v2055, 16
        %v2086 = vrot.slane %v2084, 4
        %v2087 = vshll.u32 %v2055, 16
        %v2089 = vrot.slane %v2087, 5
        %v2090 = vor.u32 %v2086, %v2089
        %v2091 = vrot.slane %v2090, 4
        %v2093 = vshll.u32 %v2056, 16
        %v2095 = vrot.slane %v2093, 5
        %v2096 = vsel %vm1076, %v2091, %v2095
        %v2098 = vshrl.u32 %v2057, 16
        %v2100 = vrot.slane %v2098, 4
        %v2101 = vshll.u32 %v2057, 16
        %v2103 = vrot.slane %v2101, 5
        %v2104 = vor.u32 %v2100, %v2103
        %v2105 = vrot.slane %v2104, 4
        %v2107 = vshll.u32 %v2058, 16
        %v2109 = vrot.slane %v2107, 5
        %v2110 = vsel %vm1076, %v2105, %v2109
        %v2112 = vshrl.u32 %v2059, 16
        %v2114 = vrot.slane %v2112, 4
        %v2115 = vshll.u32 %v2059, 16
        %v2117 = vrot.slane %v2115, 5
        %v2118 = vor.u32 %v2114, %v2117
        %v2119 = vrot.slane %v2118, 4
        %v2121 = vshll.u32 %v2060, 16
        %v2123 = vrot.slane %v2121, 5
        %v2124 = vsel %vm1076, %v2119, %v2123
        %v2126 = vshrl.u32 %v2061, 16
        %v2128 = vrot.slane %v2126, 4
        %v2129 = vshll.u32 %v2061, 16
        %v2131 = vrot.slane %v2129, 5
        %v2132 = vor.u32 %v2128, %v2131
        %v2133 = vrot.slane %v2132, 4
        %v2135 = vshll.u32 %v2062, 16
        %v2137 = vrot.slane %v2135, 5
        %v2138 = vsel %vm1076, %v2133, %v2137
        %v2140 = vshrl.u32 %v2063, 16
        %v2142 = vrot.slane %v2140, 4
        %v2143 = vshll.u32 %v2063, 16
        %v2145 = vrot.slane %v2143, 5
        %v2146 = vor.u32 %v2142, %v2145
        %v2147 = vrot.slane %v2146, 4
        %v2149 = vshll.u32 %v2064, 16
        %v2151 = vrot.slane %v2149, 5
        %v2152 = vsel %vm1076, %v2147, %v2151
        %v2154 = vshrl.u32 %v2065, 16
        %v2156 = vrot.slane %v2154, 4
        %v2157 = vshll.u32 %v2065, 16
        %v2159 = vrot.slane %v2157, 5
        %v2160 = vor.u32 %v2156, %v2159
        %v2161 = vrot.slane %v2160, 4
        %v2163 = vshll.u32 %v2066, 16
        %v2165 = vrot.slane %v2163, 5
        %v2166 = vsel %vm1076, %v2161, %v2165
        %v2168 = vshrl.u32 %v2067, 16
        %v2170 = vrot.slane %v2168, 4
        %v2171 = vshll.u32 %v2067, 16
        %v2173 = vrot.slane %v2171, 5
        %v2174 = vor.u32 %v2170, %v2173
        %v2175 = vrot.slane %v2174, 4
        %v2177 = vshll.u32 %v2068, 16
        %v2179 = vrot.slane %v2177, 5
        %v2180 = vsel %vm1076, %v2175, %v2179
        %s2181 = scalar_lea.vmem %s4, 168
        %v2182 = vld [vmem:[%s2181] sm:$0xf]
        %v2183 = vld [vmem:[%s2181 + $0x4] sm:$0xf]
        %v2184 = vld [vmem:[%s2181 + $0x8] sm:$0xf]
        %v2185 = vld [vmem:[%s2181 + $0xc] sm:$0xf]
        %v2186 = vld [vmem:[%s2181 + $0x10] sm:$0xf]
        %v2187 = vld [vmem:[%s2181 + $0x14] sm:$0xf]
        %v2188 = vunpack.c.l.b16 %v2082
        %v2189 = vunpack.c.l.b16 %v2096
        %v2190 = vunpack.c.l.b16 %v2110
        %v2191 = vunpack.c.l.b16 %v2124
        %v2192 = vunpack.c.l.b16 %v2138
        %v2193 = vunpack.c.l.b16 %v2152
        %v2194 = vunpack.c.l.b16 %v2166
        %v2195 = vunpack.c.l.b16 %v2180
        %v2196 = vpack.c.b16 %v2189, %v2188
        %v2197 = vpack.c.b16 %v2191, %v2190
        %v2198 = vpack.c.b16 %v2193, %v2192
        %v2199 = vpack.c.b16 %v2195, %v2194
        %v2206 = vunpack.c.l.b16 %v2182
        %v2207 = vunpack.c.l.b16 %v2183
        %v2208 = vunpack.c.l.b16 %v2184
        %v2209 = vunpack.c.l.b16 %v2185
        %v2210 = vunpack.c.l.b16 %v2186
        %v2211 = vunpack.c.l.b16 %v2187
        %v2212 = vpack.c.b16 %v2207, %v2206
        %v2213 = vpack.c.b16 %v2209, %v2208
        %v2214 = vpack.c.b16 %v2211, %v2210
        %v2219 = vsel %vm1226, %v2196, 0
        %v2222 = vsel %vm1226, %v2197, 0
        %v2225 = vsel %vm1226, %v2198, 0
        %v2228 = vsel %vm1226, %v2199, 0
        %2230 = vmatpush.bf16.msra.mxu0 0
        %2231 = vmatpush.bf16.msra.mxu0 0
        %2232 = vmatpush.bf16.msra.mxu0 0
        %2233 = vmatpush.bf16.msra.mxu0 0
        %2234 = vmatpush.bf16.msra.mxu0 0
        %2235 = vmatpush.bf16.msra.mxu0 %v2214
        %2236 = vmatpush.bf16.msra.mxu0 %v2213
        %2237 = vmatpush.bf16.msra.mxu0 %v2212
        %2238 = vmatmul.bf16.gmra.mxu0 %v2219
        %v2239 = vpop.f32.mrf.mxu0
        %v2240 = vadd.f32 0.0, %v2239
        %v2241 = vpop.f32.mrf.mxu0
        %v2242 = vadd.f32 0.0, %v2241
        %2243 = vmatmul.bf16.gmra.mxu0 %v2222
        %v2244 = vpop.f32.mrf.mxu0
        %v2245 = vadd.f32 0.0, %v2244
        %v2246 = vpop.f32.mrf.mxu0
        %v2247 = vadd.f32 0.0, %v2246
        %2248 = vmatmul.bf16.gmra.mxu0 %v2225
        %v2249 = vpop.f32.mrf.mxu0
        %v2250 = vadd.f32 0.0, %v2249
        %v2251 = vpop.f32.mrf.mxu0
        %v2252 = vadd.f32 0.0, %v2251
        %2253 = vmatmul.bf16.gmra.mxu0 %v2228
        %v2254 = vpop.f32.mrf.mxu0
        %v2255 = vadd.f32 0.0, %v2254
        %v2256 = vpop.f32.mrf.mxu0
        %v2257 = vadd.f32 0.0, %v2256
        %2258 = vdwg.mxu0
        %v2259 = vadd.f32 %v2045, %v2240
        %v2260 = vadd.f32 %v2046, %v2242
        %v2261 = vadd.f32 %v2047, %v2245
        %v2262 = vadd.f32 %v2048, %v2247
        %v2263 = vadd.f32 %v2049, %v2250
        %v2264 = vadd.f32 %v2050, %v2252
        %v2265 = vadd.f32 %v2051, %v2255
        %v2266 = vadd.f32 %v2052, %v2257
        %v2267 = vld [vmem:[%s1950] sm:$0xe]
        %v2268 = vld [vmem:[%s1950 + $0x8] sm:$0xe]
        %v2269 = vld [vmem:[%s1950 + $0x10] sm:$0xe]
        %v2270 = vld [vmem:[%s1950 + $0x18] sm:$0xe]
        %v2271 = vld [vmem:[%s1950 + $0x20] sm:$0xe]
        %v2272 = vld [vmem:[%s1950 + $0x28] sm:$0xe]
        %v2273 = vld [vmem:[%s1950 + $0x30] sm:$0xe]
        %v2274 = vld [vmem:[%s1950 + $0x38] sm:$0xe]
        %v2291 = vrot.slane %v2267, 5
        %v2292 = vrot.slane %v2291, 4
        %v2293 = vrot.slane %v2054, 5
        %v2294 = vsel %vm1373, %v2292, %v2293
        %v2295 = vrot.slane %v2268, 5
        %v2296 = vrot.slane %v2295, 4
        %v2297 = vrot.slane %v2056, 5
        %v2298 = vsel %vm1373, %v2296, %v2297
        %v2299 = vrot.slane %v2269, 5
        %v2300 = vrot.slane %v2299, 4
        %v2301 = vrot.slane %v2058, 5
        %v2302 = vsel %vm1373, %v2300, %v2301
        %v2303 = vrot.slane %v2270, 5
        %v2304 = vrot.slane %v2303, 4
        %v2305 = vrot.slane %v2060, 5
        %v2306 = vsel %vm1373, %v2304, %v2305
        %v2307 = vrot.slane %v2271, 5
        %v2308 = vrot.slane %v2307, 4
        %v2309 = vrot.slane %v2062, 5
        %v2310 = vsel %vm1373, %v2308, %v2309
        %v2311 = vrot.slane %v2272, 5
        %v2312 = vrot.slane %v2311, 4
        %v2313 = vrot.slane %v2064, 5
        %v2314 = vsel %vm1373, %v2312, %v2313
        %v2315 = vrot.slane %v2273, 5
        %v2316 = vrot.slane %v2315, 4
        %v2317 = vrot.slane %v2066, 5
        %v2318 = vsel %vm1373, %v2316, %v2317
        %v2319 = vrot.slane %v2274, 5
        %v2320 = vrot.slane %v2319, 4
        %v2321 = vrot.slane %v2068, 5
        %v2322 = vsel %vm1373, %v2320, %v2321
        %s2323 = scalar_lea.vmem %s4, 192
        %v2324 = vld [vmem:[%s2323] sm:$0xf]
        %v2325 = vld [vmem:[%s2323 + $0x4] sm:$0xf]
        %v2326 = vld [vmem:[%s2323 + $0x8] sm:$0xf]
        %v2327 = vld [vmem:[%s2323 + $0xc] sm:$0xf]
        %v2328 = vld [vmem:[%s2323 + $0x10] sm:$0xf]
        %v2329 = vld [vmem:[%s2323 + $0x14] sm:$0xf]
        %v2330 = vunpack.c.l.b16 %v2294
        %v2331 = vunpack.c.l.b16 %v2298
        %v2332 = vunpack.c.l.b16 %v2302
        %v2333 = vunpack.c.l.b16 %v2306
        %v2334 = vunpack.c.l.b16 %v2310
        %v2335 = vunpack.c.l.b16 %v2314
        %v2336 = vunpack.c.l.b16 %v2318
        %v2337 = vunpack.c.l.b16 %v2322
        %v2338 = vpack.c.b16 %v2331, %v2330
        %v2339 = vpack.c.b16 %v2333, %v2332
        %v2340 = vpack.c.b16 %v2335, %v2334
        %v2341 = vpack.c.b16 %v2337, %v2336
        %v2348 = vunpack.c.l.b16 %v2324
        %v2349 = vunpack.c.l.b16 %v2325
        %v2350 = vunpack.c.l.b16 %v2326
        %v2351 = vunpack.c.l.b16 %v2327
        %v2352 = vunpack.c.l.b16 %v2328
        %v2353 = vunpack.c.l.b16 %v2329
        %v2354 = vpack.c.b16 %v2349, %v2348
        %v2355 = vpack.c.b16 %v2351, %v2350
        %v2356 = vpack.c.b16 %v2353, %v2352
        %v2361 = vsel %vm1226, %v2338, 0
        %v2364 = vsel %vm1226, %v2339, 0
        %v2367 = vsel %vm1226, %v2340, 0
        %v2370 = vsel %vm1226, %v2341, 0
        %2372 = vmatpush.bf16.msra.mxu0 0
        %2373 = vmatpush.bf16.msra.mxu0 0
        %2374 = vmatpush.bf16.msra.mxu0 0
        %2375 = vmatpush.bf16.msra.mxu0 0
        %2376 = vmatpush.bf16.msra.mxu0 0
        %2377 = vmatpush.bf16.msra.mxu0 %v2356
        %2378 = vmatpush.bf16.msra.mxu0 %v2355
        %2379 = vmatpush.bf16.msra.mxu0 %v2354
        %2380 = vmatmul.bf16.gmra.mxu0 %v2361
        %v2381 = vpop.f32.mrf.mxu0
        %v2382 = vadd.f32 0.0, %v2381
        %v2383 = vpop.f32.mrf.mxu0
        %v2384 = vadd.f32 0.0, %v2383
        %2385 = vmatmul.bf16.gmra.mxu0 %v2364
        %v2386 = vpop.f32.mrf.mxu0
        %v2387 = vadd.f32 0.0, %v2386
        %v2388 = vpop.f32.mrf.mxu0
        %v2389 = vadd.f32 0.0, %v2388
        %2390 = vmatmul.bf16.gmra.mxu0 %v2367
        %v2391 = vpop.f32.mrf.mxu0
        %v2392 = vadd.f32 0.0, %v2391
        %v2393 = vpop.f32.mrf.mxu0
        %v2394 = vadd.f32 0.0, %v2393
        %2395 = vmatmul.bf16.gmra.mxu0 %v2370
        %v2396 = vpop.f32.mrf.mxu0
        %v2397 = vadd.f32 0.0, %v2396
        %v2398 = vpop.f32.mrf.mxu0
        %v2399 = vadd.f32 0.0, %v2398
        %2400 = vdwg.mxu0
        %v2401 = vadd.f32 %v2259, %v2382
        %v2402 = vadd.f32 %v2260, %v2384
        %v2403 = vadd.f32 %v2261, %v2387
        %v2404 = vadd.f32 %v2262, %v2389
        %v2405 = vadd.f32 %v2263, %v2392
        %v2406 = vadd.f32 %v2264, %v2394
        %v2407 = vadd.f32 %v2265, %v2397
        %v2408 = vadd.f32 %v2266, %v2399
        %v2409 = vld [vmem:[%s5] sm:$0x1]
        %v2411 = vperm.slane %v2409, 0
        %v2413 = vmul.f32 %v2401, %v2411
        %v2414 = vmul.f32 %v2402, %v2411
        %v2415 = vmul.f32 %v2403, %v2411
        %v2416 = vmul.f32 %v2404, %v2411
        %v2417 = vmul.f32 %v2405, %v2411
        %v2418 = vmul.f32 %v2406, %v2411
        %v2419 = vmul.f32 %v2407, %v2411
        %v2420 = vmul.f32 %v2408, %v2411
        %v2421 = vld [vmem:[%s6] sm:$0x1]
        %v2423 = vperm.slane %v2421, 0
        %v2425 = vadd.f32 %v2413, %v2423
        %v2426 = vadd.f32 %v2414, %v2423
        %v2427 = vadd.f32 %v2415, %v2423
        %v2428 = vadd.f32 %v2416, %v2423
        %v2429 = vadd.f32 %v2417, %v2423
        %v2430 = vadd.f32 %v2418, %v2423
        %v2431 = vadd.f32 %v2419, %v2423
        %v2432 = vadd.f32 %v2420, %v2423
        %v2433 = vmax.f32 %v2425, 0.0
        %v2434 = vmax.f32 %v2426, 0.0
        %v2435 = vmax.f32 %v2427, 0.0
        %v2436 = vmax.f32 %v2428, 0.0
        %v2437 = vmax.f32 %v2429, 0.0
        %v2438 = vmax.f32 %v2430, 0.0
        %v2439 = vmax.f32 %v2431, 0.0
        %v2440 = vmax.f32 %v2432, 0.0
        %vm2441 = vcmask 191488
        %2442 = vst.msk [vmem:[#allocation3] sm:$0xf] %vm2441, 0
        %2443 = vst.msk [vmem:[#allocation3 + $0x4] sm:$0xf] %vm2441, 0
        %vm2444 = vcmask 188416
        %2445 = vst.msk [vmem:[#allocation3 + $0x8] sm:$0x1] %vm2444, 0
        %s2446 = scalar_lea.vmem [#allocation3], 204
        %2447 = vst.msk [vmem:[%s2446] sm:$0xf] %vm2441, 0
        %2448 = vst.msk [vmem:[%s2446 + $0x4] sm:$0xf] %vm2441, 0
        %2449 = vst.msk [vmem:[%s2446 + $0x8] sm:$0x1] %vm2444, 0
        %vm2450 = vcmask 188416
        %vm2451 = vmand %vm2450, %vm574
        %v2452 = vld [vmem:[#allocation3] sm:$0x1]
        %v2453 = vsel %vm2451, 0, %v2452
        %2454 = vst [vmem:[#allocation3] sm:$0x1] %v2453
        %v2455 = vld [vmem:[#allocation3 + $0xc] sm:$0x1]
        %v2456 = vsel %vm2451, 0, %v2455
        %2457 = vst [vmem:[#allocation3 + $0xc] sm:$0x1] %v2456
        %v2458 = vld [vmem:[#allocation3 + $0x18] sm:$0x1]
        %v2459 = vsel %vm2451, 0, %v2458
        %2460 = vst [vmem:[#allocation3 + $0x18] sm:$0x1] %v2459
        %v2461 = vld [vmem:[#allocation3 + $0x24] sm:$0x1]
        %v2462 = vsel %vm2451, 0, %v2461
        %2463 = vst [vmem:[#allocation3 + $0x24] sm:$0x1] %v2462
        %v2464 = vld [vmem:[#allocation3 + $0x30] sm:$0x1]
        %v2465 = vsel %vm2451, 0, %v2464
        %2466 = vst [vmem:[#allocation3 + $0x30] sm:$0x1] %v2465
        %v2467 = vld [vmem:[#allocation3 + $0x3c] sm:$0x1]
        %v2468 = vsel %vm2451, 0, %v2467
        %2469 = vst [vmem:[#allocation3 + $0x3c] sm:$0x1] %v2468
        %v2470 = vld [vmem:[#allocation3 + $0x48] sm:$0x1]
        %v2471 = vsel %vm2451, 0, %v2470
        %2472 = vst [vmem:[#allocation3 + $0x48] sm:$0x1] %v2471
        %v2473 = vld [vmem:[#allocation3 + $0x54] sm:$0x1]
        %v2474 = vsel %vm2451, 0, %v2473
        %2475 = vst [vmem:[#allocation3 + $0x54] sm:$0x1] %v2474
        %v2476 = vld [vmem:[#allocation3 + $0x60] sm:$0x1]
        %v2477 = vsel %vm2451, 0, %v2476
        %2478 = vst [vmem:[#allocation3 + $0x60] sm:$0x1] %v2477
        %v2479 = vld [vmem:[#allocation3 + $0x6c] sm:$0x1]
        %v2480 = vsel %vm2451, 0, %v2479
        %2481 = vst [vmem:[#allocation3 + $0x6c] sm:$0x1] %v2480
        %v2482 = vld [vmem:[#allocation3 + $0x78] sm:$0x1]
        %v2483 = vsel %vm2451, 0, %v2482
        %2484 = vst [vmem:[#allocation3 + $0x78] sm:$0x1] %v2483
        %v2485 = vld [vmem:[#allocation3 + $0x84] sm:$0x1]
        %v2486 = vsel %vm2451, 0, %v2485
        %2487 = vst [vmem:[#allocation3 + $0x84] sm:$0x1] %v2486
        %v2488 = vld [vmem:[#allocation3 + $0x90] sm:$0x1]
        %v2489 = vsel %vm2451, 0, %v2488
        %2490 = vst [vmem:[#allocation3 + $0x90] sm:$0x1] %v2489
        %v2491 = vld [vmem:[#allocation3 + $0x9c] sm:$0x1]
        %v2492 = vsel %vm2451, 0, %v2491
        %2493 = vst [vmem:[#allocation3 + $0x9c] sm:$0x1] %v2492
        %v2494 = vld [vmem:[#allocation3 + $0xa8] sm:$0x1]
        %v2495 = vsel %vm2451, 0, %v2494
        %2496 = vst [vmem:[#allocation3 + $0xa8] sm:$0x1] %v2495
        %v2497 = vld [vmem:[#allocation3 + $0xb4] sm:$0x1]
        %v2498 = vsel %vm2451, 0, %v2497
        %2499 = vst [vmem:[#allocation3 + $0xb4] sm:$0x1] %v2498
        %v2500 = vld [vmem:[#allocation3 + $0xc0] sm:$0x1]
        %v2501 = vsel %vm2451, 0, %v2500
        %2502 = vst [vmem:[#allocation3 + $0xc0] sm:$0x1] %v2501
        %v2503 = vld [vmem:[#allocation3 + $0xcc] sm:$0x1]
        %v2504 = vsel %vm2451, 0, %v2503
        %2505 = vst [vmem:[#allocation3 + $0xcc] sm:$0x1] %v2504
        %vm2506 = vmand %vm2450, %vm606
        %v2507 = vld [vmem:[#allocation3 + $0x8] sm:$0x1]
        %v2508 = vsel %vm2506, 0, %v2507
        %2509 = vst [vmem:[#allocation3 + $0x8] sm:$0x1] %v2508
        %v2510 = vld [vmem:[#allocation3 + $0x14] sm:$0x1]
        %v2511 = vsel %vm2506, 0, %v2510
        %2512 = vst [vmem:[#allocation3 + $0x14] sm:$0x1] %v2511
        %v2513 = vld [vmem:[#allocation3 + $0x20] sm:$0x1]
        %v2514 = vsel %vm2506, 0, %v2513
        %2515 = vst [vmem:[#allocation3 + $0x20] sm:$0x1] %v2514
        %v2516 = vld [vmem:[#allocation3 + $0x2c] sm:$0x1]
        %v2517 = vsel %vm2506, 0, %v2516
        %2518 = vst [vmem:[#allocation3 + $0x2c] sm:$0x1] %v2517
        %v2519 = vld [vmem:[#allocation3 + $0x38] sm:$0x1]
        %v2520 = vsel %vm2506, 0, %v2519
        %2521 = vst [vmem:[#allocation3 + $0x38] sm:$0x1] %v2520
        %v2522 = vld [vmem:[#allocation3 + $0x44] sm:$0x1]
        %v2523 = vsel %vm2506, 0, %v2522
        %2524 = vst [vmem:[#allocation3 + $0x44] sm:$0x1] %v2523
        %v2525 = vld [vmem:[#allocation3 + $0x50] sm:$0x1]
        %v2526 = vsel %vm2506, 0, %v2525
        %2527 = vst [vmem:[#allocation3 + $0x50] sm:$0x1] %v2526
        %v2528 = vld [vmem:[#allocation3 + $0x5c] sm:$0x1]
        %v2529 = vsel %vm2506, 0, %v2528
        %2530 = vst [vmem:[#allocation3 + $0x5c] sm:$0x1] %v2529
        %v2531 = vld [vmem:[#allocation3 + $0x68] sm:$0x1]
        %v2532 = vsel %vm2506, 0, %v2531
        %2533 = vst [vmem:[#allocation3 + $0x68] sm:$0x1] %v2532
        %v2534 = vld [vmem:[#allocation3 + $0x74] sm:$0x1]
        %v2535 = vsel %vm2506, 0, %v2534
        %2536 = vst [vmem:[#allocation3 + $0x74] sm:$0x1] %v2535
        %v2537 = vld [vmem:[#allocation3 + $0x80] sm:$0x1]
        %v2538 = vsel %vm2506, 0, %v2537
        %2539 = vst [vmem:[#allocation3 + $0x80] sm:$0x1] %v2538
        %v2540 = vld [vmem:[#allocation3 + $0x8c] sm:$0x1]
        %v2541 = vsel %vm2506, 0, %v2540
        %2542 = vst [vmem:[#allocation3 + $0x8c] sm:$0x1] %v2541
        %v2543 = vld [vmem:[#allocation3 + $0x98] sm:$0x1]
        %v2544 = vsel %vm2506, 0, %v2543
        %2545 = vst [vmem:[#allocation3 + $0x98] sm:$0x1] %v2544
        %v2546 = vld [vmem:[#allocation3 + $0xa4] sm:$0x1]
        %v2547 = vsel %vm2506, 0, %v2546
        %2548 = vst [vmem:[#allocation3 + $0xa4] sm:$0x1] %v2547
        %v2549 = vld [vmem:[#allocation3 + $0xb0] sm:$0x1]
        %v2550 = vsel %vm2506, 0, %v2549
        %2551 = vst [vmem:[#allocation3 + $0xb0] sm:$0x1] %v2550
        %v2552 = vld [vmem:[#allocation3 + $0xbc] sm:$0x1]
        %v2553 = vsel %vm2506, 0, %v2552
        %2554 = vst [vmem:[#allocation3 + $0xbc] sm:$0x1] %v2553
        %v2555 = vld [vmem:[#allocation3 + $0xc8] sm:$0x1]
        %v2556 = vsel %vm2506, 0, %v2555
        %2557 = vst [vmem:[#allocation3 + $0xc8] sm:$0x1] %v2556
        %v2558 = vld [vmem:[#allocation3 + $0xd4] sm:$0x1]
        %v2559 = vsel %vm2506, 0, %v2558
        %2560 = vst [vmem:[#allocation3 + $0xd4] sm:$0x1] %v2559
        %v2561 = vld [vmem:[%s550] sm:$0xff]
        %v2562 = vld [vmem:[%s550 + $0x8] sm:$0xff]
        %v2563 = vld [vmem:[%s550 + $0x10] sm:$0xff]
        %v2564 = vld [vmem:[%s550 + $0x18] sm:$0xff]
        %v2565 = vld [vmem:[%s550 + $0x20] sm:$0xff]
        %v2566 = vld [vmem:[%s550 + $0x28] sm:$0xff]
        %v2567 = vld [vmem:[%s550 + $0x30] sm:$0xff]
        %v2568 = vld [vmem:[%s550 + $0x38] sm:$0xff]
        %v2569 = vld [vmem:[%s550 + $0x40] sm:$0xff]
        %v2570 = vld [vmem:[%s550 + $0x48] sm:$0xff]
        %v2571 = vld [vmem:[%s550 + $0x50] sm:$0xff]
        %v2572 = vld [vmem:[%s550 + $0x58] sm:$0xff]
        %v2573 = vld [vmem:[%s550 + $0x60] sm:$0xff]
        %v2574 = vld [vmem:[%s550 + $0x68] sm:$0xff]
        %v2575 = vld [vmem:[%s550 + $0x70] sm:$0xff]
        %v2576 = vld [vmem:[%s550 + $0x78] sm:$0xff]
        %v2577 = vld [vmem:[%s550 + $0x80] sm:$0xff]
        %v2578 = vld [vmem:[%s550 + $0x88] sm:$0xff]
        %v2579 = vld [vmem:[%s550 + $0x90] sm:$0xff]
        %v2580 = vld [vmem:[%s550 + $0x98] sm:$0xff]
        %v2581 = vld [vmem:[%s550 + $0xa0] sm:$0xff]
        %v2582 = vld [vmem:[%s550 + $0xa8] sm:$0xff]
        %v2583 = vld [vmem:[%s550 + $0xb0] sm:$0xff]
        %v2584 = vld [vmem:[%s550 + $0xb8] sm:$0xff]
        %v2585 = vld [vmem:[%s550 + $0xc0] sm:$0xff]
        %v2586 = vld [vmem:[%s550 + $0xc8] sm:$0xff]
        %v2587 = vld [vmem:[%s550 + $0xd0] sm:$0xff]
        %v2588 = vld [vmem:[%s550 + $0xd8] sm:$0xff]
        %v2589 = vld [vmem:[%s550 + $0xe0] sm:$0xff]
        %v2590 = vld [vmem:[%s550 + $0xe8] sm:$0xff]
        %v2591 = vld [vmem:[%s550 + $0xf0] sm:$0xff]
        %v2592 = vld [vmem:[%s550 + $0xf8] sm:$0xff]
        %v2593 = vpack.c.bf16 %v2561, %v2561
        %v2594 = vpack.c.bf16 %v2562, %v2562
        %v2595 = vpack.c.bf16 %v2563, %v2563
        %v2596 = vpack.c.bf16 %v2564, %v2564
        %v2597 = vpack.c.bf16 %v2565, %v2565
        %v2598 = vpack.c.bf16 %v2566, %v2566
        %v2599 = vpack.c.bf16 %v2567, %v2567
        %v2600 = vpack.c.bf16 %v2568, %v2568
        %v2601 = vpack.c.bf16 %v2569, %v2569
        %v2602 = vpack.c.bf16 %v2570, %v2570
        %v2603 = vpack.c.bf16 %v2571, %v2571
        %v2604 = vpack.c.bf16 %v2572, %v2572
        %v2605 = vpack.c.bf16 %v2573, %v2573
        %v2606 = vpack.c.bf16 %v2574, %v2574
        %v2607 = vpack.c.bf16 %v2575, %v2575
        %v2608 = vpack.c.bf16 %v2576, %v2576
        %v2609 = vpack.c.bf16 %v2577, %v2577
        %v2610 = vpack.c.bf16 %v2578, %v2578
        %v2611 = vpack.c.bf16 %v2579, %v2579
        %v2612 = vpack.c.bf16 %v2580, %v2580
        %v2613 = vpack.c.bf16 %v2581, %v2581
        %v2614 = vpack.c.bf16 %v2582, %v2582
        %v2615 = vpack.c.bf16 %v2583, %v2583
        %v2616 = vpack.c.bf16 %v2584, %v2584
        %v2617 = vpack.c.bf16 %v2585, %v2585
        %v2618 = vpack.c.bf16 %v2586, %v2586
        %v2619 = vpack.c.bf16 %v2587, %v2587
        %v2620 = vpack.c.bf16 %v2588, %v2588
        %v2621 = vpack.c.bf16 %v2589, %v2589
        %v2622 = vpack.c.bf16 %v2590, %v2590
        %v2623 = vpack.c.bf16 %v2591, %v2591
        %v2624 = vpack.c.bf16 %v2592, %v2592
        %vm2625 = vsmask.f32 4368
        %vm2626 = vmor %vm574, %vm2625
        %v2628 = vshrl.u32 %v2593, 16
        %v2630 = vrot.slane %v2628, 7
        %v2631 = vshll.u32 %v2593, 16
        %v2633 = vor.u32 %v2630, %v2631
        %v2634 = vrot.slane %v2630, 4
        %v2636 = vshrl.u32 %v2594, 16
        %v2638 = vrot.slane %v2636, 7
        %v2639 = vshll.u32 %v2594, 16
        %v2641 = vor.u32 %v2638, %v2639
        %v2642 = vsel %vm2626, %v2634, %v2641
        %v2643 = vrot.slane %v2638, 4
        %v2645 = vshrl.u32 %v2595, 16
        %v2647 = vrot.slane %v2645, 7
        %v2648 = vshll.u32 %v2595, 16
        %v2650 = vor.u32 %v2647, %v2648
        %v2651 = vrot.slane %v2647, 4
        %v2653 = vshrl.u32 %v2596, 16
        %v2655 = vrot.slane %v2653, 7
        %v2656 = vshll.u32 %v2596, 16
        %v2658 = vor.u32 %v2655, %v2656
        %v2659 = vsel %vm2626, %v2651, %v2658
        %v2660 = vrot.slane %v2655, 4
        %v2662 = vshrl.u32 %v2597, 16
        %v2664 = vrot.slane %v2662, 7
        %v2665 = vshll.u32 %v2597, 16
        %v2667 = vor.u32 %v2664, %v2665
        %v2668 = vrot.slane %v2664, 4
        %v2670 = vshrl.u32 %v2598, 16
        %v2672 = vrot.slane %v2670, 7
        %v2673 = vshll.u32 %v2598, 16
        %v2675 = vor.u32 %v2672, %v2673
        %v2676 = vsel %vm2626, %v2668, %v2675
        %v2677 = vrot.slane %v2672, 4
        %v2679 = vshrl.u32 %v2599, 16
        %v2681 = vrot.slane %v2679, 7
        %v2682 = vshll.u32 %v2599, 16
        %v2684 = vor.u32 %v2681, %v2682
        %v2685 = vrot.slane %v2681, 4
        %v2687 = vshrl.u32 %v2600, 16
        %v2689 = vrot.slane %v2687, 7
        %v2690 = vshll.u32 %v2600, 16
        %v2692 = vor.u32 %v2689, %v2690
        %v2693 = vsel %vm2626, %v2685, %v2692
        %v2694 = vrot.slane %v2689, 4
        %v2696 = vshrl.u32 %v2601, 16
        %v2698 = vrot.slane %v2696, 7
        %v2699 = vshll.u32 %v2601, 16
        %v2701 = vor.u32 %v2698, %v2699
        %v2702 = vrot.slane %v2698, 4
        %v2704 = vshrl.u32 %v2602, 16
        %v2706 = vrot.slane %v2704, 7
        %v2707 = vshll.u32 %v2602, 16
        %v2709 = vor.u32 %v2706, %v2707
        %v2710 = vsel %vm2626, %v2702, %v2709
        %v2711 = vrot.slane %v2706, 4
        %v2713 = vshrl.u32 %v2603, 16
        %v2715 = vrot.slane %v2713, 7
        %v2716 = vshll.u32 %v2603, 16
        %v2718 = vor.u32 %v2715, %v2716
        %v2719 = vrot.slane %v2715, 4
        %v2721 = vshrl.u32 %v2604, 16
        %v2723 = vrot.slane %v2721, 7
        %v2724 = vshll.u32 %v2604, 16
        %v2726 = vor.u32 %v2723, %v2724
        %v2727 = vsel %vm2626, %v2719, %v2726
        %v2728 = vrot.slane %v2723, 4
        %v2730 = vshrl.u32 %v2605, 16
        %v2732 = vrot.slane %v2730, 7
        %v2733 = vshll.u32 %v2605, 16
        %v2735 = vor.u32 %v2732, %v2733
        %v2736 = vrot.slane %v2732, 4
        %v2738 = vshrl.u32 %v2606, 16
        %v2740 = vrot.slane %v2738, 7
        %v2741 = vshll.u32 %v2606, 16
        %v2743 = vor.u32 %v2740, %v2741
        %v2744 = vsel %vm2626, %v2736, %v2743
        %v2745 = vrot.slane %v2740, 4
        %v2747 = vshrl.u32 %v2607, 16
        %v2749 = vrot.slane %v2747, 7
        %v2750 = vshll.u32 %v2607, 16
        %v2752 = vor.u32 %v2749, %v2750
        %v2753 = vrot.slane %v2749, 4
        %v2755 = vshrl.u32 %v2608, 16
        %v2757 = vrot.slane %v2755, 7
        %v2758 = vshll.u32 %v2608, 16
        %v2760 = vor.u32 %v2757, %v2758
        %v2761 = vsel %vm2626, %v2753, %v2760
        %v2762 = vrot.slane %v2757, 4
        %v2764 = vshrl.u32 %v2609, 16
        %v2766 = vrot.slane %v2764, 7
        %v2767 = vshll.u32 %v2609, 16
        %v2769 = vor.u32 %v2766, %v2767
        %v2770 = vrot.slane %v2766, 4
        %v2772 = vshrl.u32 %v2610, 16
        %v2774 = vrot.slane %v2772, 7
        %v2775 = vshll.u32 %v2610, 16
        %v2777 = vor.u32 %v2774, %v2775
        %v2778 = vsel %vm2626, %v2770, %v2777
        %v2779 = vrot.slane %v2774, 4
        %v2781 = vshrl.u32 %v2611, 16
        %v2783 = vrot.slane %v2781, 7
        %v2784 = vshll.u32 %v2611, 16
        %v2786 = vor.u32 %v2783, %v2784
        %v2787 = vrot.slane %v2783, 4
        %v2789 = vshrl.u32 %v2612, 16
        %v2791 = vrot.slane %v2789, 7
        %v2792 = vshll.u32 %v2612, 16
        %v2794 = vor.u32 %v2791, %v2792
        %v2795 = vsel %vm2626, %v2787, %v2794
        %v2796 = vrot.slane %v2791, 4
        %v2798 = vshrl.u32 %v2613, 16
        %v2800 = vrot.slane %v2798, 7
        %v2801 = vshll.u32 %v2613, 16
        %v2803 = vor.u32 %v2800, %v2801
        %v2804 = vrot.slane %v2800, 4
        %v2806 = vshrl.u32 %v2614, 16
        %v2808 = vrot.slane %v2806, 7
        %v2809 = vshll.u32 %v2614, 16
        %v2811 = vor.u32 %v2808, %v2809
        %v2812 = vsel %vm2626, %v2804, %v2811
        %v2813 = vrot.slane %v2808, 4
        %v2815 = vshrl.u32 %v2615, 16
        %v2817 = vrot.slane %v2815, 7
        %v2818 = vshll.u32 %v2615, 16
        %v2820 = vor.u32 %v2817, %v2818
        %v2821 = vrot.slane %v2817, 4
        %v2823 = vshrl.u32 %v2616, 16
        %v2825 = vrot.slane %v2823, 7
        %v2826 = vshll.u32 %v2616, 16
        %v2828 = vor.u32 %v2825, %v2826
        %v2829 = vsel %vm2626, %v2821, %v2828
        %v2830 = vrot.slane %v2825, 4
        %v2832 = vshrl.u32 %v2617, 16
        %v2834 = vrot.slane %v2832, 7
        %v2835 = vshll.u32 %v2617, 16
        %v2837 = vor.u32 %v2834, %v2835
        %v2838 = vrot.slane %v2834, 4
        %v2840 = vshrl.u32 %v2618, 16
        %v2842 = vrot.slane %v2840, 7
        %v2843 = vshll.u32 %v2618, 16
        %v2845 = vor.u32 %v2842, %v2843
        %v2846 = vsel %vm2626, %v2838, %v2845
        %v2847 = vrot.slane %v2842, 4
        %v2849 = vshrl.u32 %v2619, 16
        %v2851 = vrot.slane %v2849, 7
        %v2852 = vshll.u32 %v2619, 16
        %v2854 = vor.u32 %v2851, %v2852
        %v2855 = vrot.slane %v2851, 4
        %v2857 = vshrl.u32 %v2620, 16
        %v2859 = vrot.slane %v2857, 7
        %v2860 = vshll.u32 %v2620, 16
        %v2862 = vor.u32 %v2859, %v2860
        %v2863 = vsel %vm2626, %v2855, %v2862
        %v2864 = vrot.slane %v2859, 4
        %v2866 = vshrl.u32 %v2621, 16
        %v2868 = vrot.slane %v2866, 7
        %v2869 = vshll.u32 %v2621, 16
        %v2871 = vor.u32 %v2868, %v2869
        %v2872 = vrot.slane %v2868, 4
        %v2874 = vshrl.u32 %v2622, 16
        %v2876 = vrot.slane %v2874, 7
        %v2877 = vshll.u32 %v2622, 16
        %v2879 = vor.u32 %v2876, %v2877
        %v2880 = vsel %vm2626, %v2872, %v2879
        %v2881 = vrot.slane %v2876, 4
        %v2883 = vshrl.u32 %v2623, 16
        %v2885 = vrot.slane %v2883, 7
        %v2886 = vshll.u32 %v2623, 16
        %v2888 = vor.u32 %v2885, %v2886
        %v2889 = vrot.slane %v2885, 4
        %v2891 = vshrl.u32 %v2624, 16
        %v2893 = vrot.slane %v2891, 7
        %v2894 = vshll.u32 %v2624, 16
        %v2896 = vor.u32 %v2893, %v2894
        %v2897 = vsel %vm2626, %v2889, %v2896
        %v2898 = vrot.slane %v2893, 4
        %s2947 = scalar_lea.vmem [#allocation3], 12
        %vm2948 = vcmask 60416
        %vm2949 = vmand %vm2948, %vm606
        %v2950 = vld [vmem:[%s2947] sm:$0xf]
        %v2951 = vsel %vm2949, %v2633, %v2950
        %2952 = vst [vmem:[%s2947] sm:$0xf] %v2951
        %vm2953 = vcmask 60416
        %2954 = vst.msk [vmem:[%s2947 + $0x4] sm:$0xf] %vm2953, %v2642
        %vm2955 = vcmask 57344
        %vm2956 = vmand %vm2955, %vm574
        %v2957 = vld [vmem:[%s2947 + $0x8] sm:$0x1]
        %v2958 = vsel %vm2956, %v2643, %v2957
        %2959 = vst [vmem:[%s2947 + $0x8] sm:$0x1] %v2958
        %v2960 = vld [vmem:[%s2947 + $0xc] sm:$0xf]
        %v2961 = vsel %vm2949, %v2650, %v2960
        %2962 = vst [vmem:[%s2947 + $0xc] sm:$0xf] %v2961
        %2963 = vst.msk [vmem:[%s2947 + $0x10] sm:$0xf] %vm2953, %v2659
        %v2964 = vld [vmem:[%s2947 + $0x14] sm:$0x1]
        %v2965 = vsel %vm2956, %v2660, %v2964
        %2966 = vst [vmem:[%s2947 + $0x14] sm:$0x1] %v2965
        %v2967 = vld [vmem:[%s2947 + $0x18] sm:$0xf]
        %v2968 = vsel %vm2949, %v2667, %v2967
        %2969 = vst [vmem:[%s2947 + $0x18] sm:$0xf] %v2968
        %2970 = vst.msk [vmem:[%s2947 + $0x1c] sm:$0xf] %vm2953, %v2676
        %v2971 = vld [vmem:[%s2947 + $0x20] sm:$0x1]
        %v2972 = vsel %vm2956, %v2677, %v2971
        %2973 = vst [vmem:[%s2947 + $0x20] sm:$0x1] %v2972
        %v2974 = vld [vmem:[%s2947 + $0x24] sm:$0xf]
        %v2975 = vsel %vm2949, %v2684, %v2974
        %2976 = vst [vmem:[%s2947 + $0x24] sm:$0xf] %v2975
        %2977 = vst.msk [vmem:[%s2947 + $0x28] sm:$0xf] %vm2953, %v2693
        %v2978 = vld [vmem:[%s2947 + $0x2c] sm:$0x1]
        %v2979 = vsel %vm2956, %v2694, %v2978
        %2980 = vst [vmem:[%s2947 + $0x2c] sm:$0x1] %v2979
        %v2981 = vld [vmem:[%s2947 + $0x30] sm:$0xf]
        %v2982 = vsel %vm2949, %v2701, %v2981
        %2983 = vst [vmem:[%s2947 + $0x30] sm:$0xf] %v2982
        %2984 = vst.msk [vmem:[%s2947 + $0x34] sm:$0xf] %vm2953, %v2710
        %v2985 = vld [vmem:[%s2947 + $0x38] sm:$0x1]
        %v2986 = vsel %vm2956, %v2711, %v2985
        %2987 = vst [vmem:[%s2947 + $0x38] sm:$0x1] %v2986
        %v2988 = vld [vmem:[%s2947 + $0x3c] sm:$0xf]
        %v2989 = vsel %vm2949, %v2718, %v2988
        %2990 = vst [vmem:[%s2947 + $0x3c] sm:$0xf] %v2989
        %2991 = vst.msk [vmem:[%s2947 + $0x40] sm:$0xf] %vm2953, %v2727
        %v2992 = vld [vmem:[%s2947 + $0x44] sm:$0x1]
        %v2993 = vsel %vm2956, %v2728, %v2992
        %2994 = vst [vmem:[%s2947 + $0x44] sm:$0x1] %v2993
        %v2995 = vld [vmem:[%s2947 + $0x48] sm:$0xf]
        %v2996 = vsel %vm2949, %v2735, %v2995
        %2997 = vst [vmem:[%s2947 + $0x48] sm:$0xf] %v2996
        %2998 = vst.msk [vmem:[%s2947 + $0x4c] sm:$0xf] %vm2953, %v2744
        %v2999 = vld [vmem:[%s2947 + $0x50] sm:$0x1]
        %v3000 = vsel %vm2956, %v2745, %v2999
        %3001 = vst [vmem:[%s2947 + $0x50] sm:$0x1] %v3000
        %v3002 = vld [vmem:[%s2947 + $0x54] sm:$0xf]
        %v3003 = vsel %vm2949, %v2752, %v3002
        %3004 = vst [vmem:[%s2947 + $0x54] sm:$0xf] %v3003
        %3005 = vst.msk [vmem:[%s2947 + $0x58] sm:$0xf] %vm2953, %v2761
        %v3006 = vld [vmem:[%s2947 + $0x5c] sm:$0x1]
        %v3007 = vsel %vm2956, %v2762, %v3006
        %3008 = vst [vmem:[%s2947 + $0x5c] sm:$0x1] %v3007
        %v3009 = vld [vmem:[%s2947 + $0x60] sm:$0xf]
        %v3010 = vsel %vm2949, %v2769, %v3009
        %3011 = vst [vmem:[%s2947 + $0x60] sm:$0xf] %v3010
        %3012 = vst.msk [vmem:[%s2947 + $0x64] sm:$0xf] %vm2953, %v2778
        %v3013 = vld [vmem:[%s2947 + $0x68] sm:$0x1]
        %v3014 = vsel %vm2956, %v2779, %v3013
        %3015 = vst [vmem:[%s2947 + $0x68] sm:$0x1] %v3014
        %v3016 = vld [vmem:[%s2947 + $0x6c] sm:$0xf]
        %v3017 = vsel %vm2949, %v2786, %v3016
        %3018 = vst [vmem:[%s2947 + $0x6c] sm:$0xf] %v3017
        %3019 = vst.msk [vmem:[%s2947 + $0x70] sm:$0xf] %vm2953, %v2795
        %v3020 = vld [vmem:[%s2947 + $0x74] sm:$0x1]
        %v3021 = vsel %vm2956, %v2796, %v3020
        %3022 = vst [vmem:[%s2947 + $0x74] sm:$0x1] %v3021
        %v3023 = vld [vmem:[%s2947 + $0x78] sm:$0xf]
        %v3024 = vsel %vm2949, %v2803, %v3023
        %3025 = vst [vmem:[%s2947 + $0x78] sm:$0xf] %v3024
        %3026 = vst.msk [vmem:[%s2947 + $0x7c] sm:$0xf] %vm2953, %v2812
        %v3027 = vld [vmem:[%s2947 + $0x80] sm:$0x1]
        %v3028 = vsel %vm2956, %v2813, %v3027
        %3029 = vst [vmem:[%s2947 + $0x80] sm:$0x1] %v3028
        %v3030 = vld [vmem:[%s2947 + $0x84] sm:$0xf]
        %v3031 = vsel %vm2949, %v2820, %v3030
        %3032 = vst [vmem:[%s2947 + $0x84] sm:$0xf] %v3031
        %3033 = vst.msk [vmem:[%s2947 + $0x88] sm:$0xf] %vm2953, %v2829
        %v3034 = vld [vmem:[%s2947 + $0x8c] sm:$0x1]
        %v3035 = vsel %vm2956, %v2830, %v3034
        %3036 = vst [vmem:[%s2947 + $0x8c] sm:$0x1] %v3035
        %v3037 = vld [vmem:[%s2947 + $0x90] sm:$0xf]
        %v3038 = vsel %vm2949, %v2837, %v3037
        %3039 = vst [vmem:[%s2947 + $0x90] sm:$0xf] %v3038
        %3040 = vst.msk [vmem:[%s2947 + $0x94] sm:$0xf] %vm2953, %v2846
        %v3041 = vld [vmem:[%s2947 + $0x98] sm:$0x1]
        %v3042 = vsel %vm2956, %v2847, %v3041
        %3043 = vst [vmem:[%s2947 + $0x98] sm:$0x1] %v3042
        %v3044 = vld [vmem:[%s2947 + $0x9c] sm:$0xf]
        %v3045 = vsel %vm2949, %v2854, %v3044
        %3046 = vst [vmem:[%s2947 + $0x9c] sm:$0xf] %v3045
        %3047 = vst.msk [vmem:[%s2947 + $0xa0] sm:$0xf] %vm2953, %v2863
        %v3048 = vld [vmem:[%s2947 + $0xa4] sm:$0x1]
        %v3049 = vsel %vm2956, %v2864, %v3048
        %3050 = vst [vmem:[%s2947 + $0xa4] sm:$0x1] %v3049
        %v3051 = vld [vmem:[%s2947 + $0xa8] sm:$0xf]
        %v3052 = vsel %vm2949, %v2871, %v3051
        %3053 = vst [vmem:[%s2947 + $0xa8] sm:$0xf] %v3052
        %3054 = vst.msk [vmem:[%s2947 + $0xac] sm:$0xf] %vm2953, %v2880
        %v3055 = vld [vmem:[%s2947 + $0xb0] sm:$0x1]
        %v3056 = vsel %vm2956, %v2881, %v3055
        %3057 = vst [vmem:[%s2947 + $0xb0] sm:$0x1] %v3056
        %v3058 = vld [vmem:[%s2947 + $0xb4] sm:$0xf]
        %v3059 = vsel %vm2949, %v2888, %v3058
        %3060 = vst [vmem:[%s2947 + $0xb4] sm:$0xf] %v3059
        %3061 = vst.msk [vmem:[%s2947 + $0xb8] sm:$0xf] %vm2953, %v2897
        %v3062 = vld [vmem:[%s2947 + $0xbc] sm:$0x1]
        %v3063 = vsel %vm2956, %v2898, %v3062
        %3064 = vst [vmem:[%s2947 + $0xbc] sm:$0x1] %v3063
        %v3065 = vpack.c.bf16 %v2433, %v2433
        %v3066 = vpack.c.bf16 %v2434, %v2434
        %v3067 = vpack.c.bf16 %v2435, %v2435
        %v3068 = vpack.c.bf16 %v2436, %v2436
        %v3069 = vpack.c.bf16 %v2437, %v2437
        %v3070 = vpack.c.bf16 %v2438, %v2438
        %v3071 = vpack.c.bf16 %v2439, %v2439
        %v3072 = vpack.c.bf16 %v2440, %v2440
        %v3073 = vld [vmem:[%s7] sm:$0xf]
        %v3074 = vld [vmem:[%s7 + $0x4] sm:$0xf]
        %v3075 = vld [vmem:[%s7 + $0x8] sm:$0xf]
        %v3076 = vld [vmem:[%s7 + $0xc] sm:$0xf]
        %v3077 = vld [vmem:[%s7 + $0x10] sm:$0xf]
        %v3078 = vld [vmem:[%s7 + $0x14] sm:$0xf]
        %v3079 = vld [vmem:[%s7 + $0x18] sm:$0xf]
        %v3080 = vld [vmem:[%s7 + $0x1c] sm:$0xf]
        %v3081 = vld [vmem:[%s7 + $0x20] sm:$0xf]
        %v3082 = vld [vmem:[%s7 + $0x24] sm:$0xf]
        %v3083 = vld [vmem:[%s7 + $0x28] sm:$0xf]
        %v3084 = vld [vmem:[%s7 + $0x2c] sm:$0xf]
        %v3085 = vld [vmem:[%s7 + $0x30] sm:$0xf]
        %v3086 = vld [vmem:[%s7 + $0x34] sm:$0xf]
        %v3087 = vld [vmem:[%s7 + $0x38] sm:$0xf]
        %v3088 = vld [vmem:[%s7 + $0x3c] sm:$0xf]
        %v3089 = vld [vmem:[%s7 + $0x40] sm:$0xf]
        %v3090 = vld [vmem:[%s7 + $0x44] sm:$0xf]
        %v3091 = vld [vmem:[%s7 + $0x48] sm:$0xf]
        %v3092 = vld [vmem:[%s7 + $0x4c] sm:$0xf]
        %v3093 = vld [vmem:[%s7 + $0x50] sm:$0xf]
        %v3094 = vld [vmem:[%s7 + $0x54] sm:$0xf]
        %v3095 = vld [vmem:[%s7 + $0x58] sm:$0xf]
        %v3096 = vld [vmem:[%s7 + $0x5c] sm:$0xf]
        %v3097 = vld [vmem:[%s7 + $0x60] sm:$0xf]
        %v3098 = vld [vmem:[%s7 + $0x64] sm:$0xf]
        %v3099 = vld [vmem:[%s7 + $0x68] sm:$0xf]
        %v3100 = vld [vmem:[%s7 + $0x6c] sm:$0xf]
        %v3101 = vld [vmem:[%s7 + $0x70] sm:$0xf]
        %v3102 = vld [vmem:[%s7 + $0x74] sm:$0xf]
        %v3103 = vld [vmem:[%s7 + $0x78] sm:$0xf]
        %v3104 = vld [vmem:[%s7 + $0x7c] sm:$0xf]
        %v3137 = vunpack.c.l.b16 %v3073
        %v3138 = vunpack.c.l.b16 %v3074
        %v3139 = vunpack.c.l.b16 %v3075
        %v3140 = vunpack.c.l.b16 %v3076
        %v3141 = vunpack.c.l.b16 %v3077
        %v3142 = vunpack.c.l.b16 %v3078
        %v3143 = vunpack.c.l.b16 %v3079
        %v3144 = vunpack.c.l.b16 %v3080
        %v3145 = vunpack.c.l.b16 %v3081
        %v3146 = vunpack.c.l.b16 %v3082
        %v3147 = vunpack.c.l.b16 %v3083
        %v3148 = vunpack.c.l.b16 %v3084
        %v3149 = vunpack.c.l.b16 %v3085
        %v3150 = vunpack.c.l.b16 %v3086
        %v3151 = vunpack.c.l.b16 %v3087
        %v3152 = vunpack.c.l.b16 %v3088
        %v3153 = vunpack.c.l.b16 %v3089
        %v3154 = vunpack.c.l.b16 %v3090
        %v3155 = vunpack.c.l.b16 %v3091
        %v3156 = vunpack.c.l.b16 %v3092
        %v3157 = vunpack.c.l.b16 %v3093
        %v3158 = vunpack.c.l.b16 %v3094
        %v3159 = vunpack.c.l.b16 %v3095
        %v3160 = vunpack.c.l.b16 %v3096
        %v3161 = vunpack.c.l.b16 %v3097
        %v3162 = vunpack.c.l.b16 %v3098
        %v3163 = vunpack.c.l.b16 %v3099
        %v3164 = vunpack.c.l.b16 %v3100
        %v3165 = vunpack.c.l.b16 %v3101
        %v3166 = vunpack.c.l.b16 %v3102
        %v3167 = vunpack.c.l.b16 %v3103
        %v3168 = vunpack.c.l.b16 %v3104
        %v3169 = vpack.c.b16 %v3138, %v3137
        %v3170 = vpack.c.b16 %v3140, %v3139
        %v3171 = vpack.c.b16 %v3142, %v3141
        %v3172 = vpack.c.b16 %v3144, %v3143
        %v3173 = vpack.c.b16 %v3146, %v3145
        %v3174 = vpack.c.b16 %v3148, %v3147
        %v3175 = vpack.c.b16 %v3150, %v3149
        %v3176 = vpack.c.b16 %v3152, %v3151
        %v3177 = vpack.c.b16 %v3154, %v3153
        %v3178 = vpack.c.b16 %v3156, %v3155
        %v3179 = vpack.c.b16 %v3158, %v3157
        %v3180 = vpack.c.b16 %v3160, %v3159
        %v3181 = vpack.c.b16 %v3162, %v3161
        %v3182 = vpack.c.b16 %v3164, %v3163
        %v3183 = vpack.c.b16 %v3166, %v3165
        %v3184 = vpack.c.b16 %v3168, %v3167
        %v3193 = vunpack.c.l.b16 %v3065
        %v3194 = vunpack.c.l.b16 %v3066
        %v3195 = vunpack.c.l.b16 %v3067
        %v3196 = vunpack.c.l.b16 %v3068
        %v3197 = vunpack.c.l.b16 %v3069
        %v3198 = vunpack.c.l.b16 %v3070
        %v3199 = vunpack.c.l.b16 %v3071
        %v3200 = vunpack.c.l.b16 %v3072
        %v3201 = vpack.c.b16 %v3194, %v3193
        %v3202 = vpack.c.b16 %v3196, %v3195
        %v3203 = vpack.c.b16 %v3198, %v3197
        %v3204 = vpack.c.b16 %v3200, %v3199
        %vm3209 = vcmask 523264
        %v3211 = vsel %vm3209, %v3169, 0
        %v3214 = vsel %vm3209, %v3170, 0
        %v3217 = vsel %vm3209, %v3171, 0
        %v3220 = vsel %vm3209, %v3172, 0
        %v3223 = vsel %vm3209, %v3173, 0
        %v3226 = vsel %vm3209, %v3174, 0
        %v3229 = vsel %vm3209, %v3175, 0
        %v3232 = vsel %vm3209, %v3176, 0
        %v3235 = vsel %vm3209, %v3177, 0
        %v3238 = vsel %vm3209, %v3178, 0
        %v3241 = vsel %vm3209, %v3179, 0
        %v3244 = vsel %vm3209, %v3180, 0
        %v3247 = vsel %vm3209, %v3181, 0
        %v3250 = vsel %vm3209, %v3182, 0
        %v3253 = vsel %vm3209, %v3183, 0
        %v3256 = vsel %vm3209, %v3184, 0
        %3258 = vmatpush.bf16.msra.mxu0 0
        %3259 = vmatpush.bf16.msra.mxu0 0
        %3260 = vmatpush.bf16.msra.mxu0 0
        %3261 = vmatpush.bf16.msra.mxu0 0
        %3262 = vmatpush.bf16.msra.mxu0 %v3204
        %3263 = vmatpush.bf16.msra.mxu0 %v3203
        %3264 = vmatpush.bf16.msra.mxu0 %v3202
        %3265 = vmatpush.bf16.msra.mxu0 %v3201
        %3266 = vmatmul.bf16.gmra.mxu0 %v3211
        %v3267 = vpop.f32.mrf.mxu0
        %v3268 = vadd.f32 0.0, %v3267
        %v3269 = vpop.f32.mrf.mxu0
        %v3270 = vadd.f32 0.0, %v3269
        %3271 = vmatmul.bf16.gmra.mxu0 %v3214
        %v3272 = vpop.f32.mrf.mxu0
        %v3273 = vadd.f32 0.0, %v3272
        %v3274 = vpop.f32.mrf.mxu0
        %v3275 = vadd.f32 0.0, %v3274
        %3276 = vmatmul.bf16.gmra.mxu0 %v3217
        %v3277 = vpop.f32.mrf.mxu0
        %v3278 = vadd.f32 0.0, %v3277
        %v3279 = vpop.f32.mrf.mxu0
        %v3280 = vadd.f32 0.0, %v3279
        %3281 = vmatmul.bf16.gmra.mxu0 %v3220
        %v3282 = vpop.f32.mrf.mxu0
        %v3283 = vadd.f32 0.0, %v3282
        %v3284 = vpop.f32.mrf.mxu0
        %v3285 = vadd.f32 0.0, %v3284
        %3286 = vmatmul.bf16.gmra.mxu0 %v3223
        %v3287 = vpop.f32.mrf.mxu0
        %v3288 = vadd.f32 0.0, %v3287
        %v3289 = vpop.f32.mrf.mxu0
        %v3290 = vadd.f32 0.0, %v3289
        %3291 = vmatmul.bf16.gmra.mxu0 %v3226
        %v3292 = vpop.f32.mrf.mxu0
        %v3293 = vadd.f32 0.0, %v3292
        %v3294 = vpop.f32.mrf.mxu0
        %v3295 = vadd.f32 0.0, %v3294
        %3296 = vmatmul.bf16.gmra.mxu0 %v3229
        %v3297 = vpop.f32.mrf.mxu0
        %v3298 = vadd.f32 0.0, %v3297
        %v3299 = vpop.f32.mrf.mxu0
        %v3300 = vadd.f32 0.0, %v3299
        %3301 = vmatmul.bf16.gmra.mxu0 %v3232
        %v3302 = vpop.f32.mrf.mxu0
        %v3303 = vadd.f32 0.0, %v3302
        %v3304 = vpop.f32.mrf.mxu0
        %v3305 = vadd.f32 0.0, %v3304
        %3306 = vmatmul.bf16.gmra.mxu0 %v3235
        %v3307 = vpop.f32.mrf.mxu0
        %v3308 = vadd.f32 0.0, %v3307
        %v3309 = vpop.f32.mrf.mxu0
        %v3310 = vadd.f32 0.0, %v3309
        %3311 = vmatmul.bf16.gmra.mxu0 %v3238
        %v3312 = vpop.f32.mrf.mxu0
        %v3313 = vadd.f32 0.0, %v3312
        %v3314 = vpop.f32.mrf.mxu0
        %v3315 = vadd.f32 0.0, %v3314
        %3316 = vmatmul.bf16.gmra.mxu0 %v3241
        %v3317 = vpop.f32.mrf.mxu0
        %v3318 = vadd.f32 0.0, %v3317
        %v3319 = vpop.f32.mrf.mxu0
        %v3320 = vadd.f32 0.0, %v3319
        %3321 = vmatmul.bf16.gmra.mxu0 %v3244
        %v3322 = vpop.f32.mrf.mxu0
        %v3323 = vadd.f32 0.0, %v3322
        %v3324 = vpop.f32.mrf.mxu0
        %v3325 = vadd.f32 0.0, %v3324
        %3326 = vmatmul.bf16.gmra.mxu0 %v3247
        %v3327 = vpop.f32.mrf.mxu0
        %v3328 = vadd.f32 0.0, %v3327
        %v3329 = vpop.f32.mrf.mxu0
        %v3330 = vadd.f32 0.0, %v3329
        %3331 = vmatmul.bf16.gmra.mxu0 %v3250
        %v3332 = vpop.f32.mrf.mxu0
        %v3333 = vadd.f32 0.0, %v3332
        %v3334 = vpop.f32.mrf.mxu0
        %v3335 = vadd.f32 0.0, %v3334
        %3336 = vmatmul.bf16.gmra.mxu0 %v3253
        %v3337 = vpop.f32.mrf.mxu0
        %v3338 = vadd.f32 0.0, %v3337
        %v3339 = vpop.f32.mrf.mxu0
        %v3340 = vadd.f32 0.0, %v3339
        %3341 = vmatmul.bf16.gmra.mxu0 %v3256
        %v3342 = vpop.f32.mrf.mxu0
        %v3343 = vadd.f32 0.0, %v3342
        %v3344 = vpop.f32.mrf.mxu0
        %v3345 = vadd.f32 0.0, %v3344
        %3346 = vdwg.mxu0
        %v3347 = vpack.c.bf16 %v3268, %v3268
        %v3348 = vpack.c.bf16 %v3270, %v3270
        %v3349 = vpack.c.bf16 %v3273, %v3273
        %v3350 = vpack.c.bf16 %v3275, %v3275
        %v3351 = vpack.c.bf16 %v3278, %v3278
        %v3352 = vpack.c.bf16 %v3280, %v3280
        %v3353 = vpack.c.bf16 %v3283, %v3283
        %v3354 = vpack.c.bf16 %v3285, %v3285
        %v3355 = vpack.c.bf16 %v3288, %v3288
        %v3356 = vpack.c.bf16 %v3290, %v3290
        %v3357 = vpack.c.bf16 %v3293, %v3293
        %v3358 = vpack.c.bf16 %v3295, %v3295
        %v3359 = vpack.c.bf16 %v3298, %v3298
        %v3360 = vpack.c.bf16 %v3300, %v3300
        %v3361 = vpack.c.bf16 %v3303, %v3303
        %v3362 = vpack.c.bf16 %v3305, %v3305
        %v3363 = vpack.c.bf16 %v3308, %v3308
        %v3364 = vpack.c.bf16 %v3310, %v3310
        %v3365 = vpack.c.bf16 %v3313, %v3313
        %v3366 = vpack.c.bf16 %v3315, %v3315
        %v3367 = vpack.c.bf16 %v3318, %v3318
        %v3368 = vpack.c.bf16 %v3320, %v3320
        %v3369 = vpack.c.bf16 %v3323, %v3323
        %v3370 = vpack.c.bf16 %v3325, %v3325
        %v3371 = vpack.c.bf16 %v3328, %v3328
        %v3372 = vpack.c.bf16 %v3330, %v3330
        %v3373 = vpack.c.bf16 %v3333, %v3333
        %v3374 = vpack.c.bf16 %v3335, %v3335
        %v3375 = vpack.c.bf16 %v3338, %v3338
        %v3376 = vpack.c.bf16 %v3340, %v3340
        %v3377 = vpack.c.bf16 %v3343, %v3343
        %v3378 = vpack.c.bf16 %v3345, %v3345
        %v3380 = vshrl.u32 %v3347, 16
        %v3382 = vrot.slane %v3380, 7
        %v3383 = vshll.u32 %v3347, 16
        %v3385 = vor.u32 %v3382, %v3383
        %v3386 = vrot.slane %v3382, 4
        %v3388 = vshrl.u32 %v3348, 16
        %v3390 = vrot.slane %v3388, 7
        %v3391 = vshll.u32 %v3348, 16
        %v3393 = vor.u32 %v3390, %v3391
        %v3394 = vsel %vm2626, %v3386, %v3393
        %v3395 = vrot.slane %v3390, 4
        %v3397 = vshrl.u32 %v3349, 16
        %v3399 = vrot.slane %v3397, 7
        %v3400 = vshll.u32 %v3349, 16
        %v3402 = vor.u32 %v3399, %v3400
        %v3403 = vrot.slane %v3399, 4
        %v3405 = vshrl.u32 %v3350, 16
        %v3407 = vrot.slane %v3405, 7
        %v3408 = vshll.u32 %v3350, 16
        %v3410 = vor.u32 %v3407, %v3408
        %v3411 = vsel %vm2626, %v3403, %v3410
        %v3412 = vrot.slane %v3407, 4
        %v3414 = vshrl.u32 %v3351, 16
        %v3416 = vrot.slane %v3414, 7
        %v3417 = vshll.u32 %v3351, 16
        %v3419 = vor.u32 %v3416, %v3417
        %v3420 = vrot.slane %v3416, 4
        %v3422 = vshrl.u32 %v3352, 16
        %v3424 = vrot.slane %v3422, 7
        %v3425 = vshll.u32 %v3352, 16
        %v3427 = vor.u32 %v3424, %v3425
        %v3428 = vsel %vm2626, %v3420, %v3427
        %v3429 = vrot.slane %v3424, 4
        %v3431 = vshrl.u32 %v3353, 16
        %v3433 = vrot.slane %v3431, 7
        %v3434 = vshll.u32 %v3353, 16
        %v3436 = vor.u32 %v3433, %v3434
        %v3437 = vrot.slane %v3433, 4
        %v3439 = vshrl.u32 %v3354, 16
        %v3441 = vrot.slane %v3439, 7
        %v3442 = vshll.u32 %v3354, 16
        %v3444 = vor.u32 %v3441, %v3442
        %v3445 = vsel %vm2626, %v3437, %v3444
        %v3446 = vrot.slane %v3441, 4
        %v3448 = vshrl.u32 %v3355, 16
        %v3450 = vrot.slane %v3448, 7
        %v3451 = vshll.u32 %v3355, 16
        %v3453 = vor.u32 %v3450, %v3451
        %v3454 = vrot.slane %v3450, 4
        %v3456 = vshrl.u32 %v3356, 16
        %v3458 = vrot.slane %v3456, 7
        %v3459 = vshll.u32 %v3356, 16
        %v3461 = vor.u32 %v3458, %v3459
        %v3462 = vsel %vm2626, %v3454, %v3461
        %v3463 = vrot.slane %v3458, 4
        %v3465 = vshrl.u32 %v3357, 16
        %v3467 = vrot.slane %v3465, 7
        %v3468 = vshll.u32 %v3357, 16
        %v3470 = vor.u32 %v3467, %v3468
        %v3471 = vrot.slane %v3467, 4
        %v3473 = vshrl.u32 %v3358, 16
        %v3475 = vrot.slane %v3473, 7
        %v3476 = vshll.u32 %v3358, 16
        %v3478 = vor.u32 %v3475, %v3476
        %v3479 = vsel %vm2626, %v3471, %v3478
        %v3480 = vrot.slane %v3475, 4
        %v3482 = vshrl.u32 %v3359, 16
        %v3484 = vrot.slane %v3482, 7
        %v3485 = vshll.u32 %v3359, 16
        %v3487 = vor.u32 %v3484, %v3485
        %v3488 = vrot.slane %v3484, 4
        %v3490 = vshrl.u32 %v3360, 16
        %v3492 = vrot.slane %v3490, 7
        %v3493 = vshll.u32 %v3360, 16
        %v3495 = vor.u32 %v3492, %v3493
        %v3496 = vsel %vm2626, %v3488, %v3495
        %v3497 = vrot.slane %v3492, 4
        %v3499 = vshrl.u32 %v3361, 16
        %v3501 = vrot.slane %v3499, 7
        %v3502 = vshll.u32 %v3361, 16
        %v3504 = vor.u32 %v3501, %v3502
        %v3505 = vrot.slane %v3501, 4
        %v3507 = vshrl.u32 %v3362, 16
        %v3509 = vrot.slane %v3507, 7
        %v3510 = vshll.u32 %v3362, 16
        %v3512 = vor.u32 %v3509, %v3510
        %v3513 = vsel %vm2626, %v3505, %v3512
        %v3514 = vrot.slane %v3509, 4
        %v3516 = vshrl.u32 %v3363, 16
        %v3518 = vrot.slane %v3516, 7
        %v3519 = vshll.u32 %v3363, 16
        %v3521 = vor.u32 %v3518, %v3519
        %v3522 = vrot.slane %v3518, 4
        %v3524 = vshrl.u32 %v3364, 16
        %v3526 = vrot.slane %v3524, 7
        %v3527 = vshll.u32 %v3364, 16
        %v3529 = vor.u32 %v3526, %v3527
        %v3530 = vsel %vm2626, %v3522, %v3529
        %v3531 = vrot.slane %v3526, 4
        %v3533 = vshrl.u32 %v3365, 16
        %v3535 = vrot.slane %v3533, 7
        %v3536 = vshll.u32 %v3365, 16
        %v3538 = vor.u32 %v3535, %v3536
        %v3539 = vrot.slane %v3535, 4
        %v3541 = vshrl.u32 %v3366, 16
        %v3543 = vrot.slane %v3541, 7
        %v3544 = vshll.u32 %v3366, 16
        %v3546 = vor.u32 %v3543, %v3544
        %v3547 = vsel %vm2626, %v3539, %v3546
        %v3548 = vrot.slane %v3543, 4
        %v3550 = vshrl.u32 %v3367, 16
        %v3552 = vrot.slane %v3550, 7
        %v3553 = vshll.u32 %v3367, 16
        %v3555 = vor.u32 %v3552, %v3553
        %v3556 = vrot.slane %v3552, 4
        %v3558 = vshrl.u32 %v3368, 16
        %v3560 = vrot.slane %v3558, 7
        %v3561 = vshll.u32 %v3368, 16
        %v3563 = vor.u32 %v3560, %v3561
        %v3564 = vsel %vm2626, %v3556, %v3563
        %v3565 = vrot.slane %v3560, 4
        %v3567 = vshrl.u32 %v3369, 16
        %v3569 = vrot.slane %v3567, 7
        %v3570 = vshll.u32 %v3369, 16
        %v3572 = vor.u32 %v3569, %v3570
        %v3573 = vrot.slane %v3569, 4
        %v3575 = vshrl.u32 %v3370, 16
        %v3577 = vrot.slane %v3575, 7
        %v3578 = vshll.u32 %v3370, 16
        %v3580 = vor.u32 %v3577, %v3578
        %v3581 = vsel %vm2626, %v3573, %v3580
        %v3582 = vrot.slane %v3577, 4
        %v3584 = vshrl.u32 %v3371, 16
        %v3586 = vrot.slane %v3584, 7
        %v3587 = vshll.u32 %v3371, 16
        %v3589 = vor.u32 %v3586, %v3587
        %v3590 = vrot.slane %v3586, 4
        %v3592 = vshrl.u32 %v3372, 16
        %v3594 = vrot.slane %v3592, 7
        %v3595 = vshll.u32 %v3372, 16
        %v3597 = vor.u32 %v3594, %v3595
        %v3598 = vsel %vm2626, %v3590, %v3597
        %v3599 = vrot.slane %v3594, 4
        %v3601 = vshrl.u32 %v3373, 16
        %v3603 = vrot.slane %v3601, 7
        %v3604 = vshll.u32 %v3373, 16
        %v3606 = vor.u32 %v3603, %v3604
        %v3607 = vrot.slane %v3603, 4
        %v3609 = vshrl.u32 %v3374, 16
        %v3611 = vrot.slane %v3609, 7
        %v3612 = vshll.u32 %v3374, 16
        %v3614 = vor.u32 %v3611, %v3612
        %v3615 = vsel %vm2626, %v3607, %v3614
        %v3616 = vrot.slane %v3611, 4
        %v3618 = vshrl.u32 %v3375, 16
        %v3620 = vrot.slane %v3618, 7
        %v3621 = vshll.u32 %v3375, 16
        %v3623 = vor.u32 %v3620, %v3621
        %v3624 = vrot.slane %v3620, 4
        %v3626 = vshrl.u32 %v3376, 16
        %v3628 = vrot.slane %v3626, 7
        %v3629 = vshll.u32 %v3376, 16
        %v3631 = vor.u32 %v3628, %v3629
        %v3632 = vsel %vm2626, %v3624, %v3631
        %v3633 = vrot.slane %v3628, 4
        %v3635 = vshrl.u32 %v3377, 16
        %v3637 = vrot.slane %v3635, 7
        %v3638 = vshll.u32 %v3377, 16
        %v3640 = vor.u32 %v3637, %v3638
        %v3641 = vrot.slane %v3637, 4
        %v3643 = vshrl.u32 %v3378, 16
        %v3645 = vrot.slane %v3643, 7
        %v3646 = vshll.u32 %v3378, 16
        %v3648 = vor.u32 %v3645, %v3646
        %v3649 = vsel %vm2626, %v3641, %v3648
        %v3650 = vrot.slane %v3645, 4
        %3651 = vrot.lane.b32.xlu0 %v3385, 8
        %v3652 = vpop.permute.xlu0 %3651
        %3653 = vrot.lane.b32.xlu0 %v3394, 8
        %v3654 = vpop.permute.xlu0 %3653
        %3655 = vrot.lane.b32.xlu0 %v3395, 8
        %v3656 = vpop.permute.xlu0 %3655
        %3657 = vrot.lane.b32.xlu0 %v3402, 8
        %v3658 = vpop.permute.xlu0 %3657
        %3659 = vrot.lane.b32.xlu0 %v3411, 8
        %v3660 = vpop.permute.xlu0 %3659
        %3661 = vrot.lane.b32.xlu0 %v3412, 8
        %v3662 = vpop.permute.xlu0 %3661
        %3663 = vrot.lane.b32.xlu0 %v3419, 8
        %v3664 = vpop.permute.xlu0 %3663
        %3665 = vrot.lane.b32.xlu0 %v3428, 8
        %v3666 = vpop.permute.xlu0 %3665
        %3667 = vrot.lane.b32.xlu0 %v3429, 8
        %v3668 = vpop.permute.xlu0 %3667
        %3669 = vrot.lane.b32.xlu0 %v3436, 8
        %v3670 = vpop.permute.xlu0 %3669
        %3671 = vrot.lane.b32.xlu0 %v3445, 8
        %v3672 = vpop.permute.xlu0 %3671
        %3673 = vrot.lane.b32.xlu0 %v3446, 8
        %v3674 = vpop.permute.xlu0 %3673
        %3675 = vrot.lane.b32.xlu0 %v3453, 8
        %v3676 = vpop.permute.xlu0 %3675
        %3677 = vrot.lane.b32.xlu0 %v3462, 8
        %v3678 = vpop.permute.xlu0 %3677
        %3679 = vrot.lane.b32.xlu0 %v3463, 8
        %v3680 = vpop.permute.xlu0 %3679
        %3681 = vrot.lane.b32.xlu0 %v3470, 8
        %v3682 = vpop.permute.xlu0 %3681
        %3683 = vrot.lane.b32.xlu0 %v3479, 8
        %v3684 = vpop.permute.xlu0 %3683
        %3685 = vrot.lane.b32.xlu0 %v3480, 8
        %v3686 = vpop.permute.xlu0 %3685
        %3687 = vrot.lane.b32.xlu0 %v3487, 8
        %v3688 = vpop.permute.xlu0 %3687
        %3689 = vrot.lane.b32.xlu0 %v3496, 8
        %v3690 = vpop.permute.xlu0 %3689
        %3691 = vrot.lane.b32.xlu0 %v3497, 8
        %v3692 = vpop.permute.xlu0 %3691
        %3693 = vrot.lane.b32.xlu0 %v3504, 8
        %v3694 = vpop.permute.xlu0 %3693
        %3695 = vrot.lane.b32.xlu0 %v3513, 8
        %v3696 = vpop.permute.xlu0 %3695
        %3697 = vrot.lane.b32.xlu0 %v3514, 8
        %v3698 = vpop.permute.xlu0 %3697
        %3699 = vrot.lane.b32.xlu0 %v3521, 8
        %v3700 = vpop.permute.xlu0 %3699
        %3701 = vrot.lane.b32.xlu0 %v3530, 8
        %v3702 = vpop.permute.xlu0 %3701
        %3703 = vrot.lane.b32.xlu0 %v3531, 8
        %v3704 = vpop.permute.xlu0 %3703
        %3705 = vrot.lane.b32.xlu0 %v3538, 8
        %v3706 = vpop.permute.xlu0 %3705
        %3707 = vrot.lane.b32.xlu0 %v3547, 8
        %v3708 = vpop.permute.xlu0 %3707
        %3709 = vrot.lane.b32.xlu0 %v3548, 8
        %v3710 = vpop.permute.xlu0 %3709
        %3711 = vrot.lane.b32.xlu0 %v3555, 8
        %v3712 = vpop.permute.xlu0 %3711
        %3713 = vrot.lane.b32.xlu0 %v3564, 8
        %v3714 = vpop.permute.xlu0 %3713
        %3715 = vrot.lane.b32.xlu0 %v3565, 8
        %v3716 = vpop.permute.xlu0 %3715
        %3717 = vrot.lane.b32.xlu0 %v3572, 8
        %v3718 = vpop.permute.xlu0 %3717
        %3719 = vrot.lane.b32.xlu0 %v3581, 8
        %v3720 = vpop.permute.xlu0 %3719
        %3721 = vrot.lane.b32.xlu0 %v3582, 8
        %v3722 = vpop.permute.xlu0 %3721
        %3723 = vrot.lane.b32.xlu0 %v3589, 8
        %v3724 = vpop.permute.xlu0 %3723
        %3725 = vrot.lane.b32.xlu0 %v3598, 8
        %v3726 = vpop.permute.xlu0 %3725
        %3727 = vrot.lane.b32.xlu0 %v3599, 8
        %v3728 = vpop.permute.xlu0 %3727
        %3729 = vrot.lane.b32.xlu0 %v3606, 8
        %v3730 = vpop.permute.xlu0 %3729
        %3731 = vrot.lane.b32.xlu0 %v3615, 8
        %v3732 = vpop.permute.xlu0 %3731
        %3733 = vrot.lane.b32.xlu0 %v3616, 8
        %v3734 = vpop.permute.xlu0 %3733
        %3735 = vrot.lane.b32.xlu0 %v3623, 8
        %v3736 = vpop.permute.xlu0 %3735
        %3737 = vrot.lane.b32.xlu0 %v3632, 8
        %v3738 = vpop.permute.xlu0 %3737
        %3739 = vrot.lane.b32.xlu0 %v3633, 8
        %v3740 = vpop.permute.xlu0 %3739
        %3741 = vrot.lane.b32.xlu0 %v3640, 8
        %v3742 = vpop.permute.xlu0 %3741
        %3743 = vrot.lane.b32.xlu0 %v3649, 8
        %v3744 = vpop.permute.xlu0 %3743
        %3745 = vrot.lane.b32.xlu0 %v3650, 8
        %v3746 = vpop.permute.xlu0 %3745
        %vm3795 = vcmask 191552
        %vm3796 = vmand %vm3795, %vm606
        %v3797 = vld [vmem:[%s2947] sm:$0xf]
        %v3798 = vsel %vm3796, %v3652, %v3797
        %3799 = vst [vmem:[%s2947] sm:$0xf] %v3798
        %vm3800 = vcmask 191552
        %3801 = vst.msk [vmem:[%s2947 + $0x4] sm:$0xf] %vm3800, %v3654
        %vm3802 = vcmask 188480
        %vm3803 = vmand %vm3802, %vm574
        %v3804 = vld [vmem:[%s2947 + $0x8] sm:$0x1]
        %v3805 = vsel %vm3803, %v3656, %v3804
        %3806 = vst [vmem:[%s2947 + $0x8] sm:$0x1] %v3805
        %v3807 = vld [vmem:[%s2947 + $0xc] sm:$0xf]
        %v3808 = vsel %vm3796, %v3658, %v3807
        %3809 = vst [vmem:[%s2947 + $0xc] sm:$0xf] %v3808
        %3810 = vst.msk [vmem:[%s2947 + $0x10] sm:$0xf] %vm3800, %v3660
        %v3811 = vld [vmem:[%s2947 + $0x14] sm:$0x1]
        %v3812 = vsel %vm3803, %v3662, %v3811
        %3813 = vst [vmem:[%s2947 + $0x14] sm:$0x1] %v3812
        %v3814 = vld [vmem:[%s2947 + $0x18] sm:$0xf]
        %v3815 = vsel %vm3796, %v3664, %v3814
        %3816 = vst [vmem:[%s2947 + $0x18] sm:$0xf] %v3815
        %3817 = vst.msk [vmem:[%s2947 + $0x1c] sm:$0xf] %vm3800, %v3666
        %v3818 = vld [vmem:[%s2947 + $0x20] sm:$0x1]
        %v3819 = vsel %vm3803, %v3668, %v3818
        %3820 = vst [vmem:[%s2947 + $0x20] sm:$0x1] %v3819
        %v3821 = vld [vmem:[%s2947 + $0x24] sm:$0xf]
        %v3822 = vsel %vm3796, %v3670, %v3821
        %3823 = vst [vmem:[%s2947 + $0x24] sm:$0xf] %v3822
        %3824 = vst.msk [vmem:[%s2947 + $0x28] sm:$0xf] %vm3800, %v3672
        %v3825 = vld [vmem:[%s2947 + $0x2c] sm:$0x1]
        %v3826 = vsel %vm3803, %v3674, %v3825
        %3827 = vst [vmem:[%s2947 + $0x2c] sm:$0x1] %v3826
        %v3828 = vld [vmem:[%s2947 + $0x30] sm:$0xf]
        %v3829 = vsel %vm3796, %v3676, %v3828
        %3830 = vst [vmem:[%s2947 + $0x30] sm:$0xf] %v3829
        %3831 = vst.msk [vmem:[%s2947 + $0x34] sm:$0xf] %vm3800, %v3678
        %v3832 = vld [vmem:[%s2947 + $0x38] sm:$0x1]
        %v3833 = vsel %vm3803, %v3680, %v3832
        %3834 = vst [vmem:[%s2947 + $0x38] sm:$0x1] %v3833
        %v3835 = vld [vmem:[%s2947 + $0x3c] sm:$0xf]
        %v3836 = vsel %vm3796, %v3682, %v3835
        %3837 = vst [vmem:[%s2947 + $0x3c] sm:$0xf] %v3836
        %3838 = vst.msk [vmem:[%s2947 + $0x40] sm:$0xf] %vm3800, %v3684
        %v3839 = vld [vmem:[%s2947 + $0x44] sm:$0x1]
        %v3840 = vsel %vm3803, %v3686, %v3839
        %3841 = vst [vmem:[%s2947 + $0x44] sm:$0x1] %v3840
        %v3842 = vld [vmem:[%s2947 + $0x48] sm:$0xf]
        %v3843 = vsel %vm3796, %v3688, %v3842
        %3844 = vst [vmem:[%s2947 + $0x48] sm:$0xf] %v3843
        %3845 = vst.msk [vmem:[%s2947 + $0x4c] sm:$0xf] %vm3800, %v3690
        %v3846 = vld [vmem:[%s2947 + $0x50] sm:$0x1]
        %v3847 = vsel %vm3803, %v3692, %v3846
        %3848 = vst [vmem:[%s2947 + $0x50] sm:$0x1] %v3847
        %v3849 = vld [vmem:[%s2947 + $0x54] sm:$0xf]
        %v3850 = vsel %vm3796, %v3694, %v3849
        %3851 = vst [vmem:[%s2947 + $0x54] sm:$0xf] %v3850
        %3852 = vst.msk [vmem:[%s2947 + $0x58] sm:$0xf] %vm3800, %v3696
        %v3853 = vld [vmem:[%s2947 + $0x5c] sm:$0x1]
        %v3854 = vsel %vm3803, %v3698, %v3853
        %3855 = vst [vmem:[%s2947 + $0x5c] sm:$0x1] %v3854
        %v3856 = vld [vmem:[%s2947 + $0x60] sm:$0xf]
        %v3857 = vsel %vm3796, %v3700, %v3856
        %3858 = vst [vmem:[%s2947 + $0x60] sm:$0xf] %v3857
        %3859 = vst.msk [vmem:[%s2947 + $0x64] sm:$0xf] %vm3800, %v3702
        %v3860 = vld [vmem:[%s2947 + $0x68] sm:$0x1]
        %v3861 = vsel %vm3803, %v3704, %v3860
        %3862 = vst [vmem:[%s2947 + $0x68] sm:$0x1] %v3861
        %v3863 = vld [vmem:[%s2947 + $0x6c] sm:$0xf]
        %v3864 = vsel %vm3796, %v3706, %v3863
        %3865 = vst [vmem:[%s2947 + $0x6c] sm:$0xf] %v3864
        %3866 = vst.msk [vmem:[%s2947 + $0x70] sm:$0xf] %vm3800, %v3708
        %v3867 = vld [vmem:[%s2947 + $0x74] sm:$0x1]
        %v3868 = vsel %vm3803, %v3710, %v3867
        %3869 = vst [vmem:[%s2947 + $0x74] sm:$0x1] %v3868
        %v3870 = vld [vmem:[%s2947 + $0x78] sm:$0xf]
        %v3871 = vsel %vm3796, %v3712, %v3870
        %3872 = vst [vmem:[%s2947 + $0x78] sm:$0xf] %v3871
        %3873 = vst.msk [vmem:[%s2947 + $0x7c] sm:$0xf] %vm3800, %v3714
        %v3874 = vld [vmem:[%s2947 + $0x80] sm:$0x1]
        %v3875 = vsel %vm3803, %v3716, %v3874
        %3876 = vst [vmem:[%s2947 + $0x80] sm:$0x1] %v3875
        %v3877 = vld [vmem:[%s2947 + $0x84] sm:$0xf]
        %v3878 = vsel %vm3796, %v3718, %v3877
        %3879 = vst [vmem:[%s2947 + $0x84] sm:$0xf] %v3878
        %3880 = vst.msk [vmem:[%s2947 + $0x88] sm:$0xf] %vm3800, %v3720
        %v3881 = vld [vmem:[%s2947 + $0x8c] sm:$0x1]
        %v3882 = vsel %vm3803, %v3722, %v3881
        %3883 = vst [vmem:[%s2947 + $0x8c] sm:$0x1] %v3882
        %v3884 = vld [vmem:[%s2947 + $0x90] sm:$0xf]
        %v3885 = vsel %vm3796, %v3724, %v3884
        %3886 = vst [vmem:[%s2947 + $0x90] sm:$0xf] %v3885
        %3887 = vst.msk [vmem:[%s2947 + $0x94] sm:$0xf] %vm3800, %v3726
        %v3888 = vld [vmem:[%s2947 + $0x98] sm:$0x1]
        %v3889 = vsel %vm3803, %v3728, %v3888
        %3890 = vst [vmem:[%s2947 + $0x98] sm:$0x1] %v3889
        %v3891 = vld [vmem:[%s2947 + $0x9c] sm:$0xf]
        %v3892 = vsel %vm3796, %v3730, %v3891
        %3893 = vst [vmem:[%s2947 + $0x9c] sm:$0xf] %v3892
        %3894 = vst.msk [vmem:[%s2947 + $0xa0] sm:$0xf] %vm3800, %v3732
        %v3895 = vld [vmem:[%s2947 + $0xa4] sm:$0x1]
        %v3896 = vsel %vm3803, %v3734, %v3895
        %3897 = vst [vmem:[%s2947 + $0xa4] sm:$0x1] %v3896
        %v3898 = vld [vmem:[%s2947 + $0xa8] sm:$0xf]
        %v3899 = vsel %vm3796, %v3736, %v3898
        %3900 = vst [vmem:[%s2947 + $0xa8] sm:$0xf] %v3899
        %3901 = vst.msk [vmem:[%s2947 + $0xac] sm:$0xf] %vm3800, %v3738
        %v3902 = vld [vmem:[%s2947 + $0xb0] sm:$0x1]
        %v3903 = vsel %vm3803, %v3740, %v3902
        %3904 = vst [vmem:[%s2947 + $0xb0] sm:$0x1] %v3903
        %v3905 = vld [vmem:[%s2947 + $0xb4] sm:$0xf]
        %v3906 = vsel %vm3796, %v3742, %v3905
        %3907 = vst [vmem:[%s2947 + $0xb4] sm:$0xf] %v3906
        %3908 = vst.msk [vmem:[%s2947 + $0xb8] sm:$0xf] %vm3800, %v3744
        %v3909 = vld [vmem:[%s2947 + $0xbc] sm:$0x1]
        %v3910 = vsel %vm3803, %v3746, %v3909
        %3911 = vst [vmem:[%s2947 + $0xbc] sm:$0x1] %v3910
        %v3912 = vld [vmem:[#allocation3] sm:$0xf]
        %v3913 = vld [vmem:[#allocation3 + $0x4] sm:$0xf]
        %v3914 = vld [vmem:[#allocation3 + $0xc] sm:$0xf]
        %v3915 = vld [vmem:[#allocation3 + $0x10] sm:$0xf]
        %v3916 = vld [vmem:[#allocation3 + $0x18] sm:$0xf]
        %v3917 = vld [vmem:[#allocation3 + $0x1c] sm:$0xf]
        %v3918 = vld [vmem:[#allocation3 + $0x24] sm:$0xf]
        %v3919 = vld [vmem:[#allocation3 + $0x28] sm:$0xf]
        %v3920 = vld [vmem:[#allocation3 + $0x30] sm:$0xf]
        %v3921 = vld [vmem:[#allocation3 + $0x34] sm:$0xf]
        %v3922 = vld [vmem:[#allocation3 + $0x3c] sm:$0xf]
        %v3923 = vld [vmem:[#allocation3 + $0x40] sm:$0xf]
        %v3924 = vld [vmem:[#allocation3 + $0x48] sm:$0xf]
        %v3925 = vld [vmem:[#allocation3 + $0x4c] sm:$0xf]
        %v3926 = vld [vmem:[#allocation3 + $0x54] sm:$0xf]
        %v3927 = vld [vmem:[#allocation3 + $0x58] sm:$0xf]
        %v3928 = vld [vmem:[#allocation3 + $0x60] sm:$0xf]
        %v3929 = vld [vmem:[#allocation3 + $0x64] sm:$0xf]
        %v3930 = vld [vmem:[#allocation3 + $0x6c] sm:$0xf]
        %v3931 = vld [vmem:[#allocation3 + $0x70] sm:$0xf]
        %v3932 = vld [vmem:[#allocation3 + $0x78] sm:$0xf]
        %v3933 = vld [vmem:[#allocation3 + $0x7c] sm:$0xf]
        %v3934 = vld [vmem:[#allocation3 + $0x84] sm:$0xf]
        %v3935 = vld [vmem:[#allocation3 + $0x88] sm:$0xf]
        %v3936 = vld [vmem:[#allocation3 + $0x90] sm:$0xf]
        %v3937 = vld [vmem:[#allocation3 + $0x94] sm:$0xf]
        %v3938 = vld [vmem:[#allocation3 + $0x9c] sm:$0xf]
        %v3939 = vld [vmem:[#allocation3 + $0xa0] sm:$0xf]
        %v3940 = vld [vmem:[#allocation3 + $0xa8] sm:$0xf]
        %v3941 = vld [vmem:[#allocation3 + $0xac] sm:$0xf]
        %v3942 = vld [vmem:[#allocation3 + $0xb4] sm:$0xf]
        %v3943 = vld [vmem:[#allocation3 + $0xb8] sm:$0xf]
        %v3944 = vld [vmem:[%s8] sm:$0xf]
        %v3945 = vld [vmem:[%s8 + $0x4] sm:$0xf]
        %v3946 = vld [vmem:[%s8 + $0x8] sm:$0xf]
        %v3947 = vld [vmem:[#allocation3 + $0x8] sm:$0x1]
        %v3948 = vld [vmem:[#allocation3 + $0x14] sm:$0x1]
        %v3949 = vld [vmem:[#allocation3 + $0x20] sm:$0x1]
        %v3950 = vld [vmem:[#allocation3 + $0x2c] sm:$0x1]
        %v3951 = vld [vmem:[#allocation3 + $0x38] sm:$0x1]
        %v3952 = vld [vmem:[#allocation3 + $0x44] sm:$0x1]
        %v3953 = vld [vmem:[#allocation3 + $0x50] sm:$0x1]
        %v3954 = vld [vmem:[#allocation3 + $0x5c] sm:$0x1]
        %v3955 = vld [vmem:[#allocation3 + $0x68] sm:$0x1]
        %v3956 = vld [vmem:[#allocation3 + $0x74] sm:$0x1]
        %v3957 = vld [vmem:[#allocation3 + $0x80] sm:$0x1]
        %v3958 = vld [vmem:[#allocation3 + $0x8c] sm:$0x1]
        %v3959 = vld [vmem:[#allocation3 + $0x98] sm:$0x1]
        %v3960 = vld [vmem:[#allocation3 + $0xa4] sm:$0x1]
        %v3961 = vld [vmem:[#allocation3 + $0xb0] sm:$0x1]
        %v3962 = vld [vmem:[#allocation3 + $0xbc] sm:$0x1]
        %v3964 = vshrl.u32 %v3912, 16
        %v3966 = vrot.slane %v3964, 4
        %v3967 = vshll.u32 %v3912, 16
        %v3969 = vrot.slane %v3967, 5
        %v3970 = vor.u32 %v3966, %v3969
        %v3971 = vrot.slane %v3970, 4
        %v3973 = vshll.u32 %v3913, 16
        %v3975 = vrot.slane %v3973, 5
        %v3976 = vsel %vm1076, %v3971, %v3975
        %v3977 = vshrl.u32 %v3913, 16
        %v3979 = vrot.slane %v3977, 4
        %v3980 = vor.u32 %v3979, %v3975
        %v3981 = vrot.slane %v3980, 4
        %v3983 = vshll.u32 %v3947, 16
        %v3985 = vrot.slane %v3983, 5
        %v3986 = vsel %vm1076, %v3981, %v3985
        %v3988 = vshrl.u32 %v3914, 16
        %v3990 = vrot.slane %v3988, 4
        %v3991 = vshll.u32 %v3914, 16
        %v3993 = vrot.slane %v3991, 5
        %v3994 = vor.u32 %v3990, %v3993
        %v3995 = vrot.slane %v3994, 4
        %v3997 = vshll.u32 %v3915, 16
        %v3999 = vrot.slane %v3997, 5
        %v4000 = vsel %vm1076, %v3995, %v3999
        %v4001 = vshrl.u32 %v3915, 16
        %v4003 = vrot.slane %v4001, 4
        %v4004 = vor.u32 %v4003, %v3999
        %v4005 = vrot.slane %v4004, 4
        %v4007 = vshll.u32 %v3948, 16
        %v4009 = vrot.slane %v4007, 5
        %v4010 = vsel %vm1076, %v4005, %v4009
        %v4012 = vshrl.u32 %v3916, 16
        %v4014 = vrot.slane %v4012, 4
        %v4015 = vshll.u32 %v3916, 16
        %v4017 = vrot.slane %v4015, 5
        %v4018 = vor.u32 %v4014, %v4017
        %v4019 = vrot.slane %v4018, 4
        %v4021 = vshll.u32 %v3917, 16
        %v4023 = vrot.slane %v4021, 5
        %v4024 = vsel %vm1076, %v4019, %v4023
        %v4025 = vshrl.u32 %v3917, 16
        %v4027 = vrot.slane %v4025, 4
        %v4028 = vor.u32 %v4027, %v4023
        %v4029 = vrot.slane %v4028, 4
        %v4031 = vshll.u32 %v3949, 16
        %v4033 = vrot.slane %v4031, 5
        %v4034 = vsel %vm1076, %v4029, %v4033
        %v4036 = vshrl.u32 %v3918, 16
        %v4038 = vrot.slane %v4036, 4
        %v4039 = vshll.u32 %v3918, 16
        %v4041 = vrot.slane %v4039, 5
        %v4042 = vor.u32 %v4038, %v4041
        %v4043 = vrot.slane %v4042, 4
        %v4045 = vshll.u32 %v3919, 16
        %v4047 = vrot.slane %v4045, 5
        %v4048 = vsel %vm1076, %v4043, %v4047
        %v4049 = vshrl.u32 %v3919, 16
        %v4051 = vrot.slane %v4049, 4
        %v4052 = vor.u32 %v4051, %v4047
        %v4053 = vrot.slane %v4052, 4
        %v4055 = vshll.u32 %v3950, 16
        %v4057 = vrot.slane %v4055, 5
        %v4058 = vsel %vm1076, %v4053, %v4057
        %v4060 = vshrl.u32 %v3920, 16
        %v4062 = vrot.slane %v4060, 4
        %v4063 = vshll.u32 %v3920, 16
        %v4065 = vrot.slane %v4063, 5
        %v4066 = vor.u32 %v4062, %v4065
        %v4067 = vrot.slane %v4066, 4
        %v4069 = vshll.u32 %v3921, 16
        %v4071 = vrot.slane %v4069, 5
        %v4072 = vsel %vm1076, %v4067, %v4071
        %v4073 = vshrl.u32 %v3921, 16
        %v4075 = vrot.slane %v4073, 4
        %v4076 = vor.u32 %v4075, %v4071
        %v4077 = vrot.slane %v4076, 4
        %v4079 = vshll.u32 %v3951, 16
        %v4081 = vrot.slane %v4079, 5
        %v4082 = vsel %vm1076, %v4077, %v4081
        %v4084 = vshrl.u32 %v3922, 16
        %v4086 = vrot.slane %v4084, 4
        %v4087 = vshll.u32 %v3922, 16
        %v4089 = vrot.slane %v4087, 5
        %v4090 = vor.u32 %v4086, %v4089
        %v4091 = vrot.slane %v4090, 4
        %v4093 = vshll.u32 %v3923, 16
        %v4095 = vrot.slane %v4093, 5
        %v4096 = vsel %vm1076, %v4091, %v4095
        %v4097 = vshrl.u32 %v3923, 16
        %v4099 = vrot.slane %v4097, 4
        %v4100 = vor.u32 %v4099, %v4095
        %v4101 = vrot.slane %v4100, 4
        %v4103 = vshll.u32 %v3952, 16
        %v4105 = vrot.slane %v4103, 5
        %v4106 = vsel %vm1076, %v4101, %v4105
        %v4108 = vshrl.u32 %v3924, 16
        %v4110 = vrot.slane %v4108, 4
        %v4111 = vshll.u32 %v3924, 16
        %v4113 = vrot.slane %v4111, 5
        %v4114 = vor.u32 %v4110, %v4113
        %v4115 = vrot.slane %v4114, 4
        %v4117 = vshll.u32 %v3925, 16
        %v4119 = vrot.slane %v4117, 5
        %v4120 = vsel %vm1076, %v4115, %v4119
        %v4121 = vshrl.u32 %v3925, 16
        %v4123 = vrot.slane %v4121, 4
        %v4124 = vor.u32 %v4123, %v4119
        %v4125 = vrot.slane %v4124, 4
        %v4127 = vshll.u32 %v3953, 16
        %v4129 = vrot.slane %v4127, 5
        %v4130 = vsel %vm1076, %v4125, %v4129
        %v4132 = vshrl.u32 %v3926, 16
        %v4134 = vrot.slane %v4132, 4
        %v4135 = vshll.u32 %v3926, 16
        %v4137 = vrot.slane %v4135, 5
        %v4138 = vor.u32 %v4134, %v4137
        %v4139 = vrot.slane %v4138, 4
        %v4141 = vshll.u32 %v3927, 16
        %v4143 = vrot.slane %v4141, 5
        %v4144 = vsel %vm1076, %v4139, %v4143
        %v4145 = vshrl.u32 %v3927, 16
        %v4147 = vrot.slane %v4145, 4
        %v4148 = vor.u32 %v4147, %v4143
        %v4149 = vrot.slane %v4148, 4
        %v4151 = vshll.u32 %v3954, 16
        %v4153 = vrot.slane %v4151, 5
        %v4154 = vsel %vm1076, %v4149, %v4153
        %v4156 = vshrl.u32 %v3928, 16
        %v4158 = vrot.slane %v4156, 4
        %v4159 = vshll.u32 %v3928, 16
        %v4161 = vrot.slane %v4159, 5
        %v4162 = vor.u32 %v4158, %v4161
        %v4163 = vrot.slane %v4162, 4
        %v4165 = vshll.u32 %v3929, 16
        %v4167 = vrot.slane %v4165, 5
        %v4168 = vsel %vm1076, %v4163, %v4167
        %v4169 = vshrl.u32 %v3929, 16
        %v4171 = vrot.slane %v4169, 4
        %v4172 = vor.u32 %v4171, %v4167
        %v4173 = vrot.slane %v4172, 4
        %v4175 = vshll.u32 %v3955, 16
        %v4177 = vrot.slane %v4175, 5
        %v4178 = vsel %vm1076, %v4173, %v4177
        %v4180 = vshrl.u32 %v3930, 16
        %v4182 = vrot.slane %v4180, 4
        %v4183 = vshll.u32 %v3930, 16
        %v4185 = vrot.slane %v4183, 5
        %v4186 = vor.u32 %v4182, %v4185
        %v4187 = vrot.slane %v4186, 4
        %v4189 = vshll.u32 %v3931, 16
        %v4191 = vrot.slane %v4189, 5
        %v4192 = vsel %vm1076, %v4187, %v4191
        %v4193 = vshrl.u32 %v3931, 16
        %v4195 = vrot.slane %v4193, 4
        %v4196 = vor.u32 %v4195, %v4191
        %v4197 = vrot.slane %v4196, 4
        %v4199 = vshll.u32 %v3956, 16
        %v4201 = vrot.slane %v4199, 5
        %v4202 = vsel %vm1076, %v4197, %v4201
        %v4204 = vshrl.u32 %v3932, 16
        %v4206 = vrot.slane %v4204, 4
        %v4207 = vshll.u32 %v3932, 16
        %v4209 = vrot.slane %v4207, 5
        %v4210 = vor.u32 %v4206, %v4209
        %v4211 = vrot.slane %v4210, 4
        %v4213 = vshll.u32 %v3933, 16
        %v4215 = vrot.slane %v4213, 5
        %v4216 = vsel %vm1076, %v4211, %v4215
        %v4217 = vshrl.u32 %v3933, 16
        %v4219 = vrot.slane %v4217, 4
        %v4220 = vor.u32 %v4219, %v4215
        %v4221 = vrot.slane %v4220, 4
        %v4223 = vshll.u32 %v3957, 16
        %v4225 = vrot.slane %v4223, 5
        %v4226 = vsel %vm1076, %v4221, %v4225
        %v4228 = vshrl.u32 %v3934, 16
        %v4230 = vrot.slane %v4228, 4
        %v4231 = vshll.u32 %v3934, 16
        %v4233 = vrot.slane %v4231, 5
        %v4234 = vor.u32 %v4230, %v4233
        %v4235 = vrot.slane %v4234, 4
        %v4237 = vshll.u32 %v3935, 16
        %v4239 = vrot.slane %v4237, 5
        %v4240 = vsel %vm1076, %v4235, %v4239
        %v4241 = vshrl.u32 %v3935, 16
        %v4243 = vrot.slane %v4241, 4
        %v4244 = vor.u32 %v4243, %v4239
        %v4245 = vrot.slane %v4244, 4
        %v4247 = vshll.u32 %v3958, 16
        %v4249 = vrot.slane %v4247, 5
        %v4250 = vsel %vm1076, %v4245, %v4249
        %v4252 = vshrl.u32 %v3936, 16
        %v4254 = vrot.slane %v4252, 4
        %v4255 = vshll.u32 %v3936, 16
        %v4257 = vrot.slane %v4255, 5
        %v4258 = vor.u32 %v4254, %v4257
        %v4259 = vrot.slane %v4258, 4
        %v4261 = vshll.u32 %v3937, 16
        %v4263 = vrot.slane %v4261, 5
        %v4264 = vsel %vm1076, %v4259, %v4263
        %v4265 = vshrl.u32 %v3937, 16
        %v4267 = vrot.slane %v4265, 4
        %v4268 = vor.u32 %v4267, %v4263
        %v4269 = vrot.slane %v4268, 4
        %v4271 = vshll.u32 %v3959, 16
        %v4273 = vrot.slane %v4271, 5
        %v4274 = vsel %vm1076, %v4269, %v4273
        %v4276 = vshrl.u32 %v3938, 16
        %v4278 = vrot.slane %v4276, 4
        %v4279 = vshll.u32 %v3938, 16
        %v4281 = vrot.slane %v4279, 5
        %v4282 = vor.u32 %v4278, %v4281
        %v4283 = vrot.slane %v4282, 4
        %v4285 = vshll.u32 %v3939, 16
        %v4287 = vrot.slane %v4285, 5
        %v4288 = vsel %vm1076, %v4283, %v4287
        %v4289 = vshrl.u32 %v3939, 16
        %v4291 = vrot.slane %v4289, 4
        %v4292 = vor.u32 %v4291, %v4287
        %v4293 = vrot.slane %v4292, 4
        %v4295 = vshll.u32 %v3960, 16
        %v4297 = vrot.slane %v4295, 5
        %v4298 = vsel %vm1076, %v4293, %v4297
        %v4300 = vshrl.u32 %v3940, 16
        %v4302 = vrot.slane %v4300, 4
        %v4303 = vshll.u32 %v3940, 16
        %v4305 = vrot.slane %v4303, 5
        %v4306 = vor.u32 %v4302, %v4305
        %v4307 = vrot.slane %v4306, 4
        %v4309 = vshll.u32 %v3941, 16
        %v4311 = vrot.slane %v4309, 5
        %v4312 = vsel %vm1076, %v4307, %v4311
        %v4313 = vshrl.u32 %v3941, 16
        %v4315 = vrot.slane %v4313, 4
        %v4316 = vor.u32 %v4315, %v4311
        %v4317 = vrot.slane %v4316, 4
        %v4319 = vshll.u32 %v3961, 16
        %v4321 = vrot.slane %v4319, 5
        %v4322 = vsel %vm1076, %v4317, %v4321
        %v4324 = vshrl.u32 %v3942, 16
        %v4326 = vrot.slane %v4324, 4
        %v4327 = vshll.u32 %v3942, 16
        %v4329 = vrot.slane %v4327, 5
        %v4330 = vor.u32 %v4326, %v4329
        %v4331 = vrot.slane %v4330, 4
        %v4333 = vshll.u32 %v3943, 16
        %v4335 = vrot.slane %v4333, 5
        %v4336 = vsel %vm1076, %v4331, %v4335
        %v4337 = vshrl.u32 %v3943, 16
        %v4339 = vrot.slane %v4337, 4
        %v4340 = vor.u32 %v4339, %v4335
        %v4341 = vrot.slane %v4340, 4
        %v4343 = vshll.u32 %v3962, 16
        %v4345 = vrot.slane %v4343, 5
        %v4346 = vsel %vm1076, %v4341, %v4345
        %s4347 = scalar_lea.vmem %s8, 12
        %v4348 = vld [vmem:[%s4347] sm:$0xf]
        %v4349 = vld [vmem:[%s4347 + $0x4] sm:$0xf]
        %v4350 = vld [vmem:[%s4347 + $0x8] sm:$0xf]
        %v4351 = vunpack.c.l.b16 %v3976
        %v4352 = vunpack.c.l.b16 %v3986
        %v4353 = vunpack.c.l.b16 %v4000
        %v4354 = vunpack.c.l.b16 %v4010
        %v4355 = vunpack.c.l.b16 %v4024
        %v4356 = vunpack.c.l.b16 %v4034
        %v4357 = vunpack.c.l.b16 %v4048
        %v4358 = vunpack.c.l.b16 %v4058
        %v4359 = vunpack.c.l.b16 %v4072
        %v4360 = vunpack.c.l.b16 %v4082
        %v4361 = vunpack.c.l.b16 %v4096
        %v4362 = vunpack.c.l.b16 %v4106
        %v4363 = vunpack.c.l.b16 %v4120
        %v4364 = vunpack.c.l.b16 %v4130
        %v4365 = vunpack.c.l.b16 %v4144
        %v4366 = vunpack.c.l.b16 %v4154
        %v4367 = vunpack.c.l.b16 %v4168
        %v4368 = vunpack.c.l.b16 %v4178
        %v4369 = vunpack.c.l.b16 %v4192
        %v4370 = vunpack.c.l.b16 %v4202
        %v4371 = vunpack.c.l.b16 %v4216
        %v4372 = vunpack.c.l.b16 %v4226
        %v4373 = vunpack.c.l.b16 %v4240
        %v4374 = vunpack.c.l.b16 %v4250
        %v4375 = vunpack.c.l.b16 %v4264
        %v4376 = vunpack.c.l.b16 %v4274
        %v4377 = vunpack.c.l.b16 %v4288
        %v4378 = vunpack.c.l.b16 %v4298
        %v4379 = vunpack.c.l.b16 %v4312
        %v4380 = vunpack.c.l.b16 %v4322
        %v4381 = vunpack.c.l.b16 %v4336
        %v4382 = vunpack.c.l.b16 %v4346
        %v4383 = vpack.c.b16 %v4352, %v4351
        %v4384 = vpack.c.b16 %v4354, %v4353
        %v4385 = vpack.c.b16 %v4356, %v4355
        %v4386 = vpack.c.b16 %v4358, %v4357
        %v4387 = vpack.c.b16 %v4360, %v4359
        %v4388 = vpack.c.b16 %v4362, %v4361
        %v4389 = vpack.c.b16 %v4364, %v4363
        %v4390 = vpack.c.b16 %v4366, %v4365
        %v4391 = vpack.c.b16 %v4368, %v4367
        %v4392 = vpack.c.b16 %v4370, %v4369
        %v4393 = vpack.c.b16 %v4372, %v4371
        %v4394 = vpack.c.b16 %v4374, %v4373
        %v4395 = vpack.c.b16 %v4376, %v4375
        %v4396 = vpack.c.b16 %v4378, %v4377
        %v4397 = vpack.c.b16 %v4380, %v4379
        %v4398 = vpack.c.b16 %v4382, %v4381
        %v4402 = vunpack.c.l.b16 %v4348
        %v4403 = vunpack.c.l.b16 %v4349
        %v4404 = vunpack.c.l.b16 %v4350
        %v4405 = vpack.c.b16 %v4403, %v4402
        %v4406 = vpack.c.b16 %v4404, %v4404
        %vm4408 = vcmask 195584
        %v4410 = vsel %vm4408, %v4383, 0
        %v4413 = vsel %vm4408, %v4384, 0
        %v4416 = vsel %vm4408, %v4385, 0
        %v4419 = vsel %vm4408, %v4386, 0
        %v4422 = vsel %vm4408, %v4387, 0
        %v4425 = vsel %vm4408, %v4388, 0
        %v4428 = vsel %vm4408, %v4389, 0
        %v4431 = vsel %vm4408, %v4390, 0
        %v4434 = vsel %vm4408, %v4391, 0
        %v4437 = vsel %vm4408, %v4392, 0
        %v4440 = vsel %vm4408, %v4393, 0
        %v4443 = vsel %vm4408, %v4394, 0
        %v4446 = vsel %vm4408, %v4395, 0
        %v4449 = vsel %vm4408, %v4396, 0
        %v4452 = vsel %vm4408, %v4397, 0
        %v4455 = vsel %vm4408, %v4398, 0
        %vm4457 = vcmask 1043456
        %v4459 = vsel %vm4457, %v4406, 0
        %4461 = vmatpush.bf16.msra.mxu0 0
        %4462 = vmatpush.bf16.msra.mxu0 0
        %4463 = vmatpush.bf16.msra.mxu0 0
        %4464 = vmatpush.bf16.msra.mxu0 0
        %4465 = vmatpush.bf16.msra.mxu0 0
        %4466 = vmatpush.bf16.msra.mxu0 0
        %4467 = vmatpush.bf16.msra.mxu0 %v4459
        %4468 = vmatpush.bf16.msra.mxu0 %v4405
        %4469 = vmatmul.bf16.gmra.mxu0 %v4410
        %v4470 = vpop.f32.mrf.mxu0
        %v4471 = vadd.f32 0.0, %v4470
        %v4472 = vpop.f32.mrf.mxu0
        %v4473 = vadd.f32 0.0, %v4472
        %4474 = vmatmul.bf16.gmra.mxu0 %v4413
        %v4475 = vpop.f32.mrf.mxu0
        %v4476 = vadd.f32 0.0, %v4475
        %v4477 = vpop.f32.mrf.mxu0
        %v4478 = vadd.f32 0.0, %v4477
        %4479 = vmatmul.bf16.gmra.mxu0 %v4416
        %v4480 = vpop.f32.mrf.mxu0
        %v4481 = vadd.f32 0.0, %v4480
        %v4482 = vpop.f32.mrf.mxu0
        %v4483 = vadd.f32 0.0, %v4482
        %4484 = vmatmul.bf16.gmra.mxu0 %v4419
        %v4485 = vpop.f32.mrf.mxu0
        %v4486 = vadd.f32 0.0, %v4485
        %v4487 = vpop.f32.mrf.mxu0
        %v4488 = vadd.f32 0.0, %v4487
        %4489 = vmatmul.bf16.gmra.mxu0 %v4422
        %v4490 = vpop.f32.mrf.mxu0
        %v4491 = vadd.f32 0.0, %v4490
        %v4492 = vpop.f32.mrf.mxu0
        %v4493 = vadd.f32 0.0, %v4492
        %4494 = vmatmul.bf16.gmra.mxu0 %v4425
        %v4495 = vpop.f32.mrf.mxu0
        %v4496 = vadd.f32 0.0, %v4495
        %v4497 = vpop.f32.mrf.mxu0
        %v4498 = vadd.f32 0.0, %v4497
        %4499 = vmatmul.bf16.gmra.mxu0 %v4428
        %v4500 = vpop.f32.mrf.mxu0
        %v4501 = vadd.f32 0.0, %v4500
        %v4502 = vpop.f32.mrf.mxu0
        %v4503 = vadd.f32 0.0, %v4502
        %4504 = vmatmul.bf16.gmra.mxu0 %v4431
        %v4505 = vpop.f32.mrf.mxu0
        %v4506 = vadd.f32 0.0, %v4505
        %v4507 = vpop.f32.mrf.mxu0
        %v4508 = vadd.f32 0.0, %v4507
        %4509 = vmatmul.bf16.gmra.mxu0 %v4434
        %v4510 = vpop.f32.mrf.mxu0
        %v4511 = vadd.f32 0.0, %v4510
        %v4512 = vpop.f32.mrf.mxu0
        %v4513 = vadd.f32 0.0, %v4512
        %4514 = vmatmul.bf16.gmra.mxu0 %v4437
        %v4515 = vpop.f32.mrf.mxu0
        %v4516 = vadd.f32 0.0, %v4515
        %v4517 = vpop.f32.mrf.mxu0
        %v4518 = vadd.f32 0.0, %v4517
        %4519 = vmatmul.bf16.gmra.mxu0 %v4440
        %v4520 = vpop.f32.mrf.mxu0
        %v4521 = vadd.f32 0.0, %v4520
        %v4522 = vpop.f32.mrf.mxu0
        %v4523 = vadd.f32 0.0, %v4522
        %4524 = vmatmul.bf16.gmra.mxu0 %v4443
        %v4525 = vpop.f32.mrf.mxu0
        %v4526 = vadd.f32 0.0, %v4525
        %v4527 = vpop.f32.mrf.mxu0
        %v4528 = vadd.f32 0.0, %v4527
        %4529 = vmatmul.bf16.gmra.mxu0 %v4446
        %v4530 = vpop.f32.mrf.mxu0
        %v4531 = vadd.f32 0.0, %v4530
        %v4532 = vpop.f32.mrf.mxu0
        %v4533 = vadd.f32 0.0, %v4532
        %4534 = vmatmul.bf16.gmra.mxu0 %v4449
        %v4535 = vpop.f32.mrf.mxu0
        %v4536 = vadd.f32 0.0, %v4535
        %v4537 = vpop.f32.mrf.mxu0
        %v4538 = vadd.f32 0.0, %v4537
        %4539 = vmatmul.bf16.gmra.mxu0 %v4452
        %v4540 = vpop.f32.mrf.mxu0
        %v4541 = vadd.f32 0.0, %v4540
        %v4542 = vpop.f32.mrf.mxu0
        %v4543 = vadd.f32 0.0, %v4542
        %4544 = vmatmul.bf16.gmra.mxu0 %v4455
        %v4545 = vpop.f32.mrf.mxu0
        %v4546 = vadd.f32 0.0, %v4545
        %v4547 = vpop.f32.mrf.mxu0
        %v4548 = vadd.f32 0.0, %v4547
        %4549 = vdwg.mxu0
        %v4582 = vunpack.c.l.b16 %v3912
        %v4583 = vunpack.c.l.b16 %v3913
        %v4584 = vunpack.c.l.b16 %v3914
        %v4585 = vunpack.c.l.b16 %v3915
        %v4586 = vunpack.c.l.b16 %v3916
        %v4587 = vunpack.c.l.b16 %v3917
        %v4588 = vunpack.c.l.b16 %v3918
        %v4589 = vunpack.c.l.b16 %v3919
        %v4590 = vunpack.c.l.b16 %v3920
        %v4591 = vunpack.c.l.b16 %v3921
        %v4592 = vunpack.c.l.b16 %v3922
        %v4593 = vunpack.c.l.b16 %v3923
        %v4594 = vunpack.c.l.b16 %v3924
        %v4595 = vunpack.c.l.b16 %v3925
        %v4596 = vunpack.c.l.b16 %v3926
        %v4597 = vunpack.c.l.b16 %v3927
        %v4598 = vunpack.c.l.b16 %v3928
        %v4599 = vunpack.c.l.b16 %v3929
        %v4600 = vunpack.c.l.b16 %v3930
        %v4601 = vunpack.c.l.b16 %v3931
        %v4602 = vunpack.c.l.b16 %v3932
        %v4603 = vunpack.c.l.b16 %v3933
        %v4604 = vunpack.c.l.b16 %v3934
        %v4605 = vunpack.c.l.b16 %v3935
        %v4606 = vunpack.c.l.b16 %v3936
        %v4607 = vunpack.c.l.b16 %v3937
        %v4608 = vunpack.c.l.b16 %v3938
        %v4609 = vunpack.c.l.b16 %v3939
        %v4610 = vunpack.c.l.b16 %v3940
        %v4611 = vunpack.c.l.b16 %v3941
        %v4612 = vunpack.c.l.b16 %v3942
        %v4613 = vunpack.c.l.b16 %v3943
        %v4614 = vpack.c.b16 %v4583, %v4582
        %v4615 = vpack.c.b16 %v4585, %v4584
        %v4616 = vpack.c.b16 %v4587, %v4586
        %v4617 = vpack.c.b16 %v4589, %v4588
        %v4618 = vpack.c.b16 %v4591, %v4590
        %v4619 = vpack.c.b16 %v4593, %v4592
        %v4620 = vpack.c.b16 %v4595, %v4594
        %v4621 = vpack.c.b16 %v4597, %v4596
        %v4622 = vpack.c.b16 %v4599, %v4598
        %v4623 = vpack.c.b16 %v4601, %v4600
        %v4624 = vpack.c.b16 %v4603, %v4602
        %v4625 = vpack.c.b16 %v4605, %v4604
        %v4626 = vpack.c.b16 %v4607, %v4606
        %v4627 = vpack.c.b16 %v4609, %v4608
        %v4628 = vpack.c.b16 %v4611, %v4610
        %v4629 = vpack.c.b16 %v4613, %v4612
        %v4633 = vunpack.c.l.b16 %v3944
        %v4634 = vunpack.c.l.b16 %v3945
        %v4635 = vunpack.c.l.b16 %v3946
        %v4636 = vpack.c.b16 %v4634, %v4633
        %v4637 = vpack.c.b16 %v4635, %v4635
        %v4640 = vsel %vm4408, %v4614, 0
        %v4643 = vsel %vm4408, %v4615, 0
        %v4646 = vsel %vm4408, %v4616, 0
        %v4649 = vsel %vm4408, %v4617, 0
        %v4652 = vsel %vm4408, %v4618, 0
        %v4655 = vsel %vm4408, %v4619, 0
        %v4658 = vsel %vm4408, %v4620, 0
        %v4661 = vsel %vm4408, %v4621, 0
        %v4664 = vsel %vm4408, %v4622, 0
        %v4667 = vsel %vm4408, %v4623, 0
        %v4670 = vsel %vm4408, %v4624, 0
        %v4673 = vsel %vm4408, %v4625, 0
        %v4676 = vsel %vm4408, %v4626, 0
        %v4679 = vsel %vm4408, %v4627, 0
        %v4682 = vsel %vm4408, %v4628, 0
        %v4685 = vsel %vm4408, %v4629, 0
        %v4688 = vsel %vm4457, %v4637, 0
        %4690 = vmatpush.bf16.msra.mxu0 0
        %4691 = vmatpush.bf16.msra.mxu0 0
        %4692 = vmatpush.bf16.msra.mxu0 0
        %4693 = vmatpush.bf16.msra.mxu0 0
        %4694 = vmatpush.bf16.msra.mxu0 0
        %4695 = vmatpush.bf16.msra.mxu0 0
        %4696 = vmatpush.bf16.msra.mxu0 %v4688
        %4697 = vmatpush.bf16.msra.mxu0 %v4636
        %4698 = vmatmul.bf16.gmra.mxu0 %v4640
        %v4699 = vpop.f32.mrf.mxu0
        %v4700 = vadd.f32 %v4471, %v4699
        %v4701 = vpop.f32.mrf.mxu0
        %v4702 = vadd.f32 %v4473, %v4701
        %4703 = vmatmul.bf16.gmra.mxu0 %v4643
        %v4704 = vpop.f32.mrf.mxu0
        %v4705 = vadd.f32 %v4476, %v4704
        %v4706 = vpop.f32.mrf.mxu0
        %v4707 = vadd.f32 %v4478, %v4706
        %4708 = vmatmul.bf16.gmra.mxu0 %v4646
        %v4709 = vpop.f32.mrf.mxu0
        %v4710 = vadd.f32 %v4481, %v4709
        %v4711 = vpop.f32.mrf.mxu0
        %v4712 = vadd.f32 %v4483, %v4711
        %4713 = vmatmul.bf16.gmra.mxu0 %v4649
        %v4714 = vpop.f32.mrf.mxu0
        %v4715 = vadd.f32 %v4486, %v4714
        %v4716 = vpop.f32.mrf.mxu0
        %v4717 = vadd.f32 %v4488, %v4716
        %4718 = vmatmul.bf16.gmra.mxu0 %v4652
        %v4719 = vpop.f32.mrf.mxu0
        %v4720 = vadd.f32 %v4491, %v4719
        %v4721 = vpop.f32.mrf.mxu0
        %v4722 = vadd.f32 %v4493, %v4721
        %4723 = vmatmul.bf16.gmra.mxu0 %v4655
        %v4724 = vpop.f32.mrf.mxu0
        %v4725 = vadd.f32 %v4496, %v4724
        %v4726 = vpop.f32.mrf.mxu0
        %v4727 = vadd.f32 %v4498, %v4726
        %4728 = vmatmul.bf16.gmra.mxu0 %v4658
        %v4729 = vpop.f32.mrf.mxu0
        %v4730 = vadd.f32 %v4501, %v4729
        %v4731 = vpop.f32.mrf.mxu0
        %v4732 = vadd.f32 %v4503, %v4731
        %4733 = vmatmul.bf16.gmra.mxu0 %v4661
        %v4734 = vpop.f32.mrf.mxu0
        %v4735 = vadd.f32 %v4506, %v4734
        %v4736 = vpop.f32.mrf.mxu0
        %v4737 = vadd.f32 %v4508, %v4736
        %4738 = vmatmul.bf16.gmra.mxu0 %v4664
        %v4739 = vpop.f32.mrf.mxu0
        %v4740 = vadd.f32 %v4511, %v4739
        %v4741 = vpop.f32.mrf.mxu0
        %v4742 = vadd.f32 %v4513, %v4741
        %4743 = vmatmul.bf16.gmra.mxu0 %v4667
        %v4744 = vpop.f32.mrf.mxu0
        %v4745 = vadd.f32 %v4516, %v4744
        %v4746 = vpop.f32.mrf.mxu0
        %v4747 = vadd.f32 %v4518, %v4746
        %4748 = vmatmul.bf16.gmra.mxu0 %v4670
        %v4749 = vpop.f32.mrf.mxu0
        %v4750 = vadd.f32 %v4521, %v4749
        %v4751 = vpop.f32.mrf.mxu0
        %v4752 = vadd.f32 %v4523, %v4751
        %4753 = vmatmul.bf16.gmra.mxu0 %v4673
        %v4754 = vpop.f32.mrf.mxu0
        %v4755 = vadd.f32 %v4526, %v4754
        %v4756 = vpop.f32.mrf.mxu0
        %v4757 = vadd.f32 %v4528, %v4756
        %4758 = vmatmul.bf16.gmra.mxu0 %v4676
        %v4759 = vpop.f32.mrf.mxu0
        %v4760 = vadd.f32 %v4531, %v4759
        %v4761 = vpop.f32.mrf.mxu0
        %v4762 = vadd.f32 %v4533, %v4761
        %4763 = vmatmul.bf16.gmra.mxu0 %v4679
        %v4764 = vpop.f32.mrf.mxu0
        %v4765 = vadd.f32 %v4536, %v4764
        %v4766 = vpop.f32.mrf.mxu0
        %v4767 = vadd.f32 %v4538, %v4766
        %4768 = vmatmul.bf16.gmra.mxu0 %v4682
        %v4769 = vpop.f32.mrf.mxu0
        %v4770 = vadd.f32 %v4541, %v4769
        %v4771 = vpop.f32.mrf.mxu0
        %v4772 = vadd.f32 %v4543, %v4771
        %4773 = vmatmul.bf16.gmra.mxu0 %v4685
        %v4774 = vpop.f32.mrf.mxu0
        %v4775 = vadd.f32 %v4546, %v4774
        %v4776 = vpop.f32.mrf.mxu0
        %v4777 = vadd.f32 %v4548, %v4776
        %4778 = vdwg.mxu0
        %v4779 = vld [vmem:[#allocation3] sm:$0xe]
        %v4780 = vld [vmem:[#allocation3 + $0xc] sm:$0xe]
        %v4781 = vld [vmem:[#allocation3 + $0x18] sm:$0xe]
        %v4782 = vld [vmem:[#allocation3 + $0x24] sm:$0xe]
        %v4783 = vld [vmem:[#allocation3 + $0x30] sm:$0xe]
        %v4784 = vld [vmem:[#allocation3 + $0x3c] sm:$0xe]
        %v4785 = vld [vmem:[#allocation3 + $0x48] sm:$0xe]
        %v4786 = vld [vmem:[#allocation3 + $0x54] sm:$0xe]
        %v4787 = vld [vmem:[#allocation3 + $0x60] sm:$0xe]
        %v4788 = vld [vmem:[#allocation3 + $0x6c] sm:$0xe]
        %v4789 = vld [vmem:[#allocation3 + $0x78] sm:$0xe]
        %v4790 = vld [vmem:[#allocation3 + $0x84] sm:$0xe]
        %v4791 = vld [vmem:[#allocation3 + $0x90] sm:$0xe]
        %v4792 = vld [vmem:[#allocation3 + $0x9c] sm:$0xe]
        %v4793 = vld [vmem:[#allocation3 + $0xa8] sm:$0xe]
        %v4794 = vld [vmem:[#allocation3 + $0xb4] sm:$0xe]
        %v4827 = vrot.slane %v4779, 5
        %v4828 = vrot.slane %v4827, 4
        %v4829 = vrot.slane %v3913, 5
        %v4830 = vsel %vm1373, %v4828, %v4829
        %v4831 = vrot.slane %v4829, 4
        %v4832 = vrot.slane %v3947, 5
        %v4833 = vsel %vm1373, %v4831, %v4832
        %v4834 = vrot.slane %v4780, 5
        %v4835 = vrot.slane %v4834, 4
        %v4836 = vrot.slane %v3915, 5
        %v4837 = vsel %vm1373, %v4835, %v4836
        %v4838 = vrot.slane %v4836, 4
        %v4839 = vrot.slane %v3948, 5
        %v4840 = vsel %vm1373, %v4838, %v4839
        %v4841 = vrot.slane %v4781, 5
        %v4842 = vrot.slane %v4841, 4
        %v4843 = vrot.slane %v3917, 5
        %v4844 = vsel %vm1373, %v4842, %v4843
        %v4845 = vrot.slane %v4843, 4
        %v4846 = vrot.slane %v3949, 5
        %v4847 = vsel %vm1373, %v4845, %v4846
        %v4848 = vrot.slane %v4782, 5
        %v4849 = vrot.slane %v4848, 4
        %v4850 = vrot.slane %v3919, 5
        %v4851 = vsel %vm1373, %v4849, %v4850
        %v4852 = vrot.slane %v4850, 4
        %v4853 = vrot.slane %v3950, 5
        %v4854 = vsel %vm1373, %v4852, %v4853
        %v4855 = vrot.slane %v4783, 5
        %v4856 = vrot.slane %v4855, 4
        %v4857 = vrot.slane %v3921, 5
        %v4858 = vsel %vm1373, %v4856, %v4857
        %v4859 = vrot.slane %v4857, 4
        %v4860 = vrot.slane %v3951, 5
        %v4861 = vsel %vm1373, %v4859, %v4860
        %v4862 = vrot.slane %v4784, 5
        %v4863 = vrot.slane %v4862, 4
        %v4864 = vrot.slane %v3923, 5
        %v4865 = vsel %vm1373, %v4863, %v4864
        %v4866 = vrot.slane %v4864, 4
        %v4867 = vrot.slane %v3952, 5
        %v4868 = vsel %vm1373, %v4866, %v4867
        %v4869 = vrot.slane %v4785, 5
        %v4870 = vrot.slane %v4869, 4
        %v4871 = vrot.slane %v3925, 5
        %v4872 = vsel %vm1373, %v4870, %v4871
        %v4873 = vrot.slane %v4871, 4
        %v4874 = vrot.slane %v3953, 5
        %v4875 = vsel %vm1373, %v4873, %v4874
        %v4876 = vrot.slane %v4786, 5
        %v4877 = vrot.slane %v4876, 4
        %v4878 = vrot.slane %v3927, 5
        %v4879 = vsel %vm1373, %v4877, %v4878
        %v4880 = vrot.slane %v4878, 4
        %v4881 = vrot.slane %v3954, 5
        %v4882 = vsel %vm1373, %v4880, %v4881
        %v4883 = vrot.slane %v4787, 5
        %v4884 = vrot.slane %v4883, 4
        %v4885 = vrot.slane %v3929, 5
        %v4886 = vsel %vm1373, %v4884, %v4885
        %v4887 = vrot.slane %v4885, 4
        %v4888 = vrot.slane %v3955, 5
        %v4889 = vsel %vm1373, %v4887, %v4888
        %v4890 = vrot.slane %v4788, 5
        %v4891 = vrot.slane %v4890, 4
        %v4892 = vrot.slane %v3931, 5
        %v4893 = vsel %vm1373, %v4891, %v4892
        %v4894 = vrot.slane %v4892, 4
        %v4895 = vrot.slane %v3956, 5
        %v4896 = vsel %vm1373, %v4894, %v4895
        %v4897 = vrot.slane %v4789, 5
        %v4898 = vrot.slane %v4897, 4
        %v4899 = vrot.slane %v3933, 5
        %v4900 = vsel %vm1373, %v4898, %v4899
        %v4901 = vrot.slane %v4899, 4
        %v4902 = vrot.slane %v3957, 5
        %v4903 = vsel %vm1373, %v4901, %v4902
        %v4904 = vrot.slane %v4790, 5
        %v4905 = vrot.slane %v4904, 4
        %v4906 = vrot.slane %v3935, 5
        %v4907 = vsel %vm1373, %v4905, %v4906
        %v4908 = vrot.slane %v4906, 4
        %v4909 = vrot.slane %v3958, 5
        %v4910 = vsel %vm1373, %v4908, %v4909
        %v4911 = vrot.slane %v4791, 5
        %v4912 = vrot.slane %v4911, 4
        %v4913 = vrot.slane %v3937, 5
        %v4914 = vsel %vm1373, %v4912, %v4913
        %v4915 = vrot.slane %v4913, 4
        %v4916 = vrot.slane %v3959, 5
        %v4917 = vsel %vm1373, %v4915, %v4916
        %v4918 = vrot.slane %v4792, 5
        %v4919 = vrot.slane %v4918, 4
        %v4920 = vrot.slane %v3939, 5
        %v4921 = vsel %vm1373, %v4919, %v4920
        %v4922 = vrot.slane %v4920, 4
        %v4923 = vrot.slane %v3960, 5
        %v4924 = vsel %vm1373, %v4922, %v4923
        %v4925 = vrot.slane %v4793, 5
        %v4926 = vrot.slane %v4925, 4
        %v4927 = vrot.slane %v3941, 5
        %v4928 = vsel %vm1373, %v4926, %v4927
        %v4929 = vrot.slane %v4927, 4
        %v4930 = vrot.slane %v3961, 5
        %v4931 = vsel %vm1373, %v4929, %v4930
        %v4932 = vrot.slane %v4794, 5
        %v4933 = vrot.slane %v4932, 4
        %v4934 = vrot.slane %v3943, 5
        %v4935 = vsel %vm1373, %v4933, %v4934
        %v4936 = vrot.slane %v4934, 4
        %v4937 = vrot.slane %v3962, 5
        %v4938 = vsel %vm1373, %v4936, %v4937
        %s4939 = scalar_lea.vmem %s8, 24
        %v4940 = vld [vmem:[%s4939] sm:$0xf]
        %v4941 = vld [vmem:[%s4939 + $0x4] sm:$0xf]
        %v4942 = vld [vmem:[%s4939 + $0x8] sm:$0xf]
        %v4943 = vunpack.c.l.b16 %v4830
        %v4944 = vunpack.c.l.b16 %v4833
        %v4945 = vunpack.c.l.b16 %v4837
        %v4946 = vunpack.c.l.b16 %v4840
        %v4947 = vunpack.c.l.b16 %v4844
        %v4948 = vunpack.c.l.b16 %v4847
        %v4949 = vunpack.c.l.b16 %v4851
        %v4950 = vunpack.c.l.b16 %v4854
        %v4951 = vunpack.c.l.b16 %v4858
        %v4952 = vunpack.c.l.b16 %v4861
        %v4953 = vunpack.c.l.b16 %v4865
        %v4954 = vunpack.c.l.b16 %v4868
        %v4955 = vunpack.c.l.b16 %v4872
        %v4956 = vunpack.c.l.b16 %v4875
        %v4957 = vunpack.c.l.b16 %v4879
        %v4958 = vunpack.c.l.b16 %v4882
        %v4959 = vunpack.c.l.b16 %v4886
        %v4960 = vunpack.c.l.b16 %v4889
        %v4961 = vunpack.c.l.b16 %v4893
        %v4962 = vunpack.c.l.b16 %v4896
        %v4963 = vunpack.c.l.b16 %v4900
        %v4964 = vunpack.c.l.b16 %v4903
        %v4965 = vunpack.c.l.b16 %v4907
        %v4966 = vunpack.c.l.b16 %v4910
        %v4967 = vunpack.c.l.b16 %v4914
        %v4968 = vunpack.c.l.b16 %v4917
        %v4969 = vunpack.c.l.b16 %v4921
        %v4970 = vunpack.c.l.b16 %v4924
        %v4971 = vunpack.c.l.b16 %v4928
        %v4972 = vunpack.c.l.b16 %v4931
        %v4973 = vunpack.c.l.b16 %v4935
        %v4974 = vunpack.c.l.b16 %v4938
        %v4975 = vpack.c.b16 %v4944, %v4943
        %v4976 = vpack.c.b16 %v4946, %v4945
        %v4977 = vpack.c.b16 %v4948, %v4947
        %v4978 = vpack.c.b16 %v4950, %v4949
        %v4979 = vpack.c.b16 %v4952, %v4951
        %v4980 = vpack.c.b16 %v4954, %v4953
        %v4981 = vpack.c.b16 %v4956, %v4955
        %v4982 = vpack.c.b16 %v4958, %v4957
        %v4983 = vpack.c.b16 %v4960, %v4959
        %v4984 = vpack.c.b16 %v4962, %v4961
        %v4985 = vpack.c.b16 %v4964, %v4963
        %v4986 = vpack.c.b16 %v4966, %v4965
        %v4987 = vpack.c.b16 %v4968, %v4967
        %v4988 = vpack.c.b16 %v4970, %v4969
        %v4989 = vpack.c.b16 %v4972, %v4971
        %v4990 = vpack.c.b16 %v4974, %v4973
        %v4994 = vunpack.c.l.b16 %v4940
        %v4995 = vunpack.c.l.b16 %v4941
        %v4996 = vunpack.c.l.b16 %v4942
        %v4997 = vpack.c.b16 %v4995, %v4994
        %v4998 = vpack.c.b16 %v4996, %v4996
        %v5001 = vsel %vm4408, %v4975, 0
        %v5004 = vsel %vm4408, %v4976, 0
        %v5007 = vsel %vm4408, %v4977, 0
        %v5010 = vsel %vm4408, %v4978, 0
        %v5013 = vsel %vm4408, %v4979, 0
        %v5016 = vsel %vm4408, %v4980, 0
        %v5019 = vsel %vm4408, %v4981, 0
        %v5022 = vsel %vm4408, %v4982, 0
        %v5025 = vsel %vm4408, %v4983, 0
        %v5028 = vsel %vm4408, %v4984, 0
        %v5031 = vsel %vm4408, %v4985, 0
        %v5034 = vsel %vm4408, %v4986, 0
        %v5037 = vsel %vm4408, %v4987, 0
        %v5040 = vsel %vm4408, %v4988, 0
        %v5043 = vsel %vm4408, %v4989, 0
        %v5046 = vsel %vm4408, %v4990, 0
        %v5049 = vsel %vm4457, %v4998, 0
        %5051 = vmatpush.bf16.msra.mxu0 0
        %5052 = vmatpush.bf16.msra.mxu0 0
        %5053 = vmatpush.bf16.msra.mxu0 0
        %5054 = vmatpush.bf16.msra.mxu0 0
        %5055 = vmatpush.bf16.msra.mxu0 0
        %5056 = vmatpush.bf16.msra.mxu0 0
        %5057 = vmatpush.bf16.msra.mxu0 %v5049
        %5058 = vmatpush.bf16.msra.mxu0 %v4997
        %5059 = vmatmul.bf16.gmra.mxu0 %v5001
        %v5060 = vpop.f32.mrf.mxu0
        %v5061 = vadd.f32 0.0, %v5060
        %v5062 = vpop.f32.mrf.mxu0
        %v5063 = vadd.f32 0.0, %v5062
        %5064 = vmatmul.bf16.gmra.mxu0 %v5004
        %v5065 = vpop.f32.mrf.mxu0
        %v5066 = vadd.f32 0.0, %v5065
        %v5067 = vpop.f32.mrf.mxu0
        %v5068 = vadd.f32 0.0, %v5067
        %5069 = vmatmul.bf16.gmra.mxu0 %v5007
        %v5070 = vpop.f32.mrf.mxu0
        %v5071 = vadd.f32 0.0, %v5070
        %v5072 = vpop.f32.mrf.mxu0
        %v5073 = vadd.f32 0.0, %v5072
        %5074 = vmatmul.bf16.gmra.mxu0 %v5010
        %v5075 = vpop.f32.mrf.mxu0
        %v5076 = vadd.f32 0.0, %v5075
        %v5077 = vpop.f32.mrf.mxu0
        %v5078 = vadd.f32 0.0, %v5077
        %5079 = vmatmul.bf16.gmra.mxu0 %v5013
        %v5080 = vpop.f32.mrf.mxu0
        %v5081 = vadd.f32 0.0, %v5080
        %v5082 = vpop.f32.mrf.mxu0
        %v5083 = vadd.f32 0.0, %v5082
        %5084 = vmatmul.bf16.gmra.mxu0 %v5016
        %v5085 = vpop.f32.mrf.mxu0
        %v5086 = vadd.f32 0.0, %v5085
        %v5087 = vpop.f32.mrf.mxu0
        %v5088 = vadd.f32 0.0, %v5087
        %5089 = vmatmul.bf16.gmra.mxu0 %v5019
        %v5090 = vpop.f32.mrf.mxu0
        %v5091 = vadd.f32 0.0, %v5090
        %v5092 = vpop.f32.mrf.mxu0
        %v5093 = vadd.f32 0.0, %v5092
        %5094 = vmatmul.bf16.gmra.mxu0 %v5022
        %v5095 = vpop.f32.mrf.mxu0
        %v5096 = vadd.f32 0.0, %v5095
        %v5097 = vpop.f32.mrf.mxu0
        %v5098 = vadd.f32 0.0, %v5097
        %5099 = vmatmul.bf16.gmra.mxu0 %v5025
        %v5100 = vpop.f32.mrf.mxu0
        %v5101 = vadd.f32 0.0, %v5100
        %v5102 = vpop.f32.mrf.mxu0
        %v5103 = vadd.f32 0.0, %v5102
        %5104 = vmatmul.bf16.gmra.mxu0 %v5028
        %v5105 = vpop.f32.mrf.mxu0
        %v5106 = vadd.f32 0.0, %v5105
        %v5107 = vpop.f32.mrf.mxu0
        %v5108 = vadd.f32 0.0, %v5107
        %5109 = vmatmul.bf16.gmra.mxu0 %v5031
        %v5110 = vpop.f32.mrf.mxu0
        %v5111 = vadd.f32 0.0, %v5110
        %v5112 = vpop.f32.mrf.mxu0
        %v5113 = vadd.f32 0.0, %v5112
        %5114 = vmatmul.bf16.gmra.mxu0 %v5034
        %v5115 = vpop.f32.mrf.mxu0
        %v5116 = vadd.f32 0.0, %v5115
        %v5117 = vpop.f32.mrf.mxu0
        %v5118 = vadd.f32 0.0, %v5117
        %5119 = vmatmul.bf16.gmra.mxu0 %v5037
        %v5120 = vpop.f32.mrf.mxu0
        %v5121 = vadd.f32 0.0, %v5120
        %v5122 = vpop.f32.mrf.mxu0
        %v5123 = vadd.f32 0.0, %v5122
        %5124 = vmatmul.bf16.gmra.mxu0 %v5040
        %v5125 = vpop.f32.mrf.mxu0
        %v5126 = vadd.f32 0.0, %v5125
        %v5127 = vpop.f32.mrf.mxu0
        %v5128 = vadd.f32 0.0, %v5127
        %5129 = vmatmul.bf16.gmra.mxu0 %v5043
        %v5130 = vpop.f32.mrf.mxu0
        %v5131 = vadd.f32 0.0, %v5130
        %v5132 = vpop.f32.mrf.mxu0
        %v5133 = vadd.f32 0.0, %v5132
        %5134 = vmatmul.bf16.gmra.mxu0 %v5046
        %v5135 = vpop.f32.mrf.mxu0
        %v5136 = vadd.f32 0.0, %v5135
        %v5137 = vpop.f32.mrf.mxu0
        %v5138 = vadd.f32 0.0, %v5137
        %5139 = vdwg.mxu0
        %v5140 = vadd.f32 %v4700, %v5061
        %v5141 = vadd.f32 %v4702, %v5063
        %v5142 = vadd.f32 %v4705, %v5066
        %v5143 = vadd.f32 %v4707, %v5068
        %v5144 = vadd.f32 %v4710, %v5071
        %v5145 = vadd.f32 %v4712, %v5073
        %v5146 = vadd.f32 %v4715, %v5076
        %v5147 = vadd.f32 %v4717, %v5078
        %v5148 = vadd.f32 %v4720, %v5081
        %v5149 = vadd.f32 %v4722, %v5083
        %v5150 = vadd.f32 %v4725, %v5086
        %v5151 = vadd.f32 %v4727, %v5088
        %v5152 = vadd.f32 %v4730, %v5091
        %v5153 = vadd.f32 %v4732, %v5093
        %v5154 = vadd.f32 %v4735, %v5096
        %v5155 = vadd.f32 %v4737, %v5098
        %v5156 = vadd.f32 %v4740, %v5101
        %v5157 = vadd.f32 %v4742, %v5103
        %v5158 = vadd.f32 %v4745, %v5106
        %v5159 = vadd.f32 %v4747, %v5108
        %v5160 = vadd.f32 %v4750, %v5111
        %v5161 = vadd.f32 %v4752, %v5113
        %v5162 = vadd.f32 %v4755, %v5116
        %v5163 = vadd.f32 %v4757, %v5118
        %v5164 = vadd.f32 %v4760, %v5121
        %v5165 = vadd.f32 %v4762, %v5123
        %v5166 = vadd.f32 %v4765, %v5126
        %v5167 = vadd.f32 %v4767, %v5128
        %v5168 = vadd.f32 %v4770, %v5131
        %v5169 = vadd.f32 %v4772, %v5133
        %v5170 = vadd.f32 %v4775, %v5136
        %v5171 = vadd.f32 %v4777, %v5138
        %v5172 = vld [vmem:[%s2947] sm:$0xf]
        %v5173 = vld [vmem:[%s2947 + $0x4] sm:$0xf]
        %v5174 = vld [vmem:[%s2947 + $0xc] sm:$0xf]
        %v5175 = vld [vmem:[%s2947 + $0x10] sm:$0xf]
        %v5176 = vld [vmem:[%s2947 + $0x18] sm:$0xf]
        %v5177 = vld [vmem:[%s2947 + $0x1c] sm:$0xf]
        %v5178 = vld [vmem:[%s2947 + $0x24] sm:$0xf]
        %v5179 = vld [vmem:[%s2947 + $0x28] sm:$0xf]
        %v5180 = vld [vmem:[%s2947 + $0x30] sm:$0xf]
        %v5181 = vld [vmem:[%s2947 + $0x34] sm:$0xf]
        %v5182 = vld [vmem:[%s2947 + $0x3c] sm:$0xf]
        %v5183 = vld [vmem:[%s2947 + $0x40] sm:$0xf]
        %v5184 = vld [vmem:[%s2947 + $0x48] sm:$0xf]
        %v5185 = vld [vmem:[%s2947 + $0x4c] sm:$0xf]
        %v5186 = vld [vmem:[%s2947 + $0x54] sm:$0xf]
        %v5187 = vld [vmem:[%s2947 + $0x58] sm:$0xf]
        %v5188 = vld [vmem:[%s2947 + $0x60] sm:$0xf]
        %v5189 = vld [vmem:[%s2947 + $0x64] sm:$0xf]
        %v5190 = vld [vmem:[%s2947 + $0x6c] sm:$0xf]
        %v5191 = vld [vmem:[%s2947 + $0x70] sm:$0xf]
        %v5192 = vld [vmem:[%s2947 + $0x78] sm:$0xf]
        %v5193 = vld [vmem:[%s2947 + $0x7c] sm:$0xf]
        %v5194 = vld [vmem:[%s2947 + $0x84] sm:$0xf]
        %v5195 = vld [vmem:[%s2947 + $0x88] sm:$0xf]
        %v5196 = vld [vmem:[%s2947 + $0x90] sm:$0xf]
        %v5197 = vld [vmem:[%s2947 + $0x94] sm:$0xf]
        %v5198 = vld [vmem:[%s2947 + $0x9c] sm:$0xf]
        %v5199 = vld [vmem:[%s2947 + $0xa0] sm:$0xf]
        %v5200 = vld [vmem:[%s2947 + $0xa8] sm:$0xf]
        %v5201 = vld [vmem:[%s2947 + $0xac] sm:$0xf]
        %v5202 = vld [vmem:[%s2947 + $0xb4] sm:$0xf]
        %v5203 = vld [vmem:[%s2947 + $0xb8] sm:$0xf]
        %s5204 = scalar_lea.vmem %s8, 36
        %v5205 = vld [vmem:[%s5204] sm:$0xf]
        %v5206 = vld [vmem:[%s5204 + $0x4] sm:$0xf]
        %v5207 = vld [vmem:[%s5204 + $0x8] sm:$0xf]
        %v5240 = vunpack.c.l.b16 %v5172
        %v5241 = vunpack.c.l.b16 %v5173
        %v5242 = vunpack.c.l.b16 %v5174
        %v5243 = vunpack.c.l.b16 %v5175
        %v5244 = vunpack.c.l.b16 %v5176
        %v5245 = vunpack.c.l.b16 %v5177
        %v5246 = vunpack.c.l.b16 %v5178
        %v5247 = vunpack.c.l.b16 %v5179
        %v5248 = vunpack.c.l.b16 %v5180
        %v5249 = vunpack.c.l.b16 %v5181
        %v5250 = vunpack.c.l.b16 %v5182
        %v5251 = vunpack.c.l.b16 %v5183
        %v5252 = vunpack.c.l.b16 %v5184
        %v5253 = vunpack.c.l.b16 %v5185
        %v5254 = vunpack.c.l.b16 %v5186
        %v5255 = vunpack.c.l.b16 %v5187
        %v5256 = vunpack.c.l.b16 %v5188
        %v5257 = vunpack.c.l.b16 %v5189
        %v5258 = vunpack.c.l.b16 %v5190
        %v5259 = vunpack.c.l.b16 %v5191
        %v5260 = vunpack.c.l.b16 %v5192
        %v5261 = vunpack.c.l.b16 %v5193
        %v5262 = vunpack.c.l.b16 %v5194
        %v5263 = vunpack.c.l.b16 %v5195
        %v5264 = vunpack.c.l.b16 %v5196
        %v5265 = vunpack.c.l.b16 %v5197
        %v5266 = vunpack.c.l.b16 %v5198
        %v5267 = vunpack.c.l.b16 %v5199
        %v5268 = vunpack.c.l.b16 %v5200
        %v5269 = vunpack.c.l.b16 %v5201
        %v5270 = vunpack.c.l.b16 %v5202
        %v5271 = vunpack.c.l.b16 %v5203
        %v5272 = vpack.c.b16 %v5241, %v5240
        %v5273 = vpack.c.b16 %v5243, %v5242
        %v5274 = vpack.c.b16 %v5245, %v5244
        %v5275 = vpack.c.b16 %v5247, %v5246
        %v5276 = vpack.c.b16 %v5249, %v5248
        %v5277 = vpack.c.b16 %v5251, %v5250
        %v5278 = vpack.c.b16 %v5253, %v5252
        %v5279 = vpack.c.b16 %v5255, %v5254
        %v5280 = vpack.c.b16 %v5257, %v5256
        %v5281 = vpack.c.b16 %v5259, %v5258
        %v5282 = vpack.c.b16 %v5261, %v5260
        %v5283 = vpack.c.b16 %v5263, %v5262
        %v5284 = vpack.c.b16 %v5265, %v5264
        %v5285 = vpack.c.b16 %v5267, %v5266
        %v5286 = vpack.c.b16 %v5269, %v5268
        %v5287 = vpack.c.b16 %v5271, %v5270
        %v5291 = vunpack.c.l.b16 %v5205
        %v5292 = vunpack.c.l.b16 %v5206
        %v5293 = vunpack.c.l.b16 %v5207
        %v5294 = vpack.c.b16 %v5292, %v5291
        %v5295 = vpack.c.b16 %v5293, %v5293
        %v5298 = vsel %vm4408, %v5272, 0
        %v5301 = vsel %vm4408, %v5273, 0
        %v5304 = vsel %vm4408, %v5274, 0
        %v5307 = vsel %vm4408, %v5275, 0
        %v5310 = vsel %vm4408, %v5276, 0
        %v5313 = vsel %vm4408, %v5277, 0
        %v5316 = vsel %vm4408, %v5278, 0
        %v5319 = vsel %vm4408, %v5279, 0
        %v5322 = vsel %vm4408, %v5280, 0
        %v5325 = vsel %vm4408, %v5281, 0
        %v5328 = vsel %vm4408, %v5282, 0
        %v5331 = vsel %vm4408, %v5283, 0
        %v5334 = vsel %vm4408, %v5284, 0
        %v5337 = vsel %vm4408, %v5285, 0
        %v5340 = vsel %vm4408, %v5286, 0
        %v5343 = vsel %vm4408, %v5287, 0
        %v5346 = vsel %vm4457, %v5295, 0
        %5348 = vmatpush.bf16.msra.mxu0 0
        %5349 = vmatpush.bf16.msra.mxu0 0
        %5350 = vmatpush.bf16.msra.mxu0 0
        %5351 = vmatpush.bf16.msra.mxu0 0
        %5352 = vmatpush.bf16.msra.mxu0 0
        %5353 = vmatpush.bf16.msra.mxu0 0
        %5354 = vmatpush.bf16.msra.mxu0 %v5346
        %5355 = vmatpush.bf16.msra.mxu0 %v5294
        %5356 = vmatmul.bf16.gmra.mxu0 %v5298
        %v5357 = vpop.f32.mrf.mxu0
        %v5358 = vadd.f32 0.0, %v5357
        %v5359 = vpop.f32.mrf.mxu0
        %v5360 = vadd.f32 0.0, %v5359
        %5361 = vmatmul.bf16.gmra.mxu0 %v5301
        %v5362 = vpop.f32.mrf.mxu0
        %v5363 = vadd.f32 0.0, %v5362
        %v5364 = vpop.f32.mrf.mxu0
        %v5365 = vadd.f32 0.0, %v5364
        %5366 = vmatmul.bf16.gmra.mxu0 %v5304
        %v5367 = vpop.f32.mrf.mxu0
        %v5368 = vadd.f32 0.0, %v5367
        %v5369 = vpop.f32.mrf.mxu0
        %v5370 = vadd.f32 0.0, %v5369
        %5371 = vmatmul.bf16.gmra.mxu0 %v5307
        %v5372 = vpop.f32.mrf.mxu0
        %v5373 = vadd.f32 0.0, %v5372
        %v5374 = vpop.f32.mrf.mxu0
        %v5375 = vadd.f32 0.0, %v5374
        %5376 = vmatmul.bf16.gmra.mxu0 %v5310
        %v5377 = vpop.f32.mrf.mxu0
        %v5378 = vadd.f32 0.0, %v5377
        %v5379 = vpop.f32.mrf.mxu0
        %v5380 = vadd.f32 0.0, %v5379
        %5381 = vmatmul.bf16.gmra.mxu0 %v5313
        %v5382 = vpop.f32.mrf.mxu0
        %v5383 = vadd.f32 0.0, %v5382
        %v5384 = vpop.f32.mrf.mxu0
        %v5385 = vadd.f32 0.0, %v5384
        %5386 = vmatmul.bf16.gmra.mxu0 %v5316
        %v5387 = vpop.f32.mrf.mxu0
        %v5388 = vadd.f32 0.0, %v5387
        %v5389 = vpop.f32.mrf.mxu0
        %v5390 = vadd.f32 0.0, %v5389
        %5391 = vmatmul.bf16.gmra.mxu0 %v5319
        %v5392 = vpop.f32.mrf.mxu0
        %v5393 = vadd.f32 0.0, %v5392
        %v5394 = vpop.f32.mrf.mxu0
        %v5395 = vadd.f32 0.0, %v5394
        %5396 = vmatmul.bf16.gmra.mxu0 %v5322
        %v5397 = vpop.f32.mrf.mxu0
        %v5398 = vadd.f32 0.0, %v5397
        %v5399 = vpop.f32.mrf.mxu0
        %v5400 = vadd.f32 0.0, %v5399
        %5401 = vmatmul.bf16.gmra.mxu0 %v5325
        %v5402 = vpop.f32.mrf.mxu0
        %v5403 = vadd.f32 0.0, %v5402
        %v5404 = vpop.f32.mrf.mxu0
        %v5405 = vadd.f32 0.0, %v5404
        %5406 = vmatmul.bf16.gmra.mxu0 %v5328
        %v5407 = vpop.f32.mrf.mxu0
        %v5408 = vadd.f32 0.0, %v5407
        %v5409 = vpop.f32.mrf.mxu0
        %v5410 = vadd.f32 0.0, %v5409
        %5411 = vmatmul.bf16.gmra.mxu0 %v5331
        %v5412 = vpop.f32.mrf.mxu0
        %v5413 = vadd.f32 0.0, %v5412
        %v5414 = vpop.f32.mrf.mxu0
        %v5415 = vadd.f32 0.0, %v5414
        %5416 = vmatmul.bf16.gmra.mxu0 %v5334
        %v5417 = vpop.f32.mrf.mxu0
        %v5418 = vadd.f32 0.0, %v5417
        %v5419 = vpop.f32.mrf.mxu0
        %v5420 = vadd.f32 0.0, %v5419
        %5421 = vmatmul.bf16.gmra.mxu0 %v5337
        %v5422 = vpop.f32.mrf.mxu0
        %v5423 = vadd.f32 0.0, %v5422
        %v5424 = vpop.f32.mrf.mxu0
        %v5425 = vadd.f32 0.0, %v5424
        %5426 = vmatmul.bf16.gmra.mxu0 %v5340
        %v5427 = vpop.f32.mrf.mxu0
        %v5428 = vadd.f32 0.0, %v5427
        %v5429 = vpop.f32.mrf.mxu0
        %v5430 = vadd.f32 0.0, %v5429
        %5431 = vmatmul.bf16.gmra.mxu0 %v5343
        %v5432 = vpop.f32.mrf.mxu0
        %v5433 = vadd.f32 0.0, %v5432
        %v5434 = vpop.f32.mrf.mxu0
        %v5435 = vadd.f32 0.0, %v5434
        %5436 = vdwg.mxu0
        %v5437 = vadd.f32 %v5140, %v5358
        %v5438 = vadd.f32 %v5141, %v5360
        %v5439 = vadd.f32 %v5142, %v5363
        %v5440 = vadd.f32 %v5143, %v5365
        %v5441 = vadd.f32 %v5144, %v5368
        %v5442 = vadd.f32 %v5145, %v5370
        %v5443 = vadd.f32 %v5146, %v5373
        %v5444 = vadd.f32 %v5147, %v5375
        %v5445 = vadd.f32 %v5148, %v5378
        %v5446 = vadd.f32 %v5149, %v5380
        %v5447 = vadd.f32 %v5150, %v5383
        %v5448 = vadd.f32 %v5151, %v5385
        %v5449 = vadd.f32 %v5152, %v5388
        %v5450 = vadd.f32 %v5153, %v5390
        %v5451 = vadd.f32 %v5154, %v5393
        %v5452 = vadd.f32 %v5155, %v5395
        %v5453 = vadd.f32 %v5156, %v5398
        %v5454 = vadd.f32 %v5157, %v5400
        %v5455 = vadd.f32 %v5158, %v5403
        %v5456 = vadd.f32 %v5159, %v5405
        %v5457 = vadd.f32 %v5160, %v5408
        %v5458 = vadd.f32 %v5161, %v5410
        %v5459 = vadd.f32 %v5162, %v5413
        %v5460 = vadd.f32 %v5163, %v5415
        %v5461 = vadd.f32 %v5164, %v5418
        %v5462 = vadd.f32 %v5165, %v5420
        %v5463 = vadd.f32 %v5166, %v5423
        %v5464 = vadd.f32 %v5167, %v5425
        %v5465 = vadd.f32 %v5168, %v5428
        %v5466 = vadd.f32 %v5169, %v5430
        %v5467 = vadd.f32 %v5170, %v5433
        %v5468 = vadd.f32 %v5171, %v5435
        %v5469 = vld [vmem:[%s2947] sm:$0xf]
        %v5470 = vld [vmem:[%s2947 + $0x4] sm:$0xf]
        %v5471 = vld [vmem:[%s2947 + $0x8] sm:$0x1]
        %v5472 = vld [vmem:[%s2947 + $0xc] sm:$0xf]
        %v5473 = vld [vmem:[%s2947 + $0x10] sm:$0xf]
        %v5474 = vld [vmem:[%s2947 + $0x14] sm:$0x1]
        %v5475 = vld [vmem:[%s2947 + $0x18] sm:$0xf]
        %v5476 = vld [vmem:[%s2947 + $0x1c] sm:$0xf]
        %v5477 = vld [vmem:[%s2947 + $0x20] sm:$0x1]
        %v5478 = vld [vmem:[%s2947 + $0x24] sm:$0xf]
        %v5479 = vld [vmem:[%s2947 + $0x28] sm:$0xf]
        %v5480 = vld [vmem:[%s2947 + $0x2c] sm:$0x1]
        %v5481 = vld [vmem:[%s2947 + $0x30] sm:$0xf]
        %v5482 = vld [vmem:[%s2947 + $0x34] sm:$0xf]
        %v5483 = vld [vmem:[%s2947 + $0x38] sm:$0x1]
        %v5484 = vld [vmem:[%s2947 + $0x3c] sm:$0xf]
        %v5485 = vld [vmem:[%s2947 + $0x40] sm:$0xf]
        %v5486 = vld [vmem:[%s2947 + $0x44] sm:$0x1]
        %v5487 = vld [vmem:[%s2947 + $0x48] sm:$0xf]
        %v5488 = vld [vmem:[%s2947 + $0x4c] sm:$0xf]
        %v5489 = vld [vmem:[%s2947 + $0x50] sm:$0x1]
        %v5490 = vld [vmem:[%s2947 + $0x54] sm:$0xf]
        %v5491 = vld [vmem:[%s2947 + $0x58] sm:$0xf]
        %v5492 = vld [vmem:[%s2947 + $0x5c] sm:$0x1]
        %v5493 = vld [vmem:[%s2947 + $0x60] sm:$0xf]
        %v5494 = vld [vmem:[%s2947 + $0x64] sm:$0xf]
        %v5495 = vld [vmem:[%s2947 + $0x68] sm:$0x1]
        %v5496 = vld [vmem:[%s2947 + $0x6c] sm:$0xf]
        %v5497 = vld [vmem:[%s2947 + $0x70] sm:$0xf]
        %v5498 = vld [vmem:[%s2947 + $0x74] sm:$0x1]
        %v5499 = vld [vmem:[%s2947 + $0x78] sm:$0xf]
        %v5500 = vld [vmem:[%s2947 + $0x7c] sm:$0xf]
        %v5501 = vld [vmem:[%s2947 + $0x80] sm:$0x1]
        %v5502 = vld [vmem:[%s2947 + $0x84] sm:$0xf]
        %v5503 = vld [vmem:[%s2947 + $0x88] sm:$0xf]
        %v5504 = vld [vmem:[%s2947 + $0x8c] sm:$0x1]
        %v5505 = vld [vmem:[%s2947 + $0x90] sm:$0xf]
        %v5506 = vld [vmem:[%s2947 + $0x94] sm:$0xf]
        %v5507 = vld [vmem:[%s2947 + $0x98] sm:$0x1]
        %v5508 = vld [vmem:[%s2947 + $0x9c] sm:$0xf]
        %v5509 = vld [vmem:[%s2947 + $0xa0] sm:$0xf]
        %v5510 = vld [vmem:[%s2947 + $0xa4] sm:$0x1]
        %v5511 = vld [vmem:[%s2947 + $0xa8] sm:$0xf]
        %v5512 = vld [vmem:[%s2947 + $0xac] sm:$0xf]
        %v5513 = vld [vmem:[%s2947 + $0xb0] sm:$0x1]
        %v5514 = vld [vmem:[%s2947 + $0xb4] sm:$0xf]
        %v5515 = vld [vmem:[%s2947 + $0xb8] sm:$0xf]
        %v5516 = vld [vmem:[%s2947 + $0xbc] sm:$0x1]
        %v5518 = vshrl.u32 %v5469, 16
        %v5520 = vrot.slane %v5518, 4
        %v5521 = vshll.u32 %v5469, 16
        %v5523 = vrot.slane %v5521, 5
        %v5524 = vor.u32 %v5520, %v5523
        %v5525 = vrot.slane %v5524, 4
        %v5527 = vshll.u32 %v5470, 16
        %v5529 = vrot.slane %v5527, 5
        %v5530 = vsel %vm1076, %v5525, %v5529
        %v5531 = vshrl.u32 %v5470, 16
        %v5533 = vrot.slane %v5531, 4
        %v5534 = vor.u32 %v5533, %v5529
        %v5535 = vrot.slane %v5534, 4
        %v5537 = vshll.u32 %v5471, 16
        %v5539 = vrot.slane %v5537, 5
        %v5540 = vsel %vm1076, %v5535, %v5539
        %v5542 = vshrl.u32 %v5472, 16
        %v5544 = vrot.slane %v5542, 4
        %v5545 = vshll.u32 %v5472, 16
        %v5547 = vrot.slane %v5545, 5
        %v5548 = vor.u32 %v5544, %v5547
        %v5549 = vrot.slane %v5548, 4
        %v5551 = vshll.u32 %v5473, 16
        %v5553 = vrot.slane %v5551, 5
        %v5554 = vsel %vm1076, %v5549, %v5553
        %v5555 = vshrl.u32 %v5473, 16
        %v5557 = vrot.slane %v5555, 4
        %v5558 = vor.u32 %v5557, %v5553
        %v5559 = vrot.slane %v5558, 4
        %v5561 = vshll.u32 %v5474, 16
        %v5563 = vrot.slane %v5561, 5
        %v5564 = vsel %vm1076, %v5559, %v5563
        %v5566 = vshrl.u32 %v5475, 16
        %v5568 = vrot.slane %v5566, 4
        %v5569 = vshll.u32 %v5475, 16
        %v5571 = vrot.slane %v5569, 5
        %v5572 = vor.u32 %v5568, %v5571
        %v5573 = vrot.slane %v5572, 4
        %v5575 = vshll.u32 %v5476, 16
        %v5577 = vrot.slane %v5575, 5
        %v5578 = vsel %vm1076, %v5573, %v5577
        %v5579 = vshrl.u32 %v5476, 16
        %v5581 = vrot.slane %v5579, 4
        %v5582 = vor.u32 %v5581, %v5577
        %v5583 = vrot.slane %v5582, 4
        %v5585 = vshll.u32 %v5477, 16
        %v5587 = vrot.slane %v5585, 5
        %v5588 = vsel %vm1076, %v5583, %v5587
        %v5590 = vshrl.u32 %v5478, 16
        %v5592 = vrot.slane %v5590, 4
        %v5593 = vshll.u32 %v5478, 16
        %v5595 = vrot.slane %v5593, 5
        %v5596 = vor.u32 %v5592, %v5595
        %v5597 = vrot.slane %v5596, 4
        %v5599 = vshll.u32 %v5479, 16
        %v5601 = vrot.slane %v5599, 5
        %v5602 = vsel %vm1076, %v5597, %v5601
        %v5603 = vshrl.u32 %v5479, 16
        %v5605 = vrot.slane %v5603, 4
        %v5606 = vor.u32 %v5605, %v5601
        %v5607 = vrot.slane %v5606, 4
        %v5609 = vshll.u32 %v5480, 16
        %v5611 = vrot.slane %v5609, 5
        %v5612 = vsel %vm1076, %v5607, %v5611
        %v5614 = vshrl.u32 %v5481, 16
        %v5616 = vrot.slane %v5614, 4
        %v5617 = vshll.u32 %v5481, 16
        %v5619 = vrot.slane %v5617, 5
        %v5620 = vor.u32 %v5616, %v5619
        %v5621 = vrot.slane %v5620, 4
        %v5623 = vshll.u32 %v5482, 16
        %v5625 = vrot.slane %v5623, 5
        %v5626 = vsel %vm1076, %v5621, %v5625
        %v5627 = vshrl.u32 %v5482, 16
        %v5629 = vrot.slane %v5627, 4
        %v5630 = vor.u32 %v5629, %v5625
        %v5631 = vrot.slane %v5630, 4
        %v5633 = vshll.u32 %v5483, 16
        %v5635 = vrot.slane %v5633, 5
        %v5636 = vsel %vm1076, %v5631, %v5635
        %v5638 = vshrl.u32 %v5484, 16
        %v5640 = vrot.slane %v5638, 4
        %v5641 = vshll.u32 %v5484, 16
        %v5643 = vrot.slane %v5641, 5
        %v5644 = vor.u32 %v5640, %v5643
        %v5645 = vrot.slane %v5644, 4
        %v5647 = vshll.u32 %v5485, 16
        %v5649 = vrot.slane %v5647, 5
        %v5650 = vsel %vm1076, %v5645, %v5649
        %v5651 = vshrl.u32 %v5485, 16
        %v5653 = vrot.slane %v5651, 4
        %v5654 = vor.u32 %v5653, %v5649
        %v5655 = vrot.slane %v5654, 4
        %v5657 = vshll.u32 %v5486, 16
        %v5659 = vrot.slane %v5657, 5
        %v5660 = vsel %vm1076, %v5655, %v5659
        %v5662 = vshrl.u32 %v5487, 16
        %v5664 = vrot.slane %v5662, 4
        %v5665 = vshll.u32 %v5487, 16
        %v5667 = vrot.slane %v5665, 5
        %v5668 = vor.u32 %v5664, %v5667
        %v5669 = vrot.slane %v5668, 4
        %v5671 = vshll.u32 %v5488, 16
        %v5673 = vrot.slane %v5671, 5
        %v5674 = vsel %vm1076, %v5669, %v5673
        %v5675 = vshrl.u32 %v5488, 16
        %v5677 = vrot.slane %v5675, 4
        %v5678 = vor.u32 %v5677, %v5673
        %v5679 = vrot.slane %v5678, 4
        %v5681 = vshll.u32 %v5489, 16
        %v5683 = vrot.slane %v5681, 5
        %v5684 = vsel %vm1076, %v5679, %v5683
        %v5686 = vshrl.u32 %v5490, 16
        %v5688 = vrot.slane %v5686, 4
        %v5689 = vshll.u32 %v5490, 16
        %v5691 = vrot.slane %v5689, 5
        %v5692 = vor.u32 %v5688, %v5691
        %v5693 = vrot.slane %v5692, 4
        %v5695 = vshll.u32 %v5491, 16
        %v5697 = vrot.slane %v5695, 5
        %v5698 = vsel %vm1076, %v5693, %v5697
        %v5699 = vshrl.u32 %v5491, 16
        %v5701 = vrot.slane %v5699, 4
        %v5702 = vor.u32 %v5701, %v5697
        %v5703 = vrot.slane %v5702, 4
        %v5705 = vshll.u32 %v5492, 16
        %v5707 = vrot.slane %v5705, 5
        %v5708 = vsel %vm1076, %v5703, %v5707
        %v5710 = vshrl.u32 %v5493, 16
        %v5712 = vrot.slane %v5710, 4
        %v5713 = vshll.u32 %v5493, 16
        %v5715 = vrot.slane %v5713, 5
        %v5716 = vor.u32 %v5712, %v5715
        %v5717 = vrot.slane %v5716, 4
        %v5719 = vshll.u32 %v5494, 16
        %v5721 = vrot.slane %v5719, 5
        %v5722 = vsel %vm1076, %v5717, %v5721
        %v5723 = vshrl.u32 %v5494, 16
        %v5725 = vrot.slane %v5723, 4
        %v5726 = vor.u32 %v5725, %v5721
        %v5727 = vrot.slane %v5726, 4
        %v5729 = vshll.u32 %v5495, 16
        %v5731 = vrot.slane %v5729, 5
        %v5732 = vsel %vm1076, %v5727, %v5731
        %v5734 = vshrl.u32 %v5496, 16
        %v5736 = vrot.slane %v5734, 4
        %v5737 = vshll.u32 %v5496, 16
        %v5739 = vrot.slane %v5737, 5
        %v5740 = vor.u32 %v5736, %v5739
        %v5741 = vrot.slane %v5740, 4
        %v5743 = vshll.u32 %v5497, 16
        %v5745 = vrot.slane %v5743, 5
        %v5746 = vsel %vm1076, %v5741, %v5745
        %v5747 = vshrl.u32 %v5497, 16
        %v5749 = vrot.slane %v5747, 4
        %v5750 = vor.u32 %v5749, %v5745
        %v5751 = vrot.slane %v5750, 4
        %v5753 = vshll.u32 %v5498, 16
        %v5755 = vrot.slane %v5753, 5
        %v5756 = vsel %vm1076, %v5751, %v5755
        %v5758 = vshrl.u32 %v5499, 16
        %v5760 = vrot.slane %v5758, 4
        %v5761 = vshll.u32 %v5499, 16
        %v5763 = vrot.slane %v5761, 5
        %v5764 = vor.u32 %v5760, %v5763
        %v5765 = vrot.slane %v5764, 4
        %v5767 = vshll.u32 %v5500, 16
        %v5769 = vrot.slane %v5767, 5
        %v5770 = vsel %vm1076, %v5765, %v5769
        %v5771 = vshrl.u32 %v5500, 16
        %v5773 = vrot.slane %v5771, 4
        %v5774 = vor.u32 %v5773, %v5769
        %v5775 = vrot.slane %v5774, 4
        %v5777 = vshll.u32 %v5501, 16
        %v5779 = vrot.slane %v5777, 5
        %v5780 = vsel %vm1076, %v5775, %v5779
        %v5782 = vshrl.u32 %v5502, 16
        %v5784 = vrot.slane %v5782, 4
        %v5785 = vshll.u32 %v5502, 16
        %v5787 = vrot.slane %v5785, 5
        %v5788 = vor.u32 %v5784, %v5787
        %v5789 = vrot.slane %v5788, 4
        %v5791 = vshll.u32 %v5503, 16
        %v5793 = vrot.slane %v5791, 5
        %v5794 = vsel %vm1076, %v5789, %v5793
        %v5795 = vshrl.u32 %v5503, 16
        %v5797 = vrot.slane %v5795, 4
        %v5798 = vor.u32 %v5797, %v5793
        %v5799 = vrot.slane %v5798, 4
        %v5801 = vshll.u32 %v5504, 16
        %v5803 = vrot.slane %v5801, 5
        %v5804 = vsel %vm1076, %v5799, %v5803
        %v5806 = vshrl.u32 %v5505, 16
        %v5808 = vrot.slane %v5806, 4
        %v5809 = vshll.u32 %v5505, 16
        %v5811 = vrot.slane %v5809, 5
        %v5812 = vor.u32 %v5808, %v5811
        %v5813 = vrot.slane %v5812, 4
        %v5815 = vshll.u32 %v5506, 16
        %v5817 = vrot.slane %v5815, 5
        %v5818 = vsel %vm1076, %v5813, %v5817
        %v5819 = vshrl.u32 %v5506, 16
        %v5821 = vrot.slane %v5819, 4
        %v5822 = vor.u32 %v5821, %v5817
        %v5823 = vrot.slane %v5822, 4
        %v5825 = vshll.u32 %v5507, 16
        %v5827 = vrot.slane %v5825, 5
        %v5828 = vsel %vm1076, %v5823, %v5827
        %v5830 = vshrl.u32 %v5508, 16
        %v5832 = vrot.slane %v5830, 4
        %v5833 = vshll.u32 %v5508, 16
        %v5835 = vrot.slane %v5833, 5
        %v5836 = vor.u32 %v5832, %v5835
        %v5837 = vrot.slane %v5836, 4
        %v5839 = vshll.u32 %v5509, 16
        %v5841 = vrot.slane %v5839, 5
        %v5842 = vsel %vm1076, %v5837, %v5841
        %v5843 = vshrl.u32 %v5509, 16
        %v5845 = vrot.slane %v5843, 4
        %v5846 = vor.u32 %v5845, %v5841
        %v5847 = vrot.slane %v5846, 4
        %v5849 = vshll.u32 %v5510, 16
        %v5851 = vrot.slane %v5849, 5
        %v5852 = vsel %vm1076, %v5847, %v5851
        %v5854 = vshrl.u32 %v5511, 16
        %v5856 = vrot.slane %v5854, 4
        %v5857 = vshll.u32 %v5511, 16
        %v5859 = vrot.slane %v5857, 5
        %v5860 = vor.u32 %v5856, %v5859
        %v5861 = vrot.slane %v5860, 4
        %v5863 = vshll.u32 %v5512, 16
        %v5865 = vrot.slane %v5863, 5
        %v5866 = vsel %vm1076, %v5861, %v5865
        %v5867 = vshrl.u32 %v5512, 16
        %v5869 = vrot.slane %v5867, 4
        %v5870 = vor.u32 %v5869, %v5865
        %v5871 = vrot.slane %v5870, 4
        %v5873 = vshll.u32 %v5513, 16
        %v5875 = vrot.slane %v5873, 5
        %v5876 = vsel %vm1076, %v5871, %v5875
        %v5878 = vshrl.u32 %v5514, 16
        %v5880 = vrot.slane %v5878, 4
        %v5881 = vshll.u32 %v5514, 16
        %v5883 = vrot.slane %v5881, 5
        %v5884 = vor.u32 %v5880, %v5883
        %v5885 = vrot.slane %v5884, 4
        %v5887 = vshll.u32 %v5515, 16
        %v5889 = vrot.slane %v5887, 5
        %v5890 = vsel %vm1076, %v5885, %v5889
        %v5891 = vshrl.u32 %v5515, 16
        %v5893 = vrot.slane %v5891, 4
        %v5894 = vor.u32 %v5893, %v5889
        %v5895 = vrot.slane %v5894, 4
        %v5897 = vshll.u32 %v5516, 16
        %v5899 = vrot.slane %v5897, 5
        %v5900 = vsel %vm1076, %v5895, %v5899
        %s5901 = scalar_lea.vmem %s8, 48
        %v5902 = vld [vmem:[%s5901] sm:$0xf]
        %v5903 = vld [vmem:[%s5901 + $0x4] sm:$0xf]
        %v5904 = vld [vmem:[%s5901 + $0x8] sm:$0xf]
        %v5905 = vunpack.c.l.b16 %v5530
        %v5906 = vunpack.c.l.b16 %v5540
        %v5907 = vunpack.c.l.b16 %v5554
        %v5908 = vunpack.c.l.b16 %v5564
        %v5909 = vunpack.c.l.b16 %v5578
        %v5910 = vunpack.c.l.b16 %v5588
        %v5911 = vunpack.c.l.b16 %v5602
        %v5912 = vunpack.c.l.b16 %v5612
        %v5913 = vunpack.c.l.b16 %v5626
        %v5914 = vunpack.c.l.b16 %v5636
        %v5915 = vunpack.c.l.b16 %v5650
        %v5916 = vunpack.c.l.b16 %v5660
        %v5917 = vunpack.c.l.b16 %v5674
        %v5918 = vunpack.c.l.b16 %v5684
        %v5919 = vunpack.c.l.b16 %v5698
        %v5920 = vunpack.c.l.b16 %v5708
        %v5921 = vunpack.c.l.b16 %v5722
        %v5922 = vunpack.c.l.b16 %v5732
        %v5923 = vunpack.c.l.b16 %v5746
        %v5924 = vunpack.c.l.b16 %v5756
        %v5925 = vunpack.c.l.b16 %v5770
        %v5926 = vunpack.c.l.b16 %v5780
        %v5927 = vunpack.c.l.b16 %v5794
        %v5928 = vunpack.c.l.b16 %v5804
        %v5929 = vunpack.c.l.b16 %v5818
        %v5930 = vunpack.c.l.b16 %v5828
        %v5931 = vunpack.c.l.b16 %v5842
        %v5932 = vunpack.c.l.b16 %v5852
        %v5933 = vunpack.c.l.b16 %v5866
        %v5934 = vunpack.c.l.b16 %v5876
        %v5935 = vunpack.c.l.b16 %v5890
        %v5936 = vunpack.c.l.b16 %v5900
        %v5937 = vpack.c.b16 %v5906, %v5905
        %v5938 = vpack.c.b16 %v5908, %v5907
        %v5939 = vpack.c.b16 %v5910, %v5909
        %v5940 = vpack.c.b16 %v5912, %v5911
        %v5941 = vpack.c.b16 %v5914, %v5913
        %v5942 = vpack.c.b16 %v5916, %v5915
        %v5943 = vpack.c.b16 %v5918, %v5917
        %v5944 = vpack.c.b16 %v5920, %v5919
        %v5945 = vpack.c.b16 %v5922, %v5921
        %v5946 = vpack.c.b16 %v5924, %v5923
        %v5947 = vpack.c.b16 %v5926, %v5925
        %v5948 = vpack.c.b16 %v5928, %v5927
        %v5949 = vpack.c.b16 %v5930, %v5929
        %v5950 = vpack.c.b16 %v5932, %v5931
        %v5951 = vpack.c.b16 %v5934, %v5933
        %v5952 = vpack.c.b16 %v5936, %v5935
        %v5956 = vunpack.c.l.b16 %v5902
        %v5957 = vunpack.c.l.b16 %v5903
        %v5958 = vunpack.c.l.b16 %v5904
        %v5959 = vpack.c.b16 %v5957, %v5956
        %v5960 = vpack.c.b16 %v5958, %v5958
        %v5963 = vsel %vm4408, %v5937, 0
        %v5966 = vsel %vm4408, %v5938, 0
        %v5969 = vsel %vm4408, %v5939, 0
        %v5972 = vsel %vm4408, %v5940, 0
        %v5975 = vsel %vm4408, %v5941, 0
        %v5978 = vsel %vm4408, %v5942, 0
        %v5981 = vsel %vm4408, %v5943, 0
        %v5984 = vsel %vm4408, %v5944, 0
        %v5987 = vsel %vm4408, %v5945, 0
        %v5990 = vsel %vm4408, %v5946, 0
        %v5993 = vsel %vm4408, %v5947, 0
        %v5996 = vsel %vm4408, %v5948, 0
        %v5999 = vsel %vm4408, %v5949, 0
        %v6002 = vsel %vm4408, %v5950, 0
        %v6005 = vsel %vm4408, %v5951, 0
        %v6008 = vsel %vm4408, %v5952, 0
        %v6011 = vsel %vm4457, %v5960, 0
        %6013 = vmatpush.bf16.msra.mxu0 0
        %6014 = vmatpush.bf16.msra.mxu0 0
        %6015 = vmatpush.bf16.msra.mxu0 0
        %6016 = vmatpush.bf16.msra.mxu0 0
        %6017 = vmatpush.bf16.msra.mxu0 0
        %6018 = vmatpush.bf16.msra.mxu0 0
        %6019 = vmatpush.bf16.msra.mxu0 %v6011
        %6020 = vmatpush.bf16.msra.mxu0 %v5959
        %6021 = vmatmul.bf16.gmra.mxu0 %v5963
        %v6022 = vpop.f32.mrf.mxu0
        %v6023 = vadd.f32 0.0, %v6022
        %v6024 = vpop.f32.mrf.mxu0
        %v6025 = vadd.f32 0.0, %v6024
        %6026 = vmatmul.bf16.gmra.mxu0 %v5966
        %v6027 = vpop.f32.mrf.mxu0
        %v6028 = vadd.f32 0.0, %v6027
        %v6029 = vpop.f32.mrf.mxu0
        %v6030 = vadd.f32 0.0, %v6029
        %6031 = vmatmul.bf16.gmra.mxu0 %v5969
        %v6032 = vpop.f32.mrf.mxu0
        %v6033 = vadd.f32 0.0, %v6032
        %v6034 = vpop.f32.mrf.mxu0
        %v6035 = vadd.f32 0.0, %v6034
        %6036 = vmatmul.bf16.gmra.mxu0 %v5972
        %v6037 = vpop.f32.mrf.mxu0
        %v6038 = vadd.f32 0.0, %v6037
        %v6039 = vpop.f32.mrf.mxu0
        %v6040 = vadd.f32 0.0, %v6039
        %6041 = vmatmul.bf16.gmra.mxu0 %v5975
        %v6042 = vpop.f32.mrf.mxu0
        %v6043 = vadd.f32 0.0, %v6042
        %v6044 = vpop.f32.mrf.mxu0
        %v6045 = vadd.f32 0.0, %v6044
        %6046 = vmatmul.bf16.gmra.mxu0 %v5978
        %v6047 = vpop.f32.mrf.mxu0
        %v6048 = vadd.f32 0.0, %v6047
        %v6049 = vpop.f32.mrf.mxu0
        %v6050 = vadd.f32 0.0, %v6049
        %6051 = vmatmul.bf16.gmra.mxu0 %v5981
        %v6052 = vpop.f32.mrf.mxu0
        %v6053 = vadd.f32 0.0, %v6052
        %v6054 = vpop.f32.mrf.mxu0
        %v6055 = vadd.f32 0.0, %v6054
        %6056 = vmatmul.bf16.gmra.mxu0 %v5984
        %v6057 = vpop.f32.mrf.mxu0
        %v6058 = vadd.f32 0.0, %v6057
        %v6059 = vpop.f32.mrf.mxu0
        %v6060 = vadd.f32 0.0, %v6059
        %6061 = vmatmul.bf16.gmra.mxu0 %v5987
        %v6062 = vpop.f32.mrf.mxu0
        %v6063 = vadd.f32 0.0, %v6062
        %v6064 = vpop.f32.mrf.mxu0
        %v6065 = vadd.f32 0.0, %v6064
        %6066 = vmatmul.bf16.gmra.mxu0 %v5990
        %v6067 = vpop.f32.mrf.mxu0
        %v6068 = vadd.f32 0.0, %v6067
        %v6069 = vpop.f32.mrf.mxu0
        %v6070 = vadd.f32 0.0, %v6069
        %6071 = vmatmul.bf16.gmra.mxu0 %v5993
        %v6072 = vpop.f32.mrf.mxu0
        %v6073 = vadd.f32 0.0, %v6072
        %v6074 = vpop.f32.mrf.mxu0
        %v6075 = vadd.f32 0.0, %v6074
        %6076 = vmatmul.bf16.gmra.mxu0 %v5996
        %v6077 = vpop.f32.mrf.mxu0
        %v6078 = vadd.f32 0.0, %v6077
        %v6079 = vpop.f32.mrf.mxu0
        %v6080 = vadd.f32 0.0, %v6079
        %6081 = vmatmul.bf16.gmra.mxu0 %v5999
        %v6082 = vpop.f32.mrf.mxu0
        %v6083 = vadd.f32 0.0, %v6082
        %v6084 = vpop.f32.mrf.mxu0
        %v6085 = vadd.f32 0.0, %v6084
        %6086 = vmatmul.bf16.gmra.mxu0 %v6002
        %v6087 = vpop.f32.mrf.mxu0
        %v6088 = vadd.f32 0.0, %v6087
        %v6089 = vpop.f32.mrf.mxu0
        %v6090 = vadd.f32 0.0, %v6089
        %6091 = vmatmul.bf16.gmra.mxu0 %v6005
        %v6092 = vpop.f32.mrf.mxu0
        %v6093 = vadd.f32 0.0, %v6092
        %v6094 = vpop.f32.mrf.mxu0
        %v6095 = vadd.f32 0.0, %v6094
        %6096 = vmatmul.bf16.gmra.mxu0 %v6008
        %v6097 = vpop.f32.mrf.mxu0
        %v6098 = vadd.f32 0.0, %v6097
        %v6099 = vpop.f32.mrf.mxu0
        %v6100 = vadd.f32 0.0, %v6099
        %6101 = vdwg.mxu0
        %v6102 = vadd.f32 %v5437, %v6023
        %v6103 = vadd.f32 %v5438, %v6025
        %v6104 = vadd.f32 %v5439, %v6028
        %v6105 = vadd.f32 %v5440, %v6030
        %v6106 = vadd.f32 %v5441, %v6033
        %v6107 = vadd.f32 %v5442, %v6035
        %v6108 = vadd.f32 %v5443, %v6038
        %v6109 = vadd.f32 %v5444, %v6040
        %v6110 = vadd.f32 %v5445, %v6043
        %v6111 = vadd.f32 %v5446, %v6045
        %v6112 = vadd.f32 %v5447, %v6048
        %v6113 = vadd.f32 %v5448, %v6050
        %v6114 = vadd.f32 %v5449, %v6053
        %v6115 = vadd.f32 %v5450, %v6055
        %v6116 = vadd.f32 %v5451, %v6058
        %v6117 = vadd.f32 %v5452, %v6060
        %v6118 = vadd.f32 %v5453, %v6063
        %v6119 = vadd.f32 %v5454, %v6065
        %v6120 = vadd.f32 %v5455, %v6068
        %v6121 = vadd.f32 %v5456, %v6070
        %v6122 = vadd.f32 %v5457, %v6073
        %v6123 = vadd.f32 %v5458, %v6075
        %v6124 = vadd.f32 %v5459, %v6078
        %v6125 = vadd.f32 %v5460, %v6080
        %v6126 = vadd.f32 %v5461, %v6083
        %v6127 = vadd.f32 %v5462, %v6085
        %v6128 = vadd.f32 %v5463, %v6088
        %v6129 = vadd.f32 %v5464, %v6090
        %v6130 = vadd.f32 %v5465, %v6093
        %v6131 = vadd.f32 %v5466, %v6095
        %v6132 = vadd.f32 %v5467, %v6098
        %v6133 = vadd.f32 %v5468, %v6100
        %v6134 = vld [vmem:[%s2947] sm:$0xe]
        %v6135 = vld [vmem:[%s2947 + $0xc] sm:$0xe]
        %v6136 = vld [vmem:[%s2947 + $0x18] sm:$0xe]
        %v6137 = vld [vmem:[%s2947 + $0x24] sm:$0xe]
        %v6138 = vld [vmem:[%s2947 + $0x30] sm:$0xe]
        %v6139 = vld [vmem:[%s2947 + $0x3c] sm:$0xe]
        %v6140 = vld [vmem:[%s2947 + $0x48] sm:$0xe]
        %v6141 = vld [vmem:[%s2947 + $0x54] sm:$0xe]
        %v6142 = vld [vmem:[%s2947 + $0x60] sm:$0xe]
        %v6143 = vld [vmem:[%s2947 + $0x6c] sm:$0xe]
        %v6144 = vld [vmem:[%s2947 + $0x78] sm:$0xe]
        %v6145 = vld [vmem:[%s2947 + $0x84] sm:$0xe]
        %v6146 = vld [vmem:[%s2947 + $0x90] sm:$0xe]
        %v6147 = vld [vmem:[%s2947 + $0x9c] sm:$0xe]
        %v6148 = vld [vmem:[%s2947 + $0xa8] sm:$0xe]
        %v6149 = vld [vmem:[%s2947 + $0xb4] sm:$0xe]
        %v6198 = vrot.slane %v6134, 5
        %v6199 = vrot.slane %v6198, 4
        %v6200 = vrot.slane %v5470, 5
        %v6201 = vsel %vm1373, %v6199, %v6200
        %v6202 = vrot.slane %v6200, 4
        %v6203 = vrot.slane %v5471, 5
        %v6204 = vsel %vm1373, %v6202, %v6203
        %v6205 = vrot.slane %v6135, 5
        %v6206 = vrot.slane %v6205, 4
        %v6207 = vrot.slane %v5473, 5
        %v6208 = vsel %vm1373, %v6206, %v6207
        %v6209 = vrot.slane %v6207, 4
        %v6210 = vrot.slane %v5474, 5
        %v6211 = vsel %vm1373, %v6209, %v6210
        %v6212 = vrot.slane %v6136, 5
        %v6213 = vrot.slane %v6212, 4
        %v6214 = vrot.slane %v5476, 5
        %v6215 = vsel %vm1373, %v6213, %v6214
        %v6216 = vrot.slane %v6214, 4
        %v6217 = vrot.slane %v5477, 5
        %v6218 = vsel %vm1373, %v6216, %v6217
        %v6219 = vrot.slane %v6137, 5
        %v6220 = vrot.slane %v6219, 4
        %v6221 = vrot.slane %v5479, 5
        %v6222 = vsel %vm1373, %v6220, %v6221
        %v6223 = vrot.slane %v6221, 4
        %v6224 = vrot.slane %v5480, 5
        %v6225 = vsel %vm1373, %v6223, %v6224
        %v6226 = vrot.slane %v6138, 5
        %v6227 = vrot.slane %v6226, 4
        %v6228 = vrot.slane %v5482, 5
        %v6229 = vsel %vm1373, %v6227, %v6228
        %v6230 = vrot.slane %v6228, 4
        %v6231 = vrot.slane %v5483, 5
        %v6232 = vsel %vm1373, %v6230, %v6231
        %v6233 = vrot.slane %v6139, 5
        %v6234 = vrot.slane %v6233, 4
        %v6235 = vrot.slane %v5485, 5
        %v6236 = vsel %vm1373, %v6234, %v6235
        %v6237 = vrot.slane %v6235, 4
        %v6238 = vrot.slane %v5486, 5
        %v6239 = vsel %vm1373, %v6237, %v6238
        %v6240 = vrot.slane %v6140, 5
        %v6241 = vrot.slane %v6240, 4
        %v6242 = vrot.slane %v5488, 5
        %v6243 = vsel %vm1373, %v6241, %v6242
        %v6244 = vrot.slane %v6242, 4
        %v6245 = vrot.slane %v5489, 5
        %v6246 = vsel %vm1373, %v6244, %v6245
        %v6247 = vrot.slane %v6141, 5
        %v6248 = vrot.slane %v6247, 4
        %v6249 = vrot.slane %v5491, 5
        %v6250 = vsel %vm1373, %v6248, %v6249
        %v6251 = vrot.slane %v6249, 4
        %v6252 = vrot.slane %v5492, 5
        %v6253 = vsel %vm1373, %v6251, %v6252
        %v6254 = vrot.slane %v6142, 5
        %v6255 = vrot.slane %v6254, 4
        %v6256 = vrot.slane %v5494, 5
        %v6257 = vsel %vm1373, %v6255, %v6256
        %v6258 = vrot.slane %v6256, 4
        %v6259 = vrot.slane %v5495, 5
        %v6260 = vsel %vm1373, %v6258, %v6259
        %v6261 = vrot.slane %v6143, 5
        %v6262 = vrot.slane %v6261, 4
        %v6263 = vrot.slane %v5497, 5
        %v6264 = vsel %vm1373, %v6262, %v6263
        %v6265 = vrot.slane %v6263, 4
        %v6266 = vrot.slane %v5498, 5
        %v6267 = vsel %vm1373, %v6265, %v6266
        %v6268 = vrot.slane %v6144, 5
        %v6269 = vrot.slane %v6268, 4
        %v6270 = vrot.slane %v5500, 5
        %v6271 = vsel %vm1373, %v6269, %v6270
        %v6272 = vrot.slane %v6270, 4
        %v6273 = vrot.slane %v5501, 5
        %v6274 = vsel %vm1373, %v6272, %v6273
        %v6275 = vrot.slane %v6145, 5
        %v6276 = vrot.slane %v6275, 4
        %v6277 = vrot.slane %v5503, 5
        %v6278 = vsel %vm1373, %v6276, %v6277
        %v6279 = vrot.slane %v6277, 4
        %v6280 = vrot.slane %v5504, 5
        %v6281 = vsel %vm1373, %v6279, %v6280
        %v6282 = vrot.slane %v6146, 5
        %v6283 = vrot.slane %v6282, 4
        %v6284 = vrot.slane %v5506, 5
        %v6285 = vsel %vm1373, %v6283, %v6284
        %v6286 = vrot.slane %v6284, 4
        %v6287 = vrot.slane %v5507, 5
        %v6288 = vsel %vm1373, %v6286, %v6287
        %v6289 = vrot.slane %v6147, 5
        %v6290 = vrot.slane %v6289, 4
        %v6291 = vrot.slane %v5509, 5
        %v6292 = vsel %vm1373, %v6290, %v6291
        %v6293 = vrot.slane %v6291, 4
        %v6294 = vrot.slane %v5510, 5
        %v6295 = vsel %vm1373, %v6293, %v6294
        %v6296 = vrot.slane %v6148, 5
        %v6297 = vrot.slane %v6296, 4
        %v6298 = vrot.slane %v5512, 5
        %v6299 = vsel %vm1373, %v6297, %v6298
        %v6300 = vrot.slane %v6298, 4
        %v6301 = vrot.slane %v5513, 5
        %v6302 = vsel %vm1373, %v6300, %v6301
        %v6303 = vrot.slane %v6149, 5
        %v6304 = vrot.slane %v6303, 4
        %v6305 = vrot.slane %v5515, 5
        %v6306 = vsel %vm1373, %v6304, %v6305
        %v6307 = vrot.slane %v6305, 4
        %v6308 = vrot.slane %v5516, 5
        %v6309 = vsel %vm1373, %v6307, %v6308
        %s6310 = scalar_lea.vmem %s8, 60
        %v6311 = vld [vmem:[%s6310] sm:$0xf]
        %v6312 = vld [vmem:[%s6310 + $0x4] sm:$0xf]
        %v6313 = vld [vmem:[%s6310 + $0x8] sm:$0xf]
        %v6314 = vunpack.c.l.b16 %v6201
        %v6315 = vunpack.c.l.b16 %v6204
        %v6316 = vunpack.c.l.b16 %v6208
        %v6317 = vunpack.c.l.b16 %v6211
        %v6318 = vunpack.c.l.b16 %v6215
        %v6319 = vunpack.c.l.b16 %v6218
        %v6320 = vunpack.c.l.b16 %v6222
        %v6321 = vunpack.c.l.b16 %v6225
        %v6322 = vunpack.c.l.b16 %v6229
        %v6323 = vunpack.c.l.b16 %v6232
        %v6324 = vunpack.c.l.b16 %v6236
        %v6325 = vunpack.c.l.b16 %v6239
        %v6326 = vunpack.c.l.b16 %v6243
        %v6327 = vunpack.c.l.b16 %v6246
        %v6328 = vunpack.c.l.b16 %v6250
        %v6329 = vunpack.c.l.b16 %v6253
        %v6330 = vunpack.c.l.b16 %v6257
        %v6331 = vunpack.c.l.b16 %v6260
        %v6332 = vunpack.c.l.b16 %v6264
        %v6333 = vunpack.c.l.b16 %v6267
        %v6334 = vunpack.c.l.b16 %v6271
        %v6335 = vunpack.c.l.b16 %v6274
        %v6336 = vunpack.c.l.b16 %v6278
        %v6337 = vunpack.c.l.b16 %v6281
        %v6338 = vunpack.c.l.b16 %v6285
        %v6339 = vunpack.c.l.b16 %v6288
        %v6340 = vunpack.c.l.b16 %v6292
        %v6341 = vunpack.c.l.b16 %v6295
        %v6342 = vunpack.c.l.b16 %v6299
        %v6343 = vunpack.c.l.b16 %v6302
        %v6344 = vunpack.c.l.b16 %v6306
        %v6345 = vunpack.c.l.b16 %v6309
        %v6346 = vpack.c.b16 %v6315, %v6314
        %v6347 = vpack.c.b16 %v6317, %v6316
        %v6348 = vpack.c.b16 %v6319, %v6318
        %v6349 = vpack.c.b16 %v6321, %v6320
        %v6350 = vpack.c.b16 %v6323, %v6322
        %v6351 = vpack.c.b16 %v6325, %v6324
        %v6352 = vpack.c.b16 %v6327, %v6326
        %v6353 = vpack.c.b16 %v6329, %v6328
        %v6354 = vpack.c.b16 %v6331, %v6330
        %v6355 = vpack.c.b16 %v6333, %v6332
        %v6356 = vpack.c.b16 %v6335, %v6334
        %v6357 = vpack.c.b16 %v6337, %v6336
        %v6358 = vpack.c.b16 %v6339, %v6338
        %v6359 = vpack.c.b16 %v6341, %v6340
        %v6360 = vpack.c.b16 %v6343, %v6342
        %v6361 = vpack.c.b16 %v6345, %v6344
        %v6365 = vunpack.c.l.b16 %v6311
        %v6366 = vunpack.c.l.b16 %v6312
        %v6367 = vunpack.c.l.b16 %v6313
        %v6368 = vpack.c.b16 %v6366, %v6365
        %v6369 = vpack.c.b16 %v6367, %v6367
        %v6372 = vsel %vm4408, %v6346, 0
        %v6375 = vsel %vm4408, %v6347, 0
        %v6378 = vsel %vm4408, %v6348, 0
        %v6381 = vsel %vm4408, %v6349, 0
        %v6384 = vsel %vm4408, %v6350, 0
        %v6387 = vsel %vm4408, %v6351, 0
        %v6390 = vsel %vm4408, %v6352, 0
        %v6393 = vsel %vm4408, %v6353, 0
        %v6396 = vsel %vm4408, %v6354, 0
        %v6399 = vsel %vm4408, %v6355, 0
        %v6402 = vsel %vm4408, %v6356, 0
        %v6405 = vsel %vm4408, %v6357, 0
        %v6408 = vsel %vm4408, %v6358, 0
        %v6411 = vsel %vm4408, %v6359, 0
        %v6414 = vsel %vm4408, %v6360, 0
        %v6417 = vsel %vm4408, %v6361, 0
        %v6420 = vsel %vm4457, %v6369, 0
        %6422 = vmatpush.bf16.msra.mxu0 0
        %6423 = vmatpush.bf16.msra.mxu0 0
        %6424 = vmatpush.bf16.msra.mxu0 0
        %6425 = vmatpush.bf16.msra.mxu0 0
        %6426 = vmatpush.bf16.msra.mxu0 0
        %6427 = vmatpush.bf16.msra.mxu0 0
        %6428 = vmatpush.bf16.msra.mxu0 %v6420
        %6429 = vmatpush.bf16.msra.mxu0 %v6368
        %6430 = vmatmul.bf16.gmra.mxu0 %v6372
        %v6431 = vpop.f32.mrf.mxu0
        %v6432 = vadd.f32 0.0, %v6431
        %v6433 = vpop.f32.mrf.mxu0
        %v6434 = vadd.f32 0.0, %v6433
        %6435 = vmatmul.bf16.gmra.mxu0 %v6375
        %v6436 = vpop.f32.mrf.mxu0
        %v6437 = vadd.f32 0.0, %v6436
        %v6438 = vpop.f32.mrf.mxu0
        %v6439 = vadd.f32 0.0, %v6438
        %6440 = vmatmul.bf16.gmra.mxu0 %v6378
        %v6441 = vpop.f32.mrf.mxu0
        %v6442 = vadd.f32 0.0, %v6441
        %v6443 = vpop.f32.mrf.mxu0
        %v6444 = vadd.f32 0.0, %v6443
        %6445 = vmatmul.bf16.gmra.mxu0 %v6381
        %v6446 = vpop.f32.mrf.mxu0
        %v6447 = vadd.f32 0.0, %v6446
        %v6448 = vpop.f32.mrf.mxu0
        %v6449 = vadd.f32 0.0, %v6448
        %6450 = vmatmul.bf16.gmra.mxu0 %v6384
        %v6451 = vpop.f32.mrf.mxu0
        %v6452 = vadd.f32 0.0, %v6451
        %v6453 = vpop.f32.mrf.mxu0
        %v6454 = vadd.f32 0.0, %v6453
        %6455 = vmatmul.bf16.gmra.mxu0 %v6387
        %v6456 = vpop.f32.mrf.mxu0
        %v6457 = vadd.f32 0.0, %v6456
        %v6458 = vpop.f32.mrf.mxu0
        %v6459 = vadd.f32 0.0, %v6458
        %6460 = vmatmul.bf16.gmra.mxu0 %v6390
        %v6461 = vpop.f32.mrf.mxu0
        %v6462 = vadd.f32 0.0, %v6461
        %v6463 = vpop.f32.mrf.mxu0
        %v6464 = vadd.f32 0.0, %v6463
        %6465 = vmatmul.bf16.gmra.mxu0 %v6393
        %v6466 = vpop.f32.mrf.mxu0
        %v6467 = vadd.f32 0.0, %v6466
        %v6468 = vpop.f32.mrf.mxu0
        %v6469 = vadd.f32 0.0, %v6468
        %6470 = vmatmul.bf16.gmra.mxu0 %v6396
        %v6471 = vpop.f32.mrf.mxu0
        %v6472 = vadd.f32 0.0, %v6471
        %v6473 = vpop.f32.mrf.mxu0
        %v6474 = vadd.f32 0.0, %v6473
        %6475 = vmatmul.bf16.gmra.mxu0 %v6399
        %v6476 = vpop.f32.mrf.mxu0
        %v6477 = vadd.f32 0.0, %v6476
        %v6478 = vpop.f32.mrf.mxu0
        %v6479 = vadd.f32 0.0, %v6478
        %6480 = vmatmul.bf16.gmra.mxu0 %v6402
        %v6481 = vpop.f32.mrf.mxu0
        %v6482 = vadd.f32 0.0, %v6481
        %v6483 = vpop.f32.mrf.mxu0
        %v6484 = vadd.f32 0.0, %v6483
        %6485 = vmatmul.bf16.gmra.mxu0 %v6405
        %v6486 = vpop.f32.mrf.mxu0
        %v6487 = vadd.f32 0.0, %v6486
        %v6488 = vpop.f32.mrf.mxu0
        %v6489 = vadd.f32 0.0, %v6488
        %6490 = vmatmul.bf16.gmra.mxu0 %v6408
        %v6491 = vpop.f32.mrf.mxu0
        %v6492 = vadd.f32 0.0, %v6491
        %v6493 = vpop.f32.mrf.mxu0
        %v6494 = vadd.f32 0.0, %v6493
        %6495 = vmatmul.bf16.gmra.mxu0 %v6411
        %v6496 = vpop.f32.mrf.mxu0
        %v6497 = vadd.f32 0.0, %v6496
        %v6498 = vpop.f32.mrf.mxu0
        %v6499 = vadd.f32 0.0, %v6498
        %6500 = vmatmul.bf16.gmra.mxu0 %v6414
        %v6501 = vpop.f32.mrf.mxu0
        %v6502 = vadd.f32 0.0, %v6501
        %v6503 = vpop.f32.mrf.mxu0
        %v6504 = vadd.f32 0.0, %v6503
        %6505 = vmatmul.bf16.gmra.mxu0 %v6417
        %v6506 = vpop.f32.mrf.mxu0
        %v6507 = vadd.f32 0.0, %v6506
        %v6508 = vpop.f32.mrf.mxu0
        %v6509 = vadd.f32 0.0, %v6508
        %6510 = vdwg.mxu0
        %v6511 = vadd.f32 %v6102, %v6432
        %v6512 = vadd.f32 %v6103, %v6434
        %v6513 = vadd.f32 %v6104, %v6437
        %v6514 = vadd.f32 %v6105, %v6439
        %v6515 = vadd.f32 %v6106, %v6442
        %v6516 = vadd.f32 %v6107, %v6444
        %v6517 = vadd.f32 %v6108, %v6447
        %v6518 = vadd.f32 %v6109, %v6449
        %v6519 = vadd.f32 %v6110, %v6452
        %v6520 = vadd.f32 %v6111, %v6454
        %v6521 = vadd.f32 %v6112, %v6457
        %v6522 = vadd.f32 %v6113, %v6459
        %v6523 = vadd.f32 %v6114, %v6462
        %v6524 = vadd.f32 %v6115, %v6464
        %v6525 = vadd.f32 %v6116, %v6467
        %v6526 = vadd.f32 %v6117, %v6469
        %v6527 = vadd.f32 %v6118, %v6472
        %v6528 = vadd.f32 %v6119, %v6474
        %v6529 = vadd.f32 %v6120, %v6477
        %v6530 = vadd.f32 %v6121, %v6479
        %v6531 = vadd.f32 %v6122, %v6482
        %v6532 = vadd.f32 %v6123, %v6484
        %v6533 = vadd.f32 %v6124, %v6487
        %v6534 = vadd.f32 %v6125, %v6489
        %v6535 = vadd.f32 %v6126, %v6492
        %v6536 = vadd.f32 %v6127, %v6494
        %v6537 = vadd.f32 %v6128, %v6497
        %v6538 = vadd.f32 %v6129, %v6499
        %v6539 = vadd.f32 %v6130, %v6502
        %v6540 = vadd.f32 %v6131, %v6504
        %v6541 = vadd.f32 %v6132, %v6507
        %v6542 = vadd.f32 %v6133, %v6509
        %s6543 = scalar_lea.vmem [#allocation3], 24
        %v6544 = vld [vmem:[%s6543] sm:$0xf]
        %v6545 = vld [vmem:[%s6543 + $0x4] sm:$0xf]
        %v6546 = vld [vmem:[%s6543 + $0xc] sm:$0xf]
        %v6547 = vld [vmem:[%s6543 + $0x10] sm:$0xf]
        %v6548 = vld [vmem:[%s6543 + $0x18] sm:$0xf]
        %v6549 = vld [vmem:[%s6543 + $0x1c] sm:$0xf]
        %v6550 = vld [vmem:[%s6543 + $0x24] sm:$0xf]
        %v6551 = vld [vmem:[%s6543 + $0x28] sm:$0xf]
        %v6552 = vld [vmem:[%s6543 + $0x30] sm:$0xf]
        %v6553 = vld [vmem:[%s6543 + $0x34] sm:$0xf]
        %v6554 = vld [vmem:[%s6543 + $0x3c] sm:$0xf]
        %v6555 = vld [vmem:[%s6543 + $0x40] sm:$0xf]
        %v6556 = vld [vmem:[%s6543 + $0x48] sm:$0xf]
        %v6557 = vld [vmem:[%s6543 + $0x4c] sm:$0xf]
        %v6558 = vld [vmem:[%s6543 + $0x54] sm:$0xf]
        %v6559 = vld [vmem:[%s6543 + $0x58] sm:$0xf]
        %v6560 = vld [vmem:[%s6543 + $0x60] sm:$0xf]
        %v6561 = vld [vmem:[%s6543 + $0x64] sm:$0xf]
        %v6562 = vld [vmem:[%s6543 + $0x6c] sm:$0xf]
        %v6563 = vld [vmem:[%s6543 + $0x70] sm:$0xf]
        %v6564 = vld [vmem:[%s6543 + $0x78] sm:$0xf]
        %v6565 = vld [vmem:[%s6543 + $0x7c] sm:$0xf]
        %v6566 = vld [vmem:[%s6543 + $0x84] sm:$0xf]
        %v6567 = vld [vmem:[%s6543 + $0x88] sm:$0xf]
        %v6568 = vld [vmem:[%s6543 + $0x90] sm:$0xf]
        %v6569 = vld [vmem:[%s6543 + $0x94] sm:$0xf]
        %v6570 = vld [vmem:[%s6543 + $0x9c] sm:$0xf]
        %v6571 = vld [vmem:[%s6543 + $0xa0] sm:$0xf]
        %v6572 = vld [vmem:[%s6543 + $0xa8] sm:$0xf]
        %v6573 = vld [vmem:[%s6543 + $0xac] sm:$0xf]
        %v6574 = vld [vmem:[%s6543 + $0xb4] sm:$0xf]
        %v6575 = vld [vmem:[%s6543 + $0xb8] sm:$0xf]
        %s6576 = scalar_lea.vmem %s8, 72
        %v6577 = vld [vmem:[%s6576] sm:$0xf]
        %v6578 = vld [vmem:[%s6576 + $0x4] sm:$0xf]
        %v6579 = vld [vmem:[%s6576 + $0x8] sm:$0xf]
        %v6612 = vunpack.c.l.b16 %v6544
        %v6613 = vunpack.c.l.b16 %v6545
        %v6614 = vunpack.c.l.b16 %v6546
        %v6615 = vunpack.c.l.b16 %v6547
        %v6616 = vunpack.c.l.b16 %v6548
        %v6617 = vunpack.c.l.b16 %v6549
        %v6618 = vunpack.c.l.b16 %v6550
        %v6619 = vunpack.c.l.b16 %v6551
        %v6620 = vunpack.c.l.b16 %v6552
        %v6621 = vunpack.c.l.b16 %v6553
        %v6622 = vunpack.c.l.b16 %v6554
        %v6623 = vunpack.c.l.b16 %v6555
        %v6624 = vunpack.c.l.b16 %v6556
        %v6625 = vunpack.c.l.b16 %v6557
        %v6626 = vunpack.c.l.b16 %v6558
        %v6627 = vunpack.c.l.b16 %v6559
        %v6628 = vunpack.c.l.b16 %v6560
        %v6629 = vunpack.c.l.b16 %v6561
        %v6630 = vunpack.c.l.b16 %v6562
        %v6631 = vunpack.c.l.b16 %v6563
        %v6632 = vunpack.c.l.b16 %v6564
        %v6633 = vunpack.c.l.b16 %v6565
        %v6634 = vunpack.c.l.b16 %v6566
        %v6635 = vunpack.c.l.b16 %v6567
        %v6636 = vunpack.c.l.b16 %v6568
        %v6637 = vunpack.c.l.b16 %v6569
        %v6638 = vunpack.c.l.b16 %v6570
        %v6639 = vunpack.c.l.b16 %v6571
        %v6640 = vunpack.c.l.b16 %v6572
        %v6641 = vunpack.c.l.b16 %v6573
        %v6642 = vunpack.c.l.b16 %v6574
        %v6643 = vunpack.c.l.b16 %v6575
        %v6644 = vpack.c.b16 %v6613, %v6612
        %v6645 = vpack.c.b16 %v6615, %v6614
        %v6646 = vpack.c.b16 %v6617, %v6616
        %v6647 = vpack.c.b16 %v6619, %v6618
        %v6648 = vpack.c.b16 %v6621, %v6620
        %v6649 = vpack.c.b16 %v6623, %v6622
        %v6650 = vpack.c.b16 %v6625, %v6624
        %v6651 = vpack.c.b16 %v6627, %v6626
        %v6652 = vpack.c.b16 %v6629, %v6628
        %v6653 = vpack.c.b16 %v6631, %v6630
        %v6654 = vpack.c.b16 %v6633, %v6632
        %v6655 = vpack.c.b16 %v6635, %v6634
        %v6656 = vpack.c.b16 %v6637, %v6636
        %v6657 = vpack.c.b16 %v6639, %v6638
        %v6658 = vpack.c.b16 %v6641, %v6640
        %v6659 = vpack.c.b16 %v6643, %v6642
        %v6663 = vunpack.c.l.b16 %v6577
        %v6664 = vunpack.c.l.b16 %v6578
        %v6665 = vunpack.c.l.b16 %v6579
        %v6666 = vpack.c.b16 %v6664, %v6663
        %v6667 = vpack.c.b16 %v6665, %v6665
        %v6670 = vsel %vm4408, %v6644, 0
        %v6673 = vsel %vm4408, %v6645, 0
        %v6676 = vsel %vm4408, %v6646, 0
        %v6679 = vsel %vm4408, %v6647, 0
        %v6682 = vsel %vm4408, %v6648, 0
        %v6685 = vsel %vm4408, %v6649, 0
        %v6688 = vsel %vm4408, %v6650, 0
        %v6691 = vsel %vm4408, %v6651, 0
        %v6694 = vsel %vm4408, %v6652, 0
        %v6697 = vsel %vm4408, %v6653, 0
        %v6700 = vsel %vm4408, %v6654, 0
        %v6703 = vsel %vm4408, %v6655, 0
        %v6706 = vsel %vm4408, %v6656, 0
        %v6709 = vsel %vm4408, %v6657, 0
        %v6712 = vsel %vm4408, %v6658, 0
        %v6715 = vsel %vm4408, %v6659, 0
        %v6718 = vsel %vm4457, %v6667, 0
        %6720 = vmatpush.bf16.msra.mxu0 0
        %6721 = vmatpush.bf16.msra.mxu0 0
        %6722 = vmatpush.bf16.msra.mxu0 0
        %6723 = vmatpush.bf16.msra.mxu0 0
        %6724 = vmatpush.bf16.msra.mxu0 0
        %6725 = vmatpush.bf16.msra.mxu0 0
        %6726 = vmatpush.bf16.msra.mxu0 %v6718
        %6727 = vmatpush.bf16.msra.mxu0 %v6666
        %6728 = vmatmul.bf16.gmra.mxu0 %v6670
        %v6729 = vpop.f32.mrf.mxu0
        %v6730 = vadd.f32 0.0, %v6729
        %v6731 = vpop.f32.mrf.mxu0
        %v6732 = vadd.f32 0.0, %v6731
        %6733 = vmatmul.bf16.gmra.mxu0 %v6673
        %v6734 = vpop.f32.mrf.mxu0
        %v6735 = vadd.f32 0.0, %v6734
        %v6736 = vpop.f32.mrf.mxu0
        %v6737 = vadd.f32 0.0, %v6736
        %6738 = vmatmul.bf16.gmra.mxu0 %v6676
        %v6739 = vpop.f32.mrf.mxu0
        %v6740 = vadd.f32 0.0, %v6739
        %v6741 = vpop.f32.mrf.mxu0
        %v6742 = vadd.f32 0.0, %v6741
        %6743 = vmatmul.bf16.gmra.mxu0 %v6679
        %v6744 = vpop.f32.mrf.mxu0
        %v6745 = vadd.f32 0.0, %v6744
        %v6746 = vpop.f32.mrf.mxu0
        %v6747 = vadd.f32 0.0, %v6746
        %6748 = vmatmul.bf16.gmra.mxu0 %v6682
        %v6749 = vpop.f32.mrf.mxu0
        %v6750 = vadd.f32 0.0, %v6749
        %v6751 = vpop.f32.mrf.mxu0
        %v6752 = vadd.f32 0.0, %v6751
        %6753 = vmatmul.bf16.gmra.mxu0 %v6685
        %v6754 = vpop.f32.mrf.mxu0
        %v6755 = vadd.f32 0.0, %v6754
        %v6756 = vpop.f32.mrf.mxu0
        %v6757 = vadd.f32 0.0, %v6756
        %6758 = vmatmul.bf16.gmra.mxu0 %v6688
        %v6759 = vpop.f32.mrf.mxu0
        %v6760 = vadd.f32 0.0, %v6759
        %v6761 = vpop.f32.mrf.mxu0
        %v6762 = vadd.f32 0.0, %v6761
        %6763 = vmatmul.bf16.gmra.mxu0 %v6691
        %v6764 = vpop.f32.mrf.mxu0
        %v6765 = vadd.f32 0.0, %v6764
        %v6766 = vpop.f32.mrf.mxu0
        %v6767 = vadd.f32 0.0, %v6766
        %6768 = vmatmul.bf16.gmra.mxu0 %v6694
        %v6769 = vpop.f32.mrf.mxu0
        %v6770 = vadd.f32 0.0, %v6769
        %v6771 = vpop.f32.mrf.mxu0
        %v6772 = vadd.f32 0.0, %v6771
        %6773 = vmatmul.bf16.gmra.mxu0 %v6697
        %v6774 = vpop.f32.mrf.mxu0
        %v6775 = vadd.f32 0.0, %v6774
        %v6776 = vpop.f32.mrf.mxu0
        %v6777 = vadd.f32 0.0, %v6776
        %6778 = vmatmul.bf16.gmra.mxu0 %v6700
        %v6779 = vpop.f32.mrf.mxu0
        %v6780 = vadd.f32 0.0, %v6779
        %v6781 = vpop.f32.mrf.mxu0
        %v6782 = vadd.f32 0.0, %v6781
        %6783 = vmatmul.bf16.gmra.mxu0 %v6703
        %v6784 = vpop.f32.mrf.mxu0
        %v6785 = vadd.f32 0.0, %v6784
        %v6786 = vpop.f32.mrf.mxu0
        %v6787 = vadd.f32 0.0, %v6786
        %6788 = vmatmul.bf16.gmra.mxu0 %v6706
        %v6789 = vpop.f32.mrf.mxu0
        %v6790 = vadd.f32 0.0, %v6789
        %v6791 = vpop.f32.mrf.mxu0
        %v6792 = vadd.f32 0.0, %v6791
        %6793 = vmatmul.bf16.gmra.mxu0 %v6709
        %v6794 = vpop.f32.mrf.mxu0
        %v6795 = vadd.f32 0.0, %v6794
        %v6796 = vpop.f32.mrf.mxu0
        %v6797 = vadd.f32 0.0, %v6796
        %6798 = vmatmul.bf16.gmra.mxu0 %v6712
        %v6799 = vpop.f32.mrf.mxu0
        %v6800 = vadd.f32 0.0, %v6799
        %v6801 = vpop.f32.mrf.mxu0
        %v6802 = vadd.f32 0.0, %v6801
        %6803 = vmatmul.bf16.gmra.mxu0 %v6715
        %v6804 = vpop.f32.mrf.mxu0
        %v6805 = vadd.f32 0.0, %v6804
        %v6806 = vpop.f32.mrf.mxu0
        %v6807 = vadd.f32 0.0, %v6806
        %6808 = vdwg.mxu0
        %v6809 = vadd.f32 %v6511, %v6730
        %v6810 = vadd.f32 %v6512, %v6732
        %v6811 = vadd.f32 %v6513, %v6735
        %v6812 = vadd.f32 %v6514, %v6737
        %v6813 = vadd.f32 %v6515, %v6740
        %v6814 = vadd.f32 %v6516, %v6742
        %v6815 = vadd.f32 %v6517, %v6745
        %v6816 = vadd.f32 %v6518, %v6747
        %v6817 = vadd.f32 %v6519, %v6750
        %v6818 = vadd.f32 %v6520, %v6752
        %v6819 = vadd.f32 %v6521, %v6755
        %v6820 = vadd.f32 %v6522, %v6757
        %v6821 = vadd.f32 %v6523, %v6760
        %v6822 = vadd.f32 %v6524, %v6762
        %v6823 = vadd.f32 %v6525, %v6765
        %v6824 = vadd.f32 %v6526, %v6767
        %v6825 = vadd.f32 %v6527, %v6770
        %v6826 = vadd.f32 %v6528, %v6772
        %v6827 = vadd.f32 %v6529, %v6775
        %v6828 = vadd.f32 %v6530, %v6777
        %v6829 = vadd.f32 %v6531, %v6780
        %v6830 = vadd.f32 %v6532, %v6782
        %v6831 = vadd.f32 %v6533, %v6785
        %v6832 = vadd.f32 %v6534, %v6787
        %v6833 = vadd.f32 %v6535, %v6790
        %v6834 = vadd.f32 %v6536, %v6792
        %v6835 = vadd.f32 %v6537, %v6795
        %v6836 = vadd.f32 %v6538, %v6797
        %v6837 = vadd.f32 %v6539, %v6800
        %v6838 = vadd.f32 %v6540, %v6802
        %v6839 = vadd.f32 %v6541, %v6805
        %v6840 = vadd.f32 %v6542, %v6807
        %v6841 = vld [vmem:[%s6543] sm:$0xf]
        %v6842 = vld [vmem:[%s6543 + $0x4] sm:$0xf]
        %v6843 = vld [vmem:[%s6543 + $0x8] sm:$0x1]
        %v6844 = vld [vmem:[%s6543 + $0xc] sm:$0xf]
        %v6845 = vld [vmem:[%s6543 + $0x10] sm:$0xf]
        %v6846 = vld [vmem:[%s6543 + $0x14] sm:$0x1]
        %v6847 = vld [vmem:[%s6543 + $0x18] sm:$0xf]
        %v6848 = vld [vmem:[%s6543 + $0x1c] sm:$0xf]
        %v6849 = vld [vmem:[%s6543 + $0x20] sm:$0x1]
        %v6850 = vld [vmem:[%s6543 + $0x24] sm:$0xf]
        %v6851 = vld [vmem:[%s6543 + $0x28] sm:$0xf]
        %v6852 = vld [vmem:[%s6543 + $0x2c] sm:$0x1]
        %v6853 = vld [vmem:[%s6543 + $0x30] sm:$0xf]
        %v6854 = vld [vmem:[%s6543 + $0x34] sm:$0xf]
        %v6855 = vld [vmem:[%s6543 + $0x38] sm:$0x1]
        %v6856 = vld [vmem:[%s6543 + $0x3c] sm:$0xf]
        %v6857 = vld [vmem:[%s6543 + $0x40] sm:$0xf]
        %v6858 = vld [vmem:[%s6543 + $0x44] sm:$0x1]
        %v6859 = vld [vmem:[%s6543 + $0x48] sm:$0xf]
        %v6860 = vld [vmem:[%s6543 + $0x4c] sm:$0xf]
        %v6861 = vld [vmem:[%s6543 + $0x50] sm:$0x1]
        %v6862 = vld [vmem:[%s6543 + $0x54] sm:$0xf]
        %v6863 = vld [vmem:[%s6543 + $0x58] sm:$0xf]
        %v6864 = vld [vmem:[%s6543 + $0x5c] sm:$0x1]
        %v6865 = vld [vmem:[%s6543 + $0x60] sm:$0xf]
        %v6866 = vld [vmem:[%s6543 + $0x64] sm:$0xf]
        %v6867 = vld [vmem:[%s6543 + $0x68] sm:$0x1]
        %v6868 = vld [vmem:[%s6543 + $0x6c] sm:$0xf]
        %v6869 = vld [vmem:[%s6543 + $0x70] sm:$0xf]
        %v6870 = vld [vmem:[%s6543 + $0x74] sm:$0x1]
        %v6871 = vld [vmem:[%s6543 + $0x78] sm:$0xf]
        %v6872 = vld [vmem:[%s6543 + $0x7c] sm:$0xf]
        %v6873 = vld [vmem:[%s6543 + $0x80] sm:$0x1]
        %v6874 = vld [vmem:[%s6543 + $0x84] sm:$0xf]
        %v6875 = vld [vmem:[%s6543 + $0x88] sm:$0xf]
        %v6876 = vld [vmem:[%s6543 + $0x8c] sm:$0x1]
        %v6877 = vld [vmem:[%s6543 + $0x90] sm:$0xf]
        %v6878 = vld [vmem:[%s6543 + $0x94] sm:$0xf]
        %v6879 = vld [vmem:[%s6543 + $0x98] sm:$0x1]
        %v6880 = vld [vmem:[%s6543 + $0x9c] sm:$0xf]
        %v6881 = vld [vmem:[%s6543 + $0xa0] sm:$0xf]
        %v6882 = vld [vmem:[%s6543 + $0xa4] sm:$0x1]
        %v6883 = vld [vmem:[%s6543 + $0xa8] sm:$0xf]
        %v6884 = vld [vmem:[%s6543 + $0xac] sm:$0xf]
        %v6885 = vld [vmem:[%s6543 + $0xb0] sm:$0x1]
        %v6886 = vld [vmem:[%s6543 + $0xb4] sm:$0xf]
        %v6887 = vld [vmem:[%s6543 + $0xb8] sm:$0xf]
        %v6888 = vld [vmem:[%s6543 + $0xbc] sm:$0x1]
        %v6890 = vshrl.u32 %v6841, 16
        %v6892 = vrot.slane %v6890, 4
        %v6893 = vshll.u32 %v6841, 16
        %v6895 = vrot.slane %v6893, 5
        %v6896 = vor.u32 %v6892, %v6895
        %v6897 = vrot.slane %v6896, 4
        %v6899 = vshll.u32 %v6842, 16
        %v6901 = vrot.slane %v6899, 5
        %v6902 = vsel %vm1076, %v6897, %v6901
        %v6903 = vshrl.u32 %v6842, 16
        %v6905 = vrot.slane %v6903, 4
        %v6906 = vor.u32 %v6905, %v6901
        %v6907 = vrot.slane %v6906, 4
        %v6909 = vshll.u32 %v6843, 16
        %v6911 = vrot.slane %v6909, 5
        %v6912 = vsel %vm1076, %v6907, %v6911
        %v6914 = vshrl.u32 %v6844, 16
        %v6916 = vrot.slane %v6914, 4
        %v6917 = vshll.u32 %v6844, 16
        %v6919 = vrot.slane %v6917, 5
        %v6920 = vor.u32 %v6916, %v6919
        %v6921 = vrot.slane %v6920, 4
        %v6923 = vshll.u32 %v6845, 16
        %v6925 = vrot.slane %v6923, 5
        %v6926 = vsel %vm1076, %v6921, %v6925
        %v6927 = vshrl.u32 %v6845, 16
        %v6929 = vrot.slane %v6927, 4
        %v6930 = vor.u32 %v6929, %v6925
        %v6931 = vrot.slane %v6930, 4
        %v6933 = vshll.u32 %v6846, 16
        %v6935 = vrot.slane %v6933, 5
        %v6936 = vsel %vm1076, %v6931, %v6935
        %v6938 = vshrl.u32 %v6847, 16
        %v6940 = vrot.slane %v6938, 4
        %v6941 = vshll.u32 %v6847, 16
        %v6943 = vrot.slane %v6941, 5
        %v6944 = vor.u32 %v6940, %v6943
        %v6945 = vrot.slane %v6944, 4
        %v6947 = vshll.u32 %v6848, 16
        %v6949 = vrot.slane %v6947, 5
        %v6950 = vsel %vm1076, %v6945, %v6949
        %v6951 = vshrl.u32 %v6848, 16
        %v6953 = vrot.slane %v6951, 4
        %v6954 = vor.u32 %v6953, %v6949
        %v6955 = vrot.slane %v6954, 4
        %v6957 = vshll.u32 %v6849, 16
        %v6959 = vrot.slane %v6957, 5
        %v6960 = vsel %vm1076, %v6955, %v6959
        %v6962 = vshrl.u32 %v6850, 16
        %v6964 = vrot.slane %v6962, 4
        %v6965 = vshll.u32 %v6850, 16
        %v6967 = vrot.slane %v6965, 5
        %v6968 = vor.u32 %v6964, %v6967
        %v6969 = vrot.slane %v6968, 4
        %v6971 = vshll.u32 %v6851, 16
        %v6973 = vrot.slane %v6971, 5
        %v6974 = vsel %vm1076, %v6969, %v6973
        %v6975 = vshrl.u32 %v6851, 16
        %v6977 = vrot.slane %v6975, 4
        %v6978 = vor.u32 %v6977, %v6973
        %v6979 = vrot.slane %v6978, 4
        %v6981 = vshll.u32 %v6852, 16
        %v6983 = vrot.slane %v6981, 5
        %v6984 = vsel %vm1076, %v6979, %v6983
        %v6986 = vshrl.u32 %v6853, 16
        %v6988 = vrot.slane %v6986, 4
        %v6989 = vshll.u32 %v6853, 16
        %v6991 = vrot.slane %v6989, 5
        %v6992 = vor.u32 %v6988, %v6991
        %v6993 = vrot.slane %v6992, 4
        %v6995 = vshll.u32 %v6854, 16
        %v6997 = vrot.slane %v6995, 5
        %v6998 = vsel %vm1076, %v6993, %v6997
        %v6999 = vshrl.u32 %v6854, 16
        %v7001 = vrot.slane %v6999, 4
        %v7002 = vor.u32 %v7001, %v6997
        %v7003 = vrot.slane %v7002, 4
        %v7005 = vshll.u32 %v6855, 16
        %v7007 = vrot.slane %v7005, 5
        %v7008 = vsel %vm1076, %v7003, %v7007
        %v7010 = vshrl.u32 %v6856, 16
        %v7012 = vrot.slane %v7010, 4
        %v7013 = vshll.u32 %v6856, 16
        %v7015 = vrot.slane %v7013, 5
        %v7016 = vor.u32 %v7012, %v7015
        %v7017 = vrot.slane %v7016, 4
        %v7019 = vshll.u32 %v6857, 16
        %v7021 = vrot.slane %v7019, 5
        %v7022 = vsel %vm1076, %v7017, %v7021
        %v7023 = vshrl.u32 %v6857, 16
        %v7025 = vrot.slane %v7023, 4
        %v7026 = vor.u32 %v7025, %v7021
        %v7027 = vrot.slane %v7026, 4
        %v7029 = vshll.u32 %v6858, 16
        %v7031 = vrot.slane %v7029, 5
        %v7032 = vsel %vm1076, %v7027, %v7031
        %v7034 = vshrl.u32 %v6859, 16
        %v7036 = vrot.slane %v7034, 4
        %v7037 = vshll.u32 %v6859, 16
        %v7039 = vrot.slane %v7037, 5
        %v7040 = vor.u32 %v7036, %v7039
        %v7041 = vrot.slane %v7040, 4
        %v7043 = vshll.u32 %v6860, 16
        %v7045 = vrot.slane %v7043, 5
        %v7046 = vsel %vm1076, %v7041, %v7045
        %v7047 = vshrl.u32 %v6860, 16
        %v7049 = vrot.slane %v7047, 4
        %v7050 = vor.u32 %v7049, %v7045
        %v7051 = vrot.slane %v7050, 4
        %v7053 = vshll.u32 %v6861, 16
        %v7055 = vrot.slane %v7053, 5
        %v7056 = vsel %vm1076, %v7051, %v7055
        %v7058 = vshrl.u32 %v6862, 16
        %v7060 = vrot.slane %v7058, 4
        %v7061 = vshll.u32 %v6862, 16
        %v7063 = vrot.slane %v7061, 5
        %v7064 = vor.u32 %v7060, %v7063
        %v7065 = vrot.slane %v7064, 4
        %v7067 = vshll.u32 %v6863, 16
        %v7069 = vrot.slane %v7067, 5
        %v7070 = vsel %vm1076, %v7065, %v7069
        %v7071 = vshrl.u32 %v6863, 16
        %v7073 = vrot.slane %v7071, 4
        %v7074 = vor.u32 %v7073, %v7069
        %v7075 = vrot.slane %v7074, 4
        %v7077 = vshll.u32 %v6864, 16
        %v7079 = vrot.slane %v7077, 5
        %v7080 = vsel %vm1076, %v7075, %v7079
        %v7082 = vshrl.u32 %v6865, 16
        %v7084 = vrot.slane %v7082, 4
        %v7085 = vshll.u32 %v6865, 16
        %v7087 = vrot.slane %v7085, 5
        %v7088 = vor.u32 %v7084, %v7087
        %v7089 = vrot.slane %v7088, 4
        %v7091 = vshll.u32 %v6866, 16
        %v7093 = vrot.slane %v7091, 5
        %v7094 = vsel %vm1076, %v7089, %v7093
        %v7095 = vshrl.u32 %v6866, 16
        %v7097 = vrot.slane %v7095, 4
        %v7098 = vor.u32 %v7097, %v7093
        %v7099 = vrot.slane %v7098, 4
        %v7101 = vshll.u32 %v6867, 16
        %v7103 = vrot.slane %v7101, 5
        %v7104 = vsel %vm1076, %v7099, %v7103
        %v7106 = vshrl.u32 %v6868, 16
        %v7108 = vrot.slane %v7106, 4
        %v7109 = vshll.u32 %v6868, 16
        %v7111 = vrot.slane %v7109, 5
        %v7112 = vor.u32 %v7108, %v7111
        %v7113 = vrot.slane %v7112, 4
        %v7115 = vshll.u32 %v6869, 16
        %v7117 = vrot.slane %v7115, 5
        %v7118 = vsel %vm1076, %v7113, %v7117
        %v7119 = vshrl.u32 %v6869, 16
        %v7121 = vrot.slane %v7119, 4
        %v7122 = vor.u32 %v7121, %v7117
        %v7123 = vrot.slane %v7122, 4
        %v7125 = vshll.u32 %v6870, 16
        %v7127 = vrot.slane %v7125, 5
        %v7128 = vsel %vm1076, %v7123, %v7127
        %v7130 = vshrl.u32 %v6871, 16
        %v7132 = vrot.slane %v7130, 4
        %v7133 = vshll.u32 %v6871, 16
        %v7135 = vrot.slane %v7133, 5
        %v7136 = vor.u32 %v7132, %v7135
        %v7137 = vrot.slane %v7136, 4
        %v7139 = vshll.u32 %v6872, 16
        %v7141 = vrot.slane %v7139, 5
        %v7142 = vsel %vm1076, %v7137, %v7141
        %v7143 = vshrl.u32 %v6872, 16
        %v7145 = vrot.slane %v7143, 4
        %v7146 = vor.u32 %v7145, %v7141
        %v7147 = vrot.slane %v7146, 4
        %v7149 = vshll.u32 %v6873, 16
        %v7151 = vrot.slane %v7149, 5
        %v7152 = vsel %vm1076, %v7147, %v7151
        %v7154 = vshrl.u32 %v6874, 16
        %v7156 = vrot.slane %v7154, 4
        %v7157 = vshll.u32 %v6874, 16
        %v7159 = vrot.slane %v7157, 5
        %v7160 = vor.u32 %v7156, %v7159
        %v7161 = vrot.slane %v7160, 4
        %v7163 = vshll.u32 %v6875, 16
        %v7165 = vrot.slane %v7163, 5
        %v7166 = vsel %vm1076, %v7161, %v7165
        %v7167 = vshrl.u32 %v6875, 16
        %v7169 = vrot.slane %v7167, 4
        %v7170 = vor.u32 %v7169, %v7165
        %v7171 = vrot.slane %v7170, 4
        %v7173 = vshll.u32 %v6876, 16
        %v7175 = vrot.slane %v7173, 5
        %v7176 = vsel %vm1076, %v7171, %v7175
        %v7178 = vshrl.u32 %v6877, 16
        %v7180 = vrot.slane %v7178, 4
        %v7181 = vshll.u32 %v6877, 16
        %v7183 = vrot.slane %v7181, 5
        %v7184 = vor.u32 %v7180, %v7183
        %v7185 = vrot.slane %v7184, 4
        %v7187 = vshll.u32 %v6878, 16
        %v7189 = vrot.slane %v7187, 5
        %v7190 = vsel %vm1076, %v7185, %v7189
        %v7191 = vshrl.u32 %v6878, 16
        %v7193 = vrot.slane %v7191, 4
        %v7194 = vor.u32 %v7193, %v7189
        %v7195 = vrot.slane %v7194, 4
        %v7197 = vshll.u32 %v6879, 16
        %v7199 = vrot.slane %v7197, 5
        %v7200 = vsel %vm1076, %v7195, %v7199
        %v7202 = vshrl.u32 %v6880, 16
        %v7204 = vrot.slane %v7202, 4
        %v7205 = vshll.u32 %v6880, 16
        %v7207 = vrot.slane %v7205, 5
        %v7208 = vor.u32 %v7204, %v7207
        %v7209 = vrot.slane %v7208, 4
        %v7211 = vshll.u32 %v6881, 16
        %v7213 = vrot.slane %v7211, 5
        %v7214 = vsel %vm1076, %v7209, %v7213
        %v7215 = vshrl.u32 %v6881, 16
        %v7217 = vrot.slane %v7215, 4
        %v7218 = vor.u32 %v7217, %v7213
        %v7219 = vrot.slane %v7218, 4
        %v7221 = vshll.u32 %v6882, 16
        %v7223 = vrot.slane %v7221, 5
        %v7224 = vsel %vm1076, %v7219, %v7223
        %v7226 = vshrl.u32 %v6883, 16
        %v7228 = vrot.slane %v7226, 4
        %v7229 = vshll.u32 %v6883, 16
        %v7231 = vrot.slane %v7229, 5
        %v7232 = vor.u32 %v7228, %v7231
        %v7233 = vrot.slane %v7232, 4
        %v7235 = vshll.u32 %v6884, 16
        %v7237 = vrot.slane %v7235, 5
        %v7238 = vsel %vm1076, %v7233, %v7237
        %v7239 = vshrl.u32 %v6884, 16
        %v7241 = vrot.slane %v7239, 4
        %v7242 = vor.u32 %v7241, %v7237
        %v7243 = vrot.slane %v7242, 4
        %v7245 = vshll.u32 %v6885, 16
        %v7247 = vrot.slane %v7245, 5
        %v7248 = vsel %vm1076, %v7243, %v7247
        %v7250 = vshrl.u32 %v6886, 16
        %v7252 = vrot.slane %v7250, 4
        %v7253 = vshll.u32 %v6886, 16
        %v7255 = vrot.slane %v7253, 5
        %v7256 = vor.u32 %v7252, %v7255
        %v7257 = vrot.slane %v7256, 4
        %v7259 = vshll.u32 %v6887, 16
        %v7261 = vrot.slane %v7259, 5
        %v7262 = vsel %vm1076, %v7257, %v7261
        %v7263 = vshrl.u32 %v6887, 16
        %v7265 = vrot.slane %v7263, 4
        %v7266 = vor.u32 %v7265, %v7261
        %v7267 = vrot.slane %v7266, 4
        %v7269 = vshll.u32 %v6888, 16
        %v7271 = vrot.slane %v7269, 5
        %v7272 = vsel %vm1076, %v7267, %v7271
        %s7273 = scalar_lea.vmem %s8, 84
        %v7274 = vld [vmem:[%s7273] sm:$0xf]
        %v7275 = vld [vmem:[%s7273 + $0x4] sm:$0xf]
        %v7276 = vld [vmem:[%s7273 + $0x8] sm:$0xf]
        %v7277 = vunpack.c.l.b16 %v6902
        %v7278 = vunpack.c.l.b16 %v6912
        %v7279 = vunpack.c.l.b16 %v6926
        %v7280 = vunpack.c.l.b16 %v6936
        %v7281 = vunpack.c.l.b16 %v6950
        %v7282 = vunpack.c.l.b16 %v6960
        %v7283 = vunpack.c.l.b16 %v6974
        %v7284 = vunpack.c.l.b16 %v6984
        %v7285 = vunpack.c.l.b16 %v6998
        %v7286 = vunpack.c.l.b16 %v7008
        %v7287 = vunpack.c.l.b16 %v7022
        %v7288 = vunpack.c.l.b16 %v7032
        %v7289 = vunpack.c.l.b16 %v7046
        %v7290 = vunpack.c.l.b16 %v7056
        %v7291 = vunpack.c.l.b16 %v7070
        %v7292 = vunpack.c.l.b16 %v7080
        %v7293 = vunpack.c.l.b16 %v7094
        %v7294 = vunpack.c.l.b16 %v7104
        %v7295 = vunpack.c.l.b16 %v7118
        %v7296 = vunpack.c.l.b16 %v7128
        %v7297 = vunpack.c.l.b16 %v7142
        %v7298 = vunpack.c.l.b16 %v7152
        %v7299 = vunpack.c.l.b16 %v7166
        %v7300 = vunpack.c.l.b16 %v7176
        %v7301 = vunpack.c.l.b16 %v7190
        %v7302 = vunpack.c.l.b16 %v7200
        %v7303 = vunpack.c.l.b16 %v7214
        %v7304 = vunpack.c.l.b16 %v7224
        %v7305 = vunpack.c.l.b16 %v7238
        %v7306 = vunpack.c.l.b16 %v7248
        %v7307 = vunpack.c.l.b16 %v7262
        %v7308 = vunpack.c.l.b16 %v7272
        %v7309 = vpack.c.b16 %v7278, %v7277
        %v7310 = vpack.c.b16 %v7280, %v7279
        %v7311 = vpack.c.b16 %v7282, %v7281
        %v7312 = vpack.c.b16 %v7284, %v7283
        %v7313 = vpack.c.b16 %v7286, %v7285
        %v7314 = vpack.c.b16 %v7288, %v7287
        %v7315 = vpack.c.b16 %v7290, %v7289
        %v7316 = vpack.c.b16 %v7292, %v7291
        %v7317 = vpack.c.b16 %v7294, %v7293
        %v7318 = vpack.c.b16 %v7296, %v7295
        %v7319 = vpack.c.b16 %v7298, %v7297
        %v7320 = vpack.c.b16 %v7300, %v7299
        %v7321 = vpack.c.b16 %v7302, %v7301
        %v7322 = vpack.c.b16 %v7304, %v7303
        %v7323 = vpack.c.b16 %v7306, %v7305
        %v7324 = vpack.c.b16 %v7308, %v7307
        %v7328 = vunpack.c.l.b16 %v7274
        %v7329 = vunpack.c.l.b16 %v7275
        %v7330 = vunpack.c.l.b16 %v7276
        %v7331 = vpack.c.b16 %v7329, %v7328
        %v7332 = vpack.c.b16 %v7330, %v7330
        %v7335 = vsel %vm4408, %v7309, 0
        %v7338 = vsel %vm4408, %v7310, 0
        %v7341 = vsel %vm4408, %v7311, 0
        %v7344 = vsel %vm4408, %v7312, 0
        %v7347 = vsel %vm4408, %v7313, 0
        %v7350 = vsel %vm4408, %v7314, 0
        %v7353 = vsel %vm4408, %v7315, 0
        %v7356 = vsel %vm4408, %v7316, 0
        %v7359 = vsel %vm4408, %v7317, 0
        %v7362 = vsel %vm4408, %v7318, 0
        %v7365 = vsel %vm4408, %v7319, 0
        %v7368 = vsel %vm4408, %v7320, 0
        %v7371 = vsel %vm4408, %v7321, 0
        %v7374 = vsel %vm4408, %v7322, 0
        %v7377 = vsel %vm4408, %v7323, 0
        %v7380 = vsel %vm4408, %v7324, 0
        %v7383 = vsel %vm4457, %v7332, 0
        %7385 = vmatpush.bf16.msra.mxu0 0
        %7386 = vmatpush.bf16.msra.mxu0 0
        %7387 = vmatpush.bf16.msra.mxu0 0
        %7388 = vmatpush.bf16.msra.mxu0 0
        %7389 = vmatpush.bf16.msra.mxu0 0
        %7390 = vmatpush.bf16.msra.mxu0 0
        %7391 = vmatpush.bf16.msra.mxu0 %v7383
        %7392 = vmatpush.bf16.msra.mxu0 %v7331
        %7393 = vmatmul.bf16.gmra.mxu0 %v7335
        %v7394 = vpop.f32.mrf.mxu0
        %v7395 = vadd.f32 0.0, %v7394
        %v7396 = vpop.f32.mrf.mxu0
        %v7397 = vadd.f32 0.0, %v7396
        %7398 = vmatmul.bf16.gmra.mxu0 %v7338
        %v7399 = vpop.f32.mrf.mxu0
        %v7400 = vadd.f32 0.0, %v7399
        %v7401 = vpop.f32.mrf.mxu0
        %v7402 = vadd.f32 0.0, %v7401
        %7403 = vmatmul.bf16.gmra.mxu0 %v7341
        %v7404 = vpop.f32.mrf.mxu0
        %v7405 = vadd.f32 0.0, %v7404
        %v7406 = vpop.f32.mrf.mxu0
        %v7407 = vadd.f32 0.0, %v7406
        %7408 = vmatmul.bf16.gmra.mxu0 %v7344
        %v7409 = vpop.f32.mrf.mxu0
        %v7410 = vadd.f32 0.0, %v7409
        %v7411 = vpop.f32.mrf.mxu0
        %v7412 = vadd.f32 0.0, %v7411
        %7413 = vmatmul.bf16.gmra.mxu0 %v7347
        %v7414 = vpop.f32.mrf.mxu0
        %v7415 = vadd.f32 0.0, %v7414
        %v7416 = vpop.f32.mrf.mxu0
        %v7417 = vadd.f32 0.0, %v7416
        %7418 = vmatmul.bf16.gmra.mxu0 %v7350
        %v7419 = vpop.f32.mrf.mxu0
        %v7420 = vadd.f32 0.0, %v7419
        %v7421 = vpop.f32.mrf.mxu0
        %v7422 = vadd.f32 0.0, %v7421
        %7423 = vmatmul.bf16.gmra.mxu0 %v7353
        %v7424 = vpop.f32.mrf.mxu0
        %v7425 = vadd.f32 0.0, %v7424
        %v7426 = vpop.f32.mrf.mxu0
        %v7427 = vadd.f32 0.0, %v7426
        %7428 = vmatmul.bf16.gmra.mxu0 %v7356
        %v7429 = vpop.f32.mrf.mxu0
        %v7430 = vadd.f32 0.0, %v7429
        %v7431 = vpop.f32.mrf.mxu0
        %v7432 = vadd.f32 0.0, %v7431
        %7433 = vmatmul.bf16.gmra.mxu0 %v7359
        %v7434 = vpop.f32.mrf.mxu0
        %v7435 = vadd.f32 0.0, %v7434
        %v7436 = vpop.f32.mrf.mxu0
        %v7437 = vadd.f32 0.0, %v7436
        %7438 = vmatmul.bf16.gmra.mxu0 %v7362
        %v7439 = vpop.f32.mrf.mxu0
        %v7440 = vadd.f32 0.0, %v7439
        %v7441 = vpop.f32.mrf.mxu0
        %v7442 = vadd.f32 0.0, %v7441
        %7443 = vmatmul.bf16.gmra.mxu0 %v7365
        %v7444 = vpop.f32.mrf.mxu0
        %v7445 = vadd.f32 0.0, %v7444
        %v7446 = vpop.f32.mrf.mxu0
        %v7447 = vadd.f32 0.0, %v7446
        %7448 = vmatmul.bf16.gmra.mxu0 %v7368
        %v7449 = vpop.f32.mrf.mxu0
        %v7450 = vadd.f32 0.0, %v7449
        %v7451 = vpop.f32.mrf.mxu0
        %v7452 = vadd.f32 0.0, %v7451
        %7453 = vmatmul.bf16.gmra.mxu0 %v7371
        %v7454 = vpop.f32.mrf.mxu0
        %v7455 = vadd.f32 0.0, %v7454
        %v7456 = vpop.f32.mrf.mxu0
        %v7457 = vadd.f32 0.0, %v7456
        %7458 = vmatmul.bf16.gmra.mxu0 %v7374
        %v7459 = vpop.f32.mrf.mxu0
        %v7460 = vadd.f32 0.0, %v7459
        %v7461 = vpop.f32.mrf.mxu0
        %v7462 = vadd.f32 0.0, %v7461
        %7463 = vmatmul.bf16.gmra.mxu0 %v7377
        %v7464 = vpop.f32.mrf.mxu0
        %v7465 = vadd.f32 0.0, %v7464
        %v7466 = vpop.f32.mrf.mxu0
        %v7467 = vadd.f32 0.0, %v7466
        %7468 = vmatmul.bf16.gmra.mxu0 %v7380
        %v7469 = vpop.f32.mrf.mxu0
        %v7470 = vadd.f32 0.0, %v7469
        %v7471 = vpop.f32.mrf.mxu0
        %v7472 = vadd.f32 0.0, %v7471
        %7473 = vdwg.mxu0
        %v7474 = vadd.f32 %v6809, %v7395
        %v7475 = vadd.f32 %v6810, %v7397
        %v7476 = vadd.f32 %v6811, %v7400
        %v7477 = vadd.f32 %v6812, %v7402
        %v7478 = vadd.f32 %v6813, %v7405
        %v7479 = vadd.f32 %v6814, %v7407
        %v7480 = vadd.f32 %v6815, %v7410
        %v7481 = vadd.f32 %v6816, %v7412
        %v7482 = vadd.f32 %v6817, %v7415
        %v7483 = vadd.f32 %v6818, %v7417
        %v7484 = vadd.f32 %v6819, %v7420
        %v7485 = vadd.f32 %v6820, %v7422
        %v7486 = vadd.f32 %v6821, %v7425
        %v7487 = vadd.f32 %v6822, %v7427
        %v7488 = vadd.f32 %v6823, %v7430
        %v7489 = vadd.f32 %v6824, %v7432
        %v7490 = vadd.f32 %v6825, %v7435
        %v7491 = vadd.f32 %v6826, %v7437
        %v7492 = vadd.f32 %v6827, %v7440
        %v7493 = vadd.f32 %v6828, %v7442
        %v7494 = vadd.f32 %v6829, %v7445
        %v7495 = vadd.f32 %v6830, %v7447
        %v7496 = vadd.f32 %v6831, %v7450
        %v7497 = vadd.f32 %v6832, %v7452
        %v7498 = vadd.f32 %v6833, %v7455
        %v7499 = vadd.f32 %v6834, %v7457
        %v7500 = vadd.f32 %v6835, %v7460
        %v7501 = vadd.f32 %v6836, %v7462
        %v7502 = vadd.f32 %v6837, %v7465
        %v7503 = vadd.f32 %v6838, %v7467
        %v7504 = vadd.f32 %v6839, %v7470
        %v7505 = vadd.f32 %v6840, %v7472
        %v7506 = vld [vmem:[%s6543] sm:$0xe]
        %v7507 = vld [vmem:[%s6543 + $0xc] sm:$0xe]
        %v7508 = vld [vmem:[%s6543 + $0x18] sm:$0xe]
        %v7509 = vld [vmem:[%s6543 + $0x24] sm:$0xe]
        %v7510 = vld [vmem:[%s6543 + $0x30] sm:$0xe]
        %v7511 = vld [vmem:[%s6543 + $0x3c] sm:$0xe]
        %v7512 = vld [vmem:[%s6543 + $0x48] sm:$0xe]
        %v7513 = vld [vmem:[%s6543 + $0x54] sm:$0xe]
        %v7514 = vld [vmem:[%s6543 + $0x60] sm:$0xe]
        %v7515 = vld [vmem:[%s6543 + $0x6c] sm:$0xe]
        %v7516 = vld [vmem:[%s6543 + $0x78] sm:$0xe]
        %v7517 = vld [vmem:[%s6543 + $0x84] sm:$0xe]
        %v7518 = vld [vmem:[%s6543 + $0x90] sm:$0xe]
        %v7519 = vld [vmem:[%s6543 + $0x9c] sm:$0xe]
        %v7520 = vld [vmem:[%s6543 + $0xa8] sm:$0xe]
        %v7521 = vld [vmem:[%s6543 + $0xb4] sm:$0xe]
        %v7570 = vrot.slane %v7506, 5
        %v7571 = vrot.slane %v7570, 4
        %v7572 = vrot.slane %v6842, 5
        %v7573 = vsel %vm1373, %v7571, %v7572
        %v7574 = vrot.slane %v7572, 4
        %v7575 = vrot.slane %v6843, 5
        %v7576 = vsel %vm1373, %v7574, %v7575
        %v7577 = vrot.slane %v7507, 5
        %v7578 = vrot.slane %v7577, 4
        %v7579 = vrot.slane %v6845, 5
        %v7580 = vsel %vm1373, %v7578, %v7579
        %v7581 = vrot.slane %v7579, 4
        %v7582 = vrot.slane %v6846, 5
        %v7583 = vsel %vm1373, %v7581, %v7582
        %v7584 = vrot.slane %v7508, 5
        %v7585 = vrot.slane %v7584, 4
        %v7586 = vrot.slane %v6848, 5
        %v7587 = vsel %vm1373, %v7585, %v7586
        %v7588 = vrot.slane %v7586, 4
        %v7589 = vrot.slane %v6849, 5
        %v7590 = vsel %vm1373, %v7588, %v7589
        %v7591 = vrot.slane %v7509, 5
        %v7592 = vrot.slane %v7591, 4
        %v7593 = vrot.slane %v6851, 5
        %v7594 = vsel %vm1373, %v7592, %v7593
        %v7595 = vrot.slane %v7593, 4
        %v7596 = vrot.slane %v6852, 5
        %v7597 = vsel %vm1373, %v7595, %v7596
        %v7598 = vrot.slane %v7510, 5
        %v7599 = vrot.slane %v7598, 4
        %v7600 = vrot.slane %v6854, 5
        %v7601 = vsel %vm1373, %v7599, %v7600
        %v7602 = vrot.slane %v7600, 4
        %v7603 = vrot.slane %v6855, 5
        %v7604 = vsel %vm1373, %v7602, %v7603
        %v7605 = vrot.slane %v7511, 5
        %v7606 = vrot.slane %v7605, 4
        %v7607 = vrot.slane %v6857, 5
        %v7608 = vsel %vm1373, %v7606, %v7607
        %v7609 = vrot.slane %v7607, 4
        %v7610 = vrot.slane %v6858, 5
        %v7611 = vsel %vm1373, %v7609, %v7610
        %v7612 = vrot.slane %v7512, 5
        %v7613 = vrot.slane %v7612, 4
        %v7614 = vrot.slane %v6860, 5
        %v7615 = vsel %vm1373, %v7613, %v7614
        %v7616 = vrot.slane %v7614, 4
        %v7617 = vrot.slane %v6861, 5
        %v7618 = vsel %vm1373, %v7616, %v7617
        %v7619 = vrot.slane %v7513, 5
        %v7620 = vrot.slane %v7619, 4
        %v7621 = vrot.slane %v6863, 5
        %v7622 = vsel %vm1373, %v7620, %v7621
        %v7623 = vrot.slane %v7621, 4
        %v7624 = vrot.slane %v6864, 5
        %v7625 = vsel %vm1373, %v7623, %v7624
        %v7626 = vrot.slane %v7514, 5
        %v7627 = vrot.slane %v7626, 4
        %v7628 = vrot.slane %v6866, 5
        %v7629 = vsel %vm1373, %v7627, %v7628
        %v7630 = vrot.slane %v7628, 4
        %v7631 = vrot.slane %v6867, 5
        %v7632 = vsel %vm1373, %v7630, %v7631
        %v7633 = vrot.slane %v7515, 5
        %v7634 = vrot.slane %v7633, 4
        %v7635 = vrot.slane %v6869, 5
        %v7636 = vsel %vm1373, %v7634, %v7635
        %v7637 = vrot.slane %v7635, 4
        %v7638 = vrot.slane %v6870, 5
        %v7639 = vsel %vm1373, %v7637, %v7638
        %v7640 = vrot.slane %v7516, 5
        %v7641 = vrot.slane %v7640, 4
        %v7642 = vrot.slane %v6872, 5
        %v7643 = vsel %vm1373, %v7641, %v7642
        %v7644 = vrot.slane %v7642, 4
        %v7645 = vrot.slane %v6873, 5
        %v7646 = vsel %vm1373, %v7644, %v7645
        %v7647 = vrot.slane %v7517, 5
        %v7648 = vrot.slane %v7647, 4
        %v7649 = vrot.slane %v6875, 5
        %v7650 = vsel %vm1373, %v7648, %v7649
        %v7651 = vrot.slane %v7649, 4
        %v7652 = vrot.slane %v6876, 5
        %v7653 = vsel %vm1373, %v7651, %v7652
        %v7654 = vrot.slane %v7518, 5
        %v7655 = vrot.slane %v7654, 4
        %v7656 = vrot.slane %v6878, 5
        %v7657 = vsel %vm1373, %v7655, %v7656
        %v7658 = vrot.slane %v7656, 4
        %v7659 = vrot.slane %v6879, 5
        %v7660 = vsel %vm1373, %v7658, %v7659
        %v7661 = vrot.slane %v7519, 5
        %v7662 = vrot.slane %v7661, 4
        %v7663 = vrot.slane %v6881, 5
        %v7664 = vsel %vm1373, %v7662, %v7663
        %v7665 = vrot.slane %v7663, 4
        %v7666 = vrot.slane %v6882, 5
        %v7667 = vsel %vm1373, %v7665, %v7666
        %v7668 = vrot.slane %v7520, 5
        %v7669 = vrot.slane %v7668, 4
        %v7670 = vrot.slane %v6884, 5
        %v7671 = vsel %vm1373, %v7669, %v7670
        %v7672 = vrot.slane %v7670, 4
        %v7673 = vrot.slane %v6885, 5
        %v7674 = vsel %vm1373, %v7672, %v7673
        %v7675 = vrot.slane %v7521, 5
        %v7676 = vrot.slane %v7675, 4
        %v7677 = vrot.slane %v6887, 5
        %v7678 = vsel %vm1373, %v7676, %v7677
        %v7679 = vrot.slane %v7677, 4
        %v7680 = vrot.slane %v6888, 5
        %v7681 = vsel %vm1373, %v7679, %v7680
        %s7682 = scalar_lea.vmem %s8, 96
        %v7683 = vld [vmem:[%s7682] sm:$0xf]
        %v7684 = vld [vmem:[%s7682 + $0x4] sm:$0xf]
        %v7685 = vld [vmem:[%s7682 + $0x8] sm:$0xf]
        %v7686 = vunpack.c.l.b16 %v7573
        %v7687 = vunpack.c.l.b16 %v7576
        %v7688 = vunpack.c.l.b16 %v7580
        %v7689 = vunpack.c.l.b16 %v7583
        %v7690 = vunpack.c.l.b16 %v7587
        %v7691 = vunpack.c.l.b16 %v7590
        %v7692 = vunpack.c.l.b16 %v7594
        %v7693 = vunpack.c.l.b16 %v7597
        %v7694 = vunpack.c.l.b16 %v7601
        %v7695 = vunpack.c.l.b16 %v7604
        %v7696 = vunpack.c.l.b16 %v7608
        %v7697 = vunpack.c.l.b16 %v7611
        %v7698 = vunpack.c.l.b16 %v7615
        %v7699 = vunpack.c.l.b16 %v7618
        %v7700 = vunpack.c.l.b16 %v7622
        %v7701 = vunpack.c.l.b16 %v7625
        %v7702 = vunpack.c.l.b16 %v7629
        %v7703 = vunpack.c.l.b16 %v7632
        %v7704 = vunpack.c.l.b16 %v7636
        %v7705 = vunpack.c.l.b16 %v7639
        %v7706 = vunpack.c.l.b16 %v7643
        %v7707 = vunpack.c.l.b16 %v7646
        %v7708 = vunpack.c.l.b16 %v7650
        %v7709 = vunpack.c.l.b16 %v7653
        %v7710 = vunpack.c.l.b16 %v7657
        %v7711 = vunpack.c.l.b16 %v7660
        %v7712 = vunpack.c.l.b16 %v7664
        %v7713 = vunpack.c.l.b16 %v7667
        %v7714 = vunpack.c.l.b16 %v7671
        %v7715 = vunpack.c.l.b16 %v7674
        %v7716 = vunpack.c.l.b16 %v7678
        %v7717 = vunpack.c.l.b16 %v7681
        %v7718 = vpack.c.b16 %v7687, %v7686
        %v7719 = vpack.c.b16 %v7689, %v7688
        %v7720 = vpack.c.b16 %v7691, %v7690
        %v7721 = vpack.c.b16 %v7693, %v7692
        %v7722 = vpack.c.b16 %v7695, %v7694
        %v7723 = vpack.c.b16 %v7697, %v7696
        %v7724 = vpack.c.b16 %v7699, %v7698
        %v7725 = vpack.c.b16 %v7701, %v7700
        %v7726 = vpack.c.b16 %v7703, %v7702
        %v7727 = vpack.c.b16 %v7705, %v7704
        %v7728 = vpack.c.b16 %v7707, %v7706
        %v7729 = vpack.c.b16 %v7709, %v7708
        %v7730 = vpack.c.b16 %v7711, %v7710
        %v7731 = vpack.c.b16 %v7713, %v7712
        %v7732 = vpack.c.b16 %v7715, %v7714
        %v7733 = vpack.c.b16 %v7717, %v7716
        %v7737 = vunpack.c.l.b16 %v7683
        %v7738 = vunpack.c.l.b16 %v7684
        %v7739 = vunpack.c.l.b16 %v7685
        %v7740 = vpack.c.b16 %v7738, %v7737
        %v7741 = vpack.c.b16 %v7739, %v7739
        %v7744 = vsel %vm4408, %v7718, 0
        %v7747 = vsel %vm4408, %v7719, 0
        %v7750 = vsel %vm4408, %v7720, 0
        %v7753 = vsel %vm4408, %v7721, 0
        %v7756 = vsel %vm4408, %v7722, 0
        %v7759 = vsel %vm4408, %v7723, 0
        %v7762 = vsel %vm4408, %v7724, 0
        %v7765 = vsel %vm4408, %v7725, 0
        %v7768 = vsel %vm4408, %v7726, 0
        %v7771 = vsel %vm4408, %v7727, 0
        %v7774 = vsel %vm4408, %v7728, 0
        %v7777 = vsel %vm4408, %v7729, 0
        %v7780 = vsel %vm4408, %v7730, 0
        %v7783 = vsel %vm4408, %v7731, 0
        %v7786 = vsel %vm4408, %v7732, 0
        %v7789 = vsel %vm4408, %v7733, 0
        %v7792 = vsel %vm4457, %v7741, 0
        %7794 = vmatpush.bf16.msra.mxu0 0
        %7795 = vmatpush.bf16.msra.mxu0 0
        %7796 = vmatpush.bf16.msra.mxu0 0
        %7797 = vmatpush.bf16.msra.mxu0 0
        %7798 = vmatpush.bf16.msra.mxu0 0
        %7799 = vmatpush.bf16.msra.mxu0 0
        %7800 = vmatpush.bf16.msra.mxu0 %v7792
        %7801 = vmatpush.bf16.msra.mxu0 %v7740
        %7802 = vmatmul.bf16.gmra.mxu0 %v7744
        %v7803 = vpop.f32.mrf.mxu0
        %v7804 = vadd.f32 0.0, %v7803
        %v7805 = vpop.f32.mrf.mxu0
        %v7806 = vadd.f32 0.0, %v7805
        %7807 = vmatmul.bf16.gmra.mxu0 %v7747
        %v7808 = vpop.f32.mrf.mxu0
        %v7809 = vadd.f32 0.0, %v7808
        %v7810 = vpop.f32.mrf.mxu0
        %v7811 = vadd.f32 0.0, %v7810
        %7812 = vmatmul.bf16.gmra.mxu0 %v7750
        %v7813 = vpop.f32.mrf.mxu0
        %v7814 = vadd.f32 0.0, %v7813
        %v7815 = vpop.f32.mrf.mxu0
        %v7816 = vadd.f32 0.0, %v7815
        %7817 = vmatmul.bf16.gmra.mxu0 %v7753
        %v7818 = vpop.f32.mrf.mxu0
        %v7819 = vadd.f32 0.0, %v7818
        %v7820 = vpop.f32.mrf.mxu0
        %v7821 = vadd.f32 0.0, %v7820
        %7822 = vmatmul.bf16.gmra.mxu0 %v7756
        %v7823 = vpop.f32.mrf.mxu0
        %v7824 = vadd.f32 0.0, %v7823
        %v7825 = vpop.f32.mrf.mxu0
        %v7826 = vadd.f32 0.0, %v7825
        %7827 = vmatmul.bf16.gmra.mxu0 %v7759
        %v7828 = vpop.f32.mrf.mxu0
        %v7829 = vadd.f32 0.0, %v7828
        %v7830 = vpop.f32.mrf.mxu0
        %v7831 = vadd.f32 0.0, %v7830
        %7832 = vmatmul.bf16.gmra.mxu0 %v7762
        %v7833 = vpop.f32.mrf.mxu0
        %v7834 = vadd.f32 0.0, %v7833
        %v7835 = vpop.f32.mrf.mxu0
        %v7836 = vadd.f32 0.0, %v7835
        %7837 = vmatmul.bf16.gmra.mxu0 %v7765
        %v7838 = vpop.f32.mrf.mxu0
        %v7839 = vadd.f32 0.0, %v7838
        %v7840 = vpop.f32.mrf.mxu0
        %v7841 = vadd.f32 0.0, %v7840
        %7842 = vmatmul.bf16.gmra.mxu0 %v7768
        %v7843 = vpop.f32.mrf.mxu0
        %v7844 = vadd.f32 0.0, %v7843
        %v7845 = vpop.f32.mrf.mxu0
        %v7846 = vadd.f32 0.0, %v7845
        %7847 = vmatmul.bf16.gmra.mxu0 %v7771
        %v7848 = vpop.f32.mrf.mxu0
        %v7849 = vadd.f32 0.0, %v7848
        %v7850 = vpop.f32.mrf.mxu0
        %v7851 = vadd.f32 0.0, %v7850
        %7852 = vmatmul.bf16.gmra.mxu0 %v7774
        %v7853 = vpop.f32.mrf.mxu0
        %v7854 = vadd.f32 0.0, %v7853
        %v7855 = vpop.f32.mrf.mxu0
        %v7856 = vadd.f32 0.0, %v7855
        %7857 = vmatmul.bf16.gmra.mxu0 %v7777
        %v7858 = vpop.f32.mrf.mxu0
        %v7859 = vadd.f32 0.0, %v7858
        %v7860 = vpop.f32.mrf.mxu0
        %v7861 = vadd.f32 0.0, %v7860
        %7862 = vmatmul.bf16.gmra.mxu0 %v7780
        %v7863 = vpop.f32.mrf.mxu0
        %v7864 = vadd.f32 0.0, %v7863
        %v7865 = vpop.f32.mrf.mxu0
        %v7866 = vadd.f32 0.0, %v7865
        %7867 = vmatmul.bf16.gmra.mxu0 %v7783
        %v7868 = vpop.f32.mrf.mxu0
        %v7869 = vadd.f32 0.0, %v7868
        %v7870 = vpop.f32.mrf.mxu0
        %v7871 = vadd.f32 0.0, %v7870
        %7872 = vmatmul.bf16.gmra.mxu0 %v7786
        %v7873 = vpop.f32.mrf.mxu0
        %v7874 = vadd.f32 0.0, %v7873
        %v7875 = vpop.f32.mrf.mxu0
        %v7876 = vadd.f32 0.0, %v7875
        %7877 = vmatmul.bf16.gmra.mxu0 %v7789
        %v7878 = vpop.f32.mrf.mxu0
        %v7879 = vadd.f32 0.0, %v7878
        %v7880 = vpop.f32.mrf.mxu0
        %v7881 = vadd.f32 0.0, %v7880
        %7882 = vdwg.mxu0
        %v7883 = vadd.f32 %v7474, %v7804
        %v7884 = vadd.f32 %v7475, %v7806
        %v7885 = vadd.f32 %v7476, %v7809
        %v7886 = vadd.f32 %v7477, %v7811
        %v7887 = vadd.f32 %v7478, %v7814
        %v7888 = vadd.f32 %v7479, %v7816
        %v7889 = vadd.f32 %v7480, %v7819
        %v7890 = vadd.f32 %v7481, %v7821
        %v7891 = vadd.f32 %v7482, %v7824
        %v7892 = vadd.f32 %v7483, %v7826
        %v7893 = vadd.f32 %v7484, %v7829
        %v7894 = vadd.f32 %v7485, %v7831
        %v7895 = vadd.f32 %v7486, %v7834
        %v7896 = vadd.f32 %v7487, %v7836
        %v7897 = vadd.f32 %v7488, %v7839
        %v7898 = vadd.f32 %v7489, %v7841
        %v7899 = vadd.f32 %v7490, %v7844
        %v7900 = vadd.f32 %v7491, %v7846
        %v7901 = vadd.f32 %v7492, %v7849
        %v7902 = vadd.f32 %v7493, %v7851
        %v7903 = vadd.f32 %v7494, %v7854
        %v7904 = vadd.f32 %v7495, %v7856
        %v7905 = vadd.f32 %v7496, %v7859
        %v7906 = vadd.f32 %v7497, %v7861
        %v7907 = vadd.f32 %v7498, %v7864
        %v7908 = vadd.f32 %v7499, %v7866
        %v7909 = vadd.f32 %v7500, %v7869
        %v7910 = vadd.f32 %v7501, %v7871
        %v7911 = vadd.f32 %v7502, %v7874
        %v7912 = vadd.f32 %v7503, %v7876
        %v7913 = vadd.f32 %v7504, %v7879
        %v7914 = vadd.f32 %v7505, %v7881
        %v7915 = vld [vmem:[%s9] sm:$0x1]
        %v7917 = vperm.slane %v7915, 0
        %v7919 = vmul.f32 %v7883, %v7917
        %v7920 = vmul.f32 %v7884, %v7917
        %v7921 = vmul.f32 %v7885, %v7917
        %v7922 = vmul.f32 %v7886, %v7917
        %v7923 = vmul.f32 %v7887, %v7917
        %v7924 = vmul.f32 %v7888, %v7917
        %v7925 = vmul.f32 %v7889, %v7917
        %v7926 = vmul.f32 %v7890, %v7917
        %v7927 = vmul.f32 %v7891, %v7917
        %v7928 = vmul.f32 %v7892, %v7917
        %v7929 = vmul.f32 %v7893, %v7917
        %v7930 = vmul.f32 %v7894, %v7917
        %v7931 = vmul.f32 %v7895, %v7917
        %v7932 = vmul.f32 %v7896, %v7917
        %v7933 = vmul.f32 %v7897, %v7917
        %v7934 = vmul.f32 %v7898, %v7917
        %v7935 = vmul.f32 %v7899, %v7917
        %v7936 = vmul.f32 %v7900, %v7917
        %v7937 = vmul.f32 %v7901, %v7917
        %v7938 = vmul.f32 %v7902, %v7917
        %v7939 = vmul.f32 %v7903, %v7917
        %v7940 = vmul.f32 %v7904, %v7917
        %v7941 = vmul.f32 %v7905, %v7917
        %v7942 = vmul.f32 %v7906, %v7917
        %v7943 = vmul.f32 %v7907, %v7917
        %v7944 = vmul.f32 %v7908, %v7917
        %v7945 = vmul.f32 %v7909, %v7917
        %v7946 = vmul.f32 %v7910, %v7917
        %v7947 = vmul.f32 %v7911, %v7917
        %v7948 = vmul.f32 %v7912, %v7917
        %v7949 = vmul.f32 %v7913, %v7917
        %v7950 = vmul.f32 %v7914, %v7917
        %v7951 = vld [vmem:[%s10] sm:$0x1]
        %v7953 = vperm.slane %v7951, 0
        %v7955 = vadd.f32 %v7919, %v7953
        %v7956 = vadd.f32 %v7920, %v7953
        %v7957 = vadd.f32 %v7921, %v7953
        %v7958 = vadd.f32 %v7922, %v7953
        %v7959 = vadd.f32 %v7923, %v7953
        %v7960 = vadd.f32 %v7924, %v7953
        %v7961 = vadd.f32 %v7925, %v7953
        %v7962 = vadd.f32 %v7926, %v7953
        %v7963 = vadd.f32 %v7927, %v7953
        %v7964 = vadd.f32 %v7928, %v7953
        %v7965 = vadd.f32 %v7929, %v7953
        %v7966 = vadd.f32 %v7930, %v7953
        %v7967 = vadd.f32 %v7931, %v7953
        %v7968 = vadd.f32 %v7932, %v7953
        %v7969 = vadd.f32 %v7933, %v7953
        %v7970 = vadd.f32 %v7934, %v7953
        %v7971 = vadd.f32 %v7935, %v7953
        %v7972 = vadd.f32 %v7936, %v7953
        %v7973 = vadd.f32 %v7937, %v7953
        %v7974 = vadd.f32 %v7938, %v7953
        %v7975 = vadd.f32 %v7939, %v7953
        %v7976 = vadd.f32 %v7940, %v7953
        %v7977 = vadd.f32 %v7941, %v7953
        %v7978 = vadd.f32 %v7942, %v7953
        %v7979 = vadd.f32 %v7943, %v7953
        %v7980 = vadd.f32 %v7944, %v7953
        %v7981 = vadd.f32 %v7945, %v7953
        %v7982 = vadd.f32 %v7946, %v7953
        %v7983 = vadd.f32 %v7947, %v7953
        %v7984 = vadd.f32 %v7948, %v7953
        %v7985 = vadd.f32 %v7949, %v7953
        %v7986 = vadd.f32 %v7950, %v7953
        %v7987 = vmax.f32 %v7955, 0.0
        %v7988 = vmax.f32 %v7956, 0.0
        %v7989 = vmax.f32 %v7957, 0.0
        %v7990 = vmax.f32 %v7958, 0.0
        %v7991 = vmax.f32 %v7959, 0.0
        %v7992 = vmax.f32 %v7960, 0.0
        %v7993 = vmax.f32 %v7961, 0.0
        %v7994 = vmax.f32 %v7962, 0.0
        %v7995 = vmax.f32 %v7963, 0.0
        %v7996 = vmax.f32 %v7964, 0.0
        %v7997 = vmax.f32 %v7965, 0.0
        %v7998 = vmax.f32 %v7966, 0.0
        %v7999 = vmax.f32 %v7967, 0.0
        %v8000 = vmax.f32 %v7968, 0.0
        %v8001 = vmax.f32 %v7969, 0.0
        %v8002 = vmax.f32 %v7970, 0.0
        %v8003 = vmax.f32 %v7971, 0.0
        %v8004 = vmax.f32 %v7972, 0.0
        %v8005 = vmax.f32 %v7973, 0.0
        %v8006 = vmax.f32 %v7974, 0.0
        %v8007 = vmax.f32 %v7975, 0.0
        %v8008 = vmax.f32 %v7976, 0.0
        %v8009 = vmax.f32 %v7977, 0.0
        %v8010 = vmax.f32 %v7978, 0.0
        %v8011 = vmax.f32 %v7979, 0.0
        %v8012 = vmax.f32 %v7980, 0.0
        %v8013 = vmax.f32 %v7981, 0.0
        %v8014 = vmax.f32 %v7982, 0.0
        %v8015 = vmax.f32 %v7983, 0.0
        %v8016 = vmax.f32 %v7984, 0.0
        %v8017 = vmax.f32 %v7985, 0.0
        %v8018 = vmax.f32 %v7986, 0.0
        %v8019 = vld [vmem:[%s14] sm:$0x1]
        %v8021 = vperm.slane %v8019, 0
        %v8023 = vmul.f32 %v7987, %v8021
        %v8024 = vmul.f32 %v7988, %v8021
        %v8025 = vmul.f32 %v7989, %v8021
        %v8026 = vmul.f32 %v7990, %v8021
        %v8027 = vmul.f32 %v7991, %v8021
        %v8028 = vmul.f32 %v7992, %v8021
        %v8029 = vmul.f32 %v7993, %v8021
        %v8030 = vmul.f32 %v7994, %v8021
        %v8031 = vmul.f32 %v7995, %v8021
        %v8032 = vmul.f32 %v7996, %v8021
        %v8033 = vmul.f32 %v7997, %v8021
        %v8034 = vmul.f32 %v7998, %v8021
        %v8035 = vmul.f32 %v7999, %v8021
        %v8036 = vmul.f32 %v8000, %v8021
        %v8037 = vmul.f32 %v8001, %v8021
        %v8038 = vmul.f32 %v8002, %v8021
        %v8039 = vmul.f32 %v8003, %v8021
        %v8040 = vmul.f32 %v8004, %v8021
        %v8041 = vmul.f32 %v8005, %v8021
        %v8042 = vmul.f32 %v8006, %v8021
        %v8043 = vmul.f32 %v8007, %v8021
        %v8044 = vmul.f32 %v8008, %v8021
        %v8045 = vmul.f32 %v8009, %v8021
        %v8046 = vmul.f32 %v8010, %v8021
        %v8047 = vmul.f32 %v8011, %v8021
        %v8048 = vmul.f32 %v8012, %v8021
        %v8049 = vmul.f32 %v8013, %v8021
        %v8050 = vmul.f32 %v8014, %v8021
        %v8051 = vmul.f32 %v8015, %v8021
        %v8052 = vmul.f32 %v8016, %v8021
        %v8053 = vmul.f32 %v8017, %v8021
        %v8054 = vmul.f32 %v8018, %v8021
        %vm8055 = vcmask 64512
        %v8056 = vsel %vm8055, %v8023, 0.0
        %8057 = vadd.xlane.f32.xlu0 %v8056
        %v8058 = vpop.xlane.xlu0 %8057
        %v8059 = vsel %vm8055, %v8024, 0.0
        %8060 = vadd.xlane.f32.xlu0 %v8059
        %v8061 = vpop.xlane.xlu0 %8060
        %v8062 = vsel %vm8055, %v8025, 0.0
        %8063 = vadd.xlane.f32.xlu0 %v8062
        %v8064 = vpop.xlane.xlu0 %8063
        %v8065 = vsel %vm8055, %v8026, 0.0
        %8066 = vadd.xlane.f32.xlu0 %v8065
        %v8067 = vpop.xlane.xlu0 %8066
        %v8068 = vsel %vm8055, %v8027, 0.0
        %8069 = vadd.xlane.f32.xlu0 %v8068
        %v8070 = vpop.xlane.xlu0 %8069
        %v8071 = vsel %vm8055, %v8028, 0.0
        %8072 = vadd.xlane.f32.xlu0 %v8071
        %v8073 = vpop.xlane.xlu0 %8072
        %v8074 = vsel %vm8055, %v8029, 0.0
        %8075 = vadd.xlane.f32.xlu0 %v8074
        %v8076 = vpop.xlane.xlu0 %8075
        %v8077 = vsel %vm8055, %v8030, 0.0
        %8078 = vadd.xlane.f32.xlu0 %v8077
        %v8079 = vpop.xlane.xlu0 %8078
        %v8080 = vsel %vm8055, %v8031, 0.0
        %8081 = vadd.xlane.f32.xlu0 %v8080
        %v8082 = vpop.xlane.xlu0 %8081
        %v8083 = vsel %vm8055, %v8032, 0.0
        %8084 = vadd.xlane.f32.xlu0 %v8083
        %v8085 = vpop.xlane.xlu0 %8084
        %v8086 = vsel %vm8055, %v8033, 0.0
        %8087 = vadd.xlane.f32.xlu0 %v8086
        %v8088 = vpop.xlane.xlu0 %8087
        %v8089 = vsel %vm8055, %v8034, 0.0
        %8090 = vadd.xlane.f32.xlu0 %v8089
        %v8091 = vpop.xlane.xlu0 %8090
        %v8092 = vsel %vm8055, %v8035, 0.0
        %8093 = vadd.xlane.f32.xlu0 %v8092
        %v8094 = vpop.xlane.xlu0 %8093
        %v8095 = vsel %vm8055, %v8036, 0.0
        %8096 = vadd.xlane.f32.xlu0 %v8095
        %v8097 = vpop.xlane.xlu0 %8096
        %v8098 = vsel %vm8055, %v8037, 0.0
        %8099 = vadd.xlane.f32.xlu0 %v8098
        %v8100 = vpop.xlane.xlu0 %8099
        %v8101 = vsel %vm8055, %v8038, 0.0
        %8102 = vadd.xlane.f32.xlu0 %v8101
        %v8103 = vpop.xlane.xlu0 %8102
        %v8104 = vsel %vm8055, %v8039, 0.0
        %8105 = vadd.xlane.f32.xlu0 %v8104
        %v8106 = vpop.xlane.xlu0 %8105
        %v8107 = vsel %vm8055, %v8040, 0.0
        %8108 = vadd.xlane.f32.xlu0 %v8107
        %v8109 = vpop.xlane.xlu0 %8108
        %v8110 = vsel %vm8055, %v8041, 0.0
        %8111 = vadd.xlane.f32.xlu0 %v8110
        %v8112 = vpop.xlane.xlu0 %8111
        %v8113 = vsel %vm8055, %v8042, 0.0
        %8114 = vadd.xlane.f32.xlu0 %v8113
        %v8115 = vpop.xlane.xlu0 %8114
        %v8116 = vsel %vm8055, %v8043, 0.0
        %8117 = vadd.xlane.f32.xlu0 %v8116
        %v8118 = vpop.xlane.xlu0 %8117
        %v8119 = vsel %vm8055, %v8044, 0.0
        %8120 = vadd.xlane.f32.xlu0 %v8119
        %v8121 = vpop.xlane.xlu0 %8120
        %v8122 = vsel %vm8055, %v8045, 0.0
        %8123 = vadd.xlane.f32.xlu0 %v8122
        %v8124 = vpop.xlane.xlu0 %8123
        %v8125 = vsel %vm8055, %v8046, 0.0
        %8126 = vadd.xlane.f32.xlu0 %v8125
        %v8127 = vpop.xlane.xlu0 %8126
        %v8128 = vsel %vm8055, %v8047, 0.0
        %8129 = vadd.xlane.f32.xlu0 %v8128
        %v8130 = vpop.xlane.xlu0 %8129
        %v8131 = vsel %vm8055, %v8048, 0.0
        %8132 = vadd.xlane.f32.xlu0 %v8131
        %v8133 = vpop.xlane.xlu0 %8132
        %v8134 = vsel %vm8055, %v8049, 0.0
        %8135 = vadd.xlane.f32.xlu0 %v8134
        %v8136 = vpop.xlane.xlu0 %8135
        %v8137 = vsel %vm8055, %v8050, 0.0
        %8138 = vadd.xlane.f32.xlu0 %v8137
        %v8139 = vpop.xlane.xlu0 %8138
        %v8140 = vsel %vm8055, %v8051, 0.0
        %8141 = vadd.xlane.f32.xlu0 %v8140
        %v8142 = vpop.xlane.xlu0 %8141
        %v8143 = vsel %vm8055, %v8052, 0.0
        %8144 = vadd.xlane.f32.xlu0 %v8143
        %v8145 = vpop.xlane.xlu0 %8144
        %v8146 = vsel %vm8055, %v8053, 0.0
        %8147 = vadd.xlane.f32.xlu0 %v8146
        %v8148 = vpop.xlane.xlu0 %8147
        %v8149 = vsel %vm8055, %v8054, 0.0
        %8150 = vadd.xlane.f32.xlu0 %v8149
        %v8151 = vpop.xlane.xlu0 %8150
        %v8152 = vpack.c.bf16 %v8061, %v8058
        %v8153 = vpack.c.bf16 %v8067, %v8064
        %v8154 = vpack.c.bf16 %v8073, %v8070
        %v8155 = vpack.c.bf16 %v8079, %v8076
        %v8156 = vpack.c.bf16 %v8085, %v8082
        %v8157 = vpack.c.bf16 %v8091, %v8088
        %v8158 = vpack.c.bf16 %v8097, %v8094
        %v8159 = vpack.c.bf16 %v8103, %v8100
        %v8160 = vpack.c.bf16 %v8109, %v8106
        %v8161 = vpack.c.bf16 %v8115, %v8112
        %v8162 = vpack.c.bf16 %v8121, %v8118
        %v8163 = vpack.c.bf16 %v8127, %v8124
        %v8164 = vpack.c.bf16 %v8133, %v8130
        %v8165 = vpack.c.bf16 %v8139, %v8136
        %v8166 = vpack.c.bf16 %v8145, %v8142
        %v8167 = vpack.c.bf16 %v8151, %v8148
        %v8168 = vld [vmem:[%s12] sm:$0xf]
        %v8169 = vld [vmem:[%s12 + $0x4] sm:$0xf]
        %v8186 = vunpack.c.l.b16 %v8152
        %v8187 = vunpack.c.h.b16 %v8152
        %v8188 = vunpack.c.l.b16 %v8153
        %v8189 = vunpack.c.h.b16 %v8153
        %v8190 = vunpack.c.l.b16 %v8154
        %v8191 = vunpack.c.h.b16 %v8154
        %v8192 = vunpack.c.l.b16 %v8155
        %v8193 = vunpack.c.h.b16 %v8155
        %v8194 = vunpack.c.l.b16 %v8156
        %v8195 = vunpack.c.h.b16 %v8156
        %v8196 = vunpack.c.l.b16 %v8157
        %v8197 = vunpack.c.h.b16 %v8157
        %v8198 = vunpack.c.l.b16 %v8158
        %v8199 = vunpack.c.h.b16 %v8158
        %v8200 = vunpack.c.l.b16 %v8159
        %v8201 = vunpack.c.h.b16 %v8159
        %v8202 = vunpack.c.l.b16 %v8160
        %v8203 = vunpack.c.h.b16 %v8160
        %v8204 = vunpack.c.l.b16 %v8161
        %v8205 = vunpack.c.h.b16 %v8161
        %v8206 = vunpack.c.l.b16 %v8162
        %v8207 = vunpack.c.h.b16 %v8162
        %v8208 = vunpack.c.l.b16 %v8163
        %v8209 = vunpack.c.h.b16 %v8163
        %v8210 = vunpack.c.l.b16 %v8164
        %v8211 = vunpack.c.h.b16 %v8164
        %v8212 = vunpack.c.l.b16 %v8165
        %v8213 = vunpack.c.h.b16 %v8165
        %v8214 = vunpack.c.l.b16 %v8166
        %v8215 = vunpack.c.h.b16 %v8166
        %v8216 = vunpack.c.l.b16 %v8167
        %v8217 = vunpack.c.h.b16 %v8167
        %v8218 = vlaneseq
        %v8219 = vand.u32 %v8218, 127
        %v8220 = vperm.slane %v8186, %v8219
        %v8221 = vadd.s32 %v8219, 4294967288
        %v8222 = vperm.slane %v8187, %v8221
        %vm8223 = vcmask 130112
        %v8224 = vsel %vm8223, %v8222, %v8220
        %v8225 = vperm.slane %v8188, %v8219
        %v8226 = vperm.slane %v8189, %v8221
        %v8227 = vsel %vm8223, %v8226, %v8225
        %v8228 = vperm.slane %v8190, %v8219
        %v8229 = vperm.slane %v8191, %v8221
        %v8230 = vsel %vm8223, %v8229, %v8228
        %v8231 = vperm.slane %v8192, %v8219
        %v8232 = vperm.slane %v8193, %v8221
        %v8233 = vsel %vm8223, %v8232, %v8231
        %v8234 = vperm.slane %v8194, %v8219
        %v8235 = vperm.slane %v8195, %v8221
        %v8236 = vsel %vm8223, %v8235, %v8234
        %v8237 = vperm.slane %v8196, %v8219
        %v8238 = vperm.slane %v8197, %v8221
        %v8239 = vsel %vm8223, %v8238, %v8237
        %v8240 = vperm.slane %v8198, %v8219
        %v8241 = vperm.slane %v8199, %v8221
        %v8242 = vsel %vm8223, %v8241, %v8240
        %v8243 = vperm.slane %v8200, %v8219
        %v8244 = vperm.slane %v8201, %v8221
        %v8245 = vsel %vm8223, %v8244, %v8243
        %v8246 = vperm.slane %v8202, %v8219
        %v8247 = vperm.slane %v8203, %v8221
        %v8248 = vsel %vm8223, %v8247, %v8246
        %v8249 = vperm.slane %v8204, %v8219
        %v8250 = vperm.slane %v8205, %v8221
        %v8251 = vsel %vm8223, %v8250, %v8249
        %v8252 = vperm.slane %v8206, %v8219
        %v8253 = vperm.slane %v8207, %v8221
        %v8254 = vsel %vm8223, %v8253, %v8252
        %v8255 = vperm.slane %v8208, %v8219
        %v8256 = vperm.slane %v8209, %v8221
        %v8257 = vsel %vm8223, %v8256, %v8255
        %v8258 = vperm.slane %v8210, %v8219
        %v8259 = vperm.slane %v8211, %v8221
        %v8260 = vsel %vm8223, %v8259, %v8258
        %v8261 = vperm.slane %v8212, %v8219
        %v8262 = vperm.slane %v8213, %v8221
        %v8263 = vsel %vm8223, %v8262, %v8261
        %v8264 = vperm.slane %v8214, %v8219
        %v8265 = vperm.slane %v8215, %v8221
        %v8266 = vsel %vm8223, %v8265, %v8264
        %v8267 = vperm.slane %v8216, %v8219
        %v8268 = vperm.slane %v8217, %v8221
        %v8269 = vsel %vm8223, %v8268, %v8267
        %vm8270 = vcmask 1041409
        %v8271 = vsel %vm8270, %v8227, %v8224
        %vm8272 = vcmask 1042434
        %v8273 = vsel %vm8272, %v8230, %v8271
        %vm8274 = vcmask 1043459
        %v8275 = vsel %vm8274, %v8233, %v8273
        %vm8276 = vcmask 1044484
        %v8277 = vsel %vm8276, %v8236, %v8275
        %vm8278 = vcmask 1045509
        %v8279 = vsel %vm8278, %v8239, %v8277
        %vm8280 = vcmask 1046534
        %v8281 = vsel %vm8280, %v8242, %v8279
        %vm8282 = vcmask 1047559
        %v8283 = vsel %vm8282, %v8245, %v8281
        %v8284 = vsel %vm8270, %v8251, %v8248
        %v8285 = vsel %vm8272, %v8254, %v8284
        %v8286 = vsel %vm8274, %v8257, %v8285
        %v8287 = vsel %vm8276, %v8260, %v8286
        %v8288 = vsel %vm8278, %v8263, %v8287
        %v8289 = vsel %vm8280, %v8266, %v8288
        %v8290 = vsel %vm8282, %v8269, %v8289
        %v8291 = vpack.c.b16 %v8290, %v8283
        %v8294 = vunpack.c.l.b16 %v8168
        %v8295 = vunpack.c.l.b16 %v8169
        %v8296 = vpack.c.b16 %v8295, %v8294
        %v8299 = vsel %vm838, %v8291, 0
        %8301 = vmatpush.bf16.msra.mxu0 0
        %8302 = vmatpush.bf16.msra.mxu0 0
        %8303 = vmatpush.bf16.msra.mxu0 0
        %8304 = vmatpush.bf16.msra.mxu0 0
        %8305 = vmatpush.bf16.msra.mxu0 0
        %8306 = vmatpush.bf16.msra.mxu0 0
        %8307 = vmatpush.bf16.msra.mxu0 0
        %8308 = vmatpush.bf16.msra.mxu0 %v8296
        %8309 = vmatmul.bf16.gmra.mxu0 %v8299
        %v8310 = vpop.f32.mrf.mxu0
        %v8311 = vadd.f32 0.0, %v8310
        %v8312 = vpop.f32.mrf.mxu0
        %v8313 = vadd.f32 0.0, %v8312
        %8314 = vdwg.mxu0
        %v8315 = vld [vmem:[%s13] sm:$0xf]
        %v8316 = vld [vmem:[%s13 + $0x4] sm:$0xf]
        %v8319 = vunpack.c.l.b16 %v8315
        %v8320 = vunpack.c.l.b16 %v8316
        %v8321 = vpack.c.b16 %v8320, %v8319
        %8323 = vmatpush.bf16.msra.mxu0 0
        %8324 = vmatpush.bf16.msra.mxu0 0
        %8325 = vmatpush.bf16.msra.mxu0 0
        %8326 = vmatpush.bf16.msra.mxu0 0
        %8327 = vmatpush.bf16.msra.mxu0 0
        %8328 = vmatpush.bf16.msra.mxu0 0
        %8329 = vmatpush.bf16.msra.mxu0 0
        %8330 = vmatpush.bf16.msra.mxu0 %v8321
        %8331 = vmatmul.bf16.gmra.mxu0 %v8299
        %v8332 = vpop.f32.mrf.mxu0
        %v8333 = vadd.f32 0.0, %v8332
        %v8334 = vpop.f32.mrf.mxu0
        %v8335 = vadd.f32 0.0, %v8334
        %8336 = vdwg.mxu0
        %v8337 = vld [vmem:[%s11] sm:$0xf]
        %v8338 = vld [vmem:[%s11 + $0x4] sm:$0xf]
        %v8339 = vld [vmem:[%s11 + $0x8] sm:$0xf]
        %v8340 = vld [vmem:[%s11 + $0xc] sm:$0xf]
        %v8341 = vpack.c.bf16 %v8313, %v8311
        %v8342 = vpack.c.bf16 %v8335, %v8333
        %s8343 = sld [smem:[#allocation4]]
        %v8344 = vstv %s8343
        %v8349 = vunpack.c.l.b16 %v8337
        %v8350 = vunpack.c.l.b16 %v8338
        %v8351 = vunpack.c.l.b16 %v8339
        %v8352 = vunpack.c.l.b16 %v8340
        %v8353 = vpack.c.b16 %v8350, %v8349
        %v8354 = vpack.c.b16 %v8352, %v8351
        %vm8355 = vcmask 261120
        %v8357 = vsel %vm8355, %v8353, 0
        %v8360 = vsel %vm8355, %v8354, 0
        %8362 = vmatpush.bf16.msra.mxu0 0
        %8363 = vmatpush.bf16.msra.mxu0 0
        %8364 = vmatpush.bf16.msra.mxu0 0
        %8365 = vmatpush.bf16.msra.mxu0 0
        %8366 = vmatpush.bf16.msra.mxu0 0
        %8367 = vmatpush.bf16.msra.mxu0 0
        %8368 = vmatpush.bf16.msra.mxu0 %v8342
        %8369 = vmatpush.bf16.msra.mxu0 %v8341
        %8370 = vmatmul.bf16.gmra.mxu0 %v8357
        %v8371 = vpop.f32.mrf.mxu0
        %v8372 = vadd.f32 %v8344, %v8371
        %v8373 = vpop.f32.mrf.mxu0
        %v8374 = vadd.f32 %v8344, %v8373
        %8375 = vmatmul.bf16.gmra.mxu0 %v8360
        %v8376 = vpop.f32.mrf.mxu0
        %v8377 = vadd.f32 %v8344, %v8376
        %v8378 = vpop.f32.mrf.mxu0
        %v8379 = vadd.f32 %v8344, %v8378
        %8380 = vdwg.mxu0
        %8381 = vst [vmem:[%s545] sm:$0xff] %v8372
        %8382 = vst [vmem:[%s545 + $0x8] sm:$0xff] %v8374
        %8383 = vst [vmem:[%s545 + $0x10] sm:$0xff] %v8377
        %8384 = vst [vmem:[%s545 + $0x18] sm:$0xff] %v8379
        %s8385 = sand.u32 %s390, 1
        %s8386 = scalar_lea.sflag [#allocation6], %s8385
        %s8387 = sand.u32 %s390, 1
        %s8388 = smul.addr %s8387, 32
        %s8389 = scalar_lea.vmem [#allocation5], %s8388
        // Predicated region
        $region85: #{tpu_custom_call.1} parent=83 // pred_check
          %p8390 = pneg %p400
        $region86: #{tpu_custom_call.1} parent=83 // pred_check_branch
          %8392 = sbr.rel (%p8390) target = $region88
        $region87: #{tpu_custom_call.1} parent=83 // pred_region
          %8394 = vsyncadd %s8386, 0
          %s8395 = smul.addr %s31, 4
          %s8396 = smul.addr %s8395, 8
          %s8397 = scalar_lea.hbm %s16, %s8396
          %s8398 = sshll.u32 %s8389, 4
          %s8399 = int_to_ptr.vmem [resolvable:$true] %s8398
          %s8400 = sshll.u32 %s8397, 4
          %s8401 = int_to_ptr.hbm [resolvable:$true] %s8400
          %8406 = dma.vmem_to_hbm [thread:$0]  %s8399, 512, %s8401, %s8386, 128, 128, 8
        $region88: #{tpu_custom_call.1} parent=83 // pred_fallthru
          _
      $region84: #{tpu_custom_call.1} parent=5 // pred_fallthru
        _
      %p8407 = scmp.le.s32.totalorder 2, %s26
      // Predicated region
      $region89: #{tpu_custom_call.1} parent=5 // pred_check
        %p8408 = pneg %p8407
      $region90: #{tpu_custom_call.1} parent=5 // pred_check_branch
        %8410 = sbr.rel (%p8408) target = $region92
      $region91: #{tpu_custom_call.1} parent=5 // pred_region
        %s8411 = ssub.s32 %s26, 2
        // Predicated region
        $region93: #{tpu_custom_call.1} parent=91 // pred_check
          %p8412 = pneg %p406
        $region94: #{tpu_custom_call.1} parent=91 // pred_check_branch
          %8414 = sbr.rel (%p8412) target = $region96
        $region95: #{tpu_custom_call.1} parent=91 // pred_region
          %s8415 = sand.u32 %s391, 1
          %s8416 = scalar_lea.sflag [#allocation6], %s8415
          %s8417 = sand.u32 %s391, 1
          %s8418 = smul.addr %s8417, 32
          %s8419 = scalar_lea.vmem [#allocation5], %s8418
          %8421 = dma.done %s8416, 512
        $region96: #{tpu_custom_call.1} parent=91 // pred_fallthru
          _
      $region92: #{tpu_custom_call.1} parent=5 // pred_fallthru
        _
    $region6: #{tpu_custom_call.1} parent=1 // loop_footer
      %s30 = sadd.s32 1, %s26
    $region7: #{tpu_custom_call.1} parent=1 // loop_footer_branch
      %25 = sbr.rel target = $region3
    $region8: #{tpu_custom_call.1} parent=1 // loop_exit
      _
    %8422 = vsyncpa [#allocation6], 1
    %s8423 = scalar_lea.sflag [#allocation6], 1
    %8424 = vsyncpa %s8423, 1

</llo_original>
